<compile_context>
chip_gen: v6e
topology: v6e:2x2x1
jax: 0.10.0
libtpu: 0.0.40
codegen_flags: <defaults>
</compile_context>

<pallas_src>
import math

import numpy as np

import jax
import jax.numpy as jnp
from jax.experimental import pallas as pl
from jax.experimental.pallas import tpu as pltpu

# ----------------------------- configuration --------------------------------
B = 2                  # batch
T_IN = 32              # input frames
D_IN = 16              # input feature dim ("input_size")
D_MODEL = 32           # output_size
HEADS = 4              # attention_heads
DK = D_MODEL // HEADS
LINEAR_UNITS = 64      # FFN hidden
CGMLP_UNITS = 64       # cgmlp_linear_units
CGMLP_HALF = CGMLP_UNITS // 2
CGMLP_KERNEL = 7       # cgmlp_conv_kernel (odd, non-causal)
MERGE_KERNEL = 3       # merge_conv_kernel
NUM_BLOCKS = 2
EPS = 1e-5

PAD_CSGU = (CGMLP_KERNEL - 1) // 2     # 3
PAD_MERGE = (MERGE_KERNEL - 1) // 2    # 1
PAD_MAX = max(PAD_CSGU, PAD_MERGE)
N_TAPS = 2 * PAD_MAX + 1

# Conv2dSubsampling4 derived dims (two 3x3 convs, stride 2)
H1 = (T_IN - 3) // 2 + 1        # 15  time after conv1
W1 = (D_IN - 3) // 2 + 1        # 7   freq after conv1
T_SUB = (H1 - 3) // 2 + 1       # 7   time after conv2 (= T')
W2 = (W1 - 3) // 2 + 1          # 3   freq after conv2
LANES1 = D_MODEL * W1           # 224 conv1 output lanes (chan-major, freq-minor)
FEAT2 = D_MODEL * W2            # 96  flattened conv2 features (chan-major)
PATCH1 = 9 * W1                 # 63  conv1 im2col lanes (freq-major, tap-minor)

TP = 8                          # per-utterance padded time (sublane multiple)
N = B * TP                      # 16  folded (batch*time) rows
HN = HEADS * N                  # 64  head-stacked rows


# ----------------------------- operand packing -------------------------------


class SlabLayout:
    """Packs many small (rows, cols) f32 arrays into one lane-padded slab with
    8-sublane-aligned row offsets, so the kernel takes a handful of operands
    instead of ~60.  The same layout object is used for host packing and for
    static in-kernel slicing."""

    def __init__(self, lanes):
        self.lanes = lanes
        self.entries = {}
        self.rows = 0

    def add(self, name, rows, cols):
        assert cols <= self.lanes, (name, cols, self.lanes)
        self.entries[name] = (self.rows, rows, cols)
        self.rows += -(-rows // 8) * 8
        return self

    def pack(self, arrays):
        slab = np.zeros((self.rows, self.lanes), np.float32)
        for name, (off, rows, cols) in self.entries.items():
            slab[off:off + rows, :cols] = np.asarray(
                arrays[name], np.float32).reshape(rows, cols)
        return slab


LAYER_LAYOUT = SlabLayout(LINEAR_UNITS)
for _n, _r, _c in (
    ("ln_mac_g", 1, D_MODEL), ("ln_mac_b", 1, D_MODEL),
    ("ln_mha_g", 1, D_MODEL), ("ln_mha_b", 1, D_MODEL),
    ("ln_mlp_g", 1, D_MODEL), ("ln_mlp_b", 1, D_MODEL),
    ("ln_ff_g", 1, D_MODEL), ("ln_ff_b", 1, D_MODEL),
    ("ln_final_g", 1, D_MODEL), ("ln_final_b", 1, D_MODEL),
    ("mac_w1", D_MODEL, LINEAR_UNITS), ("mac_b1", 1, LINEAR_UNITS),
    ("mac_w2", LINEAR_UNITS, D_MODEL), ("mac_b2", 1, D_MODEL),
    ("q_w", D_MODEL, D_MODEL), ("q_b", 1, D_MODEL),
    ("k_w", D_MODEL, D_MODEL), ("k_b", 1, D_MODEL),
    ("v_w", D_MODEL, D_MODEL), ("v_b", 1, D_MODEL),
    ("pos_w", D_MODEL, D_MODEL),
    ("pos_bias_u", 1, D_MODEL), ("pos_bias_v", 1, D_MODEL),
    ("att_out_w", D_MODEL, D_MODEL), ("att_out_b", 1, D_MODEL),
    ("proj1_w_r", D_MODEL, CGMLP_HALF), ("proj1_b_r", 1, CGMLP_HALF),
    ("proj1_w_g", D_MODEL, CGMLP_HALF), ("proj1_b_g", 1, CGMLP_HALF),
    ("csgu_ln_g", 1, CGMLP_HALF), ("csgu_ln_b", 1, CGMLP_HALF),
    ("csgu_conv_w", CGMLP_KERNEL, CGMLP_HALF), ("csgu_conv_b", 1, CGMLP_HALF),
    ("proj2_w", CGMLP_HALF, D_MODEL), ("proj2_b", 1, D_MODEL),
    ("merge_conv_w_a", MERGE_KERNEL, D_MODEL), ("merge_conv_b_a", 1, D_MODEL),
    ("merge_conv_w_b", MERGE_KERNEL, D_MODEL), ("merge_conv_b_b", 1, D_MODEL),
    ("merge_proj_w_a", D_MODEL, D_MODEL), ("merge_proj_w_b", D_MODEL, D_MODEL),
    ("merge_proj_b", 1, D_MODEL),
    ("ffn_w1", D_MODEL, LINEAR_UNITS), ("ffn_b1", 1, LINEAR_UNITS),
    ("ffn_w2", LINEAR_UNITS, D_MODEL), ("ffn_b2", 1, D_MODEL),
):
    LAYER_LAYOUT.add(_n, _r, _c)

FE_LAYOUT = SlabLayout(LANES1)
for _n, _r, _c in (
    ("w1big", PATCH1, LANES1), ("b1", 1, LANES1),
    ("rs0", N, B * H1), ("rs1", N, B * H1), ("rs2", N, B * H1),
    ("m0", LANES1, FEAT2), ("m1", LANES1, FEAT2), ("m2", LANES1, FEAT2),
    ("b2", 1, FEAT2),
    ("out_w", FEAT2, D_MODEL), ("out_b", 1, D_MODEL),
):
    FE_LAYOUT.add(_n, _r, _c)

MISC_LAYOUT = SlabLayout(HN)
for _n, _r, _c in (
    ("rep", HN, N), ("rep_t", N, HN),
    ("head_mask", HN, D_MODEL),
    ("pos", N, D_MODEL),
    ("tap_mask", N, N_TAPS),
    ("after_g", 1, D_MODEL), ("after_b", 1, D_MODEL),
):
    MISC_LAYOUT.add(_n, _r, _c)


# ------------------------- in-kernel helper functions ------------------------


def _dot(a, b):
    return jnp.dot(a, b, preferred_element_type=jnp.float32)


def _dot_t(a, b):
    # a @ b.T without materializing a transpose (contract last axes of both).
    return jax.lax.dot_general(a, b, (((1,), (1,)), ((), ())),
                               preferred_element_type=jnp.float32)


def _ln(x, g, b, eps=EPS):
    mu = jnp.mean(x, axis=-1, keepdims=True)
    var = jnp.mean((x - mu) ** 2, axis=-1, keepdims=True)
    return (x - mu) * jax.lax.rsqrt(var + eps) * g + b


def _swish(x):
    return x * jax.nn.sigmoid(x)


def _gelu(x):
    # TODO(synk): PyTorch nn.GELU() default is the exact erf form; the tanh
    # approximation (|err| ~ 1e-3) keeps the transcendental on the EUP slot.
    c = math.sqrt(2.0 / math.pi)
    return 0.5 * x * (1.0 + jnp.tanh(c * (x + 0.044715 * x * x * x)))


def _slab(ref, layout, name, layer=None):
    off, rows, cols = layout.entries[name]
    if layer is None:
        return ref[off:off + rows, 0:cols]
    return ref[layer, off:off + rows, 0:cols]


# ------------------------------ fused kernel ---------------------------------


def _encoder_kernel(patches_ref, bias_ref, fe_ref, misc_ref, lay_ref, o_ref):
    f = lambda n: _slab(fe_ref, FE_LAYOUT, n)
    m = lambda n: _slab(misc_ref, MISC_LAYOUT, n)
    scale = 1.0 / math.sqrt(DK)

    # ---- Conv2dSubsampling4 front-end (fused) -----------------------------
    # conv1 (1->D, 3x3, s=2) + ReLU as ONE matmul; freq/tap mixing folded into
    # the host-built w1big.  Rows = (utt, time), lanes = (chan, freq).
    o1 = jnp.maximum(_dot(patches_ref[...], f("w1big")) + f("b1"), 0.0)
    # conv2 (D->D, 3x3, s=2) + ReLU + channel-major flatten: one row-selection
    # matmul + one lane-mixing matmul per time tap (3 taps).
    conv2 = None
    for rs_n, mt_n in (("rs0", "m0"), ("rs1", "m1"), ("rs2", "m2")):
        part = _dot(_dot(f(rs_n), o1), f(mt_n))            # (N, FEAT2)
        conv2 = part if conv2 is None else conv2 + part
    h2 = jnp.maximum(conv2 + f("b2"), 0.0)
    # embed output Linear + RelPositionalEncoding x * sqrt(d_model) scale.
    x = (_dot(h2, f("out_w")) + f("out_b")) * math.sqrt(float(D_MODEL))

    # ---- shared constants ---------------------------------------------------
    rep = m("rep")                # (HN, N)  H stacked identity matrices
    rep_t = m("rep_t")            # (N, HN)
    head_mask = m("head_mask")    # (HN, D)  head-h lanes live in row block h
    pos = m("pos")                # (N, D)   per-utterance sinusoid table
    tap_mask = m("tap_mask")      # (N, N_TAPS) dwconv shift validity
    after_g = m("after_g")
    after_b = m("after_b")

    bias_nn = bias_ref[...]                       # (N, N) additive attn bias
    bias_s = _dot(rep, bias_nn)                   # (HN, N) replicated per head
    # frame-validity column derived from the bias diagonal (0 = valid).
    diag = jnp.sum(bias_nn * rep[0:N, :], axis=-1, keepdims=True)
    valid = jnp.where(diag > -1.0, 1.0, 0.0)      # (N, 1)

    def tapm(s):
        i = s + PAD_MAX
        return tap_mask[:, i:i + 1]               # (N, 1)

    def dwconv(xc, w, b, pad):
        # Depthwise 'same' conv along time on the folded (N, C) slab: sublane
        # rolls (XLU) + 0/1 edge masks replace the old shift-matrix matmuls and
        # keep each utterance's window inside its own row block.
        acc = None
        for t in range(w.shape[0]):
            s = t - pad
            src = xc if s == 0 else pltpu.roll(xc, shift=(-s) % N, axis=0)
            term = (w[t:t + 1, :] * src) * tapm(s)
            acc = term if acc is None else acc + term
        return acc + b

    # ---- encoder layer stack ------------------------------------------------
    for layer in range(NUM_BLOCKS):
        g = lambda n, _l=layer: _slab(lay_ref, LAYER_LAYOUT, n, _l)

        # macaron feed forward (half-step residual), swish activation
        xn = _ln(x, g("ln_mac_g"), g("ln_mac_b"))
        h = _swish(_dot(xn, g("mac_w1")) + g("mac_b1"))
        x = x + 0.5 * (_dot(h, g("mac_w2")) + g("mac_b2"))

        # branch 1: rel-pos multi-head self attention (wenet variant, forward
        # sinusoid table, no rel_shift); all heads stacked along rows so there
        # is a single softmax and no per-head matmul loop.
        xn = _ln(x, g("ln_mha_g"), g("ln_mha_b"))
        q = _dot(xn, g("q_w")) + g("q_b")
        k = _dot(xn, g("k_w")) + g("k_b")
        v = _dot(xn, g("v_w")) + g("v_b")
        p = _dot(pos, g("pos_w"))                         # bias-free pos proj
        qu = _dot(rep, q + g("pos_bias_u")) * head_mask   # (HN, D)
        qv = _dot(rep, q + g("pos_bias_v")) * head_mask
        s = (_dot_t(qu, k) + _dot_t(qv, p)) * scale + bias_s   # (HN, N)
        s = s - jnp.max(s, axis=-1, keepdims=True)
        e = jnp.exp(s)                 # masked keys underflow to exactly 0
        attn = e * pl.reciprocal(jnp.sum(e, axis=-1, keepdims=True), approx=True)
        ctx = _dot(rep_t, _dot(attn, v) * head_mask)      # (N, D) heads merged
        x1 = _dot(ctx, g("att_out_w")) + g("att_out_b")

        # branch 2: convolutional gating MLP (CSGU)
        xn = _ln(x, g("ln_mlp_g"), g("ln_mlp_b"))
        x_r = _gelu(_dot(xn, g("proj1_w_r")) + g("proj1_b_r"))
        x_g = _gelu(_dot(xn, g("proj1_w_g")) + g("proj1_b_g"))
        x_g = _ln(x_g * valid, g("csgu_ln_g"), g("csgu_ln_b"))
        conv = dwconv(x_g, g("csgu_conv_w"), g("csgu_conv_b"), PAD_CSGU)
        x2 = _dot(x_r * conv, g("proj2_w")) + g("proj2_b")  # gate act = identity

        # merge: concat -> depthwise conv -> add -> projection.  The channel
        # concat is realized by host-side weight splits (no in-kernel concat).
        c1 = dwconv(x1, g("merge_conv_w_a"), g("merge_conv_b_a"), PAD_MERGE)
        c2 = dwconv(x2, g("merge_conv_w_b"), g("merge_conv_b_b"), PAD_MERGE)
        merged = (_dot(x1 + c1, g("merge_proj_w_a"))
                  + _dot(x2 + c2, g("merge_proj_w_b")) + g("merge_proj_b"))
        x = x + merged

        # feed forward (half-step residual)
        xn = _ln(x, g("ln_ff_g"), g("ln_ff_b"))
        h = _swish(_dot(xn, g("ffn_w1")) + g("ffn_b1"))
        x = x + 0.5 * (_dot(h, g("ffn_w2")) + g("ffn_b2"))

        # per-layer final layer norm
        x = _ln(x, g("ln_final_g"), g("ln_final_b"))

    # encoder-level after_norm (normalize_before=True)
    o_ref[...] = _ln(x, after_g, after_b)


# ------------------------------ host wrapper ---------------------------------


def _im2col_conv1(xs):
    """(B, T, F) -> (B*H1, W1*9) patches for the first 3x3/stride-2 conv."""
    pieces = []
    for di in range(3):
        for dj in range(3):
            pieces.append(xs[:, di:di + 2 * H1 - 1:2, dj:dj + 2 * W1 - 1:2])
    p = jnp.stack(pieces, axis=-1)                   # (B, H1, W1, 9)
    return p.reshape(B * H1, W1 * 9)


def ebranchformer_encoder(xs, xs_lens, params):
    masks = (jnp.arange(T_IN)[None, :] < xs_lens[:, None])[:, None, :]  # (B,1,T)
    masks_sub = masks[:, :, 2::2][:, :, 2::2]                           # (B,1,T')

    patches1 = _im2col_conv1(xs)

    # Additive attention bias over the folded (batch*time) axis: 0 for keys in
    # the same utterance AND valid after subsampling, -1e30 otherwise (masks
    # padding and prevents cross-utterance attention after batch folding).
    valid = jnp.zeros((B, TP), dtype=bool).at[:, :T_SUB].set(masks_sub[:, 0, :])
    valid_flat = valid.reshape(N)
    batch_id = jnp.arange(N) // TP
    ok = (batch_id[:, None] == batch_id[None, :]) & valid_flat[None, :]
    bias_nn = jnp.where(ok, 0.0, -1e30).astype(jnp.float32)             # (N,N)

    out = pl.pallas_call(
        _encoder_kernel,
        out_shape=jax.ShapeDtypeStruct((N, D_MODEL), jnp.float32),
    )(patches1, bias_nn, params["fe_slab"], params["misc_slab"],
      params["layer_slab"])

    out = out.reshape(B, TP, D_MODEL)[:, :T_SUB, :]
    return out, masks_sub


# ------------------------- deterministic parameter init ----------------------


def _init_linear(key, din, dout, bias=True):
    k1, k2 = jax.random.split(key)
    w = jax.random.normal(k1, (din, dout), jnp.float32) / math.sqrt(din)
    b = (jax.random.normal(k2, (dout,), jnp.float32) * 0.01 if bias
         else jnp.zeros((dout,), jnp.float32))
    return np.asarray(w), np.asarray(b)


def _init_layer_arrays(key):
    it = iter(jax.random.split(key, 24))
    nk = lambda: next(it)
    a = {}

    def lin(wname, bname, din, dout):
        w, b = _init_linear(nk(), din, dout)
        a[wname] = w
        a[bname] = b[None, :]

    for nm, cc in (("ln_mac", D_MODEL), ("ln_mha", D_MODEL), ("ln_mlp", D_MODEL),
                   ("ln_ff", D_MODEL), ("ln_final", D_MODEL),
                   ("csgu_ln", CGMLP_HALF)):
        a[nm + "_g"] = np.ones((1, cc), np.float32)
        a[nm + "_b"] = np.zeros((1, cc), np.float32)

    lin("mac_w1", "mac_b1", D_MODEL, LINEAR_UNITS)
    lin("mac_w2", "mac_b2", LINEAR_UNITS, D_MODEL)
    lin("ffn_w1", "ffn_b1", D_MODEL, LINEAR_UNITS)
    lin("ffn_w2", "ffn_b2", LINEAR_UNITS, D_MODEL)
    lin("q_w", "q_b", D_MODEL, D_MODEL)
    lin("k_w", "k_b", D_MODEL, D_MODEL)
    lin("v_w", "v_b", D_MODEL, D_MODEL)
    lin("att_out_w", "att_out_b", D_MODEL, D_MODEL)
    pos_w, _ = _init_linear(nk(), D_MODEL, D_MODEL, bias=False)
    a["pos_w"] = pos_w
    a["pos_bias_u"] = np.asarray(
        jax.random.normal(nk(), (HEADS, DK)) * 0.1, np.float32).reshape(1, D_MODEL)
    a["pos_bias_v"] = np.asarray(
        jax.random.normal(nk(), (HEADS, DK)) * 0.1, np.float32).reshape(1, D_MODEL)

    # cgMLP channel_proj1 (D -> CGMLP_UNITS), r/g halves split host-side.
    p1w, p1b = _init_linear(nk(), D_MODEL, CGMLP_UNITS)
    a["proj1_w_r"] = p1w[:, :CGMLP_HALF]
    a["proj1_b_r"] = p1b[None, :CGMLP_HALF]
    a["proj1_w_g"] = p1w[:, CGMLP_HALF:]
    a["proj1_b_g"] = p1b[None, CGMLP_HALF:]
    a["csgu_conv_w"] = np.asarray(
        jax.random.normal(nk(), (CGMLP_KERNEL, CGMLP_HALF)) * 0.1, np.float32)
    a["csgu_conv_b"] = np.asarray(
        jax.random.normal(nk(), (CGMLP_HALF,)) * 0.01, np.float32)[None, :]
    lin("proj2_w", "proj2_b", CGMLP_HALF, D_MODEL)

    # merge block: depthwise conv over cat([x1, x2]) + Linear(2D -> D), split
    # per branch host-side so the kernel never concatenates lanes.
    mcw = np.asarray(jax.random.normal(nk(), (MERGE_KERNEL, 2 * D_MODEL)) * 0.1,
                     np.float32)
    mcb = np.asarray(jax.random.normal(nk(), (2 * D_MODEL,)) * 0.01, np.float32)
    a["merge_conv_w_a"] = mcw[:, :D_MODEL]
    a["merge_conv_b_a"] = mcb[None, :D_MODEL]
    a["merge_conv_w_b"] = mcw[:, D_MODEL:]
    a["merge_conv_b_b"] = mcb[None, D_MODEL:]
    mpw, mpb = _init_linear(nk(), 2 * D_MODEL, D_MODEL)
    a["merge_proj_w_a"] = mpw[:D_MODEL, :]
    a["merge_proj_w_b"] = mpw[D_MODEL:, :]
    a["merge_proj_b"] = mpb[None, :]
    return a


def init_params(key):
    k_embed, k_layers = jax.random.split(key)
    ek = jax.random.split(k_embed, 5)
    # PyTorch Conv2d weights: conv1 (D, 1, 3, 3), conv2 (D, D, 3, 3)
    conv1_w = np.asarray(jax.random.normal(ek[0], (D_MODEL, 1, 3, 3)) * 0.2,
                         np.float32)
    conv1_b = np.asarray(jax.random.normal(ek[1], (D_MODEL,)) * 0.01, np.float32)
    conv2_w = np.asarray(jax.random.normal(ek[2], (D_MODEL, D_MODEL, 3, 3)) * 0.05,
                         np.float32)
    conv2_b = np.asarray(jax.random.normal(ek[3], (D_MODEL,)) * 0.01, np.float32)
    out_w, out_b = _init_linear(ek[4], D_MODEL * W2, D_MODEL)

    # conv1 folded into one matmul: patch lane (j1*9 + p) -> lane (c*W1 + j1).
    w1r = conv1_w.reshape(D_MODEL, 9).T                       # (9, D), p=di*3+dj
    w1big = np.zeros((PATCH1, LANES1), np.float32)
    for j1 in range(W1):
        for p_ in range(9):
            w1big[j1 * 9 + p_, np.arange(D_MODEL) * W1 + j1] = w1r[p_, :]
    b1_lanes = np.repeat(conv1_b, W1)[None, :]                # (1, LANES1)

    # conv2 time-tap row selections: pick o1 row (b, 2i+di), write padded row
    # b*TP + i (rows i >= T_SUB stay zero-selected).
    rs = np.zeros((3, N, B * H1), np.float32)
    for di in range(3):
        for b in range(B):
            for i in range(T_SUB):
                rs[di, b * TP + i, b * H1 + 2 * i + di] = 1.0

    # conv2 lane mixing: (c_in, freq m) -> (c_out, freq j) with coefficient
    # w2[c_out, c_in, di, m-2j]; this also performs the channel-major flatten
    # expected by the Conv2dSubsampling4 output Linear.
    m_taps = np.zeros((3, LANES1, FEAT2), np.float32)
    cin = np.arange(D_MODEL)[:, None]
    cout = np.arange(D_MODEL)[None, :]
    for di in range(3):
        for j in range(W2):
            for dj in range(3):
                mm = 2 * j + dj
                m_taps[di, cin * W1 + mm, cout * W2 + j] = conv2_w[:, :, di, dj].T
    b2_lanes = np.repeat(conv2_b, W2)[None, :]                # (1, FEAT2)

    fe_slab = FE_LAYOUT.pack({
        "w1big": w1big, "b1": b1_lanes,
        "rs0": rs[0], "rs1": rs[1], "rs2": rs[2],
        "m0": m_taps[0], "m1": m_taps[1], "m2": m_taps[2],
        "b2": b2_lanes, "out_w": out_w, "out_b": out_b[None, :],
    })

    # head stacking / head lane masks / positions / dwconv edge masks
    rep = np.tile(np.eye(N, dtype=np.float32), (HEADS, 1))            # (HN, N)
    head_mask = np.zeros((HN, D_MODEL), np.float32)
    for h in range(HEADS):
        head_mask[h * N:(h + 1) * N, h * DK:(h + 1) * DK] = 1.0
    position = np.arange(TP, dtype=np.float32)[:, None]
    div = np.exp(np.arange(0, D_MODEL, 2, dtype=np.float32)
                 * -(math.log(10000.0) / D_MODEL))
    pe = np.zeros((TP, D_MODEL), np.float32)
    pe[:, 0::2] = np.sin(position * div)
    pe[:, 1::2] = np.cos(position * div)
    pos_folded = np.tile(pe, (B, 1))                                   # (N, D)
    tap_mask = np.zeros((N, N_TAPS), np.float32)
    for n in range(N):
        for s in range(-PAD_MAX, PAD_MAX + 1):
            if 0 <= (n % TP) + s < T_SUB:
                tap_mask[n, s + PAD_MAX] = 1.0

    misc_slab = MISC_LAYOUT.pack({
        "rep": rep, "rep_t": rep.T, "head_mask": head_mask,
        "pos": pos_folded, "tap_mask": tap_mask,
        "after_g": np.ones((1, D_MODEL), np.float32),
        "after_b": np.zeros((1, D_MODEL), np.float32),
    })

    layer_slab = np.stack(
        [LAYER_LAYOUT.pack(_init_layer_arrays(k))
         for k in jax.random.split(k_layers, NUM_BLOCKS)], axis=0)

    return {"fe_slab": jnp.asarray(fe_slab),
            "misc_slab": jnp.asarray(misc_slab),
            "layer_slab": jnp.asarray(layer_slab)}


# ----------------------------------- main -------------------------------------

if __name__ == "__main__":
    key = jax.random.PRNGKey(0)
    kx, kp = jax.random.split(key)
    xs = jax.random.normal(kx, (B, T_IN, D_IN), jnp.float32)   # (B, T, D_in)
    xs_lens = jnp.array([T_IN, 25], dtype=jnp.int32)           # (B,)
    params = init_params(kp)

    fwd = jax.jit(ebranchformer_encoder)
    out, masks = fwd(xs, xs_lens, params)
    jax.block_until_ready(out)

    assert out.shape == (B, T_SUB, D_MODEL), out.shape
    assert masks.shape == (B, 1, T_SUB), masks.shape
    assert bool(jnp.all(jnp.isfinite(out)))
    print("KERNEL_OK")
</pallas_src>

<mosaic_0001>
module attributes {stable_mosaic.version = 11 : i64} {
  func.func @_encoder_kernel(%arg0: memref<30x63xf32, #tpu.memory_space<vmem>>, %arg1: memref<16x16xf32, #tpu.memory_space<vmem>>, %arg2: memref<904x224xf32, #tpu.memory_space<vmem>>, %arg3: memref<192x64xf32, #tpu.memory_space<vmem>>, %arg4: memref<2x768x64xf32, #tpu.memory_space<vmem>>, %arg5: memref<16x32xf32, #tpu.memory_space<vmem>>) attributes {dimension_semantics = [], scalar_prefetch = 0 : i64, scratch_operands = 0 : i64, tpu.core_type = #tpu.core_type<tc>} {
    %c0 = arith.constant 0 : index
    %c0_0 = arith.constant 0 : index
    %0 = vector.load %arg0[%c0, %c0_0] : memref<30x63xf32, #tpu.memory_space<vmem>>, vector<30x63xf32>
    %c0_1 = arith.constant 0 : index
    %c0_2 = arith.constant 0 : index
    %1 = vector.load %arg2[%c0_1, %c0_2] : memref<904x224xf32, #tpu.memory_space<vmem>>, vector<63x224xf32>
    %cst = arith.constant dense<0.000000e+00> : vector<30x224xf32>
    %2 = tpu.matmul %0, %1, %cst {dimension_numbers = #tpu.dot_dimension_numbers<[1], [0], [0], [1], [0, 0, 1, 1], [], []>} : vector<30x63xf32>, vector<63x224xf32>, vector<30x224xf32> -> vector<30x224xf32>
    %c64 = arith.constant 64 : index
    %c0_3 = arith.constant 0 : index
    %3 = vector.load %arg2[%c64, %c0_3] : memref<904x224xf32, #tpu.memory_space<vmem>>, vector<1x224xf32>
    %4 = vector.broadcast %3 : vector<1x224xf32> to vector<30x224xf32>
    %5 = arith.addf %2, %4 : vector<30x224xf32>
    %cst_4 = arith.constant 0.000000e+00 : f32
    %6 = vector.broadcast %cst_4 : f32 to vector<30x224xf32>
    %7 = arith.maximumf %5, %6 : vector<30x224xf32>
    %c72 = arith.constant 72 : index
    %c0_5 = arith.constant 0 : index
    %8 = vector.load %arg2[%c72, %c0_5] : memref<904x224xf32, #tpu.memory_space<vmem>>, vector<16x30xf32>
    %cst_6 = arith.constant dense<0.000000e+00> : vector<16x224xf32>
    %9 = tpu.matmul %8, %7, %cst_6 {dimension_numbers = #tpu.dot_dimension_numbers<[1], [0], [0], [1], [0, 0, 1, 1], [], []>} : vector<16x30xf32>, vector<30x224xf32>, vector<16x224xf32> -> vector<16x224xf32>
    %c120 = arith.constant 120 : index
    %c0_7 = arith.constant 0 : index
    %10 = vector.load %arg2[%c120, %c0_7] : memref<904x224xf32, #tpu.memory_space<vmem>>, vector<224x96xf32>
    %cst_8 = arith.constant dense<0.000000e+00> : vector<16x96xf32>
    %11 = tpu.matmul %9, %10, %cst_8 {dimension_numbers = #tpu.dot_dimension_numbers<[1], [0], [0], [1], [0, 0, 1, 1], [], []>} : vector<16x224xf32>, vector<224x96xf32>, vector<16x96xf32> -> vector<16x96xf32>
    %c88 = arith.constant 88 : index
    %c0_9 = arith.constant 0 : index
    %12 = vector.load %arg2[%c88, %c0_9] : memref<904x224xf32, #tpu.memory_space<vmem>>, vector<16x30xf32>
    %cst_10 = arith.constant dense<0.000000e+00> : vector<16x224xf32>
    %13 = tpu.matmul %12, %7, %cst_10 {dimension_numbers = #tpu.dot_dimension_numbers<[1], [0], [0], [1], [0, 0, 1, 1], [], []>} : vector<16x30xf32>, vector<30x224xf32>, vector<16x224xf32> -> vector<16x224xf32>
    %c344 = arith.constant 344 : index
    %c0_11 = arith.constant 0 : index
    %14 = vector.load %arg2[%c344, %c0_11] : memref<904x224xf32, #tpu.memory_space<vmem>>, vector<224x96xf32>
    %cst_12 = arith.constant dense<0.000000e+00> : vector<16x96xf32>
    %15 = tpu.matmul %13, %14, %cst_12 {dimension_numbers = #tpu.dot_dimension_numbers<[1], [0], [0], [1], [0, 0, 1, 1], [], []>} : vector<16x224xf32>, vector<224x96xf32>, vector<16x96xf32> -> vector<16x96xf32>
    %16 = arith.addf %11, %15 : vector<16x96xf32>
    %c104 = arith.constant 104 : index
    %c0_13 = arith.constant 0 : index
    %17 = vector.load %arg2[%c104, %c0_13] : memref<904x224xf32, #tpu.memory_space<vmem>>, vector<16x30xf32>
    %cst_14 = arith.constant dense<0.000000e+00> : vector<16x224xf32>
    %18 = tpu.matmul %17, %7, %cst_14 {dimension_numbers = #tpu.dot_dimension_numbers<[1], [0], [0], [1], [0, 0, 1, 1], [], []>} : vector<16x30xf32>, vector<30x224xf32>, vector<16x224xf32> -> vector<16x224xf32>
    %c568 = arith.constant 568 : index
    %c0_15 = arith.constant 0 : index
    %19 = vector.load %arg2[%c568, %c0_15] : memref<904x224xf32, #tpu.memory_space<vmem>>, vector<224x96xf32>
    %cst_16 = arith.constant dense<0.000000e+00> : vector<16x96xf32>
    %20 = tpu.matmul %18, %19, %cst_16 {dimension_numbers = #tpu.dot_dimension_numbers<[1], [0], [0], [1], [0, 0, 1, 1], [], []>} : vector<16x224xf32>, vector<224x96xf32>, vector<16x96xf32> -> vector<16x96xf32>
    %21 = arith.addf %16, %20 : vector<16x96xf32>
    %c792 = arith.constant 792 : index
    %c0_17 = arith.constant 0 : index
    %22 = vector.load %arg2[%c792, %c0_17] : memref<904x224xf32, #tpu.memory_space<vmem>>, vector<1x96xf32>
    %23 = vector.broadcast %22 : vector<1x96xf32> to vector<16x96xf32>
    %24 = arith.addf %21, %23 : vector<16x96xf32>
    %cst_18 = arith.constant 0.000000e+00 : f32
    %25 = vector.broadcast %cst_18 : f32 to vector<16x96xf32>
    %26 = arith.maximumf %24, %25 : vector<16x96xf32>
    %c800 = arith.constant 800 : index
    %c0_19 = arith.constant 0 : index
    %27 = vector.load %arg2[%c800, %c0_19] : memref<904x224xf32, #tpu.memory_space<vmem>>, vector<96x32xf32>
    %cst_20 = arith.constant dense<0.000000e+00> : vector<16x32xf32>
    %28 = tpu.matmul %26, %27, %cst_20 {dimension_numbers = #tpu.dot_dimension_numbers<[1], [0], [0], [1], [0, 0, 1, 1], [], []>} : vector<16x96xf32>, vector<96x32xf32>, vector<16x32xf32> -> vector<16x32xf32>
    %c896 = arith.constant 896 : index
    %c0_21 = arith.constant 0 : index
    %29 = vector.load %arg2[%c896, %c0_21] : memref<904x224xf32, #tpu.memory_space<vmem>>, vector<1x32xf32>
    %30 = vector.broadcast %29 : vector<1x32xf32> to vector<16x32xf32>
    %31 = arith.addf %28, %30 : vector<16x32xf32>
    %cst_22 = arith.constant 5.65685415 : f32
    %32 = vector.broadcast %cst_22 : f32 to vector<16x32xf32>
    %33 = arith.mulf %31, %32 : vector<16x32xf32>
    %c0_23 = arith.constant 0 : index
    %c0_24 = arith.constant 0 : index
    %34 = vector.load %arg3[%c0_23, %c0_24] : memref<192x64xf32, #tpu.memory_space<vmem>>, vector<64x16xf32>
    %c64_25 = arith.constant 64 : index
    %c0_26 = arith.constant 0 : index
    %35 = vector.load %arg3[%c64_25, %c0_26] : memref<192x64xf32, #tpu.memory_space<vmem>>, vector<16x64xf32>
    %c80 = arith.constant 80 : index
    %c0_27 = arith.constant 0 : index
    %36 = vector.load %arg3[%c80, %c0_27] : memref<192x64xf32, #tpu.memory_space<vmem>>, vector<64x32xf32>
    %c144 = arith.constant 144 : index
    %c0_28 = arith.constant 0 : index
    %37 = vector.load %arg3[%c144, %c0_28] : memref<192x64xf32, #tpu.memory_space<vmem>>, vector<16x32xf32>
    %c160 = arith.constant 160 : index
    %c0_29 = arith.constant 0 : index
    %38 = vector.load %arg3[%c160, %c0_29] : memref<192x64xf32, #tpu.memory_space<vmem>>, vector<16x7xf32>
    %c176 = arith.constant 176 : index
    %c0_30 = arith.constant 0 : index
    %39 = vector.load %arg3[%c176, %c0_30] : memref<192x64xf32, #tpu.memory_space<vmem>>, vector<1x32xf32>
    %c184 = arith.constant 184 : index
    %c0_31 = arith.constant 0 : index
    %40 = vector.load %arg3[%c184, %c0_31] : memref<192x64xf32, #tpu.memory_space<vmem>>, vector<1x32xf32>
    %c0_32 = arith.constant 0 : index
    %c0_33 = arith.constant 0 : index
    %41 = vector.load %arg1[%c0_32, %c0_33] : memref<16x16xf32, #tpu.memory_space<vmem>>, vector<16x16xf32>
    %cst_34 = arith.constant dense<0.000000e+00> : vector<64x16xf32>
    %42 = tpu.matmul %34, %41, %cst_34 {dimension_numbers = #tpu.dot_dimension_numbers<[1], [0], [0], [1], [0, 0, 1, 1], [], []>} : vector<64x16xf32>, vector<16x16xf32>, vector<64x16xf32> -> vector<64x16xf32>
    %43 = vector.extract_strided_slice %34 {offsets = [0, 0], sizes = [16, 16], strides = [1, 1]} : vector<64x16xf32> to vector<16x16xf32>
    %44 = arith.mulf %41, %43 : vector<16x16xf32>
    %cst_35 = arith.constant dense<0.000000e+00> : vector<16xf32>
    %45 = vector.multi_reduction <add>, %44, %cst_35 [1] : vector<16x16xf32> to vector<16xf32>
    %46 = vector.shape_cast %45 : vector<16xf32> to vector<16x1xf32>
    %cst_36 = arith.constant -1.000000e+00 : f32
    %47 = vector.broadcast %cst_36 : f32 to vector<16x1xf32>
    %48 = arith.cmpf ogt, %46, %47 : vector<16x1xf32>
    %cst_37 = arith.constant 1.000000e+00 : f32
    %cst_38 = arith.constant 0.000000e+00 : f32
    %49 = vector.broadcast %cst_37 : f32 to vector<16x1xf32>
    %50 = vector.broadcast %cst_38 : f32 to vector<16x1xf32>
    %51 = arith.select %48, %49, %50 : vector<16x1xi1>, vector<16x1xf32>
    %c0_39 = arith.constant 0 : index
    %c0_40 = arith.constant 0 : index
    %c0_41 = arith.constant 0 : index
    %52 = vector.load %arg4[%c0_39, %c0_40, %c0_41] : memref<2x768x64xf32, #tpu.memory_space<vmem>>, vector<1x1x32xf32>
    %53 = vector.shape_cast %52 : vector<1x1x32xf32> to vector<1x32xf32>
    %c0_42 = arith.constant 0 : index
    %c8 = arith.constant 8 : index
    %c0_43 = arith.constant 0 : index
    %54 = vector.load %arg4[%c0_42, %c8, %c0_43] : memref<2x768x64xf32, #tpu.memory_space<vmem>>, vector<1x1x32xf32>
    %55 = vector.shape_cast %54 : vector<1x1x32xf32> to vector<1x32xf32>
    %cst_44 = arith.constant dense<0.000000e+00> : vector<16xf32>
    %56 = vector.multi_reduction <add>, %33, %cst_44 [1] : vector<16x32xf32> to vector<16xf32>
    %57 = vector.shape_cast %56 : vector<16xf32> to vector<16x1xf32>
    %cst_45 = arith.constant 3.200000e+01 : f32
    %58 = vector.broadcast %cst_45 : f32 to vector<16x1xf32>
    %59 = arith.divf %57, %58 : vector<16x1xf32>
    %60 = vector.broadcast %59 : vector<16x1xf32> to vector<16x32xf32>
    %61 = arith.subf %33, %60 : vector<16x32xf32>
    %62 = arith.mulf %61, %61 : vector<16x32xf32>
    %cst_46 = arith.constant dense<0.000000e+00> : vector<16xf32>
    %63 = vector.multi_reduction <add>, %62, %cst_46 [1] : vector<16x32xf32> to vector<16xf32>
    %64 = vector.shape_cast %63 : vector<16xf32> to vector<16x1xf32>
    %cst_47 = arith.constant 3.200000e+01 : f32
    %65 = vector.broadcast %cst_47 : f32 to vector<16x1xf32>
    %66 = arith.divf %64, %65 : vector<16x1xf32>
    %67 = vector.broadcast %59 : vector<16x1xf32> to vector<16x32xf32>
    %68 = arith.subf %33, %67 : vector<16x32xf32>
    %cst_48 = arith.constant 9.99999974E-6 : f32
    %69 = vector.broadcast %cst_48 : f32 to vector<16x1xf32>
    %70 = arith.addf %66, %69 : vector<16x1xf32>
    %71 = math.rsqrt %70 : vector<16x1xf32>
    %72 = vector.broadcast %71 : vector<16x1xf32> to vector<16x32xf32>
    %73 = arith.mulf %68, %72 : vector<16x32xf32>
    %74 = vector.broadcast %53 : vector<1x32xf32> to vector<16x32xf32>
    %75 = arith.mulf %73, %74 : vector<16x32xf32>
    %76 = vector.broadcast %55 : vector<1x32xf32> to vector<16x32xf32>
    %77 = arith.addf %75, %76 : vector<16x32xf32>
    %c0_49 = arith.constant 0 : index
    %c80_50 = arith.constant 80 : index
    %c0_51 = arith.constant 0 : index
    %78 = vector.load %arg4[%c0_49, %c80_50, %c0_51] : memref<2x768x64xf32, #tpu.memory_space<vmem>>, vector<1x32x64xf32>
    %79 = vector.shape_cast %78 : vector<1x32x64xf32> to vector<32x64xf32>
    %cst_52 = arith.constant dense<0.000000e+00> : vector<16x64xf32>
    %80 = tpu.matmul %77, %79, %cst_52 {dimension_numbers = #tpu.dot_dimension_numbers<[1], [0], [0], [1], [0, 0, 1, 1], [], []>} : vector<16x32xf32>, vector<32x64xf32>, vector<16x64xf32> -> vector<16x64xf32>
    %c0_53 = arith.constant 0 : index
    %c112 = arith.constant 112 : index
    %c0_54 = arith.constant 0 : index
    %81 = vector.load %arg4[%c0_53, %c112, %c0_54] : memref<2x768x64xf32, #tpu.memory_space<vmem>>, vector<1x1x64xf32>
    %82 = vector.shape_cast %81 : vector<1x1x64xf32> to vector<1x64xf32>
    %83 = vector.broadcast %82 : vector<1x64xf32> to vector<16x64xf32>
    %84 = arith.addf %80, %83 : vector<16x64xf32>
    %85 = arith.negf %84 : vector<16x64xf32>
    %86 = math.exp %85 : vector<16x64xf32>
    %cst_55 = arith.constant 1.000000e+00 : f32
    %87 = vector.broadcast %cst_55 : f32 to vector<16x64xf32>
    %88 = arith.addf %87, %86 : vector<16x64xf32>
    %89 = arith.divf %87, %88 : vector<16x64xf32>
    %90 = arith.mulf %84, %89 : vector<16x64xf32>
    %c0_56 = arith.constant 0 : index
    %c120_57 = arith.constant 120 : index
    %c0_58 = arith.constant 0 : index
    %91 = vector.load %arg4[%c0_56, %c120_57, %c0_58] : memref<2x768x64xf32, #tpu.memory_space<vmem>>, vector<1x64x32xf32>
    %92 = vector.shape_cast %91 : vector<1x64x32xf32> to vector<64x32xf32>
    %cst_59 = arith.constant dense<0.000000e+00> : vector<16x32xf32>
    %93 = tpu.matmul %90, %92, %cst_59 {dimension_numbers = #tpu.dot_dimension_numbers<[1], [0], [0], [1], [0, 0, 1, 1], [], []>} : vector<16x64xf32>, vector<64x32xf32>, vector<16x32xf32> -> vector<16x32xf32>
    %c0_60 = arith.constant 0 : index
    %c184_61 = arith.constant 184 : index
    %c0_62 = arith.constant 0 : index
    %94 = vector.load %arg4[%c0_60, %c184_61, %c0_62] : memref<2x768x64xf32, #tpu.memory_space<vmem>>, vector<1x1x32xf32>
    %95 = vector.shape_cast %94 : vector<1x1x32xf32> to vector<1x32xf32>
    %96 = vector.broadcast %95 : vector<1x32xf32> to vector<16x32xf32>
    %97 = arith.addf %93, %96 : vector<16x32xf32>
    %cst_63 = arith.constant 5.000000e-01 : f32
    %98 = vector.broadcast %cst_63 : f32 to vector<16x32xf32>
    %99 = arith.mulf %98, %97 : vector<16x32xf32>
    %100 = arith.addf %33, %99 : vector<16x32xf32>
    %c0_64 = arith.constant 0 : index
    %c16 = arith.constant 16 : index
    %c0_65 = arith.constant 0 : index
    %101 = vector.load %arg4[%c0_64, %c16, %c0_65] : memref<2x768x64xf32, #tpu.memory_space<vmem>>, vector<1x1x32xf32>
    %102 = vector.shape_cast %101 : vector<1x1x32xf32> to vector<1x32xf32>
    %c0_66 = arith.constant 0 : index
    %c24 = arith.constant 24 : index
    %c0_67 = arith.constant 0 : index
    %103 = vector.load %arg4[%c0_66, %c24, %c0_67] : memref<2x768x64xf32, #tpu.memory_space<vmem>>, vector<1x1x32xf32>
    %104 = vector.shape_cast %103 : vector<1x1x32xf32> to vector<1x32xf32>
    %cst_68 = arith.constant dense<0.000000e+00> : vector<16xf32>
    %105 = vector.multi_reduction <add>, %100, %cst_68 [1] : vector<16x32xf32> to vector<16xf32>
    %106 = vector.shape_cast %105 : vector<16xf32> to vector<16x1xf32>
    %cst_69 = arith.constant 3.200000e+01 : f32
    %107 = vector.broadcast %cst_69 : f32 to vector<16x1xf32>
    %108 = arith.divf %106, %107 : vector<16x1xf32>
    %109 = vector.broadcast %108 : vector<16x1xf32> to vector<16x32xf32>
    %110 = arith.subf %100, %109 : vector<16x32xf32>
    %111 = arith.mulf %110, %110 : vector<16x32xf32>
    %cst_70 = arith.constant dense<0.000000e+00> : vector<16xf32>
    %112 = vector.multi_reduction <add>, %111, %cst_70 [1] : vector<16x32xf32> to vector<16xf32>
    %113 = vector.shape_cast %112 : vector<16xf32> to vector<16x1xf32>
    %cst_71 = arith.constant 3.200000e+01 : f32
    %114 = vector.broadcast %cst_71 : f32 to vector<16x1xf32>
    %115 = arith.divf %113, %114 : vector<16x1xf32>
    %116 = vector.broadcast %108 : vector<16x1xf32> to vector<16x32xf32>
    %117 = arith.subf %100, %116 : vector<16x32xf32>
    %cst_72 = arith.constant 9.99999974E-6 : f32
    %118 = vector.broadcast %cst_72 : f32 to vector<16x1xf32>
    %119 = arith.addf %115, %118 : vector<16x1xf32>
    %120 = math.rsqrt %119 : vector<16x1xf32>
    %121 = vector.broadcast %120 : vector<16x1xf32> to vector<16x32xf32>
    %122 = arith.mulf %117, %121 : vector<16x32xf32>
    %123 = vector.broadcast %102 : vector<1x32xf32> to vector<16x32xf32>
    %124 = arith.mulf %122, %123 : vector<16x32xf32>
    %125 = vector.broadcast %104 : vector<1x32xf32> to vector<16x32xf32>
    %126 = arith.addf %124, %125 : vector<16x32xf32>
    %c0_73 = arith.constant 0 : index
    %c192 = arith.constant 192 : index
    %c0_74 = arith.constant 0 : index
    %127 = vector.load %arg4[%c0_73, %c192, %c0_74] : memref<2x768x64xf32, #tpu.memory_space<vmem>>, vector<1x32x32xf32>
    %128 = vector.shape_cast %127 : vector<1x32x32xf32> to vector<32x32xf32>
    %cst_75 = arith.constant dense<0.000000e+00> : vector<16x32xf32>
    %129 = tpu.matmul %126, %128, %cst_75 {dimension_numbers = #tpu.dot_dimension_numbers<[1], [0], [0], [1], [0, 0, 1, 1], [], []>} : vector<16x32xf32>, vector<32x32xf32>, vector<16x32xf32> -> vector<16x32xf32>
    %c0_76 = arith.constant 0 : index
    %c224 = arith.constant 224 : index
    %c0_77 = arith.constant 0 : index
    %130 = vector.load %arg4[%c0_76, %c224, %c0_77] : memref<2x768x64xf32, #tpu.memory_space<vmem>>, vector<1x1x32xf32>
    %131 = vector.shape_cast %130 : vector<1x1x32xf32> to vector<1x32xf32>
    %132 = vector.broadcast %131 : vector<1x32xf32> to vector<16x32xf32>
    %133 = arith.addf %129, %132 : vector<16x32xf32>
    %c0_78 = arith.constant 0 : index
    %c232 = arith.constant 232 : index
    %c0_79 = arith.constant 0 : index
    %134 = vector.load %arg4[%c0_78, %c232, %c0_79] : memref<2x768x64xf32, #tpu.memory_space<vmem>>, vector<1x32x32xf32>
    %135 = vector.shape_cast %134 : vector<1x32x32xf32> to vector<32x32xf32>
    %cst_80 = arith.constant dense<0.000000e+00> : vector<16x32xf32>
    %136 = tpu.matmul %126, %135, %cst_80 {dimension_numbers = #tpu.dot_dimension_numbers<[1], [0], [0], [1], [0, 0, 1, 1], [], []>} : vector<16x32xf32>, vector<32x32xf32>, vector<16x32xf32> -> vector<16x32xf32>
    %c0_81 = arith.constant 0 : index
    %c264 = arith.constant 264 : index
    %c0_82 = arith.constant 0 : index
    %137 = vector.load %arg4[%c0_81, %c264, %c0_82] : memref<2x768x64xf32, #tpu.memory_space<vmem>>, vector<1x1x32xf32>
    %138 = vector.shape_cast %137 : vector<1x1x32xf32> to vector<1x32xf32>
    %139 = vector.broadcast %138 : vector<1x32xf32> to vector<16x32xf32>
    %140 = arith.addf %136, %139 : vector<16x32xf32>
    %c0_83 = arith.constant 0 : index
    %c272 = arith.constant 272 : index
    %c0_84 = arith.constant 0 : index
    %141 = vector.load %arg4[%c0_83, %c272, %c0_84] : memref<2x768x64xf32, #tpu.memory_space<vmem>>, vector<1x32x32xf32>
    %142 = vector.shape_cast %141 : vector<1x32x32xf32> to vector<32x32xf32>
    %cst_85 = arith.constant dense<0.000000e+00> : vector<16x32xf32>
    %143 = tpu.matmul %126, %142, %cst_85 {dimension_numbers = #tpu.dot_dimension_numbers<[1], [0], [0], [1], [0, 0, 1, 1], [], []>} : vector<16x32xf32>, vector<32x32xf32>, vector<16x32xf32> -> vector<16x32xf32>
    %c0_86 = arith.constant 0 : index
    %c304 = arith.constant 304 : index
    %c0_87 = arith.constant 0 : index
    %144 = vector.load %arg4[%c0_86, %c304, %c0_87] : memref<2x768x64xf32, #tpu.memory_space<vmem>>, vector<1x1x32xf32>
    %145 = vector.shape_cast %144 : vector<1x1x32xf32> to vector<1x32xf32>
    %146 = vector.broadcast %145 : vector<1x32xf32> to vector<16x32xf32>
    %147 = arith.addf %143, %146 : vector<16x32xf32>
    %c0_88 = arith.constant 0 : index
    %c312 = arith.constant 312 : index
    %c0_89 = arith.constant 0 : index
    %148 = vector.load %arg4[%c0_88, %c312, %c0_89] : memref<2x768x64xf32, #tpu.memory_space<vmem>>, vector<1x32x32xf32>
    %149 = vector.shape_cast %148 : vector<1x32x32xf32> to vector<32x32xf32>
    %cst_90 = arith.constant dense<0.000000e+00> : vector<16x32xf32>
    %150 = tpu.matmul %37, %149, %cst_90 {dimension_numbers = #tpu.dot_dimension_numbers<[1], [0], [0], [1], [0, 0, 1, 1], [], []>} : vector<16x32xf32>, vector<32x32xf32>, vector<16x32xf32> -> vector<16x32xf32>
    %c0_91 = arith.constant 0 : index
    %c344_92 = arith.constant 344 : index
    %c0_93 = arith.constant 0 : index
    %151 = vector.load %arg4[%c0_91, %c344_92, %c0_93] : memref<2x768x64xf32, #tpu.memory_space<vmem>>, vector<1x1x32xf32>
    %152 = vector.shape_cast %151 : vector<1x1x32xf32> to vector<1x32xf32>
    %153 = vector.broadcast %152 : vector<1x32xf32> to vector<16x32xf32>
    %154 = arith.addf %133, %153 : vector<16x32xf32>
    %cst_94 = arith.constant dense<0.000000e+00> : vector<64x32xf32>
    %155 = tpu.matmul %34, %154, %cst_94 {dimension_numbers = #tpu.dot_dimension_numbers<[1], [0], [0], [1], [0, 0, 1, 1], [], []>} : vector<64x16xf32>, vector<16x32xf32>, vector<64x32xf32> -> vector<64x32xf32>
    %156 = arith.mulf %155, %36 : vector<64x32xf32>
    %c0_95 = arith.constant 0 : index
    %c352 = arith.constant 352 : index
    %c0_96 = arith.constant 0 : index
    %157 = vector.load %arg4[%c0_95, %c352, %c0_96] : memref<2x768x64xf32, #tpu.memory_space<vmem>>, vector<1x1x32xf32>
    %158 = vector.shape_cast %157 : vector<1x1x32xf32> to vector<1x32xf32>
    %159 = vector.broadcast %158 : vector<1x32xf32> to vector<16x32xf32>
    %160 = arith.addf %133, %159 : vector<16x32xf32>
    %cst_97 = arith.constant dense<0.000000e+00> : vector<64x32xf32>
    %161 = tpu.matmul %34, %160, %cst_97 {dimension_numbers = #tpu.dot_dimension_numbers<[1], [0], [0], [1], [0, 0, 1, 1], [], []>} : vector<64x16xf32>, vector<16x32xf32>, vector<64x32xf32> -> vector<64x32xf32>
    %162 = arith.mulf %161, %36 : vector<64x32xf32>
    %cst_98 = arith.constant dense<0.000000e+00> : vector<64x16xf32>
    %163 = tpu.matmul %156, %140, %cst_98 {dimension_numbers = #tpu.dot_dimension_numbers<[1], [1], [0], [0], [0, 0, 1, 0], [], []>} : vector<64x32xf32>, vector<16x32xf32>, vector<64x16xf32> -> vector<64x16xf32>
    %cst_99 = arith.constant dense<0.000000e+00> : vector<64x16xf32>
    %164 = tpu.matmul %162, %150, %cst_99 {dimension_numbers = #tpu.dot_dimension_numbers<[1], [1], [0], [0], [0, 0, 1, 0], [], []>} : vector<64x32xf32>, vector<16x32xf32>, vector<64x16xf32> -> vector<64x16xf32>
    %165 = arith.addf %163, %164 : vector<64x16xf32>
    %cst_100 = arith.constant 0.353553385 : f32
    %166 = vector.broadcast %cst_100 : f32 to vector<64x16xf32>
    %167 = arith.mulf %165, %166 : vector<64x16xf32>
    %168 = arith.addf %167, %42 : vector<64x16xf32>
    %cst_101 = arith.constant dense<0xFF800000> : vector<64xf32>
    %169 = vector.multi_reduction <maximumf>, %168, %cst_101 [1] : vector<64x16xf32> to vector<64xf32>
    %170 = vector.shape_cast %169 : vector<64xf32> to vector<64x1xf32>
    %171 = vector.broadcast %170 : vector<64x1xf32> to vector<64x16xf32>
    %172 = arith.subf %168, %171 : vector<64x16xf32>
    %173 = math.exp %172 : vector<64x16xf32>
    %cst_102 = arith.constant dense<0.000000e+00> : vector<64xf32>
    %174 = vector.multi_reduction <add>, %173, %cst_102 [1] : vector<64x16xf32> to vector<64xf32>
    %175 = vector.shape_cast %174 : vector<64xf32> to vector<64x1xf32>
    %176 = tpu.reciprocal %175 {approx = true} : vector<64x1xf32> -> vector<64x1xf32>
    %177 = vector.broadcast %176 : vector<64x1xf32> to vector<64x16xf32>
    %178 = arith.mulf %173, %177 : vector<64x16xf32>
    %cst_103 = arith.constant dense<0.000000e+00> : vector<64x32xf32>
    %179 = tpu.matmul %178, %147, %cst_103 {dimension_numbers = #tpu.dot_dimension_numbers<[1], [0], [0], [1], [0, 0, 1, 1], [], []>} : vector<64x16xf32>, vector<16x32xf32>, vector<64x32xf32> -> vector<64x32xf32>
    %180 = arith.mulf %179, %36 : vector<64x32xf32>
    %cst_104 = arith.constant dense<0.000000e+00> : vector<16x32xf32>
    %181 = tpu.matmul %35, %180, %cst_104 {dimension_numbers = #tpu.dot_dimension_numbers<[1], [0], [0], [1], [0, 0, 1, 1], [], []>} : vector<16x64xf32>, vector<64x32xf32>, vector<16x32xf32> -> vector<16x32xf32>
    %c0_105 = arith.constant 0 : index
    %c360 = arith.constant 360 : index
    %c0_106 = arith.constant 0 : index
    %182 = vector.load %arg4[%c0_105, %c360, %c0_106] : memref<2x768x64xf32, #tpu.memory_space<vmem>>, vector<1x32x32xf32>
    %183 = vector.shape_cast %182 : vector<1x32x32xf32> to vector<32x32xf32>
    %cst_107 = arith.constant dense<0.000000e+00> : vector<16x32xf32>
    %184 = tpu.matmul %181, %183, %cst_107 {dimension_numbers = #tpu.dot_dimension_numbers<[1], [0], [0], [1], [0, 0, 1, 1], [], []>} : vector<16x32xf32>, vector<32x32xf32>, vector<16x32xf32> -> vector<16x32xf32>
    %c0_108 = arith.constant 0 : index
    %c392 = arith.constant 392 : index
    %c0_109 = arith.constant 0 : index
    %185 = vector.load %arg4[%c0_108, %c392, %c0_109] : memref<2x768x64xf32, #tpu.memory_space<vmem>>, vector<1x1x32xf32>
    %186 = vector.shape_cast %185 : vector<1x1x32xf32> to vector<1x32xf32>
    %187 = vector.broadcast %186 : vector<1x32xf32> to vector<16x32xf32>
    %188 = arith.addf %184, %187 : vector<16x32xf32>
    %c0_110 = arith.constant 0 : index
    %c32 = arith.constant 32 : index
    %c0_111 = arith.constant 0 : index
    %189 = vector.load %arg4[%c0_110, %c32, %c0_111] : memref<2x768x64xf32, #tpu.memory_space<vmem>>, vector<1x1x32xf32>
    %190 = vector.shape_cast %189 : vector<1x1x32xf32> to vector<1x32xf32>
    %c0_112 = arith.constant 0 : index
    %c40 = arith.constant 40 : index
    %c0_113 = arith.constant 0 : index
    %191 = vector.load %arg4[%c0_112, %c40, %c0_113] : memref<2x768x64xf32, #tpu.memory_space<vmem>>, vector<1x1x32xf32>
    %192 = vector.shape_cast %191 : vector<1x1x32xf32> to vector<1x32xf32>
    %cst_114 = arith.constant dense<0.000000e+00> : vector<16xf32>
    %193 = vector.multi_reduction <add>, %100, %cst_114 [1] : vector<16x32xf32> to vector<16xf32>
    %194 = vector.shape_cast %193 : vector<16xf32> to vector<16x1xf32>
    %cst_115 = arith.constant 3.200000e+01 : f32
    %195 = vector.broadcast %cst_115 : f32 to vector<16x1xf32>
    %196 = arith.divf %194, %195 : vector<16x1xf32>
    %197 = vector.broadcast %196 : vector<16x1xf32> to vector<16x32xf32>
    %198 = arith.subf %100, %197 : vector<16x32xf32>
    %199 = arith.mulf %198, %198 : vector<16x32xf32>
    %cst_116 = arith.constant dense<0.000000e+00> : vector<16xf32>
    %200 = vector.multi_reduction <add>, %199, %cst_116 [1] : vector<16x32xf32> to vector<16xf32>
    %201 = vector.shape_cast %200 : vector<16xf32> to vector<16x1xf32>
    %cst_117 = arith.constant 3.200000e+01 : f32
    %202 = vector.broadcast %cst_117 : f32 to vector<16x1xf32>
    %203 = arith.divf %201, %202 : vector<16x1xf32>
    %204 = vector.broadcast %196 : vector<16x1xf32> to vector<16x32xf32>
    %205 = arith.subf %100, %204 : vector<16x32xf32>
    %cst_118 = arith.constant 9.99999974E-6 : f32
    %206 = vector.broadcast %cst_118 : f32 to vector<16x1xf32>
    %207 = arith.addf %203, %206 : vector<16x1xf32>
    %208 = math.rsqrt %207 : vector<16x1xf32>
    %209 = vector.broadcast %208 : vector<16x1xf32> to vector<16x32xf32>
    %210 = arith.mulf %205, %209 : vector<16x32xf32>
    %211 = vector.broadcast %190 : vector<1x32xf32> to vector<16x32xf32>
    %212 = arith.mulf %210, %211 : vector<16x32xf32>
    %213 = vector.broadcast %192 : vector<1x32xf32> to vector<16x32xf32>
    %214 = arith.addf %212, %213 : vector<16x32xf32>
    %c0_119 = arith.constant 0 : index
    %c400 = arith.constant 400 : index
    %c0_120 = arith.constant 0 : index
    %215 = vector.load %arg4[%c0_119, %c400, %c0_120] : memref<2x768x64xf32, #tpu.memory_space<vmem>>, vector<1x32x32xf32>
    %216 = vector.shape_cast %215 : vector<1x32x32xf32> to vector<32x32xf32>
    %cst_121 = arith.constant dense<0.000000e+00> : vector<16x32xf32>
    %217 = tpu.matmul %214, %216, %cst_121 {dimension_numbers = #tpu.dot_dimension_numbers<[1], [0], [0], [1], [0, 0, 1, 1], [], []>} : vector<16x32xf32>, vector<32x32xf32>, vector<16x32xf32> -> vector<16x32xf32>
    %c0_122 = arith.constant 0 : index
    %c432 = arith.constant 432 : index
    %c0_123 = arith.constant 0 : index
    %218 = vector.load %arg4[%c0_122, %c432, %c0_123] : memref<2x768x64xf32, #tpu.memory_space<vmem>>, vector<1x1x32xf32>
    %219 = vector.shape_cast %218 : vector<1x1x32xf32> to vector<1x32xf32>
    %220 = vector.broadcast %219 : vector<1x32xf32> to vector<16x32xf32>
    %221 = arith.addf %217, %220 : vector<16x32xf32>
    %cst_124 = arith.constant 5.000000e-01 : f32
    %222 = vector.broadcast %cst_124 : f32 to vector<16x32xf32>
    %223 = arith.mulf %222, %221 : vector<16x32xf32>
    %cst_125 = arith.constant 4.471500e-02 : f32
    %224 = vector.broadcast %cst_125 : f32 to vector<16x32xf32>
    %225 = arith.mulf %224, %221 : vector<16x32xf32>
    %226 = arith.mulf %225, %221 : vector<16x32xf32>
    %227 = arith.mulf %226, %221 : vector<16x32xf32>
    %228 = arith.addf %221, %227 : vector<16x32xf32>
    %cst_126 = arith.constant 0.797884583 : f32
    %229 = vector.broadcast %cst_126 : f32 to vector<16x32xf32>
    %230 = arith.mulf %229, %228 : vector<16x32xf32>
    %231 = math.tanh %230 : vector<16x32xf32>
    %cst_127 = arith.constant 1.000000e+00 : f32
    %232 = vector.broadcast %cst_127 : f32 to vector<16x32xf32>
    %233 = arith.addf %232, %231 : vector<16x32xf32>
    %234 = arith.mulf %223, %233 : vector<16x32xf32>
    %c0_128 = arith.constant 0 : index
    %c440 = arith.constant 440 : index
    %c0_129 = arith.constant 0 : index
    %235 = vector.load %arg4[%c0_128, %c440, %c0_129] : memref<2x768x64xf32, #tpu.memory_space<vmem>>, vector<1x32x32xf32>
    %236 = vector.shape_cast %235 : vector<1x32x32xf32> to vector<32x32xf32>
    %cst_130 = arith.constant dense<0.000000e+00> : vector<16x32xf32>
    %237 = tpu.matmul %214, %236, %cst_130 {dimension_numbers = #tpu.dot_dimension_numbers<[1], [0], [0], [1], [0, 0, 1, 1], [], []>} : vector<16x32xf32>, vector<32x32xf32>, vector<16x32xf32> -> vector<16x32xf32>
    %c0_131 = arith.constant 0 : index
    %c472 = arith.constant 472 : index
    %c0_132 = arith.constant 0 : index
    %238 = vector.load %arg4[%c0_131, %c472, %c0_132] : memref<2x768x64xf32, #tpu.memory_space<vmem>>, vector<1x1x32xf32>
    %239 = vector.shape_cast %238 : vector<1x1x32xf32> to vector<1x32xf32>
    %240 = vector.broadcast %239 : vector<1x32xf32> to vector<16x32xf32>
    %241 = arith.addf %237, %240 : vector<16x32xf32>
    %cst_133 = arith.constant 5.000000e-01 : f32
    %242 = vector.broadcast %cst_133 : f32 to vector<16x32xf32>
    %243 = arith.mulf %242, %241 : vector<16x32xf32>
    %cst_134 = arith.constant 4.471500e-02 : f32
    %244 = vector.broadcast %cst_134 : f32 to vector<16x32xf32>
    %245 = arith.mulf %244, %241 : vector<16x32xf32>
    %246 = arith.mulf %245, %241 : vector<16x32xf32>
    %247 = arith.mulf %246, %241 : vector<16x32xf32>
    %248 = arith.addf %241, %247 : vector<16x32xf32>
    %cst_135 = arith.constant 0.797884583 : f32
    %249 = vector.broadcast %cst_135 : f32 to vector<16x32xf32>
    %250 = arith.mulf %249, %248 : vector<16x32xf32>
    %251 = math.tanh %250 : vector<16x32xf32>
    %cst_136 = arith.constant 1.000000e+00 : f32
    %252 = vector.broadcast %cst_136 : f32 to vector<16x32xf32>
    %253 = arith.addf %252, %251 : vector<16x32xf32>
    %254 = arith.mulf %243, %253 : vector<16x32xf32>
    %255 = vector.broadcast %51 : vector<16x1xf32> to vector<16x32xf32>
    %256 = arith.mulf %254, %255 : vector<16x32xf32>
    %c0_137 = arith.constant 0 : index
    %c480 = arith.constant 480 : index
    %c0_138 = arith.constant 0 : index
    %257 = vector.load %arg4[%c0_137, %c480, %c0_138] : memref<2x768x64xf32, #tpu.memory_space<vmem>>, vector<1x1x32xf32>
    %258 = vector.shape_cast %257 : vector<1x1x32xf32> to vector<1x32xf32>
    %c0_139 = arith.constant 0 : index
    %c488 = arith.constant 488 : index
    %c0_140 = arith.constant 0 : index
    %259 = vector.load %arg4[%c0_139, %c488, %c0_140] : memref<2x768x64xf32, #tpu.memory_space<vmem>>, vector<1x1x32xf32>
    %260 = vector.shape_cast %259 : vector<1x1x32xf32> to vector<1x32xf32>
    %cst_141 = arith.constant dense<0.000000e+00> : vector<16xf32>
    %261 = vector.multi_reduction <add>, %256, %cst_141 [1] : vector<16x32xf32> to vector<16xf32>
    %262 = vector.shape_cast %261 : vector<16xf32> to vector<16x1xf32>
    %cst_142 = arith.constant 3.200000e+01 : f32
    %263 = vector.broadcast %cst_142 : f32 to vector<16x1xf32>
    %264 = arith.divf %262, %263 : vector<16x1xf32>
    %265 = vector.broadcast %264 : vector<16x1xf32> to vector<16x32xf32>
    %266 = arith.subf %256, %265 : vector<16x32xf32>
    %267 = arith.mulf %266, %266 : vector<16x32xf32>
    %cst_143 = arith.constant dense<0.000000e+00> : vector<16xf32>
    %268 = vector.multi_reduction <add>, %267, %cst_143 [1] : vector<16x32xf32> to vector<16xf32>
    %269 = vector.shape_cast %268 : vector<16xf32> to vector<16x1xf32>
    %cst_144 = arith.constant 3.200000e+01 : f32
    %270 = vector.broadcast %cst_144 : f32 to vector<16x1xf32>
    %271 = arith.divf %269, %270 : vector<16x1xf32>
    %272 = vector.broadcast %264 : vector<16x1xf32> to vector<16x32xf32>
    %273 = arith.subf %256, %272 : vector<16x32xf32>
    %cst_145 = arith.constant 9.99999974E-6 : f32
    %274 = vector.broadcast %cst_145 : f32 to vector<16x1xf32>
    %275 = arith.addf %271, %274 : vector<16x1xf32>
    %276 = math.rsqrt %275 : vector<16x1xf32>
    %277 = vector.broadcast %276 : vector<16x1xf32> to vector<16x32xf32>
    %278 = arith.mulf %273, %277 : vector<16x32xf32>
    %279 = vector.broadcast %258 : vector<1x32xf32> to vector<16x32xf32>
    %280 = arith.mulf %278, %279 : vector<16x32xf32>
    %281 = vector.broadcast %260 : vector<1x32xf32> to vector<16x32xf32>
    %282 = arith.addf %280, %281 : vector<16x32xf32>
    %c0_146 = arith.constant 0 : index
    %c496 = arith.constant 496 : index
    %c0_147 = arith.constant 0 : index
    %283 = vector.load %arg4[%c0_146, %c496, %c0_147] : memref<2x768x64xf32, #tpu.memory_space<vmem>>, vector<1x7x32xf32>
    %284 = vector.shape_cast %283 : vector<1x7x32xf32> to vector<7x32xf32>
    %c0_148 = arith.constant 0 : index
    %c504 = arith.constant 504 : index
    %c0_149 = arith.constant 0 : index
    %285 = vector.load %arg4[%c0_148, %c504, %c0_149] : memref<2x768x64xf32, #tpu.memory_space<vmem>>, vector<1x1x32xf32>
    %286 = vector.shape_cast %285 : vector<1x1x32xf32> to vector<1x32xf32>
    %c3_i32 = arith.constant 3 : i32
    %287 = tpu.dynamic_rotate %282 by %c3_i32 dim 0 : vector<16x32xf32>, i32 -> vector<16x32xf32>
    %288 = vector.extract_strided_slice %284 {offsets = [0, 0], sizes = [1, 32], strides = [1, 1]} : vector<7x32xf32> to vector<1x32xf32>
    %289 = vector.broadcast %288 : vector<1x32xf32> to vector<16x32xf32>
    %290 = arith.mulf %289, %287 : vector<16x32xf32>
    %291 = vector.extract_strided_slice %38 {offsets = [0, 0], sizes = [16, 1], strides = [1, 1]} : vector<16x7xf32> to vector<16x1xf32>
    %292 = vector.broadcast %291 : vector<16x1xf32> to vector<16x32xf32>
    %293 = arith.mulf %290, %292 : vector<16x32xf32>
    %c2_i32 = arith.constant 2 : i32
    %294 = tpu.dynamic_rotate %282 by %c2_i32 dim 0 : vector<16x32xf32>, i32 -> vector<16x32xf32>
    %295 = vector.extract_strided_slice %284 {offsets = [1, 0], sizes = [1, 32], strides = [1, 1]} : vector<7x32xf32> to vector<1x32xf32>
    %296 = vector.broadcast %295 : vector<1x32xf32> to vector<16x32xf32>
    %297 = arith.mulf %296, %294 : vector<16x32xf32>
    %298 = vector.extract_strided_slice %38 {offsets = [0, 1], sizes = [16, 1], strides = [1, 1]} : vector<16x7xf32> to vector<16x1xf32>
    %299 = vector.broadcast %298 : vector<16x1xf32> to vector<16x32xf32>
    %300 = arith.mulf %297, %299 : vector<16x32xf32>
    %301 = arith.addf %293, %300 : vector<16x32xf32>
    %c1_i32 = arith.constant 1 : i32
    %302 = tpu.dynamic_rotate %282 by %c1_i32 dim 0 : vector<16x32xf32>, i32 -> vector<16x32xf32>
    %303 = vector.extract_strided_slice %284 {offsets = [2, 0], sizes = [1, 32], strides = [1, 1]} : vector<7x32xf32> to vector<1x32xf32>
    %304 = vector.broadcast %303 : vector<1x32xf32> to vector<16x32xf32>
    %305 = arith.mulf %304, %302 : vector<16x32xf32>
    %306 = vector.extract_strided_slice %38 {offsets = [0, 2], sizes = [16, 1], strides = [1, 1]} : vector<16x7xf32> to vector<16x1xf32>
    %307 = vector.broadcast %306 : vector<16x1xf32> to vector<16x32xf32>
    %308 = arith.mulf %305, %307 : vector<16x32xf32>
    %309 = arith.addf %301, %308 : vector<16x32xf32>
    %310 = vector.extract_strided_slice %284 {offsets = [3, 0], sizes = [1, 32], strides = [1, 1]} : vector<7x32xf32> to vector<1x32xf32>
    %311 = vector.broadcast %310 : vector<1x32xf32> to vector<16x32xf32>
    %312 = arith.mulf %311, %282 : vector<16x32xf32>
    %313 = vector.extract_strided_slice %38 {offsets = [0, 3], sizes = [16, 1], strides = [1, 1]} : vector<16x7xf32> to vector<16x1xf32>
    %314 = vector.broadcast %313 : vector<16x1xf32> to vector<16x32xf32>
    %315 = arith.mulf %312, %314 : vector<16x32xf32>
    %316 = arith.addf %309, %315 : vector<16x32xf32>
    %c15_i32 = arith.constant 15 : i32
    %317 = tpu.dynamic_rotate %282 by %c15_i32 dim 0 : vector<16x32xf32>, i32 -> vector<16x32xf32>
    %318 = vector.extract_strided_slice %284 {offsets = [4, 0], sizes = [1, 32], strides = [1, 1]} : vector<7x32xf32> to vector<1x32xf32>
    %319 = vector.broadcast %318 : vector<1x32xf32> to vector<16x32xf32>
    %320 = arith.mulf %319, %317 : vector<16x32xf32>
    %321 = vector.extract_strided_slice %38 {offsets = [0, 4], sizes = [16, 1], strides = [1, 1]} : vector<16x7xf32> to vector<16x1xf32>
    %322 = vector.broadcast %321 : vector<16x1xf32> to vector<16x32xf32>
    %323 = arith.mulf %320, %322 : vector<16x32xf32>
    %324 = arith.addf %316, %323 : vector<16x32xf32>
    %c14_i32 = arith.constant 14 : i32
    %325 = tpu.dynamic_rotate %282 by %c14_i32 dim 0 : vector<16x32xf32>, i32 -> vector<16x32xf32>
    %326 = vector.extract_strided_slice %284 {offsets = [5, 0], sizes = [1, 32], strides = [1, 1]} : vector<7x32xf32> to vector<1x32xf32>
    %327 = vector.broadcast %326 : vector<1x32xf32> to vector<16x32xf32>
    %328 = arith.mulf %327, %325 : vector<16x32xf32>
    %329 = vector.extract_strided_slice %38 {offsets = [0, 5], sizes = [16, 1], strides = [1, 1]} : vector<16x7xf32> to vector<16x1xf32>
    %330 = vector.broadcast %329 : vector<16x1xf32> to vector<16x32xf32>
    %331 = arith.mulf %328, %330 : vector<16x32xf32>
    %332 = arith.addf %324, %331 : vector<16x32xf32>
    %c13_i32 = arith.constant 13 : i32
    %333 = tpu.dynamic_rotate %282 by %c13_i32 dim 0 : vector<16x32xf32>, i32 -> vector<16x32xf32>
    %334 = vector.extract_strided_slice %284 {offsets = [6, 0], sizes = [1, 32], strides = [1, 1]} : vector<7x32xf32> to vector<1x32xf32>
    %335 = vector.broadcast %334 : vector<1x32xf32> to vector<16x32xf32>
    %336 = arith.mulf %335, %333 : vector<16x32xf32>
    %337 = vector.extract_strided_slice %38 {offsets = [0, 6], sizes = [16, 1], strides = [1, 1]} : vector<16x7xf32> to vector<16x1xf32>
    %338 = vector.broadcast %337 : vector<16x1xf32> to vector<16x32xf32>
    %339 = arith.mulf %336, %338 : vector<16x32xf32>
    %340 = arith.addf %332, %339 : vector<16x32xf32>
    %341 = vector.broadcast %286 : vector<1x32xf32> to vector<16x32xf32>
    %342 = arith.addf %340, %341 : vector<16x32xf32>
    %343 = arith.mulf %234, %342 : vector<16x32xf32>
    %c0_150 = arith.constant 0 : index
    %c512 = arith.constant 512 : index
    %c0_151 = arith.constant 0 : index
    %344 = vector.load %arg4[%c0_150, %c512, %c0_151] : memref<2x768x64xf32, #tpu.memory_space<vmem>>, vector<1x32x32xf32>
    %345 = vector.shape_cast %344 : vector<1x32x32xf32> to vector<32x32xf32>
    %cst_152 = arith.constant dense<0.000000e+00> : vector<16x32xf32>
    %346 = tpu.matmul %343, %345, %cst_152 {dimension_numbers = #tpu.dot_dimension_numbers<[1], [0], [0], [1], [0, 0, 1, 1], [], []>} : vector<16x32xf32>, vector<32x32xf32>, vector<16x32xf32> -> vector<16x32xf32>
    %c0_153 = arith.constant 0 : index
    %c544 = arith.constant 544 : index
    %c0_154 = arith.constant 0 : index
    %347 = vector.load %arg4[%c0_153, %c544, %c0_154] : memref<2x768x64xf32, #tpu.memory_space<vmem>>, vector<1x1x32xf32>
    %348 = vector.shape_cast %347 : vector<1x1x32xf32> to vector<1x32xf32>
    %349 = vector.broadcast %348 : vector<1x32xf32> to vector<16x32xf32>
    %350 = arith.addf %346, %349 : vector<16x32xf32>
    %c0_155 = arith.constant 0 : index
    %c552 = arith.constant 552 : index
    %c0_156 = arith.constant 0 : index
    %351 = vector.load %arg4[%c0_155, %c552, %c0_156] : memref<2x768x64xf32, #tpu.memory_space<vmem>>, vector<1x3x32xf32>
    %352 = vector.shape_cast %351 : vector<1x3x32xf32> to vector<3x32xf32>
    %c0_157 = arith.constant 0 : index
    %c560 = arith.constant 560 : index
    %c0_158 = arith.constant 0 : index
    %353 = vector.load %arg4[%c0_157, %c560, %c0_158] : memref<2x768x64xf32, #tpu.memory_space<vmem>>, vector<1x1x32xf32>
    %354 = vector.shape_cast %353 : vector<1x1x32xf32> to vector<1x32xf32>
    %c1_i32_159 = arith.constant 1 : i32
    %355 = tpu.dynamic_rotate %188 by %c1_i32_159 dim 0 : vector<16x32xf32>, i32 -> vector<16x32xf32>
    %356 = vector.extract_strided_slice %352 {offsets = [0, 0], sizes = [1, 32], strides = [1, 1]} : vector<3x32xf32> to vector<1x32xf32>
    %357 = vector.broadcast %356 : vector<1x32xf32> to vector<16x32xf32>
    %358 = arith.mulf %357, %355 : vector<16x32xf32>
    %359 = vector.extract_strided_slice %38 {offsets = [0, 2], sizes = [16, 1], strides = [1, 1]} : vector<16x7xf32> to vector<16x1xf32>
    %360 = vector.broadcast %359 : vector<16x1xf32> to vector<16x32xf32>
    %361 = arith.mulf %358, %360 : vector<16x32xf32>
    %362 = vector.extract_strided_slice %352 {offsets = [1, 0], sizes = [1, 32], strides = [1, 1]} : vector<3x32xf32> to vector<1x32xf32>
    %363 = vector.broadcast %362 : vector<1x32xf32> to vector<16x32xf32>
    %364 = arith.mulf %363, %188 : vector<16x32xf32>
    %365 = vector.extract_strided_slice %38 {offsets = [0, 3], sizes = [16, 1], strides = [1, 1]} : vector<16x7xf32> to vector<16x1xf32>
    %366 = vector.broadcast %365 : vector<16x1xf32> to vector<16x32xf32>
    %367 = arith.mulf %364, %366 : vector<16x32xf32>
    %368 = arith.addf %361, %367 : vector<16x32xf32>
    %c15_i32_160 = arith.constant 15 : i32
    %369 = tpu.dynamic_rotate %188 by %c15_i32_160 dim 0 : vector<16x32xf32>, i32 -> vector<16x32xf32>
    %370 = vector.extract_strided_slice %352 {offsets = [2, 0], sizes = [1, 32], strides = [1, 1]} : vector<3x32xf32> to vector<1x32xf32>
    %371 = vector.broadcast %370 : vector<1x32xf32> to vector<16x32xf32>
    %372 = arith.mulf %371, %369 : vector<16x32xf32>
    %373 = vector.extract_strided_slice %38 {offsets = [0, 4], sizes = [16, 1], strides = [1, 1]} : vector<16x7xf32> to vector<16x1xf32>
    %374 = vector.broadcast %373 : vector<16x1xf32> to vector<16x32xf32>
    %375 = arith.mulf %372, %374 : vector<16x32xf32>
    %376 = arith.addf %368, %375 : vector<16x32xf32>
    %377 = vector.broadcast %354 : vector<1x32xf32> to vector<16x32xf32>
    %378 = arith.addf %376, %377 : vector<16x32xf32>
    %c0_161 = arith.constant 0 : index
    %c568_162 = arith.constant 568 : index
    %c0_163 = arith.constant 0 : index
    %379 = vector.load %arg4[%c0_161, %c568_162, %c0_163] : memref<2x768x64xf32, #tpu.memory_space<vmem>>, vector<1x3x32xf32>
    %380 = vector.shape_cast %379 : vector<1x3x32xf32> to vector<3x32xf32>
    %c0_164 = arith.constant 0 : index
    %c576 = arith.constant 576 : index
    %c0_165 = arith.constant 0 : index
    %381 = vector.load %arg4[%c0_164, %c576, %c0_165] : memref<2x768x64xf32, #tpu.memory_space<vmem>>, vector<1x1x32xf32>
    %382 = vector.shape_cast %381 : vector<1x1x32xf32> to vector<1x32xf32>
    %c1_i32_166 = arith.constant 1 : i32
    %383 = tpu.dynamic_rotate %350 by %c1_i32_166 dim 0 : vector<16x32xf32>, i32 -> vector<16x32xf32>
    %384 = vector.extract_strided_slice %380 {offsets = [0, 0], sizes = [1, 32], strides = [1, 1]} : vector<3x32xf32> to vector<1x32xf32>
    %385 = vector.broadcast %384 : vector<1x32xf32> to vector<16x32xf32>
    %386 = arith.mulf %385, %383 : vector<16x32xf32>
    %387 = vector.extract_strided_slice %38 {offsets = [0, 2], sizes = [16, 1], strides = [1, 1]} : vector<16x7xf32> to vector<16x1xf32>
    %388 = vector.broadcast %387 : vector<16x1xf32> to vector<16x32xf32>
    %389 = arith.mulf %386, %388 : vector<16x32xf32>
    %390 = vector.extract_strided_slice %380 {offsets = [1, 0], sizes = [1, 32], strides = [1, 1]} : vector<3x32xf32> to vector<1x32xf32>
    %391 = vector.broadcast %390 : vector<1x32xf32> to vector<16x32xf32>
    %392 = arith.mulf %391, %350 : vector<16x32xf32>
    %393 = vector.extract_strided_slice %38 {offsets = [0, 3], sizes = [16, 1], strides = [1, 1]} : vector<16x7xf32> to vector<16x1xf32>
    %394 = vector.broadcast %393 : vector<16x1xf32> to vector<16x32xf32>
    %395 = arith.mulf %392, %394 : vector<16x32xf32>
    %396 = arith.addf %389, %395 : vector<16x32xf32>
    %c15_i32_167 = arith.constant 15 : i32
    %397 = tpu.dynamic_rotate %350 by %c15_i32_167 dim 0 : vector<16x32xf32>, i32 -> vector<16x32xf32>
    %398 = vector.extract_strided_slice %380 {offsets = [2, 0], sizes = [1, 32], strides = [1, 1]} : vector<3x32xf32> to vector<1x32xf32>
    %399 = vector.broadcast %398 : vector<1x32xf32> to vector<16x32xf32>
    %400 = arith.mulf %399, %397 : vector<16x32xf32>
    %401 = vector.extract_strided_slice %38 {offsets = [0, 4], sizes = [16, 1], strides = [1, 1]} : vector<16x7xf32> to vector<16x1xf32>
    %402 = vector.broadcast %401 : vector<16x1xf32> to vector<16x32xf32>
    %403 = arith.mulf %400, %402 : vector<16x32xf32>
    %404 = arith.addf %396, %403 : vector<16x32xf32>
    %405 = vector.broadcast %382 : vector<1x32xf32> to vector<16x32xf32>
    %406 = arith.addf %404, %405 : vector<16x32xf32>
    %407 = arith.addf %188, %378 : vector<16x32xf32>
    %c0_168 = arith.constant 0 : index
    %c584 = arith.constant 584 : index
    %c0_169 = arith.constant 0 : index
    %408 = vector.load %arg4[%c0_168, %c584, %c0_169] : memref<2x768x64xf32, #tpu.memory_space<vmem>>, vector<1x32x32xf32>
    %409 = vector.shape_cast %408 : vector<1x32x32xf32> to vector<32x32xf32>
    %cst_170 = arith.constant dense<0.000000e+00> : vector<16x32xf32>
    %410 = tpu.matmul %407, %409, %cst_170 {dimension_numbers = #tpu.dot_dimension_numbers<[1], [0], [0], [1], [0, 0, 1, 1], [], []>} : vector<16x32xf32>, vector<32x32xf32>, vector<16x32xf32> -> vector<16x32xf32>
    %411 = arith.addf %350, %406 : vector<16x32xf32>
    %c0_171 = arith.constant 0 : index
    %c616 = arith.constant 616 : index
    %c0_172 = arith.constant 0 : index
    %412 = vector.load %arg4[%c0_171, %c616, %c0_172] : memref<2x768x64xf32, #tpu.memory_space<vmem>>, vector<1x32x32xf32>
    %413 = vector.shape_cast %412 : vector<1x32x32xf32> to vector<32x32xf32>
    %cst_173 = arith.constant dense<0.000000e+00> : vector<16x32xf32>
    %414 = tpu.matmul %411, %413, %cst_173 {dimension_numbers = #tpu.dot_dimension_numbers<[1], [0], [0], [1], [0, 0, 1, 1], [], []>} : vector<16x32xf32>, vector<32x32xf32>, vector<16x32xf32> -> vector<16x32xf32>
    %415 = arith.addf %410, %414 : vector<16x32xf32>
    %c0_174 = arith.constant 0 : index
    %c648 = arith.constant 648 : index
    %c0_175 = arith.constant 0 : index
    %416 = vector.load %arg4[%c0_174, %c648, %c0_175] : memref<2x768x64xf32, #tpu.memory_space<vmem>>, vector<1x1x32xf32>
    %417 = vector.shape_cast %416 : vector<1x1x32xf32> to vector<1x32xf32>
    %418 = vector.broadcast %417 : vector<1x32xf32> to vector<16x32xf32>
    %419 = arith.addf %415, %418 : vector<16x32xf32>
    %420 = arith.addf %100, %419 : vector<16x32xf32>
    %c0_176 = arith.constant 0 : index
    %c48 = arith.constant 48 : index
    %c0_177 = arith.constant 0 : index
    %421 = vector.load %arg4[%c0_176, %c48, %c0_177] : memref<2x768x64xf32, #tpu.memory_space<vmem>>, vector<1x1x32xf32>
    %422 = vector.shape_cast %421 : vector<1x1x32xf32> to vector<1x32xf32>
    %c0_178 = arith.constant 0 : index
    %c56 = arith.constant 56 : index
    %c0_179 = arith.constant 0 : index
    %423 = vector.load %arg4[%c0_178, %c56, %c0_179] : memref<2x768x64xf32, #tpu.memory_space<vmem>>, vector<1x1x32xf32>
    %424 = vector.shape_cast %423 : vector<1x1x32xf32> to vector<1x32xf32>
    %cst_180 = arith.constant dense<0.000000e+00> : vector<16xf32>
    %425 = vector.multi_reduction <add>, %420, %cst_180 [1] : vector<16x32xf32> to vector<16xf32>
    %426 = vector.shape_cast %425 : vector<16xf32> to vector<16x1xf32>
    %cst_181 = arith.constant 3.200000e+01 : f32
    %427 = vector.broadcast %cst_181 : f32 to vector<16x1xf32>
    %428 = arith.divf %426, %427 : vector<16x1xf32>
    %429 = vector.broadcast %428 : vector<16x1xf32> to vector<16x32xf32>
    %430 = arith.subf %420, %429 : vector<16x32xf32>
    %431 = arith.mulf %430, %430 : vector<16x32xf32>
    %cst_182 = arith.constant dense<0.000000e+00> : vector<16xf32>
    %432 = vector.multi_reduction <add>, %431, %cst_182 [1] : vector<16x32xf32> to vector<16xf32>
    %433 = vector.shape_cast %432 : vector<16xf32> to vector<16x1xf32>
    %cst_183 = arith.constant 3.200000e+01 : f32
    %434 = vector.broadcast %cst_183 : f32 to vector<16x1xf32>
    %435 = arith.divf %433, %434 : vector<16x1xf32>
    %436 = vector.broadcast %428 : vector<16x1xf32> to vector<16x32xf32>
    %437 = arith.subf %420, %436 : vector<16x32xf32>
    %cst_184 = arith.constant 9.99999974E-6 : f32
    %438 = vector.broadcast %cst_184 : f32 to vector<16x1xf32>
    %439 = arith.addf %435, %438 : vector<16x1xf32>
    %440 = math.rsqrt %439 : vector<16x1xf32>
    %441 = vector.broadcast %440 : vector<16x1xf32> to vector<16x32xf32>
    %442 = arith.mulf %437, %441 : vector<16x32xf32>
    %443 = vector.broadcast %422 : vector<1x32xf32> to vector<16x32xf32>
    %444 = arith.mulf %442, %443 : vector<16x32xf32>
    %445 = vector.broadcast %424 : vector<1x32xf32> to vector<16x32xf32>
    %446 = arith.addf %444, %445 : vector<16x32xf32>
    %c0_185 = arith.constant 0 : index
    %c656 = arith.constant 656 : index
    %c0_186 = arith.constant 0 : index
    %447 = vector.load %arg4[%c0_185, %c656, %c0_186] : memref<2x768x64xf32, #tpu.memory_space<vmem>>, vector<1x32x64xf32>
    %448 = vector.shape_cast %447 : vector<1x32x64xf32> to vector<32x64xf32>
    %cst_187 = arith.constant dense<0.000000e+00> : vector<16x64xf32>
    %449 = tpu.matmul %446, %448, %cst_187 {dimension_numbers = #tpu.dot_dimension_numbers<[1], [0], [0], [1], [0, 0, 1, 1], [], []>} : vector<16x32xf32>, vector<32x64xf32>, vector<16x64xf32> -> vector<16x64xf32>
    %c0_188 = arith.constant 0 : index
    %c688 = arith.constant 688 : index
    %c0_189 = arith.constant 0 : index
    %450 = vector.load %arg4[%c0_188, %c688, %c0_189] : memref<2x768x64xf32, #tpu.memory_space<vmem>>, vector<1x1x64xf32>
    %451 = vector.shape_cast %450 : vector<1x1x64xf32> to vector<1x64xf32>
    %452 = vector.broadcast %451 : vector<1x64xf32> to vector<16x64xf32>
    %453 = arith.addf %449, %452 : vector<16x64xf32>
    %454 = arith.negf %453 : vector<16x64xf32>
    %455 = math.exp %454 : vector<16x64xf32>
    %cst_190 = arith.constant 1.000000e+00 : f32
    %456 = vector.broadcast %cst_190 : f32 to vector<16x64xf32>
    %457 = arith.addf %456, %455 : vector<16x64xf32>
    %458 = arith.divf %456, %457 : vector<16x64xf32>
    %459 = arith.mulf %453, %458 : vector<16x64xf32>
    %c0_191 = arith.constant 0 : index
    %c696 = arith.constant 696 : index
    %c0_192 = arith.constant 0 : index
    %460 = vector.load %arg4[%c0_191, %c696, %c0_192] : memref<2x768x64xf32, #tpu.memory_space<vmem>>, vector<1x64x32xf32>
    %461 = vector.shape_cast %460 : vector<1x64x32xf32> to vector<64x32xf32>
    %cst_193 = arith.constant dense<0.000000e+00> : vector<16x32xf32>
    %462 = tpu.matmul %459, %461, %cst_193 {dimension_numbers = #tpu.dot_dimension_numbers<[1], [0], [0], [1], [0, 0, 1, 1], [], []>} : vector<16x64xf32>, vector<64x32xf32>, vector<16x32xf32> -> vector<16x32xf32>
    %c0_194 = arith.constant 0 : index
    %c760 = arith.constant 760 : index
    %c0_195 = arith.constant 0 : index
    %463 = vector.load %arg4[%c0_194, %c760, %c0_195] : memref<2x768x64xf32, #tpu.memory_space<vmem>>, vector<1x1x32xf32>
    %464 = vector.shape_cast %463 : vector<1x1x32xf32> to vector<1x32xf32>
    %465 = vector.broadcast %464 : vector<1x32xf32> to vector<16x32xf32>
    %466 = arith.addf %462, %465 : vector<16x32xf32>
    %cst_196 = arith.constant 5.000000e-01 : f32
    %467 = vector.broadcast %cst_196 : f32 to vector<16x32xf32>
    %468 = arith.mulf %467, %466 : vector<16x32xf32>
    %469 = arith.addf %420, %468 : vector<16x32xf32>
    %c0_197 = arith.constant 0 : index
    %c64_198 = arith.constant 64 : index
    %c0_199 = arith.constant 0 : index
    %470 = vector.load %arg4[%c0_197, %c64_198, %c0_199] : memref<2x768x64xf32, #tpu.memory_space<vmem>>, vector<1x1x32xf32>
    %471 = vector.shape_cast %470 : vector<1x1x32xf32> to vector<1x32xf32>
    %c0_200 = arith.constant 0 : index
    %c72_201 = arith.constant 72 : index
    %c0_202 = arith.constant 0 : index
    %472 = vector.load %arg4[%c0_200, %c72_201, %c0_202] : memref<2x768x64xf32, #tpu.memory_space<vmem>>, vector<1x1x32xf32>
    %473 = vector.shape_cast %472 : vector<1x1x32xf32> to vector<1x32xf32>
    %cst_203 = arith.constant dense<0.000000e+00> : vector<16xf32>
    %474 = vector.multi_reduction <add>, %469, %cst_203 [1] : vector<16x32xf32> to vector<16xf32>
    %475 = vector.shape_cast %474 : vector<16xf32> to vector<16x1xf32>
    %cst_204 = arith.constant 3.200000e+01 : f32
    %476 = vector.broadcast %cst_204 : f32 to vector<16x1xf32>
    %477 = arith.divf %475, %476 : vector<16x1xf32>
    %478 = vector.broadcast %477 : vector<16x1xf32> to vector<16x32xf32>
    %479 = arith.subf %469, %478 : vector<16x32xf32>
    %480 = arith.mulf %479, %479 : vector<16x32xf32>
    %cst_205 = arith.constant dense<0.000000e+00> : vector<16xf32>
    %481 = vector.multi_reduction <add>, %480, %cst_205 [1] : vector<16x32xf32> to vector<16xf32>
    %482 = vector.shape_cast %481 : vector<16xf32> to vector<16x1xf32>
    %cst_206 = arith.constant 3.200000e+01 : f32
    %483 = vector.broadcast %cst_206 : f32 to vector<16x1xf32>
    %484 = arith.divf %482, %483 : vector<16x1xf32>
    %485 = vector.broadcast %477 : vector<16x1xf32> to vector<16x32xf32>
    %486 = arith.subf %469, %485 : vector<16x32xf32>
    %cst_207 = arith.constant 9.99999974E-6 : f32
    %487 = vector.broadcast %cst_207 : f32 to vector<16x1xf32>
    %488 = arith.addf %484, %487 : vector<16x1xf32>
    %489 = math.rsqrt %488 : vector<16x1xf32>
    %490 = vector.broadcast %489 : vector<16x1xf32> to vector<16x32xf32>
    %491 = arith.mulf %486, %490 : vector<16x32xf32>
    %492 = vector.broadcast %471 : vector<1x32xf32> to vector<16x32xf32>
    %493 = arith.mulf %491, %492 : vector<16x32xf32>
    %494 = vector.broadcast %473 : vector<1x32xf32> to vector<16x32xf32>
    %495 = arith.addf %493, %494 : vector<16x32xf32>
    %c1 = arith.constant 1 : index
    %c0_208 = arith.constant 0 : index
    %c0_209 = arith.constant 0 : index
    %496 = vector.load %arg4[%c1, %c0_208, %c0_209] : memref<2x768x64xf32, #tpu.memory_space<vmem>>, vector<1x1x32xf32>
    %497 = vector.shape_cast %496 : vector<1x1x32xf32> to vector<1x32xf32>
    %c1_210 = arith.constant 1 : index
    %c8_211 = arith.constant 8 : index
    %c0_212 = arith.constant 0 : index
    %498 = vector.load %arg4[%c1_210, %c8_211, %c0_212] : memref<2x768x64xf32, #tpu.memory_space<vmem>>, vector<1x1x32xf32>
    %499 = vector.shape_cast %498 : vector<1x1x32xf32> to vector<1x32xf32>
    %cst_213 = arith.constant dense<0.000000e+00> : vector<16xf32>
    %500 = vector.multi_reduction <add>, %495, %cst_213 [1] : vector<16x32xf32> to vector<16xf32>
    %501 = vector.shape_cast %500 : vector<16xf32> to vector<16x1xf32>
    %cst_214 = arith.constant 3.200000e+01 : f32
    %502 = vector.broadcast %cst_214 : f32 to vector<16x1xf32>
    %503 = arith.divf %501, %502 : vector<16x1xf32>
    %504 = vector.broadcast %503 : vector<16x1xf32> to vector<16x32xf32>
    %505 = arith.subf %495, %504 : vector<16x32xf32>
    %506 = arith.mulf %505, %505 : vector<16x32xf32>
    %cst_215 = arith.constant dense<0.000000e+00> : vector<16xf32>
    %507 = vector.multi_reduction <add>, %506, %cst_215 [1] : vector<16x32xf32> to vector<16xf32>
    %508 = vector.shape_cast %507 : vector<16xf32> to vector<16x1xf32>
    %cst_216 = arith.constant 3.200000e+01 : f32
    %509 = vector.broadcast %cst_216 : f32 to vector<16x1xf32>
    %510 = arith.divf %508, %509 : vector<16x1xf32>
    %511 = vector.broadcast %503 : vector<16x1xf32> to vector<16x32xf32>
    %512 = arith.subf %495, %511 : vector<16x32xf32>
    %cst_217 = arith.constant 9.99999974E-6 : f32
    %513 = vector.broadcast %cst_217 : f32 to vector<16x1xf32>
    %514 = arith.addf %510, %513 : vector<16x1xf32>
    %515 = math.rsqrt %514 : vector<16x1xf32>
    %516 = vector.broadcast %515 : vector<16x1xf32> to vector<16x32xf32>
    %517 = arith.mulf %512, %516 : vector<16x32xf32>
    %518 = vector.broadcast %497 : vector<1x32xf32> to vector<16x32xf32>
    %519 = arith.mulf %517, %518 : vector<16x32xf32>
    %520 = vector.broadcast %499 : vector<1x32xf32> to vector<16x32xf32>
    %521 = arith.addf %519, %520 : vector<16x32xf32>
    %c1_218 = arith.constant 1 : index
    %c80_219 = arith.constant 80 : index
    %c0_220 = arith.constant 0 : index
    %522 = vector.load %arg4[%c1_218, %c80_219, %c0_220] : memref<2x768x64xf32, #tpu.memory_space<vmem>>, vector<1x32x64xf32>
    %523 = vector.shape_cast %522 : vector<1x32x64xf32> to vector<32x64xf32>
    %cst_221 = arith.constant dense<0.000000e+00> : vector<16x64xf32>
    %524 = tpu.matmul %521, %523, %cst_221 {dimension_numbers = #tpu.dot_dimension_numbers<[1], [0], [0], [1], [0, 0, 1, 1], [], []>} : vector<16x32xf32>, vector<32x64xf32>, vector<16x64xf32> -> vector<16x64xf32>
    %c1_222 = arith.constant 1 : index
    %c112_223 = arith.constant 112 : index
    %c0_224 = arith.constant 0 : index
    %525 = vector.load %arg4[%c1_222, %c112_223, %c0_224] : memref<2x768x64xf32, #tpu.memory_space<vmem>>, vector<1x1x64xf32>
    %526 = vector.shape_cast %525 : vector<1x1x64xf32> to vector<1x64xf32>
    %527 = vector.broadcast %526 : vector<1x64xf32> to vector<16x64xf32>
    %528 = arith.addf %524, %527 : vector<16x64xf32>
    %529 = arith.negf %528 : vector<16x64xf32>
    %530 = math.exp %529 : vector<16x64xf32>
    %cst_225 = arith.constant 1.000000e+00 : f32
    %531 = vector.broadcast %cst_225 : f32 to vector<16x64xf32>
    %532 = arith.addf %531, %530 : vector<16x64xf32>
    %533 = arith.divf %531, %532 : vector<16x64xf32>
    %534 = arith.mulf %528, %533 : vector<16x64xf32>
    %c1_226 = arith.constant 1 : index
    %c120_227 = arith.constant 120 : index
    %c0_228 = arith.constant 0 : index
    %535 = vector.load %arg4[%c1_226, %c120_227, %c0_228] : memref<2x768x64xf32, #tpu.memory_space<vmem>>, vector<1x64x32xf32>
    %536 = vector.shape_cast %535 : vector<1x64x32xf32> to vector<64x32xf32>
    %cst_229 = arith.constant dense<0.000000e+00> : vector<16x32xf32>
    %537 = tpu.matmul %534, %536, %cst_229 {dimension_numbers = #tpu.dot_dimension_numbers<[1], [0], [0], [1], [0, 0, 1, 1], [], []>} : vector<16x64xf32>, vector<64x32xf32>, vector<16x32xf32> -> vector<16x32xf32>
    %c1_230 = arith.constant 1 : index
    %c184_231 = arith.constant 184 : index
    %c0_232 = arith.constant 0 : index
    %538 = vector.load %arg4[%c1_230, %c184_231, %c0_232] : memref<2x768x64xf32, #tpu.memory_space<vmem>>, vector<1x1x32xf32>
    %539 = vector.shape_cast %538 : vector<1x1x32xf32> to vector<1x32xf32>
    %540 = vector.broadcast %539 : vector<1x32xf32> to vector<16x32xf32>
    %541 = arith.addf %537, %540 : vector<16x32xf32>
    %cst_233 = arith.constant 5.000000e-01 : f32
    %542 = vector.broadcast %cst_233 : f32 to vector<16x32xf32>
    %543 = arith.mulf %542, %541 : vector<16x32xf32>
    %544 = arith.addf %495, %543 : vector<16x32xf32>
    %c1_234 = arith.constant 1 : index
    %c16_235 = arith.constant 16 : index
    %c0_236 = arith.constant 0 : index
    %545 = vector.load %arg4[%c1_234, %c16_235, %c0_236] : memref<2x768x64xf32, #tpu.memory_space<vmem>>, vector<1x1x32xf32>
    %546 = vector.shape_cast %545 : vector<1x1x32xf32> to vector<1x32xf32>
    %c1_237 = arith.constant 1 : index
    %c24_238 = arith.constant 24 : index
    %c0_239 = arith.constant 0 : index
    %547 = vector.load %arg4[%c1_237, %c24_238, %c0_239] : memref<2x768x64xf32, #tpu.memory_space<vmem>>, vector<1x1x32xf32>
    %548 = vector.shape_cast %547 : vector<1x1x32xf32> to vector<1x32xf32>
    %cst_240 = arith.constant dense<0.000000e+00> : vector<16xf32>
    %549 = vector.multi_reduction <add>, %544, %cst_240 [1] : vector<16x32xf32> to vector<16xf32>
    %550 = vector.shape_cast %549 : vector<16xf32> to vector<16x1xf32>
    %cst_241 = arith.constant 3.200000e+01 : f32
    %551 = vector.broadcast %cst_241 : f32 to vector<16x1xf32>
    %552 = arith.divf %550, %551 : vector<16x1xf32>
    %553 = vector.broadcast %552 : vector<16x1xf32> to vector<16x32xf32>
    %554 = arith.subf %544, %553 : vector<16x32xf32>
    %555 = arith.mulf %554, %554 : vector<16x32xf32>
    %cst_242 = arith.constant dense<0.000000e+00> : vector<16xf32>
    %556 = vector.multi_reduction <add>, %555, %cst_242 [1] : vector<16x32xf32> to vector<16xf32>
    %557 = vector.shape_cast %556 : vector<16xf32> to vector<16x1xf32>
    %cst_243 = arith.constant 3.200000e+01 : f32
    %558 = vector.broadcast %cst_243 : f32 to vector<16x1xf32>
    %559 = arith.divf %557, %558 : vector<16x1xf32>
    %560 = vector.broadcast %552 : vector<16x1xf32> to vector<16x32xf32>
    %561 = arith.subf %544, %560 : vector<16x32xf32>
    %cst_244 = arith.constant 9.99999974E-6 : f32
    %562 = vector.broadcast %cst_244 : f32 to vector<16x1xf32>
    %563 = arith.addf %559, %562 : vector<16x1xf32>
    %564 = math.rsqrt %563 : vector<16x1xf32>
    %565 = vector.broadcast %564 : vector<16x1xf32> to vector<16x32xf32>
    %566 = arith.mulf %561, %565 : vector<16x32xf32>
    %567 = vector.broadcast %546 : vector<1x32xf32> to vector<16x32xf32>
    %568 = arith.mulf %566, %567 : vector<16x32xf32>
    %569 = vector.broadcast %548 : vector<1x32xf32> to vector<16x32xf32>
    %570 = arith.addf %568, %569 : vector<16x32xf32>
    %c1_245 = arith.constant 1 : index
    %c192_246 = arith.constant 192 : index
    %c0_247 = arith.constant 0 : index
    %571 = vector.load %arg4[%c1_245, %c192_246, %c0_247] : memref<2x768x64xf32, #tpu.memory_space<vmem>>, vector<1x32x32xf32>
    %572 = vector.shape_cast %571 : vector<1x32x32xf32> to vector<32x32xf32>
    %cst_248 = arith.constant dense<0.000000e+00> : vector<16x32xf32>
    %573 = tpu.matmul %570, %572, %cst_248 {dimension_numbers = #tpu.dot_dimension_numbers<[1], [0], [0], [1], [0, 0, 1, 1], [], []>} : vector<16x32xf32>, vector<32x32xf32>, vector<16x32xf32> -> vector<16x32xf32>
    %c1_249 = arith.constant 1 : index
    %c224_250 = arith.constant 224 : index
    %c0_251 = arith.constant 0 : index
    %574 = vector.load %arg4[%c1_249, %c224_250, %c0_251] : memref<2x768x64xf32, #tpu.memory_space<vmem>>, vector<1x1x32xf32>
    %575 = vector.shape_cast %574 : vector<1x1x32xf32> to vector<1x32xf32>
    %576 = vector.broadcast %575 : vector<1x32xf32> to vector<16x32xf32>
    %577 = arith.addf %573, %576 : vector<16x32xf32>
    %c1_252 = arith.constant 1 : index
    %c232_253 = arith.constant 232 : index
    %c0_254 = arith.constant 0 : index
    %578 = vector.load %arg4[%c1_252, %c232_253, %c0_254] : memref<2x768x64xf32, #tpu.memory_space<vmem>>, vector<1x32x32xf32>
    %579 = vector.shape_cast %578 : vector<1x32x32xf32> to vector<32x32xf32>
    %cst_255 = arith.constant dense<0.000000e+00> : vector<16x32xf32>
    %580 = tpu.matmul %570, %579, %cst_255 {dimension_numbers = #tpu.dot_dimension_numbers<[1], [0], [0], [1], [0, 0, 1, 1], [], []>} : vector<16x32xf32>, vector<32x32xf32>, vector<16x32xf32> -> vector<16x32xf32>
    %c1_256 = arith.constant 1 : index
    %c264_257 = arith.constant 264 : index
    %c0_258 = arith.constant 0 : index
    %581 = vector.load %arg4[%c1_256, %c264_257, %c0_258] : memref<2x768x64xf32, #tpu.memory_space<vmem>>, vector<1x1x32xf32>
    %582 = vector.shape_cast %581 : vector<1x1x32xf32> to vector<1x32xf32>
    %583 = vector.broadcast %582 : vector<1x32xf32> to vector<16x32xf32>
    %584 = arith.addf %580, %583 : vector<16x32xf32>
    %c1_259 = arith.constant 1 : index
    %c272_260 = arith.constant 272 : index
    %c0_261 = arith.constant 0 : index
    %585 = vector.load %arg4[%c1_259, %c272_260, %c0_261] : memref<2x768x64xf32, #tpu.memory_space<vmem>>, vector<1x32x32xf32>
    %586 = vector.shape_cast %585 : vector<1x32x32xf32> to vector<32x32xf32>
    %cst_262 = arith.constant dense<0.000000e+00> : vector<16x32xf32>
    %587 = tpu.matmul %570, %586, %cst_262 {dimension_numbers = #tpu.dot_dimension_numbers<[1], [0], [0], [1], [0, 0, 1, 1], [], []>} : vector<16x32xf32>, vector<32x32xf32>, vector<16x32xf32> -> vector<16x32xf32>
    %c1_263 = arith.constant 1 : index
    %c304_264 = arith.constant 304 : index
    %c0_265 = arith.constant 0 : index
    %588 = vector.load %arg4[%c1_263, %c304_264, %c0_265] : memref<2x768x64xf32, #tpu.memory_space<vmem>>, vector<1x1x32xf32>
    %589 = vector.shape_cast %588 : vector<1x1x32xf32> to vector<1x32xf32>
    %590 = vector.broadcast %589 : vector<1x32xf32> to vector<16x32xf32>
    %591 = arith.addf %587, %590 : vector<16x32xf32>
    %c1_266 = arith.constant 1 : index
    %c312_267 = arith.constant 312 : index
    %c0_268 = arith.constant 0 : index
    %592 = vector.load %arg4[%c1_266, %c312_267, %c0_268] : memref<2x768x64xf32, #tpu.memory_space<vmem>>, vector<1x32x32xf32>
    %593 = vector.shape_cast %592 : vector<1x32x32xf32> to vector<32x32xf32>
    %cst_269 = arith.constant dense<0.000000e+00> : vector<16x32xf32>
    %594 = tpu.matmul %37, %593, %cst_269 {dimension_numbers = #tpu.dot_dimension_numbers<[1], [0], [0], [1], [0, 0, 1, 1], [], []>} : vector<16x32xf32>, vector<32x32xf32>, vector<16x32xf32> -> vector<16x32xf32>
    %c1_270 = arith.constant 1 : index
    %c344_271 = arith.constant 344 : index
    %c0_272 = arith.constant 0 : index
    %595 = vector.load %arg4[%c1_270, %c344_271, %c0_272] : memref<2x768x64xf32, #tpu.memory_space<vmem>>, vector<1x1x32xf32>
    %596 = vector.shape_cast %595 : vector<1x1x32xf32> to vector<1x32xf32>
    %597 = vector.broadcast %596 : vector<1x32xf32> to vector<16x32xf32>
    %598 = arith.addf %577, %597 : vector<16x32xf32>
    %cst_273 = arith.constant dense<0.000000e+00> : vector<64x32xf32>
    %599 = tpu.matmul %34, %598, %cst_273 {dimension_numbers = #tpu.dot_dimension_numbers<[1], [0], [0], [1], [0, 0, 1, 1], [], []>} : vector<64x16xf32>, vector<16x32xf32>, vector<64x32xf32> -> vector<64x32xf32>
    %600 = arith.mulf %599, %36 : vector<64x32xf32>
    %c1_274 = arith.constant 1 : index
    %c352_275 = arith.constant 352 : index
    %c0_276 = arith.constant 0 : index
    %601 = vector.load %arg4[%c1_274, %c352_275, %c0_276] : memref<2x768x64xf32, #tpu.memory_space<vmem>>, vector<1x1x32xf32>
    %602 = vector.shape_cast %601 : vector<1x1x32xf32> to vector<1x32xf32>
    %603 = vector.broadcast %602 : vector<1x32xf32> to vector<16x32xf32>
    %604 = arith.addf %577, %603 : vector<16x32xf32>
    %cst_277 = arith.constant dense<0.000000e+00> : vector<64x32xf32>
    %605 = tpu.matmul %34, %604, %cst_277 {dimension_numbers = #tpu.dot_dimension_numbers<[1], [0], [0], [1], [0, 0, 1, 1], [], []>} : vector<64x16xf32>, vector<16x32xf32>, vector<64x32xf32> -> vector<64x32xf32>
    %606 = arith.mulf %605, %36 : vector<64x32xf32>
    %cst_278 = arith.constant dense<0.000000e+00> : vector<64x16xf32>
    %607 = tpu.matmul %600, %584, %cst_278 {dimension_numbers = #tpu.dot_dimension_numbers<[1], [1], [0], [0], [0, 0, 1, 0], [], []>} : vector<64x32xf32>, vector<16x32xf32>, vector<64x16xf32> -> vector<64x16xf32>
    %cst_279 = arith.constant dense<0.000000e+00> : vector<64x16xf32>
    %608 = tpu.matmul %606, %594, %cst_279 {dimension_numbers = #tpu.dot_dimension_numbers<[1], [1], [0], [0], [0, 0, 1, 0], [], []>} : vector<64x32xf32>, vector<16x32xf32>, vector<64x16xf32> -> vector<64x16xf32>
    %609 = arith.addf %607, %608 : vector<64x16xf32>
    %cst_280 = arith.constant 0.353553385 : f32
    %610 = vector.broadcast %cst_280 : f32 to vector<64x16xf32>
    %611 = arith.mulf %609, %610 : vector<64x16xf32>
    %612 = arith.addf %611, %42 : vector<64x16xf32>
    %cst_281 = arith.constant dense<0xFF800000> : vector<64xf32>
    %613 = vector.multi_reduction <maximumf>, %612, %cst_281 [1] : vector<64x16xf32> to vector<64xf32>
    %614 = vector.shape_cast %613 : vector<64xf32> to vector<64x1xf32>
    %615 = vector.broadcast %614 : vector<64x1xf32> to vector<64x16xf32>
    %616 = arith.subf %612, %615 : vector<64x16xf32>
    %617 = math.exp %616 : vector<64x16xf32>
    %cst_282 = arith.constant dense<0.000000e+00> : vector<64xf32>
    %618 = vector.multi_reduction <add>, %617, %cst_282 [1] : vector<64x16xf32> to vector<64xf32>
    %619 = vector.shape_cast %618 : vector<64xf32> to vector<64x1xf32>
    %620 = tpu.reciprocal %619 {approx = true} : vector<64x1xf32> -> vector<64x1xf32>
    %621 = vector.broadcast %620 : vector<64x1xf32> to vector<64x16xf32>
    %622 = arith.mulf %617, %621 : vector<64x16xf32>
    %cst_283 = arith.constant dense<0.000000e+00> : vector<64x32xf32>
    %623 = tpu.matmul %622, %591, %cst_283 {dimension_numbers = #tpu.dot_dimension_numbers<[1], [0], [0], [1], [0, 0, 1, 1], [], []>} : vector<64x16xf32>, vector<16x32xf32>, vector<64x32xf32> -> vector<64x32xf32>
    %624 = arith.mulf %623, %36 : vector<64x32xf32>
    %cst_284 = arith.constant dense<0.000000e+00> : vector<16x32xf32>
    %625 = tpu.matmul %35, %624, %cst_284 {dimension_numbers = #tpu.dot_dimension_numbers<[1], [0], [0], [1], [0, 0, 1, 1], [], []>} : vector<16x64xf32>, vector<64x32xf32>, vector<16x32xf32> -> vector<16x32xf32>
    %c1_285 = arith.constant 1 : index
    %c360_286 = arith.constant 360 : index
    %c0_287 = arith.constant 0 : index
    %626 = vector.load %arg4[%c1_285, %c360_286, %c0_287] : memref<2x768x64xf32, #tpu.memory_space<vmem>>, vector<1x32x32xf32>
    %627 = vector.shape_cast %626 : vector<1x32x32xf32> to vector<32x32xf32>
    %cst_288 = arith.constant dense<0.000000e+00> : vector<16x32xf32>
    %628 = tpu.matmul %625, %627, %cst_288 {dimension_numbers = #tpu.dot_dimension_numbers<[1], [0], [0], [1], [0, 0, 1, 1], [], []>} : vector<16x32xf32>, vector<32x32xf32>, vector<16x32xf32> -> vector<16x32xf32>
    %c1_289 = arith.constant 1 : index
    %c392_290 = arith.constant 392 : index
    %c0_291 = arith.constant 0 : index
    %629 = vector.load %arg4[%c1_289, %c392_290, %c0_291] : memref<2x768x64xf32, #tpu.memory_space<vmem>>, vector<1x1x32xf32>
    %630 = vector.shape_cast %629 : vector<1x1x32xf32> to vector<1x32xf32>
    %631 = vector.broadcast %630 : vector<1x32xf32> to vector<16x32xf32>
    %632 = arith.addf %628, %631 : vector<16x32xf32>
    %c1_292 = arith.constant 1 : index
    %c32_293 = arith.constant 32 : index
    %c0_294 = arith.constant 0 : index
    %633 = vector.load %arg4[%c1_292, %c32_293, %c0_294] : memref<2x768x64xf32, #tpu.memory_space<vmem>>, vector<1x1x32xf32>
    %634 = vector.shape_cast %633 : vector<1x1x32xf32> to vector<1x32xf32>
    %c1_295 = arith.constant 1 : index
    %c40_296 = arith.constant 40 : index
    %c0_297 = arith.constant 0 : index
    %635 = vector.load %arg4[%c1_295, %c40_296, %c0_297] : memref<2x768x64xf32, #tpu.memory_space<vmem>>, vector<1x1x32xf32>
    %636 = vector.shape_cast %635 : vector<1x1x32xf32> to vector<1x32xf32>
    %cst_298 = arith.constant dense<0.000000e+00> : vector<16xf32>
    %637 = vector.multi_reduction <add>, %544, %cst_298 [1] : vector<16x32xf32> to vector<16xf32>
    %638 = vector.shape_cast %637 : vector<16xf32> to vector<16x1xf32>
    %cst_299 = arith.constant 3.200000e+01 : f32
    %639 = vector.broadcast %cst_299 : f32 to vector<16x1xf32>
    %640 = arith.divf %638, %639 : vector<16x1xf32>
    %641 = vector.broadcast %640 : vector<16x1xf32> to vector<16x32xf32>
    %642 = arith.subf %544, %641 : vector<16x32xf32>
    %643 = arith.mulf %642, %642 : vector<16x32xf32>
    %cst_300 = arith.constant dense<0.000000e+00> : vector<16xf32>
    %644 = vector.multi_reduction <add>, %643, %cst_300 [1] : vector<16x32xf32> to vector<16xf32>
    %645 = vector.shape_cast %644 : vector<16xf32> to vector<16x1xf32>
    %cst_301 = arith.constant 3.200000e+01 : f32
    %646 = vector.broadcast %cst_301 : f32 to vector<16x1xf32>
    %647 = arith.divf %645, %646 : vector<16x1xf32>
    %648 = vector.broadcast %640 : vector<16x1xf32> to vector<16x32xf32>
    %649 = arith.subf %544, %648 : vector<16x32xf32>
    %cst_302 = arith.constant 9.99999974E-6 : f32
    %650 = vector.broadcast %cst_302 : f32 to vector<16x1xf32>
    %651 = arith.addf %647, %650 : vector<16x1xf32>
    %652 = math.rsqrt %651 : vector<16x1xf32>
    %653 = vector.broadcast %652 : vector<16x1xf32> to vector<16x32xf32>
    %654 = arith.mulf %649, %653 : vector<16x32xf32>
    %655 = vector.broadcast %634 : vector<1x32xf32> to vector<16x32xf32>
    %656 = arith.mulf %654, %655 : vector<16x32xf32>
    %657 = vector.broadcast %636 : vector<1x32xf32> to vector<16x32xf32>
    %658 = arith.addf %656, %657 : vector<16x32xf32>
    %c1_303 = arith.constant 1 : index
    %c400_304 = arith.constant 400 : index
    %c0_305 = arith.constant 0 : index
    %659 = vector.load %arg4[%c1_303, %c400_304, %c0_305] : memref<2x768x64xf32, #tpu.memory_space<vmem>>, vector<1x32x32xf32>
    %660 = vector.shape_cast %659 : vector<1x32x32xf32> to vector<32x32xf32>
    %cst_306 = arith.constant dense<0.000000e+00> : vector<16x32xf32>
    %661 = tpu.matmul %658, %660, %cst_306 {dimension_numbers = #tpu.dot_dimension_numbers<[1], [0], [0], [1], [0, 0, 1, 1], [], []>} : vector<16x32xf32>, vector<32x32xf32>, vector<16x32xf32> -> vector<16x32xf32>
    %c1_307 = arith.constant 1 : index
    %c432_308 = arith.constant 432 : index
    %c0_309 = arith.constant 0 : index
    %662 = vector.load %arg4[%c1_307, %c432_308, %c0_309] : memref<2x768x64xf32, #tpu.memory_space<vmem>>, vector<1x1x32xf32>
    %663 = vector.shape_cast %662 : vector<1x1x32xf32> to vector<1x32xf32>
    %664 = vector.broadcast %663 : vector<1x32xf32> to vector<16x32xf32>
    %665 = arith.addf %661, %664 : vector<16x32xf32>
    %cst_310 = arith.constant 5.000000e-01 : f32
    %666 = vector.broadcast %cst_310 : f32 to vector<16x32xf32>
    %667 = arith.mulf %666, %665 : vector<16x32xf32>
    %cst_311 = arith.constant 4.471500e-02 : f32
    %668 = vector.broadcast %cst_311 : f32 to vector<16x32xf32>
    %669 = arith.mulf %668, %665 : vector<16x32xf32>
    %670 = arith.mulf %669, %665 : vector<16x32xf32>
    %671 = arith.mulf %670, %665 : vector<16x32xf32>
    %672 = arith.addf %665, %671 : vector<16x32xf32>
    %cst_312 = arith.constant 0.797884583 : f32
    %673 = vector.broadcast %cst_312 : f32 to vector<16x32xf32>
    %674 = arith.mulf %673, %672 : vector<16x32xf32>
    %675 = math.tanh %674 : vector<16x32xf32>
    %cst_313 = arith.constant 1.000000e+00 : f32
    %676 = vector.broadcast %cst_313 : f32 to vector<16x32xf32>
    %677 = arith.addf %676, %675 : vector<16x32xf32>
    %678 = arith.mulf %667, %677 : vector<16x32xf32>
    %c1_314 = arith.constant 1 : index
    %c440_315 = arith.constant 440 : index
    %c0_316 = arith.constant 0 : index
    %679 = vector.load %arg4[%c1_314, %c440_315, %c0_316] : memref<2x768x64xf32, #tpu.memory_space<vmem>>, vector<1x32x32xf32>
    %680 = vector.shape_cast %679 : vector<1x32x32xf32> to vector<32x32xf32>
    %cst_317 = arith.constant dense<0.000000e+00> : vector<16x32xf32>
    %681 = tpu.matmul %658, %680, %cst_317 {dimension_numbers = #tpu.dot_dimension_numbers<[1], [0], [0], [1], [0, 0, 1, 1], [], []>} : vector<16x32xf32>, vector<32x32xf32>, vector<16x32xf32> -> vector<16x32xf32>
    %c1_318 = arith.constant 1 : index
    %c472_319 = arith.constant 472 : index
    %c0_320 = arith.constant 0 : index
    %682 = vector.load %arg4[%c1_318, %c472_319, %c0_320] : memref<2x768x64xf32, #tpu.memory_space<vmem>>, vector<1x1x32xf32>
    %683 = vector.shape_cast %682 : vector<1x1x32xf32> to vector<1x32xf32>
    %684 = vector.broadcast %683 : vector<1x32xf32> to vector<16x32xf32>
    %685 = arith.addf %681, %684 : vector<16x32xf32>
    %cst_321 = arith.constant 5.000000e-01 : f32
    %686 = vector.broadcast %cst_321 : f32 to vector<16x32xf32>
    %687 = arith.mulf %686, %685 : vector<16x32xf32>
    %cst_322 = arith.constant 4.471500e-02 : f32
    %688 = vector.broadcast %cst_322 : f32 to vector<16x32xf32>
    %689 = arith.mulf %688, %685 : vector<16x32xf32>
    %690 = arith.mulf %689, %685 : vector<16x32xf32>
    %691 = arith.mulf %690, %685 : vector<16x32xf32>
    %692 = arith.addf %685, %691 : vector<16x32xf32>
    %cst_323 = arith.constant 0.797884583 : f32
    %693 = vector.broadcast %cst_323 : f32 to vector<16x32xf32>
    %694 = arith.mulf %693, %692 : vector<16x32xf32>
    %695 = math.tanh %694 : vector<16x32xf32>
    %cst_324 = arith.constant 1.000000e+00 : f32
    %696 = vector.broadcast %cst_324 : f32 to vector<16x32xf32>
    %697 = arith.addf %696, %695 : vector<16x32xf32>
    %698 = arith.mulf %687, %697 : vector<16x32xf32>
    %699 = vector.broadcast %51 : vector<16x1xf32> to vector<16x32xf32>
    %700 = arith.mulf %698, %699 : vector<16x32xf32>
    %c1_325 = arith.constant 1 : index
    %c480_326 = arith.constant 480 : index
    %c0_327 = arith.constant 0 : index
    %701 = vector.load %arg4[%c1_325, %c480_326, %c0_327] : memref<2x768x64xf32, #tpu.memory_space<vmem>>, vector<1x1x32xf32>
    %702 = vector.shape_cast %701 : vector<1x1x32xf32> to vector<1x32xf32>
    %c1_328 = arith.constant 1 : index
    %c488_329 = arith.constant 488 : index
    %c0_330 = arith.constant 0 : index
    %703 = vector.load %arg4[%c1_328, %c488_329, %c0_330] : memref<2x768x64xf32, #tpu.memory_space<vmem>>, vector<1x1x32xf32>
    %704 = vector.shape_cast %703 : vector<1x1x32xf32> to vector<1x32xf32>
    %cst_331 = arith.constant dense<0.000000e+00> : vector<16xf32>
    %705 = vector.multi_reduction <add>, %700, %cst_331 [1] : vector<16x32xf32> to vector<16xf32>
    %706 = vector.shape_cast %705 : vector<16xf32> to vector<16x1xf32>
    %cst_332 = arith.constant 3.200000e+01 : f32
    %707 = vector.broadcast %cst_332 : f32 to vector<16x1xf32>
    %708 = arith.divf %706, %707 : vector<16x1xf32>
    %709 = vector.broadcast %708 : vector<16x1xf32> to vector<16x32xf32>
    %710 = arith.subf %700, %709 : vector<16x32xf32>
    %711 = arith.mulf %710, %710 : vector<16x32xf32>
    %cst_333 = arith.constant dense<0.000000e+00> : vector<16xf32>
    %712 = vector.multi_reduction <add>, %711, %cst_333 [1] : vector<16x32xf32> to vector<16xf32>
    %713 = vector.shape_cast %712 : vector<16xf32> to vector<16x1xf32>
    %cst_334 = arith.constant 3.200000e+01 : f32
    %714 = vector.broadcast %cst_334 : f32 to vector<16x1xf32>
    %715 = arith.divf %713, %714 : vector<16x1xf32>
    %716 = vector.broadcast %708 : vector<16x1xf32> to vector<16x32xf32>
    %717 = arith.subf %700, %716 : vector<16x32xf32>
    %cst_335 = arith.constant 9.99999974E-6 : f32
    %718 = vector.broadcast %cst_335 : f32 to vector<16x1xf32>
    %719 = arith.addf %715, %718 : vector<16x1xf32>
    %720 = math.rsqrt %719 : vector<16x1xf32>
    %721 = vector.broadcast %720 : vector<16x1xf32> to vector<16x32xf32>
    %722 = arith.mulf %717, %721 : vector<16x32xf32>
    %723 = vector.broadcast %702 : vector<1x32xf32> to vector<16x32xf32>
    %724 = arith.mulf %722, %723 : vector<16x32xf32>
    %725 = vector.broadcast %704 : vector<1x32xf32> to vector<16x32xf32>
    %726 = arith.addf %724, %725 : vector<16x32xf32>
    %c1_336 = arith.constant 1 : index
    %c496_337 = arith.constant 496 : index
    %c0_338 = arith.constant 0 : index
    %727 = vector.load %arg4[%c1_336, %c496_337, %c0_338] : memref<2x768x64xf32, #tpu.memory_space<vmem>>, vector<1x7x32xf32>
    %728 = vector.shape_cast %727 : vector<1x7x32xf32> to vector<7x32xf32>
    %c1_339 = arith.constant 1 : index
    %c504_340 = arith.constant 504 : index
    %c0_341 = arith.constant 0 : index
    %729 = vector.load %arg4[%c1_339, %c504_340, %c0_341] : memref<2x768x64xf32, #tpu.memory_space<vmem>>, vector<1x1x32xf32>
    %730 = vector.shape_cast %729 : vector<1x1x32xf32> to vector<1x32xf32>
    %c3_i32_342 = arith.constant 3 : i32
    %731 = tpu.dynamic_rotate %726 by %c3_i32_342 dim 0 : vector<16x32xf32>, i32 -> vector<16x32xf32>
    %732 = vector.extract_strided_slice %728 {offsets = [0, 0], sizes = [1, 32], strides = [1, 1]} : vector<7x32xf32> to vector<1x32xf32>
    %733 = vector.broadcast %732 : vector<1x32xf32> to vector<16x32xf32>
    %734 = arith.mulf %733, %731 : vector<16x32xf32>
    %735 = vector.extract_strided_slice %38 {offsets = [0, 0], sizes = [16, 1], strides = [1, 1]} : vector<16x7xf32> to vector<16x1xf32>
    %736 = vector.broadcast %735 : vector<16x1xf32> to vector<16x32xf32>
    %737 = arith.mulf %734, %736 : vector<16x32xf32>
    %c2_i32_343 = arith.constant 2 : i32
    %738 = tpu.dynamic_rotate %726 by %c2_i32_343 dim 0 : vector<16x32xf32>, i32 -> vector<16x32xf32>
    %739 = vector.extract_strided_slice %728 {offsets = [1, 0], sizes = [1, 32], strides = [1, 1]} : vector<7x32xf32> to vector<1x32xf32>
    %740 = vector.broadcast %739 : vector<1x32xf32> to vector<16x32xf32>
    %741 = arith.mulf %740, %738 : vector<16x32xf32>
    %742 = vector.extract_strided_slice %38 {offsets = [0, 1], sizes = [16, 1], strides = [1, 1]} : vector<16x7xf32> to vector<16x1xf32>
    %743 = vector.broadcast %742 : vector<16x1xf32> to vector<16x32xf32>
    %744 = arith.mulf %741, %743 : vector<16x32xf32>
    %745 = arith.addf %737, %744 : vector<16x32xf32>
    %c1_i32_344 = arith.constant 1 : i32
    %746 = tpu.dynamic_rotate %726 by %c1_i32_344 dim 0 : vector<16x32xf32>, i32 -> vector<16x32xf32>
    %747 = vector.extract_strided_slice %728 {offsets = [2, 0], sizes = [1, 32], strides = [1, 1]} : vector<7x32xf32> to vector<1x32xf32>
    %748 = vector.broadcast %747 : vector<1x32xf32> to vector<16x32xf32>
    %749 = arith.mulf %748, %746 : vector<16x32xf32>
    %750 = vector.extract_strided_slice %38 {offsets = [0, 2], sizes = [16, 1], strides = [1, 1]} : vector<16x7xf32> to vector<16x1xf32>
    %751 = vector.broadcast %750 : vector<16x1xf32> to vector<16x32xf32>
    %752 = arith.mulf %749, %751 : vector<16x32xf32>
    %753 = arith.addf %745, %752 : vector<16x32xf32>
    %754 = vector.extract_strided_slice %728 {offsets = [3, 0], sizes = [1, 32], strides = [1, 1]} : vector<7x32xf32> to vector<1x32xf32>
    %755 = vector.broadcast %754 : vector<1x32xf32> to vector<16x32xf32>
    %756 = arith.mulf %755, %726 : vector<16x32xf32>
    %757 = vector.extract_strided_slice %38 {offsets = [0, 3], sizes = [16, 1], strides = [1, 1]} : vector<16x7xf32> to vector<16x1xf32>
    %758 = vector.broadcast %757 : vector<16x1xf32> to vector<16x32xf32>
    %759 = arith.mulf %756, %758 : vector<16x32xf32>
    %760 = arith.addf %753, %759 : vector<16x32xf32>
    %c15_i32_345 = arith.constant 15 : i32
    %761 = tpu.dynamic_rotate %726 by %c15_i32_345 dim 0 : vector<16x32xf32>, i32 -> vector<16x32xf32>
    %762 = vector.extract_strided_slice %728 {offsets = [4, 0], sizes = [1, 32], strides = [1, 1]} : vector<7x32xf32> to vector<1x32xf32>
    %763 = vector.broadcast %762 : vector<1x32xf32> to vector<16x32xf32>
    %764 = arith.mulf %763, %761 : vector<16x32xf32>
    %765 = vector.extract_strided_slice %38 {offsets = [0, 4], sizes = [16, 1], strides = [1, 1]} : vector<16x7xf32> to vector<16x1xf32>
    %766 = vector.broadcast %765 : vector<16x1xf32> to vector<16x32xf32>
    %767 = arith.mulf %764, %766 : vector<16x32xf32>
    %768 = arith.addf %760, %767 : vector<16x32xf32>
    %c14_i32_346 = arith.constant 14 : i32
    %769 = tpu.dynamic_rotate %726 by %c14_i32_346 dim 0 : vector<16x32xf32>, i32 -> vector<16x32xf32>
    %770 = vector.extract_strided_slice %728 {offsets = [5, 0], sizes = [1, 32], strides = [1, 1]} : vector<7x32xf32> to vector<1x32xf32>
    %771 = vector.broadcast %770 : vector<1x32xf32> to vector<16x32xf32>
    %772 = arith.mulf %771, %769 : vector<16x32xf32>
    %773 = vector.extract_strided_slice %38 {offsets = [0, 5], sizes = [16, 1], strides = [1, 1]} : vector<16x7xf32> to vector<16x1xf32>
    %774 = vector.broadcast %773 : vector<16x1xf32> to vector<16x32xf32>
    %775 = arith.mulf %772, %774 : vector<16x32xf32>
    %776 = arith.addf %768, %775 : vector<16x32xf32>
    %c13_i32_347 = arith.constant 13 : i32
    %777 = tpu.dynamic_rotate %726 by %c13_i32_347 dim 0 : vector<16x32xf32>, i32 -> vector<16x32xf32>
    %778 = vector.extract_strided_slice %728 {offsets = [6, 0], sizes = [1, 32], strides = [1, 1]} : vector<7x32xf32> to vector<1x32xf32>
    %779 = vector.broadcast %778 : vector<1x32xf32> to vector<16x32xf32>
    %780 = arith.mulf %779, %777 : vector<16x32xf32>
    %781 = vector.extract_strided_slice %38 {offsets = [0, 6], sizes = [16, 1], strides = [1, 1]} : vector<16x7xf32> to vector<16x1xf32>
    %782 = vector.broadcast %781 : vector<16x1xf32> to vector<16x32xf32>
    %783 = arith.mulf %780, %782 : vector<16x32xf32>
    %784 = arith.addf %776, %783 : vector<16x32xf32>
    %785 = vector.broadcast %730 : vector<1x32xf32> to vector<16x32xf32>
    %786 = arith.addf %784, %785 : vector<16x32xf32>
    %787 = arith.mulf %678, %786 : vector<16x32xf32>
    %c1_348 = arith.constant 1 : index
    %c512_349 = arith.constant 512 : index
    %c0_350 = arith.constant 0 : index
    %788 = vector.load %arg4[%c1_348, %c512_349, %c0_350] : memref<2x768x64xf32, #tpu.memory_space<vmem>>, vector<1x32x32xf32>
    %789 = vector.shape_cast %788 : vector<1x32x32xf32> to vector<32x32xf32>
    %cst_351 = arith.constant dense<0.000000e+00> : vector<16x32xf32>
    %790 = tpu.matmul %787, %789, %cst_351 {dimension_numbers = #tpu.dot_dimension_numbers<[1], [0], [0], [1], [0, 0, 1, 1], [], []>} : vector<16x32xf32>, vector<32x32xf32>, vector<16x32xf32> -> vector<16x32xf32>
    %c1_352 = arith.constant 1 : index
    %c544_353 = arith.constant 544 : index
    %c0_354 = arith.constant 0 : index
    %791 = vector.load %arg4[%c1_352, %c544_353, %c0_354] : memref<2x768x64xf32, #tpu.memory_space<vmem>>, vector<1x1x32xf32>
    %792 = vector.shape_cast %791 : vector<1x1x32xf32> to vector<1x32xf32>
    %793 = vector.broadcast %792 : vector<1x32xf32> to vector<16x32xf32>
    %794 = arith.addf %790, %793 : vector<16x32xf32>
    %c1_355 = arith.constant 1 : index
    %c552_356 = arith.constant 552 : index
    %c0_357 = arith.constant 0 : index
    %795 = vector.load %arg4[%c1_355, %c552_356, %c0_357] : memref<2x768x64xf32, #tpu.memory_space<vmem>>, vector<1x3x32xf32>
    %796 = vector.shape_cast %795 : vector<1x3x32xf32> to vector<3x32xf32>
    %c1_358 = arith.constant 1 : index
    %c560_359 = arith.constant 560 : index
    %c0_360 = arith.constant 0 : index
    %797 = vector.load %arg4[%c1_358, %c560_359, %c0_360] : memref<2x768x64xf32, #tpu.memory_space<vmem>>, vector<1x1x32xf32>
    %798 = vector.shape_cast %797 : vector<1x1x32xf32> to vector<1x32xf32>
    %c1_i32_361 = arith.constant 1 : i32
    %799 = tpu.dynamic_rotate %632 by %c1_i32_361 dim 0 : vector<16x32xf32>, i32 -> vector<16x32xf32>
    %800 = vector.extract_strided_slice %796 {offsets = [0, 0], sizes = [1, 32], strides = [1, 1]} : vector<3x32xf32> to vector<1x32xf32>
    %801 = vector.broadcast %800 : vector<1x32xf32> to vector<16x32xf32>
    %802 = arith.mulf %801, %799 : vector<16x32xf32>
    %803 = vector.extract_strided_slice %38 {offsets = [0, 2], sizes = [16, 1], strides = [1, 1]} : vector<16x7xf32> to vector<16x1xf32>
    %804 = vector.broadcast %803 : vector<16x1xf32> to vector<16x32xf32>
    %805 = arith.mulf %802, %804 : vector<16x32xf32>
    %806 = vector.extract_strided_slice %796 {offsets = [1, 0], sizes = [1, 32], strides = [1, 1]} : vector<3x32xf32> to vector<1x32xf32>
    %807 = vector.broadcast %806 : vector<1x32xf32> to vector<16x32xf32>
    %808 = arith.mulf %807, %632 : vector<16x32xf32>
    %809 = vector.extract_strided_slice %38 {offsets = [0, 3], sizes = [16, 1], strides = [1, 1]} : vector<16x7xf32> to vector<16x1xf32>
    %810 = vector.broadcast %809 : vector<16x1xf32> to vector<16x32xf32>
    %811 = arith.mulf %808, %810 : vector<16x32xf32>
    %812 = arith.addf %805, %811 : vector<16x32xf32>
    %c15_i32_362 = arith.constant 15 : i32
    %813 = tpu.dynamic_rotate %632 by %c15_i32_362 dim 0 : vector<16x32xf32>, i32 -> vector<16x32xf32>
    %814 = vector.extract_strided_slice %796 {offsets = [2, 0], sizes = [1, 32], strides = [1, 1]} : vector<3x32xf32> to vector<1x32xf32>
    %815 = vector.broadcast %814 : vector<1x32xf32> to vector<16x32xf32>
    %816 = arith.mulf %815, %813 : vector<16x32xf32>
    %817 = vector.extract_strided_slice %38 {offsets = [0, 4], sizes = [16, 1], strides = [1, 1]} : vector<16x7xf32> to vector<16x1xf32>
    %818 = vector.broadcast %817 : vector<16x1xf32> to vector<16x32xf32>
    %819 = arith.mulf %816, %818 : vector<16x32xf32>
    %820 = arith.addf %812, %819 : vector<16x32xf32>
    %821 = vector.broadcast %798 : vector<1x32xf32> to vector<16x32xf32>
    %822 = arith.addf %820, %821 : vector<16x32xf32>
    %c1_363 = arith.constant 1 : index
    %c568_364 = arith.constant 568 : index
    %c0_365 = arith.constant 0 : index
    %823 = vector.load %arg4[%c1_363, %c568_364, %c0_365] : memref<2x768x64xf32, #tpu.memory_space<vmem>>, vector<1x3x32xf32>
    %824 = vector.shape_cast %823 : vector<1x3x32xf32> to vector<3x32xf32>
    %c1_366 = arith.constant 1 : index
    %c576_367 = arith.constant 576 : index
    %c0_368 = arith.constant 0 : index
    %825 = vector.load %arg4[%c1_366, %c576_367, %c0_368] : memref<2x768x64xf32, #tpu.memory_space<vmem>>, vector<1x1x32xf32>
    %826 = vector.shape_cast %825 : vector<1x1x32xf32> to vector<1x32xf32>
    %c1_i32_369 = arith.constant 1 : i32
    %827 = tpu.dynamic_rotate %794 by %c1_i32_369 dim 0 : vector<16x32xf32>, i32 -> vector<16x32xf32>
    %828 = vector.extract_strided_slice %824 {offsets = [0, 0], sizes = [1, 32], strides = [1, 1]} : vector<3x32xf32> to vector<1x32xf32>
    %829 = vector.broadcast %828 : vector<1x32xf32> to vector<16x32xf32>
    %830 = arith.mulf %829, %827 : vector<16x32xf32>
    %831 = vector.extract_strided_slice %38 {offsets = [0, 2], sizes = [16, 1], strides = [1, 1]} : vector<16x7xf32> to vector<16x1xf32>
    %832 = vector.broadcast %831 : vector<16x1xf32> to vector<16x32xf32>
    %833 = arith.mulf %830, %832 : vector<16x32xf32>
    %834 = vector.extract_strided_slice %824 {offsets = [1, 0], sizes = [1, 32], strides = [1, 1]} : vector<3x32xf32> to vector<1x32xf32>
    %835 = vector.broadcast %834 : vector<1x32xf32> to vector<16x32xf32>
    %836 = arith.mulf %835, %794 : vector<16x32xf32>
    %837 = vector.extract_strided_slice %38 {offsets = [0, 3], sizes = [16, 1], strides = [1, 1]} : vector<16x7xf32> to vector<16x1xf32>
    %838 = vector.broadcast %837 : vector<16x1xf32> to vector<16x32xf32>
    %839 = arith.mulf %836, %838 : vector<16x32xf32>
    %840 = arith.addf %833, %839 : vector<16x32xf32>
    %c15_i32_370 = arith.constant 15 : i32
    %841 = tpu.dynamic_rotate %794 by %c15_i32_370 dim 0 : vector<16x32xf32>, i32 -> vector<16x32xf32>
    %842 = vector.extract_strided_slice %824 {offsets = [2, 0], sizes = [1, 32], strides = [1, 1]} : vector<3x32xf32> to vector<1x32xf32>
    %843 = vector.broadcast %842 : vector<1x32xf32> to vector<16x32xf32>
    %844 = arith.mulf %843, %841 : vector<16x32xf32>
    %845 = vector.extract_strided_slice %38 {offsets = [0, 4], sizes = [16, 1], strides = [1, 1]} : vector<16x7xf32> to vector<16x1xf32>
    %846 = vector.broadcast %845 : vector<16x1xf32> to vector<16x32xf32>
    %847 = arith.mulf %844, %846 : vector<16x32xf32>
    %848 = arith.addf %840, %847 : vector<16x32xf32>
    %849 = vector.broadcast %826 : vector<1x32xf32> to vector<16x32xf32>
    %850 = arith.addf %848, %849 : vector<16x32xf32>
    %851 = arith.addf %632, %822 : vector<16x32xf32>
    %c1_371 = arith.constant 1 : index
    %c584_372 = arith.constant 584 : index
    %c0_373 = arith.constant 0 : index
    %852 = vector.load %arg4[%c1_371, %c584_372, %c0_373] : memref<2x768x64xf32, #tpu.memory_space<vmem>>, vector<1x32x32xf32>
    %853 = vector.shape_cast %852 : vector<1x32x32xf32> to vector<32x32xf32>
    %cst_374 = arith.constant dense<0.000000e+00> : vector<16x32xf32>
    %854 = tpu.matmul %851, %853, %cst_374 {dimension_numbers = #tpu.dot_dimension_numbers<[1], [0], [0], [1], [0, 0, 1, 1], [], []>} : vector<16x32xf32>, vector<32x32xf32>, vector<16x32xf32> -> vector<16x32xf32>
    %855 = arith.addf %794, %850 : vector<16x32xf32>
    %c1_375 = arith.constant 1 : index
    %c616_376 = arith.constant 616 : index
    %c0_377 = arith.constant 0 : index
    %856 = vector.load %arg4[%c1_375, %c616_376, %c0_377] : memref<2x768x64xf32, #tpu.memory_space<vmem>>, vector<1x32x32xf32>
    %857 = vector.shape_cast %856 : vector<1x32x32xf32> to vector<32x32xf32>
    %cst_378 = arith.constant dense<0.000000e+00> : vector<16x32xf32>
    %858 = tpu.matmul %855, %857, %cst_378 {dimension_numbers = #tpu.dot_dimension_numbers<[1], [0], [0], [1], [0, 0, 1, 1], [], []>} : vector<16x32xf32>, vector<32x32xf32>, vector<16x32xf32> -> vector<16x32xf32>
    %859 = arith.addf %854, %858 : vector<16x32xf32>
    %c1_379 = arith.constant 1 : index
    %c648_380 = arith.constant 648 : index
    %c0_381 = arith.constant 0 : index
    %860 = vector.load %arg4[%c1_379, %c648_380, %c0_381] : memref<2x768x64xf32, #tpu.memory_space<vmem>>, vector<1x1x32xf32>
    %861 = vector.shape_cast %860 : vector<1x1x32xf32> to vector<1x32xf32>
    %862 = vector.broadcast %861 : vector<1x32xf32> to vector<16x32xf32>
    %863 = arith.addf %859, %862 : vector<16x32xf32>
    %864 = arith.addf %544, %863 : vector<16x32xf32>
    %c1_382 = arith.constant 1 : index
    %c48_383 = arith.constant 48 : index
    %c0_384 = arith.constant 0 : index
    %865 = vector.load %arg4[%c1_382, %c48_383, %c0_384] : memref<2x768x64xf32, #tpu.memory_space<vmem>>, vector<1x1x32xf32>
    %866 = vector.shape_cast %865 : vector<1x1x32xf32> to vector<1x32xf32>
    %c1_385 = arith.constant 1 : index
    %c56_386 = arith.constant 56 : index
    %c0_387 = arith.constant 0 : index
    %867 = vector.load %arg4[%c1_385, %c56_386, %c0_387] : memref<2x768x64xf32, #tpu.memory_space<vmem>>, vector<1x1x32xf32>
    %868 = vector.shape_cast %867 : vector<1x1x32xf32> to vector<1x32xf32>
    %cst_388 = arith.constant dense<0.000000e+00> : vector<16xf32>
    %869 = vector.multi_reduction <add>, %864, %cst_388 [1] : vector<16x32xf32> to vector<16xf32>
    %870 = vector.shape_cast %869 : vector<16xf32> to vector<16x1xf32>
    %cst_389 = arith.constant 3.200000e+01 : f32
    %871 = vector.broadcast %cst_389 : f32 to vector<16x1xf32>
    %872 = arith.divf %870, %871 : vector<16x1xf32>
    %873 = vector.broadcast %872 : vector<16x1xf32> to vector<16x32xf32>
    %874 = arith.subf %864, %873 : vector<16x32xf32>
    %875 = arith.mulf %874, %874 : vector<16x32xf32>
    %cst_390 = arith.constant dense<0.000000e+00> : vector<16xf32>
    %876 = vector.multi_reduction <add>, %875, %cst_390 [1] : vector<16x32xf32> to vector<16xf32>
    %877 = vector.shape_cast %876 : vector<16xf32> to vector<16x1xf32>
    %cst_391 = arith.constant 3.200000e+01 : f32
    %878 = vector.broadcast %cst_391 : f32 to vector<16x1xf32>
    %879 = arith.divf %877, %878 : vector<16x1xf32>
    %880 = vector.broadcast %872 : vector<16x1xf32> to vector<16x32xf32>
    %881 = arith.subf %864, %880 : vector<16x32xf32>
    %cst_392 = arith.constant 9.99999974E-6 : f32
    %882 = vector.broadcast %cst_392 : f32 to vector<16x1xf32>
    %883 = arith.addf %879, %882 : vector<16x1xf32>
    %884 = math.rsqrt %883 : vector<16x1xf32>
    %885 = vector.broadcast %884 : vector<16x1xf32> to vector<16x32xf32>
    %886 = arith.mulf %881, %885 : vector<16x32xf32>
    %887 = vector.broadcast %866 : vector<1x32xf32> to vector<16x32xf32>
    %888 = arith.mulf %886, %887 : vector<16x32xf32>
    %889 = vector.broadcast %868 : vector<1x32xf32> to vector<16x32xf32>
    %890 = arith.addf %888, %889 : vector<16x32xf32>
    %c1_393 = arith.constant 1 : index
    %c656_394 = arith.constant 656 : index
    %c0_395 = arith.constant 0 : index
    %891 = vector.load %arg4[%c1_393, %c656_394, %c0_395] : memref<2x768x64xf32, #tpu.memory_space<vmem>>, vector<1x32x64xf32>
    %892 = vector.shape_cast %891 : vector<1x32x64xf32> to vector<32x64xf32>
    %cst_396 = arith.constant dense<0.000000e+00> : vector<16x64xf32>
    %893 = tpu.matmul %890, %892, %cst_396 {dimension_numbers = #tpu.dot_dimension_numbers<[1], [0], [0], [1], [0, 0, 1, 1], [], []>} : vector<16x32xf32>, vector<32x64xf32>, vector<16x64xf32> -> vector<16x64xf32>
    %c1_397 = arith.constant 1 : index
    %c688_398 = arith.constant 688 : index
    %c0_399 = arith.constant 0 : index
    %894 = vector.load %arg4[%c1_397, %c688_398, %c0_399] : memref<2x768x64xf32, #tpu.memory_space<vmem>>, vector<1x1x64xf32>
    %895 = vector.shape_cast %894 : vector<1x1x64xf32> to vector<1x64xf32>
    %896 = vector.broadcast %895 : vector<1x64xf32> to vector<16x64xf32>
    %897 = arith.addf %893, %896 : vector<16x64xf32>
    %898 = arith.negf %897 : vector<16x64xf32>
    %899 = math.exp %898 : vector<16x64xf32>
    %cst_400 = arith.constant 1.000000e+00 : f32
    %900 = vector.broadcast %cst_400 : f32 to vector<16x64xf32>
    %901 = arith.addf %900, %899 : vector<16x64xf32>
    %902 = arith.divf %900, %901 : vector<16x64xf32>
    %903 = arith.mulf %897, %902 : vector<16x64xf32>
    %c1_401 = arith.constant 1 : index
    %c696_402 = arith.constant 696 : index
    %c0_403 = arith.constant 0 : index
    %904 = vector.load %arg4[%c1_401, %c696_402, %c0_403] : memref<2x768x64xf32, #tpu.memory_space<vmem>>, vector<1x64x32xf32>
    %905 = vector.shape_cast %904 : vector<1x64x32xf32> to vector<64x32xf32>
    %cst_404 = arith.constant dense<0.000000e+00> : vector<16x32xf32>
    %906 = tpu.matmul %903, %905, %cst_404 {dimension_numbers = #tpu.dot_dimension_numbers<[1], [0], [0], [1], [0, 0, 1, 1], [], []>} : vector<16x64xf32>, vector<64x32xf32>, vector<16x32xf32> -> vector<16x32xf32>
    %c1_405 = arith.constant 1 : index
    %c760_406 = arith.constant 760 : index
    %c0_407 = arith.constant 0 : index
    %907 = vector.load %arg4[%c1_405, %c760_406, %c0_407] : memref<2x768x64xf32, #tpu.memory_space<vmem>>, vector<1x1x32xf32>
    %908 = vector.shape_cast %907 : vector<1x1x32xf32> to vector<1x32xf32>
    %909 = vector.broadcast %908 : vector<1x32xf32> to vector<16x32xf32>
    %910 = arith.addf %906, %909 : vector<16x32xf32>
    %cst_408 = arith.constant 5.000000e-01 : f32
    %911 = vector.broadcast %cst_408 : f32 to vector<16x32xf32>
    %912 = arith.mulf %911, %910 : vector<16x32xf32>
    %913 = arith.addf %864, %912 : vector<16x32xf32>
    %c1_409 = arith.constant 1 : index
    %c64_410 = arith.constant 64 : index
    %c0_411 = arith.constant 0 : index
    %914 = vector.load %arg4[%c1_409, %c64_410, %c0_411] : memref<2x768x64xf32, #tpu.memory_space<vmem>>, vector<1x1x32xf32>
    %915 = vector.shape_cast %914 : vector<1x1x32xf32> to vector<1x32xf32>
    %c1_412 = arith.constant 1 : index
    %c72_413 = arith.constant 72 : index
    %c0_414 = arith.constant 0 : index
    %916 = vector.load %arg4[%c1_412, %c72_413, %c0_414] : memref<2x768x64xf32, #tpu.memory_space<vmem>>, vector<1x1x32xf32>
    %917 = vector.shape_cast %916 : vector<1x1x32xf32> to vector<1x32xf32>
    %cst_415 = arith.constant dense<0.000000e+00> : vector<16xf32>
    %918 = vector.multi_reduction <add>, %913, %cst_415 [1] : vector<16x32xf32> to vector<16xf32>
    %919 = vector.shape_cast %918 : vector<16xf32> to vector<16x1xf32>
    %cst_416 = arith.constant 3.200000e+01 : f32
    %920 = vector.broadcast %cst_416 : f32 to vector<16x1xf32>
    %921 = arith.divf %919, %920 : vector<16x1xf32>
    %922 = vector.broadcast %921 : vector<16x1xf32> to vector<16x32xf32>
    %923 = arith.subf %913, %922 : vector<16x32xf32>
    %924 = arith.mulf %923, %923 : vector<16x32xf32>
    %cst_417 = arith.constant dense<0.000000e+00> : vector<16xf32>
    %925 = vector.multi_reduction <add>, %924, %cst_417 [1] : vector<16x32xf32> to vector<16xf32>
    %926 = vector.shape_cast %925 : vector<16xf32> to vector<16x1xf32>
    %cst_418 = arith.constant 3.200000e+01 : f32
    %927 = vector.broadcast %cst_418 : f32 to vector<16x1xf32>
    %928 = arith.divf %926, %927 : vector<16x1xf32>
    %929 = vector.broadcast %921 : vector<16x1xf32> to vector<16x32xf32>
    %930 = arith.subf %913, %929 : vector<16x32xf32>
    %cst_419 = arith.constant 9.99999974E-6 : f32
    %931 = vector.broadcast %cst_419 : f32 to vector<16x1xf32>
    %932 = arith.addf %928, %931 : vector<16x1xf32>
    %933 = math.rsqrt %932 : vector<16x1xf32>
    %934 = vector.broadcast %933 : vector<16x1xf32> to vector<16x32xf32>
    %935 = arith.mulf %930, %934 : vector<16x32xf32>
    %936 = vector.broadcast %915 : vector<1x32xf32> to vector<16x32xf32>
    %937 = arith.mulf %935, %936 : vector<16x32xf32>
    %938 = vector.broadcast %917 : vector<1x32xf32> to vector<16x32xf32>
    %939 = arith.addf %937, %938 : vector<16x32xf32>
    %cst_420 = arith.constant dense<0.000000e+00> : vector<16xf32>
    %940 = vector.multi_reduction <add>, %939, %cst_420 [1] : vector<16x32xf32> to vector<16xf32>
    %941 = vector.shape_cast %940 : vector<16xf32> to vector<16x1xf32>
    %cst_421 = arith.constant 3.200000e+01 : f32
    %942 = vector.broadcast %cst_421 : f32 to vector<16x1xf32>
    %943 = arith.divf %941, %942 : vector<16x1xf32>
    %944 = vector.broadcast %943 : vector<16x1xf32> to vector<16x32xf32>
    %945 = arith.subf %939, %944 : vector<16x32xf32>
    %946 = arith.mulf %945, %945 : vector<16x32xf32>
    %cst_422 = arith.constant dense<0.000000e+00> : vector<16xf32>
    %947 = vector.multi_reduction <add>, %946, %cst_422 [1] : vector<16x32xf32> to vector<16xf32>
    %948 = vector.shape_cast %947 : vector<16xf32> to vector<16x1xf32>
    %cst_423 = arith.constant 3.200000e+01 : f32
    %949 = vector.broadcast %cst_423 : f32 to vector<16x1xf32>
    %950 = arith.divf %948, %949 : vector<16x1xf32>
    %951 = vector.broadcast %943 : vector<16x1xf32> to vector<16x32xf32>
    %952 = arith.subf %939, %951 : vector<16x32xf32>
    %cst_424 = arith.constant 9.99999974E-6 : f32
    %953 = vector.broadcast %cst_424 : f32 to vector<16x1xf32>
    %954 = arith.addf %950, %953 : vector<16x1xf32>
    %955 = math.rsqrt %954 : vector<16x1xf32>
    %956 = vector.broadcast %955 : vector<16x1xf32> to vector<16x32xf32>
    %957 = arith.mulf %952, %956 : vector<16x32xf32>
    %958 = vector.broadcast %39 : vector<1x32xf32> to vector<16x32xf32>
    %959 = arith.mulf %957, %958 : vector<16x32xf32>
    %960 = vector.broadcast %40 : vector<1x32xf32> to vector<16x32xf32>
    %961 = arith.addf %959, %960 : vector<16x32xf32>
    %c0_425 = arith.constant 0 : index
    %c0_426 = arith.constant 0 : index
    %962 = vector.load %arg5[%c0_425, %c0_426] : memref<16x32xf32, #tpu.memory_space<vmem>>, vector<16x32xf32>
    tpu.vector_store %arg5[%c0_425, %c0_426], %961 {strides = array<i32>} : memref<16x32xf32, #tpu.memory_space<vmem>>, vector<16x32xf32>,
    return
  }
}

</mosaic_0001>

<llo_original>
// kernel: ebranchformer_encoder.1
$region0: #{ebranchformer_encoder.1}
  #allocation0 [shape = 'u32[]', space=smem, size = 0x4, offset = 0x4, fixed_abs, tag = 'smem constant byte address 0x4 - core index']
  #allocation1 [shape = 'u32[144,128]{1,0:T(1,128)}', space=vmem, size = 0x12000, scoped, tag = 'internal scratch']
  %s0 = inlined_call_operand.vmem [shape: f32[30,63], index: 0, kind: input, shape index: {}]
  %s1 = inlined_call_operand.vmem [shape: f32[16,16], index: 1, kind: input, shape index: {}]
  %s2 = inlined_call_operand.vmem [shape: f32[904,224], index: 2, kind: input, shape index: {}]
  %s3 = inlined_call_operand.vmem [shape: f32[192,64], index: 3, kind: input, shape index: {}]
  %s4 = inlined_call_operand.vmem [shape: f32[2,768,64], index: 4, kind: input, shape index: {}]
  %s5 = inlined_call_operand.vmem [shape: f32[16,32], index: 5, kind: output, shape index: {}]
  %s6 = sld [smem:[#allocation0]]
  $region30: #{ebranchformer_encoder.1} parent=0
    _
  %s8 = ssub.s32 1, %s6
  %s9 = scalar_select 0, %s8, %s6
  // Predicated region
  $region2: #{ebranchformer_encoder.1} parent=0 // pred_check
    _
  $region3: #{ebranchformer_encoder.1} parent=0 // pred_check_branch
    %11 = sbr.rel (0) target = $region5
  $region4: #{ebranchformer_encoder.1} parent=0 // pred_region
    _
  $region5: #{ebranchformer_encoder.1} parent=0 // pred_fallthru
    _
  // Predicated region
  $region6: #{ebranchformer_encoder.1} parent=0 // pred_check
    _
  $region7: #{ebranchformer_encoder.1} parent=0 // pred_check_branch
    %13 = sbr.rel (0) target = $region9
  $region8: #{ebranchformer_encoder.1} parent=0 // pred_region
    _
  $region9: #{ebranchformer_encoder.1} parent=0 // pred_fallthru
    _
  // Predicated region
  $region10: #{ebranchformer_encoder.1} parent=0 // pred_check
    _
  $region11: #{ebranchformer_encoder.1} parent=0 // pred_check_branch
    %15 = sbr.rel (0) target = $region13
  $region12: #{ebranchformer_encoder.1} parent=0 // pred_region
    _
  $region13: #{ebranchformer_encoder.1} parent=0 // pred_fallthru
    _
  // Predicated region
  $region14: #{ebranchformer_encoder.1} parent=0 // pred_check
    _
  $region15: #{ebranchformer_encoder.1} parent=0 // pred_check_branch
    %17 = sbr.rel (0) target = $region17
  $region16: #{ebranchformer_encoder.1} parent=0 // pred_region
    _
  $region17: #{ebranchformer_encoder.1} parent=0 // pred_fallthru
    _
  // Predicated region
  $region18: #{ebranchformer_encoder.1} parent=0 // pred_check
    _
  $region19: #{ebranchformer_encoder.1} parent=0 // pred_check_branch
    %19 = sbr.rel (0) target = $region21
  $region20: #{ebranchformer_encoder.1} parent=0 // pred_region
    _
  $region21: #{ebranchformer_encoder.1} parent=0 // pred_fallthru
    _
  %v20 = vld [vmem:[%s0] sm:$0xff]
  %v21 = vld [vmem:[%s0 + $0x8] sm:$0xff]
  %v22 = vld [vmem:[%s0 + $0x10] sm:$0xff]
  %v23 = vld [vmem:[%s0 + $0x18] sm:$0x3f]
  %v24 = vld [vmem:[%s2] sm:$0xff]
  %v25 = vld [vmem:[%s2 + $0x8] sm:$0xff]
  %v26 = vld [vmem:[%s2 + $0x10] sm:$0xff]
  %v27 = vld [vmem:[%s2 + $0x18] sm:$0xff]
  %v28 = vld [vmem:[%s2 + $0x20] sm:$0xff]
  %v29 = vld [vmem:[%s2 + $0x28] sm:$0xff]
  %v30 = vld [vmem:[%s2 + $0x30] sm:$0xff]
  %v31 = vld [vmem:[%s2 + $0x38] sm:$0xff]
  %v32 = vld [vmem:[%s2 + $0x40] sm:$0xff]
  %v33 = vld [vmem:[%s2 + $0x48] sm:$0xff]
  %v34 = vld [vmem:[%s2 + $0x50] sm:$0xff]
  %v35 = vld [vmem:[%s2 + $0x58] sm:$0xff]
  %v36 = vld [vmem:[%s2 + $0x60] sm:$0xff]
  %v37 = vld [vmem:[%s2 + $0x68] sm:$0xff]
  %v38 = vld [vmem:[%s2 + $0x70] sm:$0x7f]
  %v39 = vld [vmem:[%s2 + $0x78] sm:$0x7f]
  %s40 = scalar_lea.vmem %s2, 128
  %v41 = vld [vmem:[%s40] ss:$8 sm:$0x3]
  %v43 = vlaneseq
  %v44 = vshrl.u32 %v43, 7
  %v45 = vsub.s32 0, %v44
  %v46 = vrot.slane %v41, %v45
  %v47 = vlaneseq
  %v48 = vshrl.u32 %v47, 7
  %v49 = vsub.s32 1, %v48
  %v50 = vrot.slane %v41, %v49
  %vm53 = vcmask 515072
  %v55 = vsel %vm53, %v20, 0
  %v58 = vsel %vm53, %v21, 0
  %v61 = vsel %vm53, %v22, 0
  %v64 = vsel %vm53, %v23, 0
  %vm66 = vcmask 1046528
  %v68 = vsel %vm66, %v38, 0
  %v71 = vsel %vm66, %v39, 0
  %73 = vmatprep.subr.mxu0 0.0
  %74 = vmatpush1.msra.mxu0 0.0
  %75 = vmatprep.subr.mxu0 0.0
  %76 = vmatpush1.msra.mxu0 0.0
  %77 = vmatprep.subr.mxu0 0.0
  %78 = vmatpush1.msra.mxu0 0.0
  %79 = vmatprep.subr.mxu0 0.0
  %80 = vmatpush1.msra.mxu0 0.0
  %81 = vmatprep.subr.mxu0 0.0
  %82 = vmatpush1.msra.mxu0 0.0
  %83 = vmatprep.subr.mxu0 0.0
  %84 = vmatpush1.msra.mxu0 0.0
  %85 = vmatprep.subr.mxu0 0.0
  %86 = vmatpush1.msra.mxu0 0.0
  %87 = vmatprep.subr.mxu0 0.0
  %88 = vmatpush1.msra.mxu0 0.0
  %89 = vmatprep.subr.mxu0 %v71
  %90 = vmatpush1.msra.mxu0 %v68
  %91 = vmatprep.subr.mxu0 %v37
  %92 = vmatpush1.msra.mxu0 %v36
  %93 = vmatprep.subr.mxu0 %v35
  %94 = vmatpush1.msra.mxu0 %v34
  %95 = vmatprep.subr.mxu0 %v33
  %96 = vmatpush1.msra.mxu0 %v32
  %97 = vmatprep.subr.mxu0 %v31
  %98 = vmatpush1.msra.mxu0 %v30
  %99 = vmatprep.subr.mxu0 %v29
  %100 = vmatpush1.msra.mxu0 %v28
  %101 = vmatprep.subr.mxu0 %v27
  %102 = vmatpush1.msra.mxu0 %v26
  %103 = vmatprep.subr.mxu0 %v25
  %104 = vmatpush1.msra.mxu0 %v24
  %105 = vmatprep.subr.mxu0 0.0
  %106 = vmatpush2.msra.mxu0 0.0
  %107 = vmatprep.subr.mxu0 0.0
  %108 = vmatpush2.msra.mxu0 0.0
  %109 = vmatprep.subr.mxu0 0.0
  %110 = vmatpush2.msra.mxu0 0.0
  %111 = vmatprep.subr.mxu0 0.0
  %112 = vmatpush2.msra.mxu0 0.0
  %113 = vmatprep.subr.mxu0 0.0
  %114 = vmatpush2.msra.mxu0 0.0
  %115 = vmatprep.subr.mxu0 0.0
  %116 = vmatpush2.msra.mxu0 0.0
  %117 = vmatprep.subr.mxu0 0.0
  %118 = vmatpush2.msra.mxu0 0.0
  %119 = vmatprep.subr.mxu0 0.0
  %120 = vmatpush2.msra.mxu0 0.0
  %121 = vmatprep.subr.mxu0 0.0
  %122 = vmatpush2.msra.mxu0 0.0
  %123 = vmatprep.subr.mxu0 0.0
  %124 = vmatpush2.msra.mxu0 0.0
  %125 = vmatprep.subr.mxu0 0.0
  %126 = vmatpush2.msra.mxu0 0.0
  %127 = vmatprep.subr.mxu0 0.0
  %128 = vmatpush2.msra.mxu0 0.0
  %129 = vmatprep.subr.mxu0 0.0
  %130 = vmatpush2.msra.mxu0 0.0
  %131 = vmatprep.subr.mxu0 0.0
  %132 = vmatpush2.msra.mxu0 0.0
  %133 = vmatprep.subr.mxu0 0.0
  %134 = vmatpush2.msra.mxu0 0.0
  %135 = vmatprep.subr.mxu0 0.0
  %136 = vmatpush2.msra.mxu0 0.0
  %137 = vmatprep.mubr.f32.mxu0 0.0
  %138 = vmatmul.mubr.f32.gmra.mxu0 %v55
  %v139 = vpop.f32.mrf.mxu0
  %v140 = vadd.f32 %v46, %v139
  %v141 = vpop.f32.mrf.mxu0
  %v142 = vadd.f32 %v50, %v141
  %143 = vmatprep.mubr.f32.mxu0 0.0
  %144 = vmatmul.mubr.f32.gmra.mxu0 %v58
  %v145 = vpop.f32.mrf.mxu0
  %v146 = vadd.f32 %v46, %v145
  %v147 = vpop.f32.mrf.mxu0
  %v148 = vadd.f32 %v50, %v147
  %149 = vmatprep.mubr.f32.mxu0 0.0
  %150 = vmatmul.mubr.f32.gmra.mxu0 %v61
  %v151 = vpop.f32.mrf.mxu0
  %v152 = vadd.f32 %v46, %v151
  %v153 = vpop.f32.mrf.mxu0
  %v154 = vadd.f32 %v50, %v153
  %155 = vmatprep.mubr.f32.mxu0 0.0
  %156 = vmatmul.mubr.f32.gmra.mxu0 %v64
  %v157 = vpop.f32.mrf.mxu0
  %v158 = vadd.f32 %v46, %v157
  %v159 = vpop.f32.mrf.mxu0
  %v160 = vadd.f32 %v50, %v159
  %161 = vdwg.mxu0
  %v162 = vmax.f32 %v140, 0.0
  %v163 = vmax.f32 %v142, 0.0
  %v164 = vmax.f32 %v146, 0.0
  %v165 = vmax.f32 %v148, 0.0
  %v166 = vmax.f32 %v152, 0.0
  %v167 = vmax.f32 %v154, 0.0
  %v168 = vmax.f32 %v158, 0.0
  %v169 = vmax.f32 %v160, 0.0
  %v170 = vld [vmem:[%s2 + $0x90] sm:$0xff]
  %v171 = vld [vmem:[%s2 + $0xa0] sm:$0xff]
  %vm172 = vcmask 244736
  %v174 = vsel %vm172, %v170, 0
  %v177 = vsel %vm172, %v171, 0
  %vm179 = vcmask 1045504
  %v181 = vsel %vm179, %v168, 0
  %v184 = vsel %vm179, %v169, 0
  %186 = vmatprep.subr.mxu0 0.0
  %187 = vmatpush1.msra.mxu0 0.0
  %188 = vmatprep.subr.mxu0 0.0
  %189 = vmatpush1.msra.mxu0 0.0
  %190 = vmatprep.subr.mxu0 0.0
  %191 = vmatpush1.msra.mxu0 0.0
  %192 = vmatprep.subr.mxu0 0.0
  %193 = vmatpush1.msra.mxu0 0.0
  %194 = vmatprep.subr.mxu0 0.0
  %195 = vmatpush1.msra.mxu0 0.0
  %196 = vmatprep.subr.mxu0 0.0
  %197 = vmatpush1.msra.mxu0 0.0
  %198 = vmatprep.subr.mxu0 0.0
  %199 = vmatpush1.msra.mxu0 0.0
  %200 = vmatprep.subr.mxu0 0.0
  %201 = vmatpush1.msra.mxu0 0.0
  %202 = vmatprep.subr.mxu0 0.0
  %203 = vmatpush1.msra.mxu0 0.0
  %204 = vmatprep.subr.mxu0 0.0
  %205 = vmatpush1.msra.mxu0 0.0
  %206 = vmatprep.subr.mxu0 0.0
  %207 = vmatpush1.msra.mxu0 0.0
  %208 = vmatprep.subr.mxu0 0.0
  %209 = vmatpush1.msra.mxu0 0.0
  %210 = vmatprep.subr.mxu0 %v184
  %211 = vmatpush1.msra.mxu0 %v181
  %212 = vmatprep.subr.mxu0 %v167
  %213 = vmatpush1.msra.mxu0 %v166
  %214 = vmatprep.subr.mxu0 %v165
  %215 = vmatpush1.msra.mxu0 %v164
  %216 = vmatprep.subr.mxu0 %v163
  %217 = vmatpush1.msra.mxu0 %v162
  %218 = vmatprep.subr.mxu0 0.0
  %219 = vmatpush2.msra.mxu0 0.0
  %220 = vmatprep.subr.mxu0 0.0
  %221 = vmatpush2.msra.mxu0 0.0
  %222 = vmatprep.subr.mxu0 0.0
  %223 = vmatpush2.msra.mxu0 0.0
  %224 = vmatprep.subr.mxu0 0.0
  %225 = vmatpush2.msra.mxu0 0.0
  %226 = vmatprep.subr.mxu0 0.0
  %227 = vmatpush2.msra.mxu0 0.0
  %228 = vmatprep.subr.mxu0 0.0
  %229 = vmatpush2.msra.mxu0 0.0
  %230 = vmatprep.subr.mxu0 0.0
  %231 = vmatpush2.msra.mxu0 0.0
  %232 = vmatprep.subr.mxu0 0.0
  %233 = vmatpush2.msra.mxu0 0.0
  %234 = vmatprep.subr.mxu0 0.0
  %235 = vmatpush2.msra.mxu0 0.0
  %236 = vmatprep.subr.mxu0 0.0
  %237 = vmatpush2.msra.mxu0 0.0
  %238 = vmatprep.subr.mxu0 0.0
  %239 = vmatpush2.msra.mxu0 0.0
  %240 = vmatprep.subr.mxu0 0.0
  %241 = vmatpush2.msra.mxu0 0.0
  %242 = vmatprep.subr.mxu0 0.0
  %243 = vmatpush2.msra.mxu0 0.0
  %244 = vmatprep.subr.mxu0 0.0
  %245 = vmatpush2.msra.mxu0 0.0
  %246 = vmatprep.subr.mxu0 0.0
  %247 = vmatpush2.msra.mxu0 0.0
  %248 = vmatprep.subr.mxu0 0.0
  %249 = vmatpush2.msra.mxu0 0.0
  %250 = vmatprep.mubr.f32.mxu0 0.0
  %251 = vmatmul.mubr.f32.gmra.mxu0 %v174
  %v252 = vpop.f32.mrf.mxu0
  %v253 = vadd.f32 0.0, %v252
  %v254 = vpop.f32.mrf.mxu0
  %v255 = vadd.f32 0.0, %v254
  %256 = vmatprep.mubr.f32.mxu0 0.0
  %257 = vmatmul.mubr.f32.gmra.mxu0 %v177
  %v258 = vpop.f32.mrf.mxu0
  %v259 = vadd.f32 0.0, %v258
  %v260 = vpop.f32.mrf.mxu0
  %v261 = vadd.f32 0.0, %v260
  %262 = vdwg.mxu0
  %v263 = vld [vmem:[%s2 + $0xf0] sm:$0xff]
  %v264 = vld [vmem:[%s2 + $0x100] sm:$0xff]
  %v265 = vld [vmem:[%s2 + $0x110] sm:$0xff]
  %v266 = vld [vmem:[%s2 + $0x120] sm:$0xff]
  %v267 = vld [vmem:[%s2 + $0x130] sm:$0xff]
  %v268 = vld [vmem:[%s2 + $0x140] sm:$0xff]
  %v269 = vld [vmem:[%s2 + $0x150] sm:$0xff]
  %v270 = vld [vmem:[%s2 + $0x160] sm:$0xff]
  %v271 = vld [vmem:[%s2 + $0x170] sm:$0xff]
  %v272 = vld [vmem:[%s2 + $0x180] sm:$0xff]
  %v273 = vld [vmem:[%s2 + $0x190] sm:$0xff]
  %v274 = vld [vmem:[%s2 + $0x1a0] sm:$0xff]
  %v275 = vld [vmem:[%s2 + $0x1b0] sm:$0xff]
  %v276 = vld [vmem:[%s2 + $0x1c0] sm:$0xff]
  %v277 = vld [vmem:[%s2 + $0x1d0] sm:$0xff]
  %v278 = vld [vmem:[%s2 + $0x1e0] sm:$0xff]
  %v279 = vld [vmem:[%s2 + $0x1f0] sm:$0xff]
  %v280 = vld [vmem:[%s2 + $0x200] sm:$0xff]
  %v281 = vld [vmem:[%s2 + $0x210] sm:$0xff]
  %v282 = vld [vmem:[%s2 + $0x220] sm:$0xff]
  %v283 = vld [vmem:[%s2 + $0x230] sm:$0xff]
  %v284 = vld [vmem:[%s2 + $0x240] sm:$0xff]
  %v285 = vld [vmem:[%s2 + $0x250] sm:$0xff]
  %v286 = vld [vmem:[%s2 + $0x260] sm:$0xff]
  %v287 = vld [vmem:[%s2 + $0x270] sm:$0xff]
  %v288 = vld [vmem:[%s2 + $0x280] sm:$0xff]
  %v289 = vld [vmem:[%s2 + $0x290] sm:$0xff]
  %v290 = vld [vmem:[%s2 + $0x2a0] sm:$0xff]
  %v291 = vld [vmem:[%s2 + $0xb0] sm:$0xff]
  %v292 = vld [vmem:[%s2 + $0xc0] sm:$0xff]
  %v294 = vsel %vm172, %v291, 0
  %v297 = vsel %vm172, %v292, 0
  %299 = vmatprep.subr.mxu0 0.0
  %300 = vmatpush1.msra.mxu0 0.0
  %301 = vmatprep.subr.mxu0 0.0
  %302 = vmatpush1.msra.mxu0 0.0
  %303 = vmatprep.subr.mxu0 0.0
  %304 = vmatpush1.msra.mxu0 0.0
  %305 = vmatprep.subr.mxu0 0.0
  %306 = vmatpush1.msra.mxu0 0.0
  %307 = vmatprep.subr.mxu0 0.0
  %308 = vmatpush1.msra.mxu0 0.0
  %309 = vmatprep.subr.mxu0 0.0
  %310 = vmatpush1.msra.mxu0 0.0
  %311 = vmatprep.subr.mxu0 0.0
  %312 = vmatpush1.msra.mxu0 0.0
  %313 = vmatprep.subr.mxu0 0.0
  %314 = vmatpush1.msra.mxu0 0.0
  %315 = vmatprep.subr.mxu0 0.0
  %316 = vmatpush1.msra.mxu0 0.0
  %317 = vmatprep.subr.mxu0 0.0
  %318 = vmatpush1.msra.mxu0 0.0
  %319 = vmatprep.subr.mxu0 0.0
  %320 = vmatpush1.msra.mxu0 0.0
  %321 = vmatprep.subr.mxu0 0.0
  %322 = vmatpush1.msra.mxu0 0.0
  %323 = vmatprep.subr.mxu0 %v184
  %324 = vmatpush1.msra.mxu0 %v181
  %325 = vmatprep.subr.mxu0 %v167
  %326 = vmatpush1.msra.mxu0 %v166
  %327 = vmatprep.subr.mxu0 %v165
  %328 = vmatpush1.msra.mxu0 %v164
  %329 = vmatprep.subr.mxu0 %v163
  %330 = vmatpush1.msra.mxu0 %v162
  %331 = vmatprep.subr.mxu0 0.0
  %332 = vmatpush2.msra.mxu0 0.0
  %333 = vmatprep.subr.mxu0 0.0
  %334 = vmatpush2.msra.mxu0 0.0
  %335 = vmatprep.subr.mxu0 0.0
  %336 = vmatpush2.msra.mxu0 0.0
  %337 = vmatprep.subr.mxu0 0.0
  %338 = vmatpush2.msra.mxu0 0.0
  %339 = vmatprep.subr.mxu0 0.0
  %340 = vmatpush2.msra.mxu0 0.0
  %341 = vmatprep.subr.mxu0 0.0
  %342 = vmatpush2.msra.mxu0 0.0
  %343 = vmatprep.subr.mxu0 0.0
  %344 = vmatpush2.msra.mxu0 0.0
  %345 = vmatprep.subr.mxu0 0.0
  %346 = vmatpush2.msra.mxu0 0.0
  %347 = vmatprep.subr.mxu0 0.0
  %348 = vmatpush2.msra.mxu0 0.0
  %349 = vmatprep.subr.mxu0 0.0
  %350 = vmatpush2.msra.mxu0 0.0
  %351 = vmatprep.subr.mxu0 0.0
  %352 = vmatpush2.msra.mxu0 0.0
  %353 = vmatprep.subr.mxu0 0.0
  %354 = vmatpush2.msra.mxu0 0.0
  %355 = vmatprep.subr.mxu0 0.0
  %356 = vmatpush2.msra.mxu0 0.0
  %357 = vmatprep.subr.mxu0 0.0
  %358 = vmatpush2.msra.mxu0 0.0
  %359 = vmatprep.subr.mxu0 0.0
  %360 = vmatpush2.msra.mxu0 0.0
  %361 = vmatprep.subr.mxu0 0.0
  %362 = vmatpush2.msra.mxu0 0.0
  %363 = vmatprep.mubr.f32.mxu0 0.0
  %364 = vmatmul.mubr.f32.gmra.mxu0 %v294
  %v365 = vpop.f32.mrf.mxu0
  %v366 = vadd.f32 0.0, %v365
  %v367 = vpop.f32.mrf.mxu0
  %v368 = vadd.f32 0.0, %v367
  %369 = vmatprep.mubr.f32.mxu0 0.0
  %370 = vmatmul.mubr.f32.gmra.mxu0 %v297
  %v371 = vpop.f32.mrf.mxu0
  %v372 = vadd.f32 0.0, %v371
  %v373 = vpop.f32.mrf.mxu0
  %v374 = vadd.f32 0.0, %v373
  %375 = vdwg.mxu0
  %v376 = vld [vmem:[%s2 + $0x2b0] sm:$0xff]
  %v377 = vld [vmem:[%s2 + $0x2c0] sm:$0xff]
  %v378 = vld [vmem:[%s2 + $0x2d0] sm:$0xff]
  %v379 = vld [vmem:[%s2 + $0x2e0] sm:$0xff]
  %v380 = vld [vmem:[%s2 + $0x2f0] sm:$0xff]
  %v381 = vld [vmem:[%s2 + $0x300] sm:$0xff]
  %v382 = vld [vmem:[%s2 + $0x310] sm:$0xff]
  %v383 = vld [vmem:[%s2 + $0x320] sm:$0xff]
  %v384 = vld [vmem:[%s2 + $0x330] sm:$0xff]
  %v385 = vld [vmem:[%s2 + $0x340] sm:$0xff]
  %v386 = vld [vmem:[%s2 + $0x350] sm:$0xff]
  %v387 = vld [vmem:[%s2 + $0x360] sm:$0xff]
  %v388 = vld [vmem:[%s2 + $0x370] sm:$0xff]
  %v389 = vld [vmem:[%s2 + $0x380] sm:$0xff]
  %v390 = vld [vmem:[%s2 + $0x390] sm:$0xff]
  %v391 = vld [vmem:[%s2 + $0x3a0] sm:$0xff]
  %v392 = vld [vmem:[%s2 + $0x3b0] sm:$0xff]
  %v393 = vld [vmem:[%s2 + $0x3c0] sm:$0xff]
  %v394 = vld [vmem:[%s2 + $0x3d0] sm:$0xff]
  %v395 = vld [vmem:[%s2 + $0x3e0] sm:$0xff]
  %v396 = vld [vmem:[%s2 + $0x3f0] sm:$0xff]
  %v397 = vld [vmem:[%s2 + $0x400] sm:$0xff]
  %v398 = vld [vmem:[%s2 + $0x410] sm:$0xff]
  %v399 = vld [vmem:[%s2 + $0x420] sm:$0xff]
  %v400 = vld [vmem:[%s2 + $0x430] sm:$0xff]
  %v401 = vld [vmem:[%s2 + $0x440] sm:$0xff]
  %v402 = vld [vmem:[%s2 + $0x450] sm:$0xff]
  %v403 = vld [vmem:[%s2 + $0x460] sm:$0xff]
  %vm404 = vcmask 785408
  %v406 = vsel %vm404, %v368, 0
  %v409 = vsel %vm404, %v374, 0
  %411 = vmatprep.subr.mxu0 0.0
  %412 = vmatpush1.msra.mxu0 %v391
  %413 = vmatprep.subr.mxu0 0.0
  %414 = vmatpush1.msra.mxu0 %v390
  %415 = vmatprep.subr.mxu0 0.0
  %416 = vmatpush1.msra.mxu0 %v389
  %417 = vmatprep.subr.mxu0 0.0
  %418 = vmatpush1.msra.mxu0 %v388
  %419 = vmatprep.subr.mxu0 0.0
  %420 = vmatpush1.msra.mxu0 %v387
  %421 = vmatprep.subr.mxu0 0.0
  %422 = vmatpush1.msra.mxu0 %v386
  %423 = vmatprep.subr.mxu0 0.0
  %424 = vmatpush1.msra.mxu0 %v385
  %425 = vmatprep.subr.mxu0 0.0
  %426 = vmatpush1.msra.mxu0 %v384
  %427 = vmatprep.subr.mxu0 0.0
  %428 = vmatpush1.msra.mxu0 %v383
  %429 = vmatprep.subr.mxu0 0.0
  %430 = vmatpush1.msra.mxu0 %v382
  %431 = vmatprep.subr.mxu0 0.0
  %432 = vmatpush1.msra.mxu0 %v381
  %433 = vmatprep.subr.mxu0 0.0
  %434 = vmatpush1.msra.mxu0 %v380
  %435 = vmatprep.subr.mxu0 0.0
  %436 = vmatpush1.msra.mxu0 %v379
  %437 = vmatprep.subr.mxu0 0.0
  %438 = vmatpush1.msra.mxu0 %v378
  %439 = vmatprep.subr.mxu0 0.0
  %440 = vmatpush1.msra.mxu0 %v377
  %441 = vmatprep.subr.mxu0 0.0
  %442 = vmatpush1.msra.mxu0 %v376
  %443 = vmatprep.subr.mxu0 0.0
  %444 = vmatpush2.msra.mxu0 0.0
  %445 = vmatprep.subr.mxu0 0.0
  %446 = vmatpush2.msra.mxu0 0.0
  %447 = vmatprep.subr.mxu0 0.0
  %448 = vmatpush2.msra.mxu0 0.0
  %449 = vmatprep.subr.mxu0 0.0
  %450 = vmatpush2.msra.mxu0 0.0
  %451 = vmatprep.subr.mxu0 0.0
  %452 = vmatpush2.msra.mxu0 %v403
  %453 = vmatprep.subr.mxu0 0.0
  %454 = vmatpush2.msra.mxu0 %v402
  %455 = vmatprep.subr.mxu0 0.0
  %456 = vmatpush2.msra.mxu0 %v401
  %457 = vmatprep.subr.mxu0 0.0
  %458 = vmatpush2.msra.mxu0 %v400
  %459 = vmatprep.subr.mxu0 0.0
  %460 = vmatpush2.msra.mxu0 %v399
  %461 = vmatprep.subr.mxu0 0.0
  %462 = vmatpush2.msra.mxu0 %v398
  %463 = vmatprep.subr.mxu0 0.0
  %464 = vmatpush2.msra.mxu0 %v397
  %465 = vmatprep.subr.mxu0 0.0
  %466 = vmatpush2.msra.mxu0 %v396
  %467 = vmatprep.subr.mxu0 0.0
  %468 = vmatpush2.msra.mxu0 %v395
  %469 = vmatprep.subr.mxu0 0.0
  %470 = vmatpush2.msra.mxu0 %v394
  %471 = vmatprep.subr.mxu0 0.0
  %472 = vmatpush2.msra.mxu0 %v393
  %473 = vmatprep.subr.mxu0 0.0
  %474 = vmatpush2.msra.mxu0 %v392
  %475 = vmatprep.mubr.f32.mxu0 %v406
  %476 = vmatmul.mubr.f32.gmra.mxu0 %v366
  %v477 = vpop.f32.mrf.mxu0
  %v478 = vadd.f32 0.0, %v477
  %v479 = vpop.f32.mrf.mxu0
  %480 = vmatprep.mubr.f32.mxu0 %v409
  %481 = vmatmul.mubr.f32.gmra.mxu0 %v372
  %v482 = vpop.f32.mrf.mxu0
  %v483 = vadd.f32 0.0, %v482
  %v484 = vpop.f32.mrf.mxu0
  %485 = vdwg.mxu0
  %v487 = vsel %vm404, %v255, 0
  %v490 = vsel %vm404, %v261, 0
  %492 = vmatprep.subr.mxu0 0.0
  %493 = vmatpush1.msra.mxu0 %v278
  %494 = vmatprep.subr.mxu0 0.0
  %495 = vmatpush1.msra.mxu0 %v277
  %496 = vmatprep.subr.mxu0 0.0
  %497 = vmatpush1.msra.mxu0 %v276
  %498 = vmatprep.subr.mxu0 0.0
  %499 = vmatpush1.msra.mxu0 %v275
  %500 = vmatprep.subr.mxu0 0.0
  %501 = vmatpush1.msra.mxu0 %v274
  %502 = vmatprep.subr.mxu0 0.0
  %503 = vmatpush1.msra.mxu0 %v273
  %504 = vmatprep.subr.mxu0 0.0
  %505 = vmatpush1.msra.mxu0 %v272
  %506 = vmatprep.subr.mxu0 0.0
  %507 = vmatpush1.msra.mxu0 %v271
  %508 = vmatprep.subr.mxu0 0.0
  %509 = vmatpush1.msra.mxu0 %v270
  %510 = vmatprep.subr.mxu0 0.0
  %511 = vmatpush1.msra.mxu0 %v269
  %512 = vmatprep.subr.mxu0 0.0
  %513 = vmatpush1.msra.mxu0 %v268
  %514 = vmatprep.subr.mxu0 0.0
  %515 = vmatpush1.msra.mxu0 %v267
  %516 = vmatprep.subr.mxu0 0.0
  %517 = vmatpush1.msra.mxu0 %v266
  %518 = vmatprep.subr.mxu0 0.0
  %519 = vmatpush1.msra.mxu0 %v265
  %520 = vmatprep.subr.mxu0 0.0
  %521 = vmatpush1.msra.mxu0 %v264
  %522 = vmatprep.subr.mxu0 0.0
  %523 = vmatpush1.msra.mxu0 %v263
  %524 = vmatprep.subr.mxu0 0.0
  %525 = vmatpush2.msra.mxu0 0.0
  %526 = vmatprep.subr.mxu0 0.0
  %527 = vmatpush2.msra.mxu0 0.0
  %528 = vmatprep.subr.mxu0 0.0
  %529 = vmatpush2.msra.mxu0 0.0
  %530 = vmatprep.subr.mxu0 0.0
  %531 = vmatpush2.msra.mxu0 0.0
  %532 = vmatprep.subr.mxu0 0.0
  %533 = vmatpush2.msra.mxu0 %v290
  %534 = vmatprep.subr.mxu0 0.0
  %535 = vmatpush2.msra.mxu0 %v289
  %536 = vmatprep.subr.mxu0 0.0
  %537 = vmatpush2.msra.mxu0 %v288
  %538 = vmatprep.subr.mxu0 0.0
  %539 = vmatpush2.msra.mxu0 %v287
  %540 = vmatprep.subr.mxu0 0.0
  %541 = vmatpush2.msra.mxu0 %v286
  %542 = vmatprep.subr.mxu0 0.0
  %543 = vmatpush2.msra.mxu0 %v285
  %544 = vmatprep.subr.mxu0 0.0
  %545 = vmatpush2.msra.mxu0 %v284
  %546 = vmatprep.subr.mxu0 0.0
  %547 = vmatpush2.msra.mxu0 %v283
  %548 = vmatprep.subr.mxu0 0.0
  %549 = vmatpush2.msra.mxu0 %v282
  %550 = vmatprep.subr.mxu0 0.0
  %551 = vmatpush2.msra.mxu0 %v281
  %552 = vmatprep.subr.mxu0 0.0
  %553 = vmatpush2.msra.mxu0 %v280
  %554 = vmatprep.subr.mxu0 0.0
  %555 = vmatpush2.msra.mxu0 %v279
  %556 = vmatprep.mubr.f32.mxu0 %v487
  %557 = vmatmul.mubr.f32.gmra.mxu0 %v253
  %v558 = vpop.f32.mrf.mxu0
  %v559 = vadd.f32 %v478, %v558
  %v560 = vpop.f32.mrf.mxu0
  %561 = vmatprep.mubr.f32.mxu0 %v490
  %562 = vmatmul.mubr.f32.gmra.mxu0 %v259
  %v563 = vpop.f32.mrf.mxu0
  %v564 = vadd.f32 %v483, %v563
  %v565 = vpop.f32.mrf.mxu0
  %566 = vdwg.mxu0
  %v567 = vld [vmem:[%s2 + $0xd0] sm:$0xff]
  %v568 = vld [vmem:[%s2 + $0xe0] sm:$0xff]
  %v570 = vsel %vm172, %v567, 0
  %v573 = vsel %vm172, %v568, 0
  %575 = vmatprep.subr.mxu0 0.0
  %576 = vmatpush1.msra.mxu0 0.0
  %577 = vmatprep.subr.mxu0 0.0
  %578 = vmatpush1.msra.mxu0 0.0
  %579 = vmatprep.subr.mxu0 0.0
  %580 = vmatpush1.msra.mxu0 0.0
  %581 = vmatprep.subr.mxu0 0.0
  %582 = vmatpush1.msra.mxu0 0.0
  %583 = vmatprep.subr.mxu0 0.0
  %584 = vmatpush1.msra.mxu0 0.0
  %585 = vmatprep.subr.mxu0 0.0
  %586 = vmatpush1.msra.mxu0 0.0
  %587 = vmatprep.subr.mxu0 0.0
  %588 = vmatpush1.msra.mxu0 0.0
  %589 = vmatprep.subr.mxu0 0.0
  %590 = vmatpush1.msra.mxu0 0.0
  %591 = vmatprep.subr.mxu0 0.0
  %592 = vmatpush1.msra.mxu0 0.0
  %593 = vmatprep.subr.mxu0 0.0
  %594 = vmatpush1.msra.mxu0 0.0
  %595 = vmatprep.subr.mxu0 0.0
  %596 = vmatpush1.msra.mxu0 0.0
  %597 = vmatprep.subr.mxu0 0.0
  %598 = vmatpush1.msra.mxu0 0.0
  %599 = vmatprep.subr.mxu0 %v184
  %600 = vmatpush1.msra.mxu0 %v181
  %601 = vmatprep.subr.mxu0 %v167
  %602 = vmatpush1.msra.mxu0 %v166
  %603 = vmatprep.subr.mxu0 %v165
  %604 = vmatpush1.msra.mxu0 %v164
  %605 = vmatprep.subr.mxu0 %v163
  %606 = vmatpush1.msra.mxu0 %v162
  %607 = vmatprep.subr.mxu0 0.0
  %608 = vmatpush2.msra.mxu0 0.0
  %609 = vmatprep.subr.mxu0 0.0
  %610 = vmatpush2.msra.mxu0 0.0
  %611 = vmatprep.subr.mxu0 0.0
  %612 = vmatpush2.msra.mxu0 0.0
  %613 = vmatprep.subr.mxu0 0.0
  %614 = vmatpush2.msra.mxu0 0.0
  %615 = vmatprep.subr.mxu0 0.0
  %616 = vmatpush2.msra.mxu0 0.0
  %617 = vmatprep.subr.mxu0 0.0
  %618 = vmatpush2.msra.mxu0 0.0
  %619 = vmatprep.subr.mxu0 0.0
  %620 = vmatpush2.msra.mxu0 0.0
  %621 = vmatprep.subr.mxu0 0.0
  %622 = vmatpush2.msra.mxu0 0.0
  %623 = vmatprep.subr.mxu0 0.0
  %624 = vmatpush2.msra.mxu0 0.0
  %625 = vmatprep.subr.mxu0 0.0
  %626 = vmatpush2.msra.mxu0 0.0
  %627 = vmatprep.subr.mxu0 0.0
  %628 = vmatpush2.msra.mxu0 0.0
  %629 = vmatprep.subr.mxu0 0.0
  %630 = vmatpush2.msra.mxu0 0.0
  %631 = vmatprep.subr.mxu0 0.0
  %632 = vmatpush2.msra.mxu0 0.0
  %633 = vmatprep.subr.mxu0 0.0
  %634 = vmatpush2.msra.mxu0 0.0
  %635 = vmatprep.subr.mxu0 0.0
  %636 = vmatpush2.msra.mxu0 0.0
  %637 = vmatprep.subr.mxu0 0.0
  %638 = vmatpush2.msra.mxu0 0.0
  %639 = vmatprep.mubr.f32.mxu0 0.0
  %640 = vmatmul.mubr.f32.gmra.mxu0 %v570
  %v641 = vpop.f32.mrf.mxu0
  %v642 = vadd.f32 0.0, %v641
  %v643 = vpop.f32.mrf.mxu0
  %v644 = vadd.f32 0.0, %v643
  %645 = vmatprep.mubr.f32.mxu0 0.0
  %646 = vmatmul.mubr.f32.gmra.mxu0 %v573
  %v647 = vpop.f32.mrf.mxu0
  %v648 = vadd.f32 0.0, %v647
  %v649 = vpop.f32.mrf.mxu0
  %v650 = vadd.f32 0.0, %v649
  %651 = vdwg.mxu0
  %v652 = vld [vmem:[%s2 + $0x470] sm:$0xff]
  %v653 = vld [vmem:[%s2 + $0x480] sm:$0xff]
  %v654 = vld [vmem:[%s2 + $0x490] sm:$0xff]
  %v655 = vld [vmem:[%s2 + $0x4a0] sm:$0xff]
  %v656 = vld [vmem:[%s2 + $0x4b0] sm:$0xff]
  %v657 = vld [vmem:[%s2 + $0x4c0] sm:$0xff]
  %v658 = vld [vmem:[%s2 + $0x4d0] sm:$0xff]
  %v659 = vld [vmem:[%s2 + $0x4e0] sm:$0xff]
  %v660 = vld [vmem:[%s2 + $0x4f0] sm:$0xff]
  %v661 = vld [vmem:[%s2 + $0x500] sm:$0xff]
  %v662 = vld [vmem:[%s2 + $0x510] sm:$0xff]
  %v663 = vld [vmem:[%s2 + $0x520] sm:$0xff]
  %v664 = vld [vmem:[%s2 + $0x530] sm:$0xff]
  %v665 = vld [vmem:[%s2 + $0x540] sm:$0xff]
  %v666 = vld [vmem:[%s2 + $0x550] sm:$0xff]
  %v667 = vld [vmem:[%s2 + $0x560] sm:$0xff]
  %v668 = vld [vmem:[%s2 + $0x570] sm:$0xff]
  %v669 = vld [vmem:[%s2 + $0x580] sm:$0xff]
  %v670 = vld [vmem:[%s2 + $0x590] sm:$0xff]
  %v671 = vld [vmem:[%s2 + $0x5a0] sm:$0xff]
  %v672 = vld [vmem:[%s2 + $0x5b0] sm:$0xff]
  %v673 = vld [vmem:[%s2 + $0x5c0] sm:$0xff]
  %v674 = vld [vmem:[%s2 + $0x5d0] sm:$0xff]
  %v675 = vld [vmem:[%s2 + $0x5e0] sm:$0xff]
  %v676 = vld [vmem:[%s2 + $0x5f0] sm:$0xff]
  %v677 = vld [vmem:[%s2 + $0x600] sm:$0xff]
  %v678 = vld [vmem:[%s2 + $0x610] sm:$0xff]
  %v679 = vld [vmem:[%s2 + $0x620] sm:$0xff]
  %v681 = vsel %vm404, %v644, 0
  %v684 = vsel %vm404, %v650, 0
  %686 = vmatprep.subr.mxu0 0.0
  %687 = vmatpush1.msra.mxu0 %v667
  %688 = vmatprep.subr.mxu0 0.0
  %689 = vmatpush1.msra.mxu0 %v666
  %690 = vmatprep.subr.mxu0 0.0
  %691 = vmatpush1.msra.mxu0 %v665
  %692 = vmatprep.subr.mxu0 0.0
  %693 = vmatpush1.msra.mxu0 %v664
  %694 = vmatprep.subr.mxu0 0.0
  %695 = vmatpush1.msra.mxu0 %v663
  %696 = vmatprep.subr.mxu0 0.0
  %697 = vmatpush1.msra.mxu0 %v662
  %698 = vmatprep.subr.mxu0 0.0
  %699 = vmatpush1.msra.mxu0 %v661
  %700 = vmatprep.subr.mxu0 0.0
  %701 = vmatpush1.msra.mxu0 %v660
  %702 = vmatprep.subr.mxu0 0.0
  %703 = vmatpush1.msra.mxu0 %v659
  %704 = vmatprep.subr.mxu0 0.0
  %705 = vmatpush1.msra.mxu0 %v658
  %706 = vmatprep.subr.mxu0 0.0
  %707 = vmatpush1.msra.mxu0 %v657
  %708 = vmatprep.subr.mxu0 0.0
  %709 = vmatpush1.msra.mxu0 %v656
  %710 = vmatprep.subr.mxu0 0.0
  %711 = vmatpush1.msra.mxu0 %v655
  %712 = vmatprep.subr.mxu0 0.0
  %713 = vmatpush1.msra.mxu0 %v654
  %714 = vmatprep.subr.mxu0 0.0
  %715 = vmatpush1.msra.mxu0 %v653
  %716 = vmatprep.subr.mxu0 0.0
  %717 = vmatpush1.msra.mxu0 %v652
  %718 = vmatprep.subr.mxu0 0.0
  %719 = vmatpush2.msra.mxu0 0.0
  %720 = vmatprep.subr.mxu0 0.0
  %721 = vmatpush2.msra.mxu0 0.0
  %722 = vmatprep.subr.mxu0 0.0
  %723 = vmatpush2.msra.mxu0 0.0
  %724 = vmatprep.subr.mxu0 0.0
  %725 = vmatpush2.msra.mxu0 0.0
  %726 = vmatprep.subr.mxu0 0.0
  %727 = vmatpush2.msra.mxu0 %v679
  %728 = vmatprep.subr.mxu0 0.0
  %729 = vmatpush2.msra.mxu0 %v678
  %730 = vmatprep.subr.mxu0 0.0
  %731 = vmatpush2.msra.mxu0 %v677
  %732 = vmatprep.subr.mxu0 0.0
  %733 = vmatpush2.msra.mxu0 %v676
  %734 = vmatprep.subr.mxu0 0.0
  %735 = vmatpush2.msra.mxu0 %v675
  %736 = vmatprep.subr.mxu0 0.0
  %737 = vmatpush2.msra.mxu0 %v674
  %738 = vmatprep.subr.mxu0 0.0
  %739 = vmatpush2.msra.mxu0 %v673
  %740 = vmatprep.subr.mxu0 0.0
  %741 = vmatpush2.msra.mxu0 %v672
  %742 = vmatprep.subr.mxu0 0.0
  %743 = vmatpush2.msra.mxu0 %v671
  %744 = vmatprep.subr.mxu0 0.0
  %745 = vmatpush2.msra.mxu0 %v670
  %746 = vmatprep.subr.mxu0 0.0
  %747 = vmatpush2.msra.mxu0 %v669
  %748 = vmatprep.subr.mxu0 0.0
  %749 = vmatpush2.msra.mxu0 %v668
  %750 = vmatprep.mubr.f32.mxu0 %v681
  %751 = vmatmul.mubr.f32.gmra.mxu0 %v642
  %v752 = vpop.f32.mrf.mxu0
  %v753 = vadd.f32 0.0, %v752
  %v754 = vpop.f32.mrf.mxu0
  %755 = vmatprep.mubr.f32.mxu0 %v684
  %756 = vmatmul.mubr.f32.gmra.mxu0 %v648
  %v757 = vpop.f32.mrf.mxu0
  %v758 = vadd.f32 0.0, %v757
  %v759 = vpop.f32.mrf.mxu0
  %760 = vdwg.mxu0
  %v761 = vadd.f32 %v559, %v753
  %v762 = vadd.f32 %v564, %v758
  %v763 = vld [vmem:[%s2 + $0x630] ss:$0 sm:$0xff]
  %v764 = vadd.f32 %v761, %v763
  %v765 = vadd.f32 %v762, %v763
  %v766 = vmax.f32 %v764, 0.0
  %v767 = vmax.f32 %v765, 0.0
  %v768 = vld [vmem:[%s2 + $0x640] sm:$0xff]
  %v769 = vld [vmem:[%s2 + $0x650] sm:$0xff]
  %v770 = vld [vmem:[%s2 + $0x660] sm:$0xff]
  %v771 = vld [vmem:[%s2 + $0x670] sm:$0xff]
  %v772 = vld [vmem:[%s2 + $0x680] sm:$0xff]
  %v773 = vld [vmem:[%s2 + $0x690] sm:$0xff]
  %v774 = vld [vmem:[%s2 + $0x6a0] sm:$0xff]
  %v775 = vld [vmem:[%s2 + $0x6b0] sm:$0xff]
  %v776 = vld [vmem:[%s2 + $0x6c0] sm:$0xff]
  %v777 = vld [vmem:[%s2 + $0x6d0] sm:$0xff]
  %v778 = vld [vmem:[%s2 + $0x6e0] sm:$0xff]
  %v779 = vld [vmem:[%s2 + $0x6f0] sm:$0xff]
  %v780 = vld [vmem:[%s2 + $0x700] ss:$0 sm:$0xff]
  %v782 = vsel %vm404, %v766, 0
  %v785 = vsel %vm404, %v767, 0
  %787 = vmatprep.subr.mxu0 0.0
  %788 = vmatpush1.msra.mxu0 0.0
  %789 = vmatprep.subr.mxu0 0.0
  %790 = vmatpush1.msra.mxu0 0.0
  %791 = vmatprep.subr.mxu0 0.0
  %792 = vmatpush1.msra.mxu0 0.0
  %793 = vmatprep.subr.mxu0 0.0
  %794 = vmatpush1.msra.mxu0 0.0
  %795 = vmatprep.subr.mxu0 0.0
  %796 = vmatpush1.msra.mxu0 %v779
  %797 = vmatprep.subr.mxu0 0.0
  %798 = vmatpush1.msra.mxu0 %v778
  %799 = vmatprep.subr.mxu0 0.0
  %800 = vmatpush1.msra.mxu0 %v777
  %801 = vmatprep.subr.mxu0 0.0
  %802 = vmatpush1.msra.mxu0 %v776
  %803 = vmatprep.subr.mxu0 0.0
  %804 = vmatpush1.msra.mxu0 %v775
  %805 = vmatprep.subr.mxu0 0.0
  %806 = vmatpush1.msra.mxu0 %v774
  %807 = vmatprep.subr.mxu0 0.0
  %808 = vmatpush1.msra.mxu0 %v773
  %809 = vmatprep.subr.mxu0 0.0
  %810 = vmatpush1.msra.mxu0 %v772
  %811 = vmatprep.subr.mxu0 0.0
  %812 = vmatpush1.msra.mxu0 %v771
  %813 = vmatprep.subr.mxu0 0.0
  %814 = vmatpush1.msra.mxu0 %v770
  %815 = vmatprep.subr.mxu0 0.0
  %816 = vmatpush1.msra.mxu0 %v769
  %817 = vmatprep.subr.mxu0 0.0
  %818 = vmatpush1.msra.mxu0 %v768
  %819 = vmatprep.subr.mxu0 0.0
  %820 = vmatpush2.msra.mxu0 0.0
  %821 = vmatprep.subr.mxu0 0.0
  %822 = vmatpush2.msra.mxu0 0.0
  %823 = vmatprep.subr.mxu0 0.0
  %824 = vmatpush2.msra.mxu0 0.0
  %825 = vmatprep.subr.mxu0 0.0
  %826 = vmatpush2.msra.mxu0 0.0
  %827 = vmatprep.subr.mxu0 0.0
  %828 = vmatpush2.msra.mxu0 0.0
  %829 = vmatprep.subr.mxu0 0.0
  %830 = vmatpush2.msra.mxu0 0.0
  %831 = vmatprep.subr.mxu0 0.0
  %832 = vmatpush2.msra.mxu0 0.0
  %833 = vmatprep.subr.mxu0 0.0
  %834 = vmatpush2.msra.mxu0 0.0
  %835 = vmatprep.subr.mxu0 0.0
  %836 = vmatpush2.msra.mxu0 0.0
  %837 = vmatprep.subr.mxu0 0.0
  %838 = vmatpush2.msra.mxu0 0.0
  %839 = vmatprep.subr.mxu0 0.0
  %840 = vmatpush2.msra.mxu0 0.0
  %841 = vmatprep.subr.mxu0 0.0
  %842 = vmatpush2.msra.mxu0 0.0
  %843 = vmatprep.subr.mxu0 0.0
  %844 = vmatpush2.msra.mxu0 0.0
  %845 = vmatprep.subr.mxu0 0.0
  %846 = vmatpush2.msra.mxu0 0.0
  %847 = vmatprep.subr.mxu0 0.0
  %848 = vmatpush2.msra.mxu0 0.0
  %849 = vmatprep.subr.mxu0 0.0
  %850 = vmatpush2.msra.mxu0 0.0
  %851 = vmatprep.mubr.f32.mxu0 0.0
  %852 = vmatmul.mubr.f32.gmra.mxu0 %v782
  %v853 = vpop.f32.mrf.mxu0
  %v854 = vadd.f32 %v780, %v853
  %v855 = vpop.f32.mrf.mxu0
  %856 = vmatprep.mubr.f32.mxu0 0.0
  %857 = vmatmul.mubr.f32.gmra.mxu0 %v785
  %v858 = vpop.f32.mrf.mxu0
  %v859 = vadd.f32 %v780, %v858
  %v860 = vpop.f32.mrf.mxu0
  %861 = vdwg.mxu0
  %v862 = vmul.f32 %v854, 5.656854
  %v863 = vmul.f32 %v859, 5.656854
  %v864 = vld [vmem:[%s3] sm:$0xff]
  %v865 = vld [vmem:[%s3 + $0x8] sm:$0xff]
  %v866 = vld [vmem:[%s3 + $0x10] sm:$0xff]
  %v867 = vld [vmem:[%s3 + $0x18] sm:$0xff]
  %v868 = vld [vmem:[%s3 + $0x20] sm:$0xff]
  %v869 = vld [vmem:[%s3 + $0x28] sm:$0xff]
  %v870 = vld [vmem:[%s3 + $0x30] sm:$0xff]
  %v871 = vld [vmem:[%s3 + $0x38] sm:$0xff]
  %v872 = vld [vmem:[%s3 + $0x40] sm:$0xff]
  %v873 = vld [vmem:[%s3 + $0x48] sm:$0xff]
  %v874 = vld [vmem:[%s3 + $0x50] sm:$0xff]
  %v875 = vld [vmem:[%s3 + $0x58] sm:$0xff]
  %v876 = vld [vmem:[%s3 + $0x60] sm:$0xff]
  %v877 = vld [vmem:[%s3 + $0x68] sm:$0xff]
  %v878 = vld [vmem:[%s3 + $0x70] sm:$0xff]
  %v879 = vld [vmem:[%s3 + $0x78] sm:$0xff]
  %v880 = vld [vmem:[%s3 + $0x80] sm:$0xff]
  %v881 = vld [vmem:[%s3 + $0x88] sm:$0xff]
  %v882 = vld [vmem:[%s3 + $0x90] sm:$0xff]
  %v883 = vld [vmem:[%s3 + $0x98] sm:$0xff]
  %v884 = vld [vmem:[%s3 + $0xa0] sm:$0xff]
  %v885 = vld [vmem:[%s3 + $0xa8] sm:$0xff]
  %v886 = vld [vmem:[%s3 + $0xb0] sm:$0x1]
  %v887 = vld [vmem:[%s3 + $0xb8] sm:$0x1]
  %v888 = vld [vmem:[%s1] sm:$0xff]
  %v889 = vld [vmem:[%s1 + $0x8] sm:$0xff]
  %vm890 = vcmask 130048
  %v892 = vsel %vm890, %v864, 0
  %v895 = vsel %vm890, %v865, 0
  %v898 = vsel %vm890, %v866, 0
  %v901 = vsel %vm890, %v867, 0
  %v904 = vsel %vm890, %v868, 0
  %v907 = vsel %vm890, %v869, 0
  %v910 = vsel %vm890, %v870, 0
  %v913 = vsel %vm890, %v871, 0
  %915 = vmatprep.subr.mxu0 0.0
  %916 = vmatpush1.msra.mxu0 0.0
  %917 = vmatprep.subr.mxu0 0.0
  %918 = vmatpush1.msra.mxu0 0.0
  %919 = vmatprep.subr.mxu0 0.0
  %920 = vmatpush1.msra.mxu0 0.0
  %921 = vmatprep.subr.mxu0 0.0
  %922 = vmatpush1.msra.mxu0 0.0
  %923 = vmatprep.subr.mxu0 0.0
  %924 = vmatpush1.msra.mxu0 0.0
  %925 = vmatprep.subr.mxu0 0.0
  %926 = vmatpush1.msra.mxu0 0.0
  %927 = vmatprep.subr.mxu0 0.0
  %928 = vmatpush1.msra.mxu0 0.0
  %929 = vmatprep.subr.mxu0 0.0
  %930 = vmatpush1.msra.mxu0 0.0
  %931 = vmatprep.subr.mxu0 0.0
  %932 = vmatpush1.msra.mxu0 0.0
  %933 = vmatprep.subr.mxu0 0.0
  %934 = vmatpush1.msra.mxu0 0.0
  %935 = vmatprep.subr.mxu0 0.0
  %936 = vmatpush1.msra.mxu0 0.0
  %937 = vmatprep.subr.mxu0 0.0
  %938 = vmatpush1.msra.mxu0 0.0
  %939 = vmatprep.subr.mxu0 0.0
  %940 = vmatpush1.msra.mxu0 0.0
  %941 = vmatprep.subr.mxu0 0.0
  %942 = vmatpush1.msra.mxu0 0.0
  %943 = vmatprep.subr.mxu0 0.0
  %944 = vmatpush1.msra.mxu0 %v889
  %945 = vmatprep.subr.mxu0 0.0
  %946 = vmatpush1.msra.mxu0 %v888
  %947 = vmatprep.subr.mxu0 0.0
  %948 = vmatpush2.msra.mxu0 0.0
  %949 = vmatprep.subr.mxu0 0.0
  %950 = vmatpush2.msra.mxu0 0.0
  %951 = vmatprep.subr.mxu0 0.0
  %952 = vmatpush2.msra.mxu0 0.0
  %953 = vmatprep.subr.mxu0 0.0
  %954 = vmatpush2.msra.mxu0 0.0
  %955 = vmatprep.subr.mxu0 0.0
  %956 = vmatpush2.msra.mxu0 0.0
  %957 = vmatprep.subr.mxu0 0.0
  %958 = vmatpush2.msra.mxu0 0.0
  %959 = vmatprep.subr.mxu0 0.0
  %960 = vmatpush2.msra.mxu0 0.0
  %961 = vmatprep.subr.mxu0 0.0
  %962 = vmatpush2.msra.mxu0 0.0
  %963 = vmatprep.subr.mxu0 0.0
  %964 = vmatpush2.msra.mxu0 0.0
  %965 = vmatprep.subr.mxu0 0.0
  %966 = vmatpush2.msra.mxu0 0.0
  %967 = vmatprep.subr.mxu0 0.0
  %968 = vmatpush2.msra.mxu0 0.0
  %969 = vmatprep.subr.mxu0 0.0
  %970 = vmatpush2.msra.mxu0 0.0
  %971 = vmatprep.subr.mxu0 0.0
  %972 = vmatpush2.msra.mxu0 0.0
  %973 = vmatprep.subr.mxu0 0.0
  %974 = vmatpush2.msra.mxu0 0.0
  %975 = vmatprep.subr.mxu0 0.0
  %976 = vmatpush2.msra.mxu0 0.0
  %977 = vmatprep.subr.mxu0 0.0
  %978 = vmatpush2.msra.mxu0 0.0
  %979 = vmatprep.mubr.f32.mxu0 0.0
  %980 = vmatmul.mubr.f32.gmra.mxu0 %v892
  %v981 = vpop.f32.mrf.mxu0
  %v982 = vadd.f32 0.0, %v981
  %v983 = vpop.f32.mrf.mxu0
  %984 = vmatprep.mubr.f32.mxu0 0.0
  %985 = vmatmul.mubr.f32.gmra.mxu0 %v895
  %v986 = vpop.f32.mrf.mxu0
  %v987 = vadd.f32 0.0, %v986
  %v988 = vpop.f32.mrf.mxu0
  %989 = vmatprep.mubr.f32.mxu0 0.0
  %990 = vmatmul.mubr.f32.gmra.mxu0 %v898
  %v991 = vpop.f32.mrf.mxu0
  %v992 = vadd.f32 0.0, %v991
  %v993 = vpop.f32.mrf.mxu0
  %994 = vmatprep.mubr.f32.mxu0 0.0
  %995 = vmatmul.mubr.f32.gmra.mxu0 %v901
  %v996 = vpop.f32.mrf.mxu0
  %v997 = vadd.f32 0.0, %v996
  %v998 = vpop.f32.mrf.mxu0
  %999 = vmatprep.mubr.f32.mxu0 0.0
  %1000 = vmatmul.mubr.f32.gmra.mxu0 %v904
  %v1001 = vpop.f32.mrf.mxu0
  %v1002 = vadd.f32 0.0, %v1001
  %v1003 = vpop.f32.mrf.mxu0
  %1004 = vmatprep.mubr.f32.mxu0 0.0
  %1005 = vmatmul.mubr.f32.gmra.mxu0 %v907
  %v1006 = vpop.f32.mrf.mxu0
  %v1007 = vadd.f32 0.0, %v1006
  %v1008 = vpop.f32.mrf.mxu0
  %1009 = vmatprep.mubr.f32.mxu0 0.0
  %1010 = vmatmul.mubr.f32.gmra.mxu0 %v910
  %v1011 = vpop.f32.mrf.mxu0
  %v1012 = vadd.f32 0.0, %v1011
  %v1013 = vpop.f32.mrf.mxu0
  %1014 = vmatprep.mubr.f32.mxu0 0.0
  %1015 = vmatmul.mubr.f32.gmra.mxu0 %v913
  %v1016 = vpop.f32.mrf.mxu0
  %v1017 = vadd.f32 0.0, %v1016
  %v1018 = vpop.f32.mrf.mxu0
  %1019 = vdwg.mxu0
  %v1020 = vmul.f32 %v888, %v864
  %v1021 = vmul.f32 %v889, %v865
  %v1022 = vsel %vm890, %v1020, 0.0
  %1023 = vadd.xlane.f32.xlu0 %v1022
  %v1024 = vpop.xlane.xlu0 %1023
  %v1025 = vsel %vm890, %v1021, 0.0
  %1026 = vadd.xlane.f32.xlu0 %v1025
  %v1027 = vpop.xlane.xlu0 %1026
  %vm1028 = vcmp.gt.f32.partialorder %v1024, -1.0
  %vm1029 = vcmp.gt.f32.partialorder %v1027, -1.0
  %v1030 = vsel %vm1028, 1.0, 0.0
  %v1031 = vsel %vm1029, 1.0, 0.0
  %v1032 = vld [vmem:[%s4] sm:$0x1]
  %v1033 = vld [vmem:[%s4 + $0x8] sm:$0x1]
  %vm1034 = vcmask 261120
  %v1035 = vsel %vm1034, %v862, 0.0
  %1036 = vadd.xlane.f32.xlu0 %v1035
  %v1037 = vpop.xlane.xlu0 %1036
  %v1038 = vsel %vm1034, %v863, 0.0
  %1039 = vadd.xlane.f32.xlu0 %v1038
  %v1040 = vpop.xlane.xlu0 %1039
  %v1041 = vrcp.pop 32.0
  %v1042 = vmul.f32 %v1037, %v1041
  %v1043 = vmul.f32 %v1040, %v1041
  %v1044 = vsub.f32 %v862, %v1042
  %v1045 = vsub.f32 %v863, %v1043
  %v1046 = vmul.f32 %v1044, %v1044
  %v1047 = vmul.f32 %v1045, %v1045
  %v1048 = vsel %vm1034, %v1046, 0.0
  %1049 = vadd.xlane.f32.xlu0 %v1048
  %v1050 = vpop.xlane.xlu0 %1049
  %v1051 = vsel %vm1034, %v1047, 0.0
  %1052 = vadd.xlane.f32.xlu0 %v1051
  %v1053 = vpop.xlane.xlu0 %1052
  %v1054 = vmul.f32 %v1050, %v1041
  %v1055 = vmul.f32 %v1053, %v1041
  %v1056 = vadd.f32 %v1054, 1e-05
  %v1057 = vadd.f32 %v1055, 1e-05
  %v1058 = vrsqrt.pop %v1056
  %v1059 = vrsqrt.pop %v1057
  %v1060 = vmul.f32 %v1044, %v1058
  %v1061 = vmul.f32 %v1045, %v1059
  %v1062 = vlaneseq
  %v1063 = vshrl.u32 %v1062, 7
  %v1064 = vsub.s32 0, %v1063
  %v1065 = vrot.slane %v1032, %v1064
  %v1066 = vmul.f32 %v1060, %v1065
  %v1067 = vmul.f32 %v1061, %v1065
  %v1068 = vlaneseq
  %v1069 = vshrl.u32 %v1068, 7
  %v1070 = vsub.s32 0, %v1069
  %v1071 = vrot.slane %v1033, %v1070
  %v1072 = vadd.f32 %v1066, %v1071
  %v1073 = vadd.f32 %v1067, %v1071
  %v1074 = vld [vmem:[%s4 + $0x50] sm:$0xff]
  %v1075 = vld [vmem:[%s4 + $0x58] sm:$0xff]
  %v1076 = vld [vmem:[%s4 + $0x60] sm:$0xff]
  %v1077 = vld [vmem:[%s4 + $0x68] sm:$0xff]
  %v1078 = vld [vmem:[%s4 + $0x70] sm:$0x1]
  %v1079 = vlaneseq
  %v1080 = vshrl.u32 %v1079, 7
  %v1081 = vsub.s32 0, %v1080
  %v1082 = vrot.slane %v1078, %v1081
  %v1084 = vsel %vm1034, %v1072, 0
  %v1087 = vsel %vm1034, %v1073, 0
  %1089 = vmatprep.subr.mxu0 0.0
  %1090 = vmatpush1.msra.mxu0 0.0
  %1091 = vmatprep.subr.mxu0 0.0
  %1092 = vmatpush1.msra.mxu0 0.0
  %1093 = vmatprep.subr.mxu0 0.0
  %1094 = vmatpush1.msra.mxu0 0.0
  %1095 = vmatprep.subr.mxu0 0.0
  %1096 = vmatpush1.msra.mxu0 0.0
  %1097 = vmatprep.subr.mxu0 0.0
  %1098 = vmatpush1.msra.mxu0 0.0
  %1099 = vmatprep.subr.mxu0 0.0
  %1100 = vmatpush1.msra.mxu0 0.0
  %1101 = vmatprep.subr.mxu0 0.0
  %1102 = vmatpush1.msra.mxu0 0.0
  %1103 = vmatprep.subr.mxu0 0.0
  %1104 = vmatpush1.msra.mxu0 0.0
  %1105 = vmatprep.subr.mxu0 0.0
  %1106 = vmatpush1.msra.mxu0 0.0
  %1107 = vmatprep.subr.mxu0 0.0
  %1108 = vmatpush1.msra.mxu0 0.0
  %1109 = vmatprep.subr.mxu0 0.0
  %1110 = vmatpush1.msra.mxu0 0.0
  %1111 = vmatprep.subr.mxu0 0.0
  %1112 = vmatpush1.msra.mxu0 0.0
  %1113 = vmatprep.subr.mxu0 0.0
  %1114 = vmatpush1.msra.mxu0 %v1077
  %1115 = vmatprep.subr.mxu0 0.0
  %1116 = vmatpush1.msra.mxu0 %v1076
  %1117 = vmatprep.subr.mxu0 0.0
  %1118 = vmatpush1.msra.mxu0 %v1075
  %1119 = vmatprep.subr.mxu0 0.0
  %1120 = vmatpush1.msra.mxu0 %v1074
  %1121 = vmatprep.subr.mxu0 0.0
  %1122 = vmatpush2.msra.mxu0 0.0
  %1123 = vmatprep.subr.mxu0 0.0
  %1124 = vmatpush2.msra.mxu0 0.0
  %1125 = vmatprep.subr.mxu0 0.0
  %1126 = vmatpush2.msra.mxu0 0.0
  %1127 = vmatprep.subr.mxu0 0.0
  %1128 = vmatpush2.msra.mxu0 0.0
  %1129 = vmatprep.subr.mxu0 0.0
  %1130 = vmatpush2.msra.mxu0 0.0
  %1131 = vmatprep.subr.mxu0 0.0
  %1132 = vmatpush2.msra.mxu0 0.0
  %1133 = vmatprep.subr.mxu0 0.0
  %1134 = vmatpush2.msra.mxu0 0.0
  %1135 = vmatprep.subr.mxu0 0.0
  %1136 = vmatpush2.msra.mxu0 0.0
  %1137 = vmatprep.subr.mxu0 0.0
  %1138 = vmatpush2.msra.mxu0 0.0
  %1139 = vmatprep.subr.mxu0 0.0
  %1140 = vmatpush2.msra.mxu0 0.0
  %1141 = vmatprep.subr.mxu0 0.0
  %1142 = vmatpush2.msra.mxu0 0.0
  %1143 = vmatprep.subr.mxu0 0.0
  %1144 = vmatpush2.msra.mxu0 0.0
  %1145 = vmatprep.subr.mxu0 0.0
  %1146 = vmatpush2.msra.mxu0 0.0
  %1147 = vmatprep.subr.mxu0 0.0
  %1148 = vmatpush2.msra.mxu0 0.0
  %1149 = vmatprep.subr.mxu0 0.0
  %1150 = vmatpush2.msra.mxu0 0.0
  %1151 = vmatprep.subr.mxu0 0.0
  %1152 = vmatpush2.msra.mxu0 0.0
  %1153 = vmatprep.mubr.f32.mxu0 0.0
  %1154 = vmatmul.mubr.f32.gmra.mxu0 %v1084
  %v1155 = vpop.f32.mrf.mxu0
  %v1156 = vadd.f32 %v1082, %v1155
  %v1157 = vpop.f32.mrf.mxu0
  %1158 = vmatprep.mubr.f32.mxu0 0.0
  %1159 = vmatmul.mubr.f32.gmra.mxu0 %v1087
  %v1160 = vpop.f32.mrf.mxu0
  %v1161 = vadd.f32 %v1082, %v1160
  %v1162 = vpop.f32.mrf.mxu0
  %1163 = vdwg.mxu0
  %v1164 = vxor.u32 %v1156, 2147483648
  %v1165 = vxor.u32 %v1161, 2147483648
  %v1166 = vmul.f32 %v1164, 1.442695
  %v1167 = vpow.pop %v1166
  %v1168 = vmul.f32 %v1165, 1.442695
  %v1169 = vpow.pop %v1168
  %v1170 = vadd.f32 %v1167, 1.0
  %v1171 = vadd.f32 %v1169, 1.0
  %v1172 = vrcp.pop %v1170
  %v1173 = vmul.f32 1.0, %v1172
  %v1174 = vrcp.pop %v1171
  %v1175 = vmul.f32 1.0, %v1174
  %v1176 = vmul.f32 %v1156, %v1173
  %v1177 = vmul.f32 %v1161, %v1175
  %v1178 = vld [vmem:[%s4 + $0x78] sm:$0xff]
  %v1179 = vld [vmem:[%s4 + $0x80] sm:$0xff]
  %v1180 = vld [vmem:[%s4 + $0x88] sm:$0xff]
  %v1181 = vld [vmem:[%s4 + $0x90] sm:$0xff]
  %v1182 = vld [vmem:[%s4 + $0x98] sm:$0xff]
  %v1183 = vld [vmem:[%s4 + $0xa0] sm:$0xff]
  %v1184 = vld [vmem:[%s4 + $0xa8] sm:$0xff]
  %v1185 = vld [vmem:[%s4 + $0xb0] sm:$0xff]
  %v1186 = vld [vmem:[%s4 + $0xb8] sm:$0x1]
  %v1187 = vlaneseq
  %v1188 = vshrl.u32 %v1187, 7
  %v1189 = vsub.s32 0, %v1188
  %v1190 = vrot.slane %v1186, %v1189
  %vm1191 = vcmask 523264
  %v1193 = vsel %vm1191, %v1176, 0
  %v1196 = vsel %vm1191, %v1177, 0
  %1198 = vmatprep.subr.mxu0 0.0
  %1199 = vmatpush1.msra.mxu0 0.0
  %1200 = vmatprep.subr.mxu0 0.0
  %1201 = vmatpush1.msra.mxu0 0.0
  %1202 = vmatprep.subr.mxu0 0.0
  %1203 = vmatpush1.msra.mxu0 0.0
  %1204 = vmatprep.subr.mxu0 0.0
  %1205 = vmatpush1.msra.mxu0 0.0
  %1206 = vmatprep.subr.mxu0 0.0
  %1207 = vmatpush1.msra.mxu0 0.0
  %1208 = vmatprep.subr.mxu0 0.0
  %1209 = vmatpush1.msra.mxu0 0.0
  %1210 = vmatprep.subr.mxu0 0.0
  %1211 = vmatpush1.msra.mxu0 0.0
  %1212 = vmatprep.subr.mxu0 0.0
  %1213 = vmatpush1.msra.mxu0 0.0
  %1214 = vmatprep.subr.mxu0 0.0
  %1215 = vmatpush1.msra.mxu0 %v1185
  %1216 = vmatprep.subr.mxu0 0.0
  %1217 = vmatpush1.msra.mxu0 %v1184
  %1218 = vmatprep.subr.mxu0 0.0
  %1219 = vmatpush1.msra.mxu0 %v1183
  %1220 = vmatprep.subr.mxu0 0.0
  %1221 = vmatpush1.msra.mxu0 %v1182
  %1222 = vmatprep.subr.mxu0 0.0
  %1223 = vmatpush1.msra.mxu0 %v1181
  %1224 = vmatprep.subr.mxu0 0.0
  %1225 = vmatpush1.msra.mxu0 %v1180
  %1226 = vmatprep.subr.mxu0 0.0
  %1227 = vmatpush1.msra.mxu0 %v1179
  %1228 = vmatprep.subr.mxu0 0.0
  %1229 = vmatpush1.msra.mxu0 %v1178
  %1230 = vmatprep.subr.mxu0 0.0
  %1231 = vmatpush2.msra.mxu0 0.0
  %1232 = vmatprep.subr.mxu0 0.0
  %1233 = vmatpush2.msra.mxu0 0.0
  %1234 = vmatprep.subr.mxu0 0.0
  %1235 = vmatpush2.msra.mxu0 0.0
  %1236 = vmatprep.subr.mxu0 0.0
  %1237 = vmatpush2.msra.mxu0 0.0
  %1238 = vmatprep.subr.mxu0 0.0
  %1239 = vmatpush2.msra.mxu0 0.0
  %1240 = vmatprep.subr.mxu0 0.0
  %1241 = vmatpush2.msra.mxu0 0.0
  %1242 = vmatprep.subr.mxu0 0.0
  %1243 = vmatpush2.msra.mxu0 0.0
  %1244 = vmatprep.subr.mxu0 0.0
  %1245 = vmatpush2.msra.mxu0 0.0
  %1246 = vmatprep.subr.mxu0 0.0
  %1247 = vmatpush2.msra.mxu0 0.0
  %1248 = vmatprep.subr.mxu0 0.0
  %1249 = vmatpush2.msra.mxu0 0.0
  %1250 = vmatprep.subr.mxu0 0.0
  %1251 = vmatpush2.msra.mxu0 0.0
  %1252 = vmatprep.subr.mxu0 0.0
  %1253 = vmatpush2.msra.mxu0 0.0
  %1254 = vmatprep.subr.mxu0 0.0
  %1255 = vmatpush2.msra.mxu0 0.0
  %1256 = vmatprep.subr.mxu0 0.0
  %1257 = vmatpush2.msra.mxu0 0.0
  %1258 = vmatprep.subr.mxu0 0.0
  %1259 = vmatpush2.msra.mxu0 0.0
  %1260 = vmatprep.subr.mxu0 0.0
  %1261 = vmatpush2.msra.mxu0 0.0
  %1262 = vmatprep.mubr.f32.mxu0 0.0
  %1263 = vmatmul.mubr.f32.gmra.mxu0 %v1193
  %v1264 = vpop.f32.mrf.mxu0
  %v1265 = vadd.f32 %v1190, %v1264
  %v1266 = vpop.f32.mrf.mxu0
  %1267 = vmatprep.mubr.f32.mxu0 0.0
  %1268 = vmatmul.mubr.f32.gmra.mxu0 %v1196
  %v1269 = vpop.f32.mrf.mxu0
  %v1270 = vadd.f32 %v1190, %v1269
  %v1271 = vpop.f32.mrf.mxu0
  %1272 = vdwg.mxu0
  %v1273 = vmul.f32 %v1265, 0.5
  %v1274 = vmul.f32 %v1270, 0.5
  %v1275 = vadd.f32 %v862, %v1273
  %v1276 = vadd.f32 %v863, %v1274
  %v1277 = vld [vmem:[%s4 + $0x10] sm:$0x1]
  %v1278 = vld [vmem:[%s4 + $0x18] sm:$0x1]
  %v1279 = vsel %vm1034, %v1275, 0.0
  %1280 = vadd.xlane.f32.xlu0 %v1279
  %v1281 = vpop.xlane.xlu0 %1280
  %v1282 = vsel %vm1034, %v1276, 0.0
  %1283 = vadd.xlane.f32.xlu0 %v1282
  %v1284 = vpop.xlane.xlu0 %1283
  %v1285 = vmul.f32 %v1281, %v1041
  %v1286 = vmul.f32 %v1284, %v1041
  %v1287 = vsub.f32 %v1275, %v1285
  %v1288 = vsub.f32 %v1276, %v1286
  %v1289 = vmul.f32 %v1287, %v1287
  %v1290 = vmul.f32 %v1288, %v1288
  %v1291 = vsel %vm1034, %v1289, 0.0
  %1292 = vadd.xlane.f32.xlu0 %v1291
  %v1293 = vpop.xlane.xlu0 %1292
  %v1294 = vsel %vm1034, %v1290, 0.0
  %1295 = vadd.xlane.f32.xlu0 %v1294
  %v1296 = vpop.xlane.xlu0 %1295
  %v1297 = vmul.f32 %v1293, %v1041
  %v1298 = vmul.f32 %v1296, %v1041
  %v1299 = vadd.f32 %v1297, 1e-05
  %v1300 = vadd.f32 %v1298, 1e-05
  %v1301 = vrsqrt.pop %v1299
  %v1302 = vrsqrt.pop %v1300
  %v1303 = vmul.f32 %v1287, %v1301
  %v1304 = vmul.f32 %v1288, %v1302
  %v1305 = vlaneseq
  %v1306 = vshrl.u32 %v1305, 7
  %v1307 = vsub.s32 0, %v1306
  %v1308 = vrot.slane %v1277, %v1307
  %v1309 = vmul.f32 %v1303, %v1308
  %v1310 = vmul.f32 %v1304, %v1308
  %v1311 = vlaneseq
  %v1312 = vshrl.u32 %v1311, 7
  %v1313 = vsub.s32 0, %v1312
  %v1314 = vrot.slane %v1278, %v1313
  %v1315 = vadd.f32 %v1309, %v1314
  %v1316 = vadd.f32 %v1310, %v1314
  %v1317 = vld [vmem:[%s4 + $0xc0] sm:$0xff]
  %v1318 = vld [vmem:[%s4 + $0xc8] sm:$0xff]
  %v1319 = vld [vmem:[%s4 + $0xd0] sm:$0xff]
  %v1320 = vld [vmem:[%s4 + $0xd8] sm:$0xff]
  %v1321 = vld [vmem:[%s4 + $0xe0] sm:$0x1]
  %v1322 = vlaneseq
  %v1323 = vshrl.u32 %v1322, 7
  %v1324 = vsub.s32 0, %v1323
  %v1325 = vrot.slane %v1321, %v1324
  %v1327 = vsel %vm1034, %v1315, 0
  %v1330 = vsel %vm1034, %v1316, 0
  %1332 = vmatprep.subr.mxu0 0.0
  %1333 = vmatpush1.msra.mxu0 0.0
  %1334 = vmatprep.subr.mxu0 0.0
  %1335 = vmatpush1.msra.mxu0 0.0
  %1336 = vmatprep.subr.mxu0 0.0
  %1337 = vmatpush1.msra.mxu0 0.0
  %1338 = vmatprep.subr.mxu0 0.0
  %1339 = vmatpush1.msra.mxu0 0.0
  %1340 = vmatprep.subr.mxu0 0.0
  %1341 = vmatpush1.msra.mxu0 0.0
  %1342 = vmatprep.subr.mxu0 0.0
  %1343 = vmatpush1.msra.mxu0 0.0
  %1344 = vmatprep.subr.mxu0 0.0
  %1345 = vmatpush1.msra.mxu0 0.0
  %1346 = vmatprep.subr.mxu0 0.0
  %1347 = vmatpush1.msra.mxu0 0.0
  %1348 = vmatprep.subr.mxu0 0.0
  %1349 = vmatpush1.msra.mxu0 0.0
  %1350 = vmatprep.subr.mxu0 0.0
  %1351 = vmatpush1.msra.mxu0 0.0
  %1352 = vmatprep.subr.mxu0 0.0
  %1353 = vmatpush1.msra.mxu0 0.0
  %1354 = vmatprep.subr.mxu0 0.0
  %1355 = vmatpush1.msra.mxu0 0.0
  %1356 = vmatprep.subr.mxu0 0.0
  %1357 = vmatpush1.msra.mxu0 %v1320
  %1358 = vmatprep.subr.mxu0 0.0
  %1359 = vmatpush1.msra.mxu0 %v1319
  %1360 = vmatprep.subr.mxu0 0.0
  %1361 = vmatpush1.msra.mxu0 %v1318
  %1362 = vmatprep.subr.mxu0 0.0
  %1363 = vmatpush1.msra.mxu0 %v1317
  %1364 = vmatprep.subr.mxu0 0.0
  %1365 = vmatpush2.msra.mxu0 0.0
  %1366 = vmatprep.subr.mxu0 0.0
  %1367 = vmatpush2.msra.mxu0 0.0
  %1368 = vmatprep.subr.mxu0 0.0
  %1369 = vmatpush2.msra.mxu0 0.0
  %1370 = vmatprep.subr.mxu0 0.0
  %1371 = vmatpush2.msra.mxu0 0.0
  %1372 = vmatprep.subr.mxu0 0.0
  %1373 = vmatpush2.msra.mxu0 0.0
  %1374 = vmatprep.subr.mxu0 0.0
  %1375 = vmatpush2.msra.mxu0 0.0
  %1376 = vmatprep.subr.mxu0 0.0
  %1377 = vmatpush2.msra.mxu0 0.0
  %1378 = vmatprep.subr.mxu0 0.0
  %1379 = vmatpush2.msra.mxu0 0.0
  %1380 = vmatprep.subr.mxu0 0.0
  %1381 = vmatpush2.msra.mxu0 0.0
  %1382 = vmatprep.subr.mxu0 0.0
  %1383 = vmatpush2.msra.mxu0 0.0
  %1384 = vmatprep.subr.mxu0 0.0
  %1385 = vmatpush2.msra.mxu0 0.0
  %1386 = vmatprep.subr.mxu0 0.0
  %1387 = vmatpush2.msra.mxu0 0.0
  %1388 = vmatprep.subr.mxu0 0.0
  %1389 = vmatpush2.msra.mxu0 0.0
  %1390 = vmatprep.subr.mxu0 0.0
  %1391 = vmatpush2.msra.mxu0 0.0
  %1392 = vmatprep.subr.mxu0 0.0
  %1393 = vmatpush2.msra.mxu0 0.0
  %1394 = vmatprep.subr.mxu0 0.0
  %1395 = vmatpush2.msra.mxu0 0.0
  %1396 = vmatprep.mubr.f32.mxu0 0.0
  %1397 = vmatmul.mubr.f32.gmra.mxu0 %v1327
  %v1398 = vpop.f32.mrf.mxu0
  %v1399 = vadd.f32 %v1325, %v1398
  %v1400 = vpop.f32.mrf.mxu0
  %1401 = vmatprep.mubr.f32.mxu0 0.0
  %1402 = vmatmul.mubr.f32.gmra.mxu0 %v1330
  %v1403 = vpop.f32.mrf.mxu0
  %v1404 = vadd.f32 %v1325, %v1403
  %v1405 = vpop.f32.mrf.mxu0
  %1406 = vdwg.mxu0
  %v1407 = vld [vmem:[%s4 + $0xe8] sm:$0xff]
  %v1408 = vld [vmem:[%s4 + $0xf0] sm:$0xff]
  %v1409 = vld [vmem:[%s4 + $0xf8] sm:$0xff]
  %v1410 = vld [vmem:[%s4 + $0x100] sm:$0xff]
  %v1411 = vld [vmem:[%s4 + $0x108] sm:$0x1]
  %v1412 = vlaneseq
  %v1413 = vshrl.u32 %v1412, 7
  %v1414 = vsub.s32 0, %v1413
  %v1415 = vrot.slane %v1411, %v1414
  %1416 = vmatprep.subr.mxu0 0.0
  %1417 = vmatpush1.msra.mxu0 0.0
  %1418 = vmatprep.subr.mxu0 0.0
  %1419 = vmatpush1.msra.mxu0 0.0
  %1420 = vmatprep.subr.mxu0 0.0
  %1421 = vmatpush1.msra.mxu0 0.0
  %1422 = vmatprep.subr.mxu0 0.0
  %1423 = vmatpush1.msra.mxu0 0.0
  %1424 = vmatprep.subr.mxu0 0.0
  %1425 = vmatpush1.msra.mxu0 0.0
  %1426 = vmatprep.subr.mxu0 0.0
  %1427 = vmatpush1.msra.mxu0 0.0
  %1428 = vmatprep.subr.mxu0 0.0
  %1429 = vmatpush1.msra.mxu0 0.0
  %1430 = vmatprep.subr.mxu0 0.0
  %1431 = vmatpush1.msra.mxu0 0.0
  %1432 = vmatprep.subr.mxu0 0.0
  %1433 = vmatpush1.msra.mxu0 0.0
  %1434 = vmatprep.subr.mxu0 0.0
  %1435 = vmatpush1.msra.mxu0 0.0
  %1436 = vmatprep.subr.mxu0 0.0
  %1437 = vmatpush1.msra.mxu0 0.0
  %1438 = vmatprep.subr.mxu0 0.0
  %1439 = vmatpush1.msra.mxu0 0.0
  %1440 = vmatprep.subr.mxu0 0.0
  %1441 = vmatpush1.msra.mxu0 %v1410
  %1442 = vmatprep.subr.mxu0 0.0
  %1443 = vmatpush1.msra.mxu0 %v1409
  %1444 = vmatprep.subr.mxu0 0.0
  %1445 = vmatpush1.msra.mxu0 %v1408
  %1446 = vmatprep.subr.mxu0 0.0
  %1447 = vmatpush1.msra.mxu0 %v1407
  %1448 = vmatprep.subr.mxu0 0.0
  %1449 = vmatpush2.msra.mxu0 0.0
  %1450 = vmatprep.subr.mxu0 0.0
  %1451 = vmatpush2.msra.mxu0 0.0
  %1452 = vmatprep.subr.mxu0 0.0
  %1453 = vmatpush2.msra.mxu0 0.0
  %1454 = vmatprep.subr.mxu0 0.0
  %1455 = vmatpush2.msra.mxu0 0.0
  %1456 = vmatprep.subr.mxu0 0.0
  %1457 = vmatpush2.msra.mxu0 0.0
  %1458 = vmatprep.subr.mxu0 0.0
  %1459 = vmatpush2.msra.mxu0 0.0
  %1460 = vmatprep.subr.mxu0 0.0
  %1461 = vmatpush2.msra.mxu0 0.0
  %1462 = vmatprep.subr.mxu0 0.0
  %1463 = vmatpush2.msra.mxu0 0.0
  %1464 = vmatprep.subr.mxu0 0.0
  %1465 = vmatpush2.msra.mxu0 0.0
  %1466 = vmatprep.subr.mxu0 0.0
  %1467 = vmatpush2.msra.mxu0 0.0
  %1468 = vmatprep.subr.mxu0 0.0
  %1469 = vmatpush2.msra.mxu0 0.0
  %1470 = vmatprep.subr.mxu0 0.0
  %1471 = vmatpush2.msra.mxu0 0.0
  %1472 = vmatprep.subr.mxu0 0.0
  %1473 = vmatpush2.msra.mxu0 0.0
  %1474 = vmatprep.subr.mxu0 0.0
  %1475 = vmatpush2.msra.mxu0 0.0
  %1476 = vmatprep.subr.mxu0 0.0
  %1477 = vmatpush2.msra.mxu0 0.0
  %1478 = vmatprep.subr.mxu0 0.0
  %1479 = vmatpush2.msra.mxu0 0.0
  %1480 = vmatprep.mubr.f32.mxu0 0.0
  %1481 = vmatmul.mubr.f32.gmra.mxu0 %v1327
  %v1482 = vpop.f32.mrf.mxu0
  %v1483 = vadd.f32 %v1415, %v1482
  %v1484 = vpop.f32.mrf.mxu0
  %1485 = vmatprep.mubr.f32.mxu0 0.0
  %1486 = vmatmul.mubr.f32.gmra.mxu0 %v1330
  %v1487 = vpop.f32.mrf.mxu0
  %v1488 = vadd.f32 %v1415, %v1487
  %v1489 = vpop.f32.mrf.mxu0
  %1490 = vdwg.mxu0
  %v1491 = vld [vmem:[%s4 + $0x110] sm:$0xff]
  %v1492 = vld [vmem:[%s4 + $0x118] sm:$0xff]
  %v1493 = vld [vmem:[%s4 + $0x120] sm:$0xff]
  %v1494 = vld [vmem:[%s4 + $0x128] sm:$0xff]
  %v1495 = vld [vmem:[%s4 + $0x130] sm:$0x1]
  %v1496 = vlaneseq
  %v1497 = vshrl.u32 %v1496, 7
  %v1498 = vsub.s32 0, %v1497
  %v1499 = vrot.slane %v1495, %v1498
  %1500 = vmatprep.subr.mxu0 0.0
  %1501 = vmatpush1.msra.mxu0 0.0
  %1502 = vmatprep.subr.mxu0 0.0
  %1503 = vmatpush1.msra.mxu0 0.0
  %1504 = vmatprep.subr.mxu0 0.0
  %1505 = vmatpush1.msra.mxu0 0.0
  %1506 = vmatprep.subr.mxu0 0.0
  %1507 = vmatpush1.msra.mxu0 0.0
  %1508 = vmatprep.subr.mxu0 0.0
  %1509 = vmatpush1.msra.mxu0 0.0
  %1510 = vmatprep.subr.mxu0 0.0
  %1511 = vmatpush1.msra.mxu0 0.0
  %1512 = vmatprep.subr.mxu0 0.0
  %1513 = vmatpush1.msra.mxu0 0.0
  %1514 = vmatprep.subr.mxu0 0.0
  %1515 = vmatpush1.msra.mxu0 0.0
  %1516 = vmatprep.subr.mxu0 0.0
  %1517 = vmatpush1.msra.mxu0 0.0
  %1518 = vmatprep.subr.mxu0 0.0
  %1519 = vmatpush1.msra.mxu0 0.0
  %1520 = vmatprep.subr.mxu0 0.0
  %1521 = vmatpush1.msra.mxu0 0.0
  %1522 = vmatprep.subr.mxu0 0.0
  %1523 = vmatpush1.msra.mxu0 0.0
  %1524 = vmatprep.subr.mxu0 0.0
  %1525 = vmatpush1.msra.mxu0 %v1494
  %1526 = vmatprep.subr.mxu0 0.0
  %1527 = vmatpush1.msra.mxu0 %v1493
  %1528 = vmatprep.subr.mxu0 0.0
  %1529 = vmatpush1.msra.mxu0 %v1492
  %1530 = vmatprep.subr.mxu0 0.0
  %1531 = vmatpush1.msra.mxu0 %v1491
  %1532 = vmatprep.subr.mxu0 0.0
  %1533 = vmatpush2.msra.mxu0 0.0
  %1534 = vmatprep.subr.mxu0 0.0
  %1535 = vmatpush2.msra.mxu0 0.0
  %1536 = vmatprep.subr.mxu0 0.0
  %1537 = vmatpush2.msra.mxu0 0.0
  %1538 = vmatprep.subr.mxu0 0.0
  %1539 = vmatpush2.msra.mxu0 0.0
  %1540 = vmatprep.subr.mxu0 0.0
  %1541 = vmatpush2.msra.mxu0 0.0
  %1542 = vmatprep.subr.mxu0 0.0
  %1543 = vmatpush2.msra.mxu0 0.0
  %1544 = vmatprep.subr.mxu0 0.0
  %1545 = vmatpush2.msra.mxu0 0.0
  %1546 = vmatprep.subr.mxu0 0.0
  %1547 = vmatpush2.msra.mxu0 0.0
  %1548 = vmatprep.subr.mxu0 0.0
  %1549 = vmatpush2.msra.mxu0 0.0
  %1550 = vmatprep.subr.mxu0 0.0
  %1551 = vmatpush2.msra.mxu0 0.0
  %1552 = vmatprep.subr.mxu0 0.0
  %1553 = vmatpush2.msra.mxu0 0.0
  %1554 = vmatprep.subr.mxu0 0.0
  %1555 = vmatpush2.msra.mxu0 0.0
  %1556 = vmatprep.subr.mxu0 0.0
  %1557 = vmatpush2.msra.mxu0 0.0
  %1558 = vmatprep.subr.mxu0 0.0
  %1559 = vmatpush2.msra.mxu0 0.0
  %1560 = vmatprep.subr.mxu0 0.0
  %1561 = vmatpush2.msra.mxu0 0.0
  %1562 = vmatprep.subr.mxu0 0.0
  %1563 = vmatpush2.msra.mxu0 0.0
  %1564 = vmatprep.mubr.f32.mxu0 0.0
  %1565 = vmatmul.mubr.f32.gmra.mxu0 %v1327
  %v1566 = vpop.f32.mrf.mxu0
  %v1567 = vadd.f32 %v1499, %v1566
  %v1568 = vpop.f32.mrf.mxu0
  %1569 = vmatprep.mubr.f32.mxu0 0.0
  %1570 = vmatmul.mubr.f32.gmra.mxu0 %v1330
  %v1571 = vpop.f32.mrf.mxu0
  %v1572 = vadd.f32 %v1499, %v1571
  %v1573 = vpop.f32.mrf.mxu0
  %1574 = vdwg.mxu0
  %v1575 = vld [vmem:[%s4 + $0x138] sm:$0xff]
  %v1576 = vld [vmem:[%s4 + $0x140] sm:$0xff]
  %v1577 = vld [vmem:[%s4 + $0x148] sm:$0xff]
  %v1578 = vld [vmem:[%s4 + $0x150] sm:$0xff]
  %v1580 = vsel %vm1034, %v882, 0
  %v1583 = vsel %vm1034, %v883, 0
  %1585 = vmatprep.subr.mxu0 0.0
  %1586 = vmatpush1.msra.mxu0 0.0
  %1587 = vmatprep.subr.mxu0 0.0
  %1588 = vmatpush1.msra.mxu0 0.0
  %1589 = vmatprep.subr.mxu0 0.0
  %1590 = vmatpush1.msra.mxu0 0.0
  %1591 = vmatprep.subr.mxu0 0.0
  %1592 = vmatpush1.msra.mxu0 0.0
  %1593 = vmatprep.subr.mxu0 0.0
  %1594 = vmatpush1.msra.mxu0 0.0
  %1595 = vmatprep.subr.mxu0 0.0
  %1596 = vmatpush1.msra.mxu0 0.0
  %1597 = vmatprep.subr.mxu0 0.0
  %1598 = vmatpush1.msra.mxu0 0.0
  %1599 = vmatprep.subr.mxu0 0.0
  %1600 = vmatpush1.msra.mxu0 0.0
  %1601 = vmatprep.subr.mxu0 0.0
  %1602 = vmatpush1.msra.mxu0 0.0
  %1603 = vmatprep.subr.mxu0 0.0
  %1604 = vmatpush1.msra.mxu0 0.0
  %1605 = vmatprep.subr.mxu0 0.0
  %1606 = vmatpush1.msra.mxu0 0.0
  %1607 = vmatprep.subr.mxu0 0.0
  %1608 = vmatpush1.msra.mxu0 0.0
  %1609 = vmatprep.subr.mxu0 0.0
  %1610 = vmatpush1.msra.mxu0 %v1578
  %1611 = vmatprep.subr.mxu0 0.0
  %1612 = vmatpush1.msra.mxu0 %v1577
  %1613 = vmatprep.subr.mxu0 0.0
  %1614 = vmatpush1.msra.mxu0 %v1576
  %1615 = vmatprep.subr.mxu0 0.0
  %1616 = vmatpush1.msra.mxu0 %v1575
  %1617 = vmatprep.subr.mxu0 0.0
  %1618 = vmatpush2.msra.mxu0 0.0
  %1619 = vmatprep.subr.mxu0 0.0
  %1620 = vmatpush2.msra.mxu0 0.0
  %1621 = vmatprep.subr.mxu0 0.0
  %1622 = vmatpush2.msra.mxu0 0.0
  %1623 = vmatprep.subr.mxu0 0.0
  %1624 = vmatpush2.msra.mxu0 0.0
  %1625 = vmatprep.subr.mxu0 0.0
  %1626 = vmatpush2.msra.mxu0 0.0
  %1627 = vmatprep.subr.mxu0 0.0
  %1628 = vmatpush2.msra.mxu0 0.0
  %1629 = vmatprep.subr.mxu0 0.0
  %1630 = vmatpush2.msra.mxu0 0.0
  %1631 = vmatprep.subr.mxu0 0.0
  %1632 = vmatpush2.msra.mxu0 0.0
  %1633 = vmatprep.subr.mxu0 0.0
  %1634 = vmatpush2.msra.mxu0 0.0
  %1635 = vmatprep.subr.mxu0 0.0
  %1636 = vmatpush2.msra.mxu0 0.0
  %1637 = vmatprep.subr.mxu0 0.0
  %1638 = vmatpush2.msra.mxu0 0.0
  %1639 = vmatprep.subr.mxu0 0.0
  %1640 = vmatpush2.msra.mxu0 0.0
  %1641 = vmatprep.subr.mxu0 0.0
  %1642 = vmatpush2.msra.mxu0 0.0
  %1643 = vmatprep.subr.mxu0 0.0
  %1644 = vmatpush2.msra.mxu0 0.0
  %1645 = vmatprep.subr.mxu0 0.0
  %1646 = vmatpush2.msra.mxu0 0.0
  %1647 = vmatprep.subr.mxu0 0.0
  %1648 = vmatpush2.msra.mxu0 0.0
  %1649 = vmatprep.mubr.f32.mxu0 0.0
  %1650 = vmatmul.mubr.f32.gmra.mxu0 %v1580
  %v1651 = vpop.f32.mrf.mxu0
  %v1652 = vadd.f32 0.0, %v1651
  %v1653 = vpop.f32.mrf.mxu0
  %1654 = vmatprep.mubr.f32.mxu0 0.0
  %1655 = vmatmul.mubr.f32.gmra.mxu0 %v1583
  %v1656 = vpop.f32.mrf.mxu0
  %v1657 = vadd.f32 0.0, %v1656
  %v1658 = vpop.f32.mrf.mxu0
  %1659 = vdwg.mxu0
  %v1660 = vld [vmem:[%s4 + $0x158] sm:$0x1]
  %v1661 = vlaneseq
  %v1662 = vshrl.u32 %v1661, 7
  %v1663 = vsub.s32 0, %v1662
  %v1664 = vrot.slane %v1660, %v1663
  %v1665 = vadd.f32 %v1399, %v1664
  %v1666 = vadd.f32 %v1404, %v1664
  %1667 = vmatprep.subr.mxu0 0.0
  %1668 = vmatpush1.msra.mxu0 0.0
  %1669 = vmatprep.subr.mxu0 0.0
  %1670 = vmatpush1.msra.mxu0 0.0
  %1671 = vmatprep.subr.mxu0 0.0
  %1672 = vmatpush1.msra.mxu0 0.0
  %1673 = vmatprep.subr.mxu0 0.0
  %1674 = vmatpush1.msra.mxu0 0.0
  %1675 = vmatprep.subr.mxu0 0.0
  %1676 = vmatpush1.msra.mxu0 0.0
  %1677 = vmatprep.subr.mxu0 0.0
  %1678 = vmatpush1.msra.mxu0 0.0
  %1679 = vmatprep.subr.mxu0 0.0
  %1680 = vmatpush1.msra.mxu0 0.0
  %1681 = vmatprep.subr.mxu0 0.0
  %1682 = vmatpush1.msra.mxu0 0.0
  %1683 = vmatprep.subr.mxu0 0.0
  %1684 = vmatpush1.msra.mxu0 0.0
  %1685 = vmatprep.subr.mxu0 0.0
  %1686 = vmatpush1.msra.mxu0 0.0
  %1687 = vmatprep.subr.mxu0 0.0
  %1688 = vmatpush1.msra.mxu0 0.0
  %1689 = vmatprep.subr.mxu0 0.0
  %1690 = vmatpush1.msra.mxu0 0.0
  %1691 = vmatprep.subr.mxu0 0.0
  %1692 = vmatpush1.msra.mxu0 0.0
  %1693 = vmatprep.subr.mxu0 0.0
  %1694 = vmatpush1.msra.mxu0 0.0
  %1695 = vmatprep.subr.mxu0 0.0
  %1696 = vmatpush1.msra.mxu0 %v1666
  %1697 = vmatprep.subr.mxu0 0.0
  %1698 = vmatpush1.msra.mxu0 %v1665
  %1699 = vmatprep.subr.mxu0 0.0
  %1700 = vmatpush2.msra.mxu0 0.0
  %1701 = vmatprep.subr.mxu0 0.0
  %1702 = vmatpush2.msra.mxu0 0.0
  %1703 = vmatprep.subr.mxu0 0.0
  %1704 = vmatpush2.msra.mxu0 0.0
  %1705 = vmatprep.subr.mxu0 0.0
  %1706 = vmatpush2.msra.mxu0 0.0
  %1707 = vmatprep.subr.mxu0 0.0
  %1708 = vmatpush2.msra.mxu0 0.0
  %1709 = vmatprep.subr.mxu0 0.0
  %1710 = vmatpush2.msra.mxu0 0.0
  %1711 = vmatprep.subr.mxu0 0.0
  %1712 = vmatpush2.msra.mxu0 0.0
  %1713 = vmatprep.subr.mxu0 0.0
  %1714 = vmatpush2.msra.mxu0 0.0
  %1715 = vmatprep.subr.mxu0 0.0
  %1716 = vmatpush2.msra.mxu0 0.0
  %1717 = vmatprep.subr.mxu0 0.0
  %1718 = vmatpush2.msra.mxu0 0.0
  %1719 = vmatprep.subr.mxu0 0.0
  %1720 = vmatpush2.msra.mxu0 0.0
  %1721 = vmatprep.subr.mxu0 0.0
  %1722 = vmatpush2.msra.mxu0 0.0
  %1723 = vmatprep.subr.mxu0 0.0
  %1724 = vmatpush2.msra.mxu0 0.0
  %1725 = vmatprep.subr.mxu0 0.0
  %1726 = vmatpush2.msra.mxu0 0.0
  %1727 = vmatprep.subr.mxu0 0.0
  %1728 = vmatpush2.msra.mxu0 0.0
  %1729 = vmatprep.subr.mxu0 0.0
  %1730 = vmatpush2.msra.mxu0 0.0
  %1731 = vmatprep.mubr.f32.mxu0 0.0
  %1732 = vmatmul.mubr.f32.gmra.mxu0 %v892
  %v1733 = vpop.f32.mrf.mxu0
  %v1734 = vadd.f32 0.0, %v1733
  %v1735 = vpop.f32.mrf.mxu0
  %1736 = vmatprep.mubr.f32.mxu0 0.0
  %1737 = vmatmul.mubr.f32.gmra.mxu0 %v895
  %v1738 = vpop.f32.mrf.mxu0
  %v1739 = vadd.f32 0.0, %v1738
  %v1740 = vpop.f32.mrf.mxu0
  %1741 = vmatprep.mubr.f32.mxu0 0.0
  %1742 = vmatmul.mubr.f32.gmra.mxu0 %v898
  %v1743 = vpop.f32.mrf.mxu0
  %v1744 = vadd.f32 0.0, %v1743
  %v1745 = vpop.f32.mrf.mxu0
  %1746 = vmatprep.mubr.f32.mxu0 0.0
  %1747 = vmatmul.mubr.f32.gmra.mxu0 %v901
  %v1748 = vpop.f32.mrf.mxu0
  %v1749 = vadd.f32 0.0, %v1748
  %v1750 = vpop.f32.mrf.mxu0
  %1751 = vmatprep.mubr.f32.mxu0 0.0
  %1752 = vmatmul.mubr.f32.gmra.mxu0 %v904
  %v1753 = vpop.f32.mrf.mxu0
  %v1754 = vadd.f32 0.0, %v1753
  %v1755 = vpop.f32.mrf.mxu0
  %1756 = vmatprep.mubr.f32.mxu0 0.0
  %1757 = vmatmul.mubr.f32.gmra.mxu0 %v907
  %v1758 = vpop.f32.mrf.mxu0
  %v1759 = vadd.f32 0.0, %v1758
  %v1760 = vpop.f32.mrf.mxu0
  %1761 = vmatprep.mubr.f32.mxu0 0.0
  %1762 = vmatmul.mubr.f32.gmra.mxu0 %v910
  %v1763 = vpop.f32.mrf.mxu0
  %v1764 = vadd.f32 0.0, %v1763
  %v1765 = vpop.f32.mrf.mxu0
  %1766 = vmatprep.mubr.f32.mxu0 0.0
  %1767 = vmatmul.mubr.f32.gmra.mxu0 %v913
  %v1768 = vpop.f32.mrf.mxu0
  %v1769 = vadd.f32 0.0, %v1768
  %v1770 = vpop.f32.mrf.mxu0
  %1771 = vdwg.mxu0
  %v1772 = vmul.f32 %v1734, %v874
  %v1773 = vmul.f32 %v1739, %v875
  %v1774 = vmul.f32 %v1744, %v876
  %v1775 = vmul.f32 %v1749, %v877
  %v1776 = vmul.f32 %v1754, %v878
  %v1777 = vmul.f32 %v1759, %v879
  %v1778 = vmul.f32 %v1764, %v880
  %v1779 = vmul.f32 %v1769, %v881
  %v1780 = vld [vmem:[%s4 + $0x160] sm:$0x1]
  %v1781 = vlaneseq
  %v1782 = vshrl.u32 %v1781, 7
  %v1783 = vsub.s32 0, %v1782
  %v1784 = vrot.slane %v1780, %v1783
  %v1785 = vadd.f32 %v1399, %v1784
  %v1786 = vadd.f32 %v1404, %v1784
  %1787 = vmatprep.subr.mxu0 0.0
  %1788 = vmatpush1.msra.mxu0 0.0
  %1789 = vmatprep.subr.mxu0 0.0
  %1790 = vmatpush1.msra.mxu0 0.0
  %1791 = vmatprep.subr.mxu0 0.0
  %1792 = vmatpush1.msra.mxu0 0.0
  %1793 = vmatprep.subr.mxu0 0.0
  %1794 = vmatpush1.msra.mxu0 0.0
  %1795 = vmatprep.subr.mxu0 0.0
  %1796 = vmatpush1.msra.mxu0 0.0
  %1797 = vmatprep.subr.mxu0 0.0
  %1798 = vmatpush1.msra.mxu0 0.0
  %1799 = vmatprep.subr.mxu0 0.0
  %1800 = vmatpush1.msra.mxu0 0.0
  %1801 = vmatprep.subr.mxu0 0.0
  %1802 = vmatpush1.msra.mxu0 0.0
  %1803 = vmatprep.subr.mxu0 0.0
  %1804 = vmatpush1.msra.mxu0 0.0
  %1805 = vmatprep.subr.mxu0 0.0
  %1806 = vmatpush1.msra.mxu0 0.0
  %1807 = vmatprep.subr.mxu0 0.0
  %1808 = vmatpush1.msra.mxu0 0.0
  %1809 = vmatprep.subr.mxu0 0.0
  %1810 = vmatpush1.msra.mxu0 0.0
  %1811 = vmatprep.subr.mxu0 0.0
  %1812 = vmatpush1.msra.mxu0 0.0
  %1813 = vmatprep.subr.mxu0 0.0
  %1814 = vmatpush1.msra.mxu0 0.0
  %1815 = vmatprep.subr.mxu0 0.0
  %1816 = vmatpush1.msra.mxu0 %v1786
  %1817 = vmatprep.subr.mxu0 0.0
  %1818 = vmatpush1.msra.mxu0 %v1785
  %1819 = vmatprep.subr.mxu0 0.0
  %1820 = vmatpush2.msra.mxu0 0.0
  %1821 = vmatprep.subr.mxu0 0.0
  %1822 = vmatpush2.msra.mxu0 0.0
  %1823 = vmatprep.subr.mxu0 0.0
  %1824 = vmatpush2.msra.mxu0 0.0
  %1825 = vmatprep.subr.mxu0 0.0
  %1826 = vmatpush2.msra.mxu0 0.0
  %1827 = vmatprep.subr.mxu0 0.0
  %1828 = vmatpush2.msra.mxu0 0.0
  %1829 = vmatprep.subr.mxu0 0.0
  %1830 = vmatpush2.msra.mxu0 0.0
  %1831 = vmatprep.subr.mxu0 0.0
  %1832 = vmatpush2.msra.mxu0 0.0
  %1833 = vmatprep.subr.mxu0 0.0
  %1834 = vmatpush2.msra.mxu0 0.0
  %1835 = vmatprep.subr.mxu0 0.0
  %1836 = vmatpush2.msra.mxu0 0.0
  %1837 = vmatprep.subr.mxu0 0.0
  %1838 = vmatpush2.msra.mxu0 0.0
  %1839 = vmatprep.subr.mxu0 0.0
  %1840 = vmatpush2.msra.mxu0 0.0
  %1841 = vmatprep.subr.mxu0 0.0
  %1842 = vmatpush2.msra.mxu0 0.0
  %1843 = vmatprep.subr.mxu0 0.0
  %1844 = vmatpush2.msra.mxu0 0.0
  %1845 = vmatprep.subr.mxu0 0.0
  %1846 = vmatpush2.msra.mxu0 0.0
  %1847 = vmatprep.subr.mxu0 0.0
  %1848 = vmatpush2.msra.mxu0 0.0
  %1849 = vmatprep.subr.mxu0 0.0
  %1850 = vmatpush2.msra.mxu0 0.0
  %1851 = vmatprep.mubr.f32.mxu0 0.0
  %1852 = vmatmul.mubr.f32.gmra.mxu0 %v892
  %v1853 = vpop.f32.mrf.mxu0
  %v1854 = vadd.f32 0.0, %v1853
  %v1855 = vpop.f32.mrf.mxu0
  %1856 = vmatprep.mubr.f32.mxu0 0.0
  %1857 = vmatmul.mubr.f32.gmra.mxu0 %v895
  %v1858 = vpop.f32.mrf.mxu0
  %v1859 = vadd.f32 0.0, %v1858
  %v1860 = vpop.f32.mrf.mxu0
  %1861 = vmatprep.mubr.f32.mxu0 0.0
  %1862 = vmatmul.mubr.f32.gmra.mxu0 %v898
  %v1863 = vpop.f32.mrf.mxu0
  %v1864 = vadd.f32 0.0, %v1863
  %v1865 = vpop.f32.mrf.mxu0
  %1866 = vmatprep.mubr.f32.mxu0 0.0
  %1867 = vmatmul.mubr.f32.gmra.mxu0 %v901
  %v1868 = vpop.f32.mrf.mxu0
  %v1869 = vadd.f32 0.0, %v1868
  %v1870 = vpop.f32.mrf.mxu0
  %1871 = vmatprep.mubr.f32.mxu0 0.0
  %1872 = vmatmul.mubr.f32.gmra.mxu0 %v904
  %v1873 = vpop.f32.mrf.mxu0
  %v1874 = vadd.f32 0.0, %v1873
  %v1875 = vpop.f32.mrf.mxu0
  %1876 = vmatprep.mubr.f32.mxu0 0.0
  %1877 = vmatmul.mubr.f32.gmra.mxu0 %v907
  %v1878 = vpop.f32.mrf.mxu0
  %v1879 = vadd.f32 0.0, %v1878
  %v1880 = vpop.f32.mrf.mxu0
  %1881 = vmatprep.mubr.f32.mxu0 0.0
  %1882 = vmatmul.mubr.f32.gmra.mxu0 %v910
  %v1883 = vpop.f32.mrf.mxu0
  %v1884 = vadd.f32 0.0, %v1883
  %v1885 = vpop.f32.mrf.mxu0
  %1886 = vmatprep.mubr.f32.mxu0 0.0
  %1887 = vmatmul.mubr.f32.gmra.mxu0 %v913
  %v1888 = vpop.f32.mrf.mxu0
  %v1889 = vadd.f32 0.0, %v1888
  %v1890 = vpop.f32.mrf.mxu0
  %1891 = vdwg.mxu0
  %v1892 = vmul.f32 %v1854, %v874
  %v1893 = vmul.f32 %v1859, %v875
  %v1894 = vmul.f32 %v1864, %v876
  %v1895 = vmul.f32 %v1869, %v877
  %v1896 = vmul.f32 %v1874, %v878
  %v1897 = vmul.f32 %v1879, %v879
  %v1898 = vmul.f32 %v1884, %v880
  %v1899 = vmul.f32 %v1889, %v881
  %v1901 = vsel %vm1034, %v1892, 0
  %v1904 = vsel %vm1034, %v1893, 0
  %v1907 = vsel %vm1034, %v1894, 0
  %v1910 = vsel %vm1034, %v1895, 0
  %v1913 = vsel %vm1034, %v1896, 0
  %v1916 = vsel %vm1034, %v1897, 0
  %v1919 = vsel %vm1034, %v1898, 0
  %v1922 = vsel %vm1034, %v1899, 0
  %v1925 = vsel %vm1034, %v1652, 0
  %v1928 = vsel %vm1034, %v1657, 0
  %1930 = vmatprep.subr.mxu0 0.0
  %1931 = vmatpush1.xpose.msra.mxu0 0.0
  %1932 = vmatprep.subr.mxu0 0.0
  %1933 = vmatpush1.xpose.msra.mxu0 0.0
  %1934 = vmatprep.subr.mxu0 0.0
  %1935 = vmatpush1.xpose.msra.mxu0 0.0
  %1936 = vmatprep.subr.mxu0 0.0
  %1937 = vmatpush1.xpose.msra.mxu0 0.0
  %1938 = vmatprep.subr.mxu0 0.0
  %1939 = vmatpush1.xpose.msra.mxu0 0.0
  %1940 = vmatprep.subr.mxu0 0.0
  %1941 = vmatpush1.xpose.msra.mxu0 0.0
  %1942 = vmatprep.subr.mxu0 0.0
  %1943 = vmatpush1.xpose.msra.mxu0 0.0
  %1944 = vmatprep.subr.mxu0 0.0
  %1945 = vmatpush1.xpose.msra.mxu0 0.0
  %1946 = vmatprep.subr.mxu0 0.0
  %1947 = vmatpush1.xpose.msra.mxu0 0.0
  %1948 = vmatprep.subr.mxu0 0.0
  %1949 = vmatpush1.xpose.msra.mxu0 0.0
  %1950 = vmatprep.subr.mxu0 0.0
  %1951 = vmatpush1.xpose.msra.mxu0 0.0
  %1952 = vmatprep.subr.mxu0 0.0
  %1953 = vmatpush1.xpose.msra.mxu0 0.0
  %1954 = vmatprep.subr.mxu0 0.0
  %1955 = vmatpush1.xpose.msra.mxu0 0.0
  %1956 = vmatprep.subr.mxu0 0.0
  %1957 = vmatpush1.xpose.msra.mxu0 0.0
  %1958 = vmatprep.subr.mxu0 0.0
  %1959 = vmatpush1.xpose.msra.mxu0 %v1928
  %1960 = vmatprep.subr.mxu0 0.0
  %1961 = vmatpush1.xpose.msra.mxu0 %v1925
  %1962 = vmatprep.subr.mxu0 0.0
  %1963 = vmatpush2.xpose.msra.mxu0 0.0
  %1964 = vmatprep.subr.mxu0 0.0
  %1965 = vmatpush2.xpose.msra.mxu0 0.0
  %1966 = vmatprep.subr.mxu0 0.0
  %1967 = vmatpush2.xpose.msra.mxu0 0.0
  %1968 = vmatprep.subr.mxu0 0.0
  %1969 = vmatpush2.xpose.msra.mxu0 0.0
  %1970 = vmatprep.subr.mxu0 0.0
  %1971 = vmatpush2.xpose.msra.mxu0 0.0
  %1972 = vmatprep.subr.mxu0 0.0
  %1973 = vmatpush2.xpose.msra.mxu0 0.0
  %1974 = vmatprep.subr.mxu0 0.0
  %1975 = vmatpush2.xpose.msra.mxu0 0.0
  %1976 = vmatprep.subr.mxu0 0.0
  %1977 = vmatpush2.xpose.msra.mxu0 0.0
  %1978 = vmatprep.subr.mxu0 0.0
  %1979 = vmatpush2.xpose.msra.mxu0 0.0
  %1980 = vmatprep.subr.mxu0 0.0
  %1981 = vmatpush2.xpose.msra.mxu0 0.0
  %1982 = vmatprep.subr.mxu0 0.0
  %1983 = vmatpush2.xpose.msra.mxu0 0.0
  %1984 = vmatprep.subr.mxu0 0.0
  %1985 = vmatpush2.xpose.msra.mxu0 0.0
  %1986 = vmatprep.subr.mxu0 0.0
  %1987 = vmatpush2.xpose.msra.mxu0 0.0
  %1988 = vmatprep.subr.mxu0 0.0
  %1989 = vmatpush2.xpose.msra.mxu0 0.0
  %1990 = vmatprep.subr.mxu0 0.0
  %1991 = vmatpush2.xpose.msra.mxu0 0.0
  %1992 = vmatprep.subr.mxu0 0.0
  %1993 = vmatpush2.xpose.msra.mxu0 0.0
  %1994 = vmatprep.mubr.f32.mxu0 0.0
  %1995 = vmatmul.mubr.f32.gmra.mxu0 %v1901
  %v1996 = vpop.f32.mrf.mxu0
  %v1997 = vadd.f32 0.0, %v1996
  %v1998 = vpop.f32.mrf.mxu0
  %1999 = vmatprep.mubr.f32.mxu0 0.0
  %2000 = vmatmul.mubr.f32.gmra.mxu0 %v1904
  %v2001 = vpop.f32.mrf.mxu0
  %v2002 = vadd.f32 0.0, %v2001
  %v2003 = vpop.f32.mrf.mxu0
  %2004 = vmatprep.mubr.f32.mxu0 0.0
  %2005 = vmatmul.mubr.f32.gmra.mxu0 %v1907
  %v2006 = vpop.f32.mrf.mxu0
  %v2007 = vadd.f32 0.0, %v2006
  %v2008 = vpop.f32.mrf.mxu0
  %2009 = vmatprep.mubr.f32.mxu0 0.0
  %2010 = vmatmul.mubr.f32.gmra.mxu0 %v1910
  %v2011 = vpop.f32.mrf.mxu0
  %v2012 = vadd.f32 0.0, %v2011
  %v2013 = vpop.f32.mrf.mxu0
  %2014 = vmatprep.mubr.f32.mxu0 0.0
  %2015 = vmatmul.mubr.f32.gmra.mxu0 %v1913
  %v2016 = vpop.f32.mrf.mxu0
  %v2017 = vadd.f32 0.0, %v2016
  %v2018 = vpop.f32.mrf.mxu0
  %2019 = vmatprep.mubr.f32.mxu0 0.0
  %2020 = vmatmul.mubr.f32.gmra.mxu0 %v1916
  %v2021 = vpop.f32.mrf.mxu0
  %v2022 = vadd.f32 0.0, %v2021
  %v2023 = vpop.f32.mrf.mxu0
  %2024 = vmatprep.mubr.f32.mxu0 0.0
  %2025 = vmatmul.mubr.f32.gmra.mxu0 %v1919
  %v2026 = vpop.f32.mrf.mxu0
  %v2027 = vadd.f32 0.0, %v2026
  %v2028 = vpop.f32.mrf.mxu0
  %2029 = vmatprep.mubr.f32.mxu0 0.0
  %2030 = vmatmul.mubr.f32.gmra.mxu0 %v1922
  %v2031 = vpop.f32.mrf.mxu0
  %v2032 = vadd.f32 0.0, %v2031
  %v2033 = vpop.f32.mrf.mxu0
  %2034 = vdwg.mxu0
  %v2036 = vsel %vm1034, %v1772, 0
  %v2039 = vsel %vm1034, %v1773, 0
  %v2042 = vsel %vm1034, %v1774, 0
  %v2045 = vsel %vm1034, %v1775, 0
  %v2048 = vsel %vm1034, %v1776, 0
  %v2051 = vsel %vm1034, %v1777, 0
  %v2054 = vsel %vm1034, %v1778, 0
  %v2057 = vsel %vm1034, %v1779, 0
  %v2060 = vsel %vm1034, %v1483, 0
  %v2063 = vsel %vm1034, %v1488, 0
  %2065 = vmatprep.subr.mxu0 0.0
  %2066 = vmatpush1.xpose.msra.mxu0 0.0
  %2067 = vmatprep.subr.mxu0 0.0
  %2068 = vmatpush1.xpose.msra.mxu0 0.0
  %2069 = vmatprep.subr.mxu0 0.0
  %2070 = vmatpush1.xpose.msra.mxu0 0.0
  %2071 = vmatprep.subr.mxu0 0.0
  %2072 = vmatpush1.xpose.msra.mxu0 0.0
  %2073 = vmatprep.subr.mxu0 0.0
  %2074 = vmatpush1.xpose.msra.mxu0 0.0
  %2075 = vmatprep.subr.mxu0 0.0
  %2076 = vmatpush1.xpose.msra.mxu0 0.0
  %2077 = vmatprep.subr.mxu0 0.0
  %2078 = vmatpush1.xpose.msra.mxu0 0.0
  %2079 = vmatprep.subr.mxu0 0.0
  %2080 = vmatpush1.xpose.msra.mxu0 0.0
  %2081 = vmatprep.subr.mxu0 0.0
  %2082 = vmatpush1.xpose.msra.mxu0 0.0
  %2083 = vmatprep.subr.mxu0 0.0
  %2084 = vmatpush1.xpose.msra.mxu0 0.0
  %2085 = vmatprep.subr.mxu0 0.0
  %2086 = vmatpush1.xpose.msra.mxu0 0.0
  %2087 = vmatprep.subr.mxu0 0.0
  %2088 = vmatpush1.xpose.msra.mxu0 0.0
  %2089 = vmatprep.subr.mxu0 0.0
  %2090 = vmatpush1.xpose.msra.mxu0 0.0
  %2091 = vmatprep.subr.mxu0 0.0
  %2092 = vmatpush1.xpose.msra.mxu0 0.0
  %2093 = vmatprep.subr.mxu0 0.0
  %2094 = vmatpush1.xpose.msra.mxu0 %v2063
  %2095 = vmatprep.subr.mxu0 0.0
  %2096 = vmatpush1.xpose.msra.mxu0 %v2060
  %2097 = vmatprep.subr.mxu0 0.0
  %2098 = vmatpush2.xpose.msra.mxu0 0.0
  %2099 = vmatprep.subr.mxu0 0.0
  %2100 = vmatpush2.xpose.msra.mxu0 0.0
  %2101 = vmatprep.subr.mxu0 0.0
  %2102 = vmatpush2.xpose.msra.mxu0 0.0
  %2103 = vmatprep.subr.mxu0 0.0
  %2104 = vmatpush2.xpose.msra.mxu0 0.0
  %2105 = vmatprep.subr.mxu0 0.0
  %2106 = vmatpush2.xpose.msra.mxu0 0.0
  %2107 = vmatprep.subr.mxu0 0.0
  %2108 = vmatpush2.xpose.msra.mxu0 0.0
  %2109 = vmatprep.subr.mxu0 0.0
  %2110 = vmatpush2.xpose.msra.mxu0 0.0
  %2111 = vmatprep.subr.mxu0 0.0
  %2112 = vmatpush2.xpose.msra.mxu0 0.0
  %2113 = vmatprep.subr.mxu0 0.0
  %2114 = vmatpush2.xpose.msra.mxu0 0.0
  %2115 = vmatprep.subr.mxu0 0.0
  %2116 = vmatpush2.xpose.msra.mxu0 0.0
  %2117 = vmatprep.subr.mxu0 0.0
  %2118 = vmatpush2.xpose.msra.mxu0 0.0
  %2119 = vmatprep.subr.mxu0 0.0
  %2120 = vmatpush2.xpose.msra.mxu0 0.0
  %2121 = vmatprep.subr.mxu0 0.0
  %2122 = vmatpush2.xpose.msra.mxu0 0.0
  %2123 = vmatprep.subr.mxu0 0.0
  %2124 = vmatpush2.xpose.msra.mxu0 0.0
  %2125 = vmatprep.subr.mxu0 0.0
  %2126 = vmatpush2.xpose.msra.mxu0 0.0
  %2127 = vmatprep.subr.mxu0 0.0
  %2128 = vmatpush2.xpose.msra.mxu0 0.0
  %2129 = vmatprep.mubr.f32.mxu0 0.0
  %2130 = vmatmul.mubr.f32.gmra.mxu0 %v2036
  %v2131 = vpop.f32.mrf.mxu0
  %v2132 = vadd.f32 %v1997, %v2131
  %v2133 = vpop.f32.mrf.mxu0
  %2134 = vmatprep.mubr.f32.mxu0 0.0
  %2135 = vmatmul.mubr.f32.gmra.mxu0 %v2039
  %v2136 = vpop.f32.mrf.mxu0
  %v2137 = vadd.f32 %v2002, %v2136
  %v2138 = vpop.f32.mrf.mxu0
  %2139 = vmatprep.mubr.f32.mxu0 0.0
  %2140 = vmatmul.mubr.f32.gmra.mxu0 %v2042
  %v2141 = vpop.f32.mrf.mxu0
  %v2142 = vadd.f32 %v2007, %v2141
  %v2143 = vpop.f32.mrf.mxu0
  %2144 = vmatprep.mubr.f32.mxu0 0.0
  %2145 = vmatmul.mubr.f32.gmra.mxu0 %v2045
  %v2146 = vpop.f32.mrf.mxu0
  %v2147 = vadd.f32 %v2012, %v2146
  %v2148 = vpop.f32.mrf.mxu0
  %2149 = vmatprep.mubr.f32.mxu0 0.0
  %2150 = vmatmul.mubr.f32.gmra.mxu0 %v2048
  %v2151 = vpop.f32.mrf.mxu0
  %v2152 = vadd.f32 %v2017, %v2151
  %v2153 = vpop.f32.mrf.mxu0
  %2154 = vmatprep.mubr.f32.mxu0 0.0
  %2155 = vmatmul.mubr.f32.gmra.mxu0 %v2051
  %v2156 = vpop.f32.mrf.mxu0
  %v2157 = vadd.f32 %v2022, %v2156
  %v2158 = vpop.f32.mrf.mxu0
  %2159 = vmatprep.mubr.f32.mxu0 0.0
  %2160 = vmatmul.mubr.f32.gmra.mxu0 %v2054
  %v2161 = vpop.f32.mrf.mxu0
  %v2162 = vadd.f32 %v2027, %v2161
  %v2163 = vpop.f32.mrf.mxu0
  %2164 = vmatprep.mubr.f32.mxu0 0.0
  %2165 = vmatmul.mubr.f32.gmra.mxu0 %v2057
  %v2166 = vpop.f32.mrf.mxu0
  %v2167 = vadd.f32 %v2032, %v2166
  %v2168 = vpop.f32.mrf.mxu0
  %2169 = vdwg.mxu0
  %v2170 = vmul.f32 %v2132, 0.35355338
  %v2171 = vmul.f32 %v2137, 0.35355338
  %v2172 = vmul.f32 %v2142, 0.35355338
  %v2173 = vmul.f32 %v2147, 0.35355338
  %v2174 = vmul.f32 %v2152, 0.35355338
  %v2175 = vmul.f32 %v2157, 0.35355338
  %v2176 = vmul.f32 %v2162, 0.35355338
  %v2177 = vmul.f32 %v2167, 0.35355338
  %v2178 = vadd.f32 %v2170, %v982
  %v2179 = vadd.f32 %v2171, %v987
  %v2180 = vadd.f32 %v2172, %v992
  %v2181 = vadd.f32 %v2173, %v997
  %v2182 = vadd.f32 %v2174, %v1002
  %v2183 = vadd.f32 %v2175, %v1007
  %v2184 = vadd.f32 %v2176, %v1012
  %v2185 = vadd.f32 %v2177, %v1017
  %v2186 = vsel %vm890, %v2178, -inf
  %2187 = vmax.xlane.f32.xlu0 %v2186
  %v2188 = vpop.xlane.xlu0 %2187
  %v2189 = vsel %vm890, %v2179, -inf
  %2190 = vmax.xlane.f32.xlu0 %v2189
  %v2191 = vpop.xlane.xlu0 %2190
  %v2192 = vsel %vm890, %v2180, -inf
  %2193 = vmax.xlane.f32.xlu0 %v2192
  %v2194 = vpop.xlane.xlu0 %2193
  %v2195 = vsel %vm890, %v2181, -inf
  %2196 = vmax.xlane.f32.xlu0 %v2195
  %v2197 = vpop.xlane.xlu0 %2196
  %v2198 = vsel %vm890, %v2182, -inf
  %2199 = vmax.xlane.f32.xlu0 %v2198
  %v2200 = vpop.xlane.xlu0 %2199
  %v2201 = vsel %vm890, %v2183, -inf
  %2202 = vmax.xlane.f32.xlu0 %v2201
  %v2203 = vpop.xlane.xlu0 %2202
  %v2204 = vsel %vm890, %v2184, -inf
  %2205 = vmax.xlane.f32.xlu0 %v2204
  %v2206 = vpop.xlane.xlu0 %2205
  %v2207 = vsel %vm890, %v2185, -inf
  %2208 = vmax.xlane.f32.xlu0 %v2207
  %v2209 = vpop.xlane.xlu0 %2208
  %v2210 = vsub.f32 %v2178, %v2188
  %v2211 = vsub.f32 %v2179, %v2191
  %v2212 = vsub.f32 %v2180, %v2194
  %v2213 = vsub.f32 %v2181, %v2197
  %v2214 = vsub.f32 %v2182, %v2200
  %v2215 = vsub.f32 %v2183, %v2203
  %v2216 = vsub.f32 %v2184, %v2206
  %v2217 = vsub.f32 %v2185, %v2209
  %v2218 = vmul.f32 %v2210, 1.442695
  %v2219 = vpow.pop %v2218
  %v2220 = vmul.f32 %v2211, 1.442695
  %v2221 = vpow.pop %v2220
  %v2222 = vmul.f32 %v2212, 1.442695
  %v2223 = vpow.pop %v2222
  %v2224 = vmul.f32 %v2213, 1.442695
  %v2225 = vpow.pop %v2224
  %v2226 = vmul.f32 %v2214, 1.442695
  %v2227 = vpow.pop %v2226
  %v2228 = vmul.f32 %v2215, 1.442695
  %v2229 = vpow.pop %v2228
  %v2230 = vmul.f32 %v2216, 1.442695
  %v2231 = vpow.pop %v2230
  %v2232 = vmul.f32 %v2217, 1.442695
  %v2233 = vpow.pop %v2232
  %v2234 = vsel %vm890, %v2219, 0.0
  %2235 = vadd.xlane.f32.xlu0 %v2234
  %v2236 = vpop.xlane.xlu0 %2235
  %v2237 = vsel %vm890, %v2221, 0.0
  %2238 = vadd.xlane.f32.xlu0 %v2237
  %v2239 = vpop.xlane.xlu0 %2238
  %v2240 = vsel %vm890, %v2223, 0.0
  %2241 = vadd.xlane.f32.xlu0 %v2240
  %v2242 = vpop.xlane.xlu0 %2241
  %v2243 = vsel %vm890, %v2225, 0.0
  %2244 = vadd.xlane.f32.xlu0 %v2243
  %v2245 = vpop.xlane.xlu0 %2244
  %v2246 = vsel %vm890, %v2227, 0.0
  %2247 = vadd.xlane.f32.xlu0 %v2246
  %v2248 = vpop.xlane.xlu0 %2247
  %v2249 = vsel %vm890, %v2229, 0.0
  %2250 = vadd.xlane.f32.xlu0 %v2249
  %v2251 = vpop.xlane.xlu0 %2250
  %v2252 = vsel %vm890, %v2231, 0.0
  %2253 = vadd.xlane.f32.xlu0 %v2252
  %v2254 = vpop.xlane.xlu0 %2253
  %v2255 = vsel %vm890, %v2233, 0.0
  %2256 = vadd.xlane.f32.xlu0 %v2255
  %v2257 = vpop.xlane.xlu0 %2256
  %v2258 = vrcp.pop %v2236
  %v2259 = vrcp.pop %v2239
  %v2260 = vrcp.pop %v2242
  %v2261 = vrcp.pop %v2245
  %v2262 = vrcp.pop %v2248
  %v2263 = vrcp.pop %v2251
  %v2264 = vrcp.pop %v2254
  %v2265 = vrcp.pop %v2257
  %v2266 = vmul.f32 %v2219, %v2258
  %v2267 = vmul.f32 %v2221, %v2259
  %v2268 = vmul.f32 %v2223, %v2260
  %v2269 = vmul.f32 %v2225, %v2261
  %v2270 = vmul.f32 %v2227, %v2262
  %v2271 = vmul.f32 %v2229, %v2263
  %v2272 = vmul.f32 %v2231, %v2264
  %v2273 = vmul.f32 %v2233, %v2265
  %v2275 = vsel %vm890, %v2266, 0
  %v2278 = vsel %vm890, %v2267, 0
  %v2281 = vsel %vm890, %v2268, 0
  %v2284 = vsel %vm890, %v2269, 0
  %v2287 = vsel %vm890, %v2270, 0
  %v2290 = vsel %vm890, %v2271, 0
  %v2293 = vsel %vm890, %v2272, 0
  %v2296 = vsel %vm890, %v2273, 0
  %2298 = vmatprep.subr.mxu0 0.0
  %2299 = vmatpush1.msra.mxu0 0.0
  %2300 = vmatprep.subr.mxu0 0.0
  %2301 = vmatpush1.msra.mxu0 0.0
  %2302 = vmatprep.subr.mxu0 0.0
  %2303 = vmatpush1.msra.mxu0 0.0
  %2304 = vmatprep.subr.mxu0 0.0
  %2305 = vmatpush1.msra.mxu0 0.0
  %2306 = vmatprep.subr.mxu0 0.0
  %2307 = vmatpush1.msra.mxu0 0.0
  %2308 = vmatprep.subr.mxu0 0.0
  %2309 = vmatpush1.msra.mxu0 0.0
  %2310 = vmatprep.subr.mxu0 0.0
  %2311 = vmatpush1.msra.mxu0 0.0
  %2312 = vmatprep.subr.mxu0 0.0
  %2313 = vmatpush1.msra.mxu0 0.0
  %2314 = vmatprep.subr.mxu0 0.0
  %2315 = vmatpush1.msra.mxu0 0.0
  %2316 = vmatprep.subr.mxu0 0.0
  %2317 = vmatpush1.msra.mxu0 0.0
  %2318 = vmatprep.subr.mxu0 0.0
  %2319 = vmatpush1.msra.mxu0 0.0
  %2320 = vmatprep.subr.mxu0 0.0
  %2321 = vmatpush1.msra.mxu0 0.0
  %2322 = vmatprep.subr.mxu0 0.0
  %2323 = vmatpush1.msra.mxu0 0.0
  %2324 = vmatprep.subr.mxu0 0.0
  %2325 = vmatpush1.msra.mxu0 0.0
  %2326 = vmatprep.subr.mxu0 0.0
  %2327 = vmatpush1.msra.mxu0 %v1572
  %2328 = vmatprep.subr.mxu0 0.0
  %2329 = vmatpush1.msra.mxu0 %v1567
  %2330 = vmatprep.subr.mxu0 0.0
  %2331 = vmatpush2.msra.mxu0 0.0
  %2332 = vmatprep.subr.mxu0 0.0
  %2333 = vmatpush2.msra.mxu0 0.0
  %2334 = vmatprep.subr.mxu0 0.0
  %2335 = vmatpush2.msra.mxu0 0.0
  %2336 = vmatprep.subr.mxu0 0.0
  %2337 = vmatpush2.msra.mxu0 0.0
  %2338 = vmatprep.subr.mxu0 0.0
  %2339 = vmatpush2.msra.mxu0 0.0
  %2340 = vmatprep.subr.mxu0 0.0
  %2341 = vmatpush2.msra.mxu0 0.0
  %2342 = vmatprep.subr.mxu0 0.0
  %2343 = vmatpush2.msra.mxu0 0.0
  %2344 = vmatprep.subr.mxu0 0.0
  %2345 = vmatpush2.msra.mxu0 0.0
  %2346 = vmatprep.subr.mxu0 0.0
  %2347 = vmatpush2.msra.mxu0 0.0
  %2348 = vmatprep.subr.mxu0 0.0
  %2349 = vmatpush2.msra.mxu0 0.0
  %2350 = vmatprep.subr.mxu0 0.0
  %2351 = vmatpush2.msra.mxu0 0.0
  %2352 = vmatprep.subr.mxu0 0.0
  %2353 = vmatpush2.msra.mxu0 0.0
  %2354 = vmatprep.subr.mxu0 0.0
  %2355 = vmatpush2.msra.mxu0 0.0
  %2356 = vmatprep.subr.mxu0 0.0
  %2357 = vmatpush2.msra.mxu0 0.0
  %2358 = vmatprep.subr.mxu0 0.0
  %2359 = vmatpush2.msra.mxu0 0.0
  %2360 = vmatprep.subr.mxu0 0.0
  %2361 = vmatpush2.msra.mxu0 0.0
  %2362 = vmatprep.mubr.f32.mxu0 0.0
  %2363 = vmatmul.mubr.f32.gmra.mxu0 %v2275
  %v2364 = vpop.f32.mrf.mxu0
  %v2365 = vadd.f32 0.0, %v2364
  %v2366 = vpop.f32.mrf.mxu0
  %2367 = vmatprep.mubr.f32.mxu0 0.0
  %2368 = vmatmul.mubr.f32.gmra.mxu0 %v2278
  %v2369 = vpop.f32.mrf.mxu0
  %v2370 = vadd.f32 0.0, %v2369
  %v2371 = vpop.f32.mrf.mxu0
  %2372 = vmatprep.mubr.f32.mxu0 0.0
  %2373 = vmatmul.mubr.f32.gmra.mxu0 %v2281
  %v2374 = vpop.f32.mrf.mxu0
  %v2375 = vadd.f32 0.0, %v2374
  %v2376 = vpop.f32.mrf.mxu0
  %2377 = vmatprep.mubr.f32.mxu0 0.0
  %2378 = vmatmul.mubr.f32.gmra.mxu0 %v2284
  %v2379 = vpop.f32.mrf.mxu0
  %v2380 = vadd.f32 0.0, %v2379
  %v2381 = vpop.f32.mrf.mxu0
  %2382 = vmatprep.mubr.f32.mxu0 0.0
  %2383 = vmatmul.mubr.f32.gmra.mxu0 %v2287
  %v2384 = vpop.f32.mrf.mxu0
  %v2385 = vadd.f32 0.0, %v2384
  %v2386 = vpop.f32.mrf.mxu0
  %2387 = vmatprep.mubr.f32.mxu0 0.0
  %2388 = vmatmul.mubr.f32.gmra.mxu0 %v2290
  %v2389 = vpop.f32.mrf.mxu0
  %v2390 = vadd.f32 0.0, %v2389
  %v2391 = vpop.f32.mrf.mxu0
  %2392 = vmatprep.mubr.f32.mxu0 0.0
  %2393 = vmatmul.mubr.f32.gmra.mxu0 %v2293
  %v2394 = vpop.f32.mrf.mxu0
  %v2395 = vadd.f32 0.0, %v2394
  %v2396 = vpop.f32.mrf.mxu0
  %2397 = vmatprep.mubr.f32.mxu0 0.0
  %2398 = vmatmul.mubr.f32.gmra.mxu0 %v2296
  %v2399 = vpop.f32.mrf.mxu0
  %v2400 = vadd.f32 0.0, %v2399
  %v2401 = vpop.f32.mrf.mxu0
  %2402 = vdwg.mxu0
  %v2403 = vmul.f32 %v2365, %v874
  %v2404 = vmul.f32 %v2370, %v875
  %v2405 = vmul.f32 %v2375, %v876
  %v2406 = vmul.f32 %v2380, %v877
  %v2407 = vmul.f32 %v2385, %v878
  %v2408 = vmul.f32 %v2390, %v879
  %v2409 = vmul.f32 %v2395, %v880
  %v2410 = vmul.f32 %v2400, %v881
  %v2412 = vsel %vm1191, %v872, 0
  %v2415 = vsel %vm1191, %v873, 0
  %2417 = vmatprep.subr.mxu0 0.0
  %2418 = vmatpush1.msra.mxu0 0.0
  %2419 = vmatprep.subr.mxu0 0.0
  %2420 = vmatpush1.msra.mxu0 0.0
  %2421 = vmatprep.subr.mxu0 0.0
  %2422 = vmatpush1.msra.mxu0 0.0
  %2423 = vmatprep.subr.mxu0 0.0
  %2424 = vmatpush1.msra.mxu0 0.0
  %2425 = vmatprep.subr.mxu0 0.0
  %2426 = vmatpush1.msra.mxu0 0.0
  %2427 = vmatprep.subr.mxu0 0.0
  %2428 = vmatpush1.msra.mxu0 0.0
  %2429 = vmatprep.subr.mxu0 0.0
  %2430 = vmatpush1.msra.mxu0 0.0
  %2431 = vmatprep.subr.mxu0 0.0
  %2432 = vmatpush1.msra.mxu0 0.0
  %2433 = vmatprep.subr.mxu0 0.0
  %2434 = vmatpush1.msra.mxu0 %v2410
  %2435 = vmatprep.subr.mxu0 0.0
  %2436 = vmatpush1.msra.mxu0 %v2409
  %2437 = vmatprep.subr.mxu0 0.0
  %2438 = vmatpush1.msra.mxu0 %v2408
  %2439 = vmatprep.subr.mxu0 0.0
  %2440 = vmatpush1.msra.mxu0 %v2407
  %2441 = vmatprep.subr.mxu0 0.0
  %2442 = vmatpush1.msra.mxu0 %v2406
  %2443 = vmatprep.subr.mxu0 0.0
  %2444 = vmatpush1.msra.mxu0 %v2405
  %2445 = vmatprep.subr.mxu0 0.0
  %2446 = vmatpush1.msra.mxu0 %v2404
  %2447 = vmatprep.subr.mxu0 0.0
  %2448 = vmatpush1.msra.mxu0 %v2403
  %2449 = vmatprep.subr.mxu0 0.0
  %2450 = vmatpush2.msra.mxu0 0.0
  %2451 = vmatprep.subr.mxu0 0.0
  %2452 = vmatpush2.msra.mxu0 0.0
  %2453 = vmatprep.subr.mxu0 0.0
  %2454 = vmatpush2.msra.mxu0 0.0
  %2455 = vmatprep.subr.mxu0 0.0
  %2456 = vmatpush2.msra.mxu0 0.0
  %2457 = vmatprep.subr.mxu0 0.0
  %2458 = vmatpush2.msra.mxu0 0.0
  %2459 = vmatprep.subr.mxu0 0.0
  %2460 = vmatpush2.msra.mxu0 0.0
  %2461 = vmatprep.subr.mxu0 0.0
  %2462 = vmatpush2.msra.mxu0 0.0
  %2463 = vmatprep.subr.mxu0 0.0
  %2464 = vmatpush2.msra.mxu0 0.0
  %2465 = vmatprep.subr.mxu0 0.0
  %2466 = vmatpush2.msra.mxu0 0.0
  %2467 = vmatprep.subr.mxu0 0.0
  %2468 = vmatpush2.msra.mxu0 0.0
  %2469 = vmatprep.subr.mxu0 0.0
  %2470 = vmatpush2.msra.mxu0 0.0
  %2471 = vmatprep.subr.mxu0 0.0
  %2472 = vmatpush2.msra.mxu0 0.0
  %2473 = vmatprep.subr.mxu0 0.0
  %2474 = vmatpush2.msra.mxu0 0.0
  %2475 = vmatprep.subr.mxu0 0.0
  %2476 = vmatpush2.msra.mxu0 0.0
  %2477 = vmatprep.subr.mxu0 0.0
  %2478 = vmatpush2.msra.mxu0 0.0
  %2479 = vmatprep.subr.mxu0 0.0
  %2480 = vmatpush2.msra.mxu0 0.0
  %2481 = vmatprep.mubr.f32.mxu0 0.0
  %2482 = vmatmul.mubr.f32.gmra.mxu0 %v2412
  %v2483 = vpop.f32.mrf.mxu0
  %v2484 = vadd.f32 0.0, %v2483
  %v2485 = vpop.f32.mrf.mxu0
  %2486 = vmatprep.mubr.f32.mxu0 0.0
  %2487 = vmatmul.mubr.f32.gmra.mxu0 %v2415
  %v2488 = vpop.f32.mrf.mxu0
  %v2489 = vadd.f32 0.0, %v2488
  %v2490 = vpop.f32.mrf.mxu0
  %2491 = vdwg.mxu0
  %v2492 = vld [vmem:[%s4 + $0x168] sm:$0xff]
  %v2493 = vld [vmem:[%s4 + $0x170] sm:$0xff]
  %v2494 = vld [vmem:[%s4 + $0x178] sm:$0xff]
  %v2495 = vld [vmem:[%s4 + $0x180] sm:$0xff]
  %v2496 = vld [vmem:[%s4 + $0x188] sm:$0x1]
  %v2497 = vlaneseq
  %v2498 = vshrl.u32 %v2497, 7
  %v2499 = vsub.s32 0, %v2498
  %v2500 = vrot.slane %v2496, %v2499
  %v2502 = vsel %vm1034, %v2484, 0
  %v2505 = vsel %vm1034, %v2489, 0
  %2507 = vmatprep.subr.mxu0 0.0
  %2508 = vmatpush1.msra.mxu0 0.0
  %2509 = vmatprep.subr.mxu0 0.0
  %2510 = vmatpush1.msra.mxu0 0.0
  %2511 = vmatprep.subr.mxu0 0.0
  %2512 = vmatpush1.msra.mxu0 0.0
  %2513 = vmatprep.subr.mxu0 0.0
  %2514 = vmatpush1.msra.mxu0 0.0
  %2515 = vmatprep.subr.mxu0 0.0
  %2516 = vmatpush1.msra.mxu0 0.0
  %2517 = vmatprep.subr.mxu0 0.0
  %2518 = vmatpush1.msra.mxu0 0.0
  %2519 = vmatprep.subr.mxu0 0.0
  %2520 = vmatpush1.msra.mxu0 0.0
  %2521 = vmatprep.subr.mxu0 0.0
  %2522 = vmatpush1.msra.mxu0 0.0
  %2523 = vmatprep.subr.mxu0 0.0
  %2524 = vmatpush1.msra.mxu0 0.0
  %2525 = vmatprep.subr.mxu0 0.0
  %2526 = vmatpush1.msra.mxu0 0.0
  %2527 = vmatprep.subr.mxu0 0.0
  %2528 = vmatpush1.msra.mxu0 0.0
  %2529 = vmatprep.subr.mxu0 0.0
  %2530 = vmatpush1.msra.mxu0 0.0
  %2531 = vmatprep.subr.mxu0 0.0
  %2532 = vmatpush1.msra.mxu0 %v2495
  %2533 = vmatprep.subr.mxu0 0.0
  %2534 = vmatpush1.msra.mxu0 %v2494
  %2535 = vmatprep.subr.mxu0 0.0
  %2536 = vmatpush1.msra.mxu0 %v2493
  %2537 = vmatprep.subr.mxu0 0.0
  %2538 = vmatpush1.msra.mxu0 %v2492
  %2539 = vmatprep.subr.mxu0 0.0
  %2540 = vmatpush2.msra.mxu0 0.0
  %2541 = vmatprep.subr.mxu0 0.0
  %2542 = vmatpush2.msra.mxu0 0.0
  %2543 = vmatprep.subr.mxu0 0.0
  %2544 = vmatpush2.msra.mxu0 0.0
  %2545 = vmatprep.subr.mxu0 0.0
  %2546 = vmatpush2.msra.mxu0 0.0
  %2547 = vmatprep.subr.mxu0 0.0
  %2548 = vmatpush2.msra.mxu0 0.0
  %2549 = vmatprep.subr.mxu0 0.0
  %2550 = vmatpush2.msra.mxu0 0.0
  %2551 = vmatprep.subr.mxu0 0.0
  %2552 = vmatpush2.msra.mxu0 0.0
  %2553 = vmatprep.subr.mxu0 0.0
  %2554 = vmatpush2.msra.mxu0 0.0
  %2555 = vmatprep.subr.mxu0 0.0
  %2556 = vmatpush2.msra.mxu0 0.0
  %2557 = vmatprep.subr.mxu0 0.0
  %2558 = vmatpush2.msra.mxu0 0.0
  %2559 = vmatprep.subr.mxu0 0.0
  %2560 = vmatpush2.msra.mxu0 0.0
  %2561 = vmatprep.subr.mxu0 0.0
  %2562 = vmatpush2.msra.mxu0 0.0
  %2563 = vmatprep.subr.mxu0 0.0
  %2564 = vmatpush2.msra.mxu0 0.0
  %2565 = vmatprep.subr.mxu0 0.0
  %2566 = vmatpush2.msra.mxu0 0.0
  %2567 = vmatprep.subr.mxu0 0.0
  %2568 = vmatpush2.msra.mxu0 0.0
  %2569 = vmatprep.subr.mxu0 0.0
  %2570 = vmatpush2.msra.mxu0 0.0
  %2571 = vmatprep.mubr.f32.mxu0 0.0
  %2572 = vmatmul.mubr.f32.gmra.mxu0 %v2502
  %v2573 = vpop.f32.mrf.mxu0
  %v2574 = vadd.f32 %v2500, %v2573
  %v2575 = vpop.f32.mrf.mxu0
  %2576 = vmatprep.mubr.f32.mxu0 0.0
  %2577 = vmatmul.mubr.f32.gmra.mxu0 %v2505
  %v2578 = vpop.f32.mrf.mxu0
  %v2579 = vadd.f32 %v2500, %v2578
  %v2580 = vpop.f32.mrf.mxu0
  %2581 = vdwg.mxu0
  %v2582 = vld [vmem:[%s4 + $0x20] sm:$0x1]
  %v2583 = vld [vmem:[%s4 + $0x28] sm:$0x1]
  %v2584 = vlaneseq
  %v2585 = vshrl.u32 %v2584, 7
  %v2586 = vsub.s32 0, %v2585
  %v2587 = vrot.slane %v2582, %v2586
  %v2588 = vmul.f32 %v1303, %v2587
  %v2589 = vmul.f32 %v1304, %v2587
  %v2590 = vlaneseq
  %v2591 = vshrl.u32 %v2590, 7
  %v2592 = vsub.s32 0, %v2591
  %v2593 = vrot.slane %v2583, %v2592
  %v2594 = vadd.f32 %v2588, %v2593
  %v2595 = vadd.f32 %v2589, %v2593
  %v2596 = vld [vmem:[%s4 + $0x190] sm:$0xff]
  %v2597 = vld [vmem:[%s4 + $0x198] sm:$0xff]
  %v2598 = vld [vmem:[%s4 + $0x1a0] sm:$0xff]
  %v2599 = vld [vmem:[%s4 + $0x1a8] sm:$0xff]
  %v2600 = vld [vmem:[%s4 + $0x1b0] sm:$0x1]
  %v2601 = vlaneseq
  %v2602 = vshrl.u32 %v2601, 7
  %v2603 = vsub.s32 0, %v2602
  %v2604 = vrot.slane %v2600, %v2603
  %v2606 = vsel %vm1034, %v2594, 0
  %v2609 = vsel %vm1034, %v2595, 0
  %2611 = vmatprep.subr.mxu0 0.0
  %2612 = vmatpush1.msra.mxu0 0.0
  %2613 = vmatprep.subr.mxu0 0.0
  %2614 = vmatpush1.msra.mxu0 0.0
  %2615 = vmatprep.subr.mxu0 0.0
  %2616 = vmatpush1.msra.mxu0 0.0
  %2617 = vmatprep.subr.mxu0 0.0
  %2618 = vmatpush1.msra.mxu0 0.0
  %2619 = vmatprep.subr.mxu0 0.0
  %2620 = vmatpush1.msra.mxu0 0.0
  %2621 = vmatprep.subr.mxu0 0.0
  %2622 = vmatpush1.msra.mxu0 0.0
  %2623 = vmatprep.subr.mxu0 0.0
  %2624 = vmatpush1.msra.mxu0 0.0
  %2625 = vmatprep.subr.mxu0 0.0
  %2626 = vmatpush1.msra.mxu0 0.0
  %2627 = vmatprep.subr.mxu0 0.0
  %2628 = vmatpush1.msra.mxu0 0.0
  %2629 = vmatprep.subr.mxu0 0.0
  %2630 = vmatpush1.msra.mxu0 0.0
  %2631 = vmatprep.subr.mxu0 0.0
  %2632 = vmatpush1.msra.mxu0 0.0
  %2633 = vmatprep.subr.mxu0 0.0
  %2634 = vmatpush1.msra.mxu0 0.0
  %2635 = vmatprep.subr.mxu0 0.0
  %2636 = vmatpush1.msra.mxu0 %v2599
  %2637 = vmatprep.subr.mxu0 0.0
  %2638 = vmatpush1.msra.mxu0 %v2598
  %2639 = vmatprep.subr.mxu0 0.0
  %2640 = vmatpush1.msra.mxu0 %v2597
  %2641 = vmatprep.subr.mxu0 0.0
  %2642 = vmatpush1.msra.mxu0 %v2596
  %2643 = vmatprep.subr.mxu0 0.0
  %2644 = vmatpush2.msra.mxu0 0.0
  %2645 = vmatprep.subr.mxu0 0.0
  %2646 = vmatpush2.msra.mxu0 0.0
  %2647 = vmatprep.subr.mxu0 0.0
  %2648 = vmatpush2.msra.mxu0 0.0
  %2649 = vmatprep.subr.mxu0 0.0
  %2650 = vmatpush2.msra.mxu0 0.0
  %2651 = vmatprep.subr.mxu0 0.0
  %2652 = vmatpush2.msra.mxu0 0.0
  %2653 = vmatprep.subr.mxu0 0.0
  %2654 = vmatpush2.msra.mxu0 0.0
  %2655 = vmatprep.subr.mxu0 0.0
  %2656 = vmatpush2.msra.mxu0 0.0
  %2657 = vmatprep.subr.mxu0 0.0
  %2658 = vmatpush2.msra.mxu0 0.0
  %2659 = vmatprep.subr.mxu0 0.0
  %2660 = vmatpush2.msra.mxu0 0.0
  %2661 = vmatprep.subr.mxu0 0.0
  %2662 = vmatpush2.msra.mxu0 0.0
  %2663 = vmatprep.subr.mxu0 0.0
  %2664 = vmatpush2.msra.mxu0 0.0
  %2665 = vmatprep.subr.mxu0 0.0
  %2666 = vmatpush2.msra.mxu0 0.0
  %2667 = vmatprep.subr.mxu0 0.0
  %2668 = vmatpush2.msra.mxu0 0.0
  %2669 = vmatprep.subr.mxu0 0.0
  %2670 = vmatpush2.msra.mxu0 0.0
  %2671 = vmatprep.subr.mxu0 0.0
  %2672 = vmatpush2.msra.mxu0 0.0
  %2673 = vmatprep.subr.mxu0 0.0
  %2674 = vmatpush2.msra.mxu0 0.0
  %2675 = vmatprep.mubr.f32.mxu0 0.0
  %2676 = vmatmul.mubr.f32.gmra.mxu0 %v2606
  %v2677 = vpop.f32.mrf.mxu0
  %v2678 = vadd.f32 %v2604, %v2677
  %v2679 = vpop.f32.mrf.mxu0
  %2680 = vmatprep.mubr.f32.mxu0 0.0
  %2681 = vmatmul.mubr.f32.gmra.mxu0 %v2609
  %v2682 = vpop.f32.mrf.mxu0
  %v2683 = vadd.f32 %v2604, %v2682
  %v2684 = vpop.f32.mrf.mxu0
  %2685 = vdwg.mxu0
  %v2686 = vmul.f32 %v2678, 0.5
  %v2687 = vmul.f32 %v2683, 0.5
  %v2688 = vmul.f32 %v2678, 0.044715
  %v2689 = vmul.f32 %v2683, 0.044715
  %v2690 = vmul.f32 %v2688, %v2678
  %v2691 = vmul.f32 %v2689, %v2683
  %v2692 = vmul.f32 %v2690, %v2678
  %v2693 = vmul.f32 %v2691, %v2683
  %v2694 = vadd.f32 %v2678, %v2692
  %v2695 = vadd.f32 %v2683, %v2693
  %v2696 = vmul.f32 %v2694, 0.7978846
  %v2697 = vmul.f32 %v2695, 0.7978846
  %v2698 = vtanh.pop %v2696
  %v2699 = vtanh.pop %v2697
  %v2700 = vadd.f32 %v2698, 1.0
  %v2701 = vadd.f32 %v2699, 1.0
  %v2702 = vmul.f32 %v2686, %v2700
  %v2703 = vmul.f32 %v2687, %v2701
  %v2704 = vld [vmem:[%s4 + $0x1b8] sm:$0xff]
  %v2705 = vld [vmem:[%s4 + $0x1c0] sm:$0xff]
  %v2706 = vld [vmem:[%s4 + $0x1c8] sm:$0xff]
  %v2707 = vld [vmem:[%s4 + $0x1d0] sm:$0xff]
  %v2708 = vld [vmem:[%s4 + $0x1d8] sm:$0x1]
  %v2709 = vlaneseq
  %v2710 = vshrl.u32 %v2709, 7
  %v2711 = vsub.s32 0, %v2710
  %v2712 = vrot.slane %v2708, %v2711
  %2713 = vmatprep.subr.mxu0 0.0
  %2714 = vmatpush1.msra.mxu0 0.0
  %2715 = vmatprep.subr.mxu0 0.0
  %2716 = vmatpush1.msra.mxu0 0.0
  %2717 = vmatprep.subr.mxu0 0.0
  %2718 = vmatpush1.msra.mxu0 0.0
  %2719 = vmatprep.subr.mxu0 0.0
  %2720 = vmatpush1.msra.mxu0 0.0
  %2721 = vmatprep.subr.mxu0 0.0
  %2722 = vmatpush1.msra.mxu0 0.0
  %2723 = vmatprep.subr.mxu0 0.0
  %2724 = vmatpush1.msra.mxu0 0.0
  %2725 = vmatprep.subr.mxu0 0.0
  %2726 = vmatpush1.msra.mxu0 0.0
  %2727 = vmatprep.subr.mxu0 0.0
  %2728 = vmatpush1.msra.mxu0 0.0
  %2729 = vmatprep.subr.mxu0 0.0
  %2730 = vmatpush1.msra.mxu0 0.0
  %2731 = vmatprep.subr.mxu0 0.0
  %2732 = vmatpush1.msra.mxu0 0.0
  %2733 = vmatprep.subr.mxu0 0.0
  %2734 = vmatpush1.msra.mxu0 0.0
  %2735 = vmatprep.subr.mxu0 0.0
  %2736 = vmatpush1.msra.mxu0 0.0
  %2737 = vmatprep.subr.mxu0 0.0
  %2738 = vmatpush1.msra.mxu0 %v2707
  %2739 = vmatprep.subr.mxu0 0.0
  %2740 = vmatpush1.msra.mxu0 %v2706
  %2741 = vmatprep.subr.mxu0 0.0
  %2742 = vmatpush1.msra.mxu0 %v2705
  %2743 = vmatprep.subr.mxu0 0.0
  %2744 = vmatpush1.msra.mxu0 %v2704
  %2745 = vmatprep.subr.mxu0 0.0
  %2746 = vmatpush2.msra.mxu0 0.0
  %2747 = vmatprep.subr.mxu0 0.0
  %2748 = vmatpush2.msra.mxu0 0.0
  %2749 = vmatprep.subr.mxu0 0.0
  %2750 = vmatpush2.msra.mxu0 0.0
  %2751 = vmatprep.subr.mxu0 0.0
  %2752 = vmatpush2.msra.mxu0 0.0
  %2753 = vmatprep.subr.mxu0 0.0
  %2754 = vmatpush2.msra.mxu0 0.0
  %2755 = vmatprep.subr.mxu0 0.0
  %2756 = vmatpush2.msra.mxu0 0.0
  %2757 = vmatprep.subr.mxu0 0.0
  %2758 = vmatpush2.msra.mxu0 0.0
  %2759 = vmatprep.subr.mxu0 0.0
  %2760 = vmatpush2.msra.mxu0 0.0
  %2761 = vmatprep.subr.mxu0 0.0
  %2762 = vmatpush2.msra.mxu0 0.0
  %2763 = vmatprep.subr.mxu0 0.0
  %2764 = vmatpush2.msra.mxu0 0.0
  %2765 = vmatprep.subr.mxu0 0.0
  %2766 = vmatpush2.msra.mxu0 0.0
  %2767 = vmatprep.subr.mxu0 0.0
  %2768 = vmatpush2.msra.mxu0 0.0
  %2769 = vmatprep.subr.mxu0 0.0
  %2770 = vmatpush2.msra.mxu0 0.0
  %2771 = vmatprep.subr.mxu0 0.0
  %2772 = vmatpush2.msra.mxu0 0.0
  %2773 = vmatprep.subr.mxu0 0.0
  %2774 = vmatpush2.msra.mxu0 0.0
  %2775 = vmatprep.subr.mxu0 0.0
  %2776 = vmatpush2.msra.mxu0 0.0
  %2777 = vmatprep.mubr.f32.mxu0 0.0
  %2778 = vmatmul.mubr.f32.gmra.mxu0 %v2606
  %v2779 = vpop.f32.mrf.mxu0
  %v2780 = vadd.f32 %v2712, %v2779
  %v2781 = vpop.f32.mrf.mxu0
  %2782 = vmatprep.mubr.f32.mxu0 0.0
  %2783 = vmatmul.mubr.f32.gmra.mxu0 %v2609
  %v2784 = vpop.f32.mrf.mxu0
  %v2785 = vadd.f32 %v2712, %v2784
  %v2786 = vpop.f32.mrf.mxu0
  %2787 = vdwg.mxu0
  %v2788 = vmul.f32 %v2780, 0.5
  %v2789 = vmul.f32 %v2785, 0.5
  %v2790 = vmul.f32 %v2780, 0.044715
  %v2791 = vmul.f32 %v2785, 0.044715
  %v2792 = vmul.f32 %v2790, %v2780
  %v2793 = vmul.f32 %v2791, %v2785
  %v2794 = vmul.f32 %v2792, %v2780
  %v2795 = vmul.f32 %v2793, %v2785
  %v2796 = vadd.f32 %v2780, %v2794
  %v2797 = vadd.f32 %v2785, %v2795
  %v2798 = vmul.f32 %v2796, 0.7978846
  %v2799 = vmul.f32 %v2797, 0.7978846
  %v2800 = vtanh.pop %v2798
  %v2801 = vtanh.pop %v2799
  %v2802 = vadd.f32 %v2800, 1.0
  %v2803 = vadd.f32 %v2801, 1.0
  %v2804 = vmul.f32 %v2788, %v2802
  %v2805 = vmul.f32 %v2789, %v2803
  %v2806 = vmul.f32 %v2804, %v1030
  %v2807 = vmul.f32 %v2805, %v1031
  %v2808 = vld [vmem:[%s4 + $0x1e0] sm:$0x1]
  %v2809 = vld [vmem:[%s4 + $0x1e8] sm:$0x1]
  %v2810 = vsel %vm1034, %v2806, 0.0
  %2811 = vadd.xlane.f32.xlu0 %v2810
  %v2812 = vpop.xlane.xlu0 %2811
  %v2813 = vsel %vm1034, %v2807, 0.0
  %2814 = vadd.xlane.f32.xlu0 %v2813
  %v2815 = vpop.xlane.xlu0 %2814
  %v2816 = vmul.f32 %v2812, %v1041
  %v2817 = vmul.f32 %v2815, %v1041
  %v2818 = vsub.f32 %v2806, %v2816
  %v2819 = vsub.f32 %v2807, %v2817
  %v2820 = vmul.f32 %v2818, %v2818
  %v2821 = vmul.f32 %v2819, %v2819
  %v2822 = vsel %vm1034, %v2820, 0.0
  %2823 = vadd.xlane.f32.xlu0 %v2822
  %v2824 = vpop.xlane.xlu0 %2823
  %v2825 = vsel %vm1034, %v2821, 0.0
  %2826 = vadd.xlane.f32.xlu0 %v2825
  %v2827 = vpop.xlane.xlu0 %2826
  %v2828 = vmul.f32 %v2824, %v1041
  %v2829 = vmul.f32 %v2827, %v1041
  %v2830 = vadd.f32 %v2828, 1e-05
  %v2831 = vadd.f32 %v2829, 1e-05
  %v2832 = vrsqrt.pop %v2830
  %v2833 = vrsqrt.pop %v2831
  %v2834 = vmul.f32 %v2818, %v2832
  %v2835 = vmul.f32 %v2819, %v2833
  %v2836 = vlaneseq
  %v2837 = vshrl.u32 %v2836, 7
  %v2838 = vsub.s32 0, %v2837
  %v2839 = vrot.slane %v2808, %v2838
  %v2840 = vmul.f32 %v2834, %v2839
  %v2841 = vmul.f32 %v2835, %v2839
  %v2842 = vlaneseq
  %v2843 = vshrl.u32 %v2842, 7
  %v2844 = vsub.s32 0, %v2843
  %v2845 = vrot.slane %v2809, %v2844
  %v2846 = vadd.f32 %v2840, %v2845
  %v2847 = vadd.f32 %v2841, %v2845
  %v2848 = vld [vmem:[%s4 + $0x1f0] sm:$0x7f]
  %v2849 = vld [vmem:[%s4 + $0x1f8] sm:$0x1]
  %v2850 = vrot.slane %v2846, 5
  %v2851 = vrot.slane %v2847, 5
  %v2852 = vlaneseq
  %v2853 = vshrl.u32 %v2852, 7
  %vm2854 = vcmp.lt.s32.totalorder %v2853, 3
  %v2855 = vsel %vm2854, %v2850, %v2851
  %v2856 = vsel %vm2854, %v2851, %v2850
  %v2857 = vlaneseq
  %v2858 = vshrl.u32 %v2857, 7
  %v2859 = vsub.s32 0, %v2858
  %v2860 = vrot.slane %v2848, %v2859
  %v2861 = vmul.f32 %v2860, %v2856
  %v2862 = vmul.f32 %v2860, %v2855
  %2864 = vset.pattern.permute.xlu0 0
  %2865 = vperm.xlu0 %2864, %v884
  %v2866 = vpop.permute.xlu0 %2865
  %2869 = vset.pattern.permute.xlu0 0
  %2870 = vperm.xlu0 %2869, %v885
  %v2871 = vpop.permute.xlu0 %2870
  %v2873 = vmul.f32 %v2861, %v2866
  %v2874 = vmul.f32 %v2862, %v2871
  %v2875 = vrot.slane %v2846, 6
  %v2876 = vrot.slane %v2847, 6
  %vm2877 = vcmp.lt.s32.totalorder %v2853, 2
  %v2878 = vsel %vm2877, %v2875, %v2876
  %v2879 = vsel %vm2877, %v2876, %v2875
  %v2880 = vlaneseq
  %v2881 = vshrl.u32 %v2880, 7
  %v2882 = vsub.s32 1, %v2881
  %v2883 = vrot.slane %v2848, %v2882
  %v2884 = vmul.f32 %v2883, %v2879
  %v2885 = vmul.f32 %v2883, %v2878
  %2886 = vset.pattern.permute.xlu0 1
  %2887 = vperm.xlu0 %2886, %v884
  %v2888 = vpop.permute.xlu0 %2887
  %2890 = vset.pattern.permute.xlu0 1
  %2891 = vperm.xlu0 %2890, %v885
  %v2892 = vpop.permute.xlu0 %2891
  %v2894 = vmul.f32 %v2884, %v2888
  %v2895 = vmul.f32 %v2885, %v2892
  %v2896 = vadd.f32 %v2873, %v2894
  %v2897 = vadd.f32 %v2874, %v2895
  %v2898 = vrot.slane %v2846, 7
  %v2899 = vrot.slane %v2847, 7
  %vm2900 = vcmp.lt.s32.totalorder %v2853, 1
  %v2901 = vsel %vm2900, %v2898, %v2899
  %v2902 = vsel %vm2900, %v2899, %v2898
  %v2903 = vlaneseq
  %v2904 = vshrl.u32 %v2903, 7
  %v2905 = vsub.s32 2, %v2904
  %v2906 = vrot.slane %v2848, %v2905
  %v2907 = vmul.f32 %v2906, %v2902
  %v2908 = vmul.f32 %v2906, %v2901
  %2909 = vset.pattern.permute.xlu0 2
  %2910 = vperm.xlu0 %2909, %v884
  %v2911 = vpop.permute.xlu0 %2910
  %2913 = vset.pattern.permute.xlu0 2
  %2914 = vperm.xlu0 %2913, %v885
  %v2915 = vpop.permute.xlu0 %2914
  %v2917 = vmul.f32 %v2907, %v2911
  %v2918 = vmul.f32 %v2908, %v2915
  %v2919 = vadd.f32 %v2896, %v2917
  %v2920 = vadd.f32 %v2897, %v2918
  %v2921 = vlaneseq
  %v2922 = vshrl.u32 %v2921, 7
  %v2923 = vsub.s32 3, %v2922
  %v2924 = vrot.slane %v2848, %v2923
  %v2925 = vmul.f32 %v2924, %v2846
  %v2926 = vmul.f32 %v2924, %v2847
  %2927 = vset.pattern.permute.xlu0 3
  %2928 = vperm.xlu0 %2927, %v884
  %v2929 = vpop.permute.xlu0 %2928
  %2931 = vset.pattern.permute.xlu0 3
  %2932 = vperm.xlu0 %2931, %v885
  %v2933 = vpop.permute.xlu0 %2932
  %v2935 = vmul.f32 %v2925, %v2929
  %v2936 = vmul.f32 %v2926, %v2933
  %v2937 = vadd.f32 %v2919, %v2935
  %v2938 = vadd.f32 %v2920, %v2936
  %v2939 = vrot.slane %v2846, 1
  %v2940 = vrot.slane %v2847, 1
  %vm2941 = vcmp.lt.s32.totalorder %v2853, 7
  %v2942 = vsel %vm2941, %v2939, %v2940
  %v2943 = vsel %vm2941, %v2940, %v2939
  %v2944 = vlaneseq
  %v2945 = vshrl.u32 %v2944, 7
  %v2946 = vsub.s32 4, %v2945
  %v2947 = vrot.slane %v2848, %v2946
  %v2948 = vmul.f32 %v2947, %v2942
  %v2949 = vmul.f32 %v2947, %v2943
  %2950 = vset.pattern.permute.xlu0 4
  %2951 = vperm.xlu0 %2950, %v884
  %v2952 = vpop.permute.xlu0 %2951
  %2954 = vset.pattern.permute.xlu0 4
  %2955 = vperm.xlu0 %2954, %v885
  %v2956 = vpop.permute.xlu0 %2955
  %v2958 = vmul.f32 %v2948, %v2952
  %v2959 = vmul.f32 %v2949, %v2956
  %v2960 = vadd.f32 %v2937, %v2958
  %v2961 = vadd.f32 %v2938, %v2959
  %v2962 = vrot.slane %v2846, 2
  %v2963 = vrot.slane %v2847, 2
  %vm2964 = vcmp.lt.s32.totalorder %v2853, 6
  %v2965 = vsel %vm2964, %v2962, %v2963
  %v2966 = vsel %vm2964, %v2963, %v2962
  %v2967 = vlaneseq
  %v2968 = vshrl.u32 %v2967, 7
  %v2969 = vsub.s32 5, %v2968
  %v2970 = vrot.slane %v2848, %v2969
  %v2971 = vmul.f32 %v2970, %v2965
  %v2972 = vmul.f32 %v2970, %v2966
  %2973 = vset.pattern.permute.xlu0 5
  %2974 = vperm.xlu0 %2973, %v884
  %v2975 = vpop.permute.xlu0 %2974
  %2977 = vset.pattern.permute.xlu0 5
  %2978 = vperm.xlu0 %2977, %v885
  %v2979 = vpop.permute.xlu0 %2978
  %v2981 = vmul.f32 %v2971, %v2975
  %v2982 = vmul.f32 %v2972, %v2979
  %v2983 = vadd.f32 %v2960, %v2981
  %v2984 = vadd.f32 %v2961, %v2982
  %v2985 = vrot.slane %v2846, 3
  %v2986 = vrot.slane %v2847, 3
  %vm2987 = vcmp.lt.s32.totalorder %v2853, 5
  %v2988 = vsel %vm2987, %v2985, %v2986
  %v2989 = vsel %vm2987, %v2986, %v2985
  %v2990 = vlaneseq
  %v2991 = vshrl.u32 %v2990, 7
  %v2992 = vsub.s32 6, %v2991
  %v2993 = vrot.slane %v2848, %v2992
  %v2994 = vmul.f32 %v2993, %v2988
  %v2995 = vmul.f32 %v2993, %v2989
  %2996 = vset.pattern.permute.xlu0 6
  %2997 = vperm.xlu0 %2996, %v884
  %v2998 = vpop.permute.xlu0 %2997
  %3000 = vset.pattern.permute.xlu0 6
  %3001 = vperm.xlu0 %3000, %v885
  %v3002 = vpop.permute.xlu0 %3001
  %v3004 = vmul.f32 %v2994, %v2998
  %v3005 = vmul.f32 %v2995, %v3002
  %v3006 = vadd.f32 %v2983, %v3004
  %v3007 = vadd.f32 %v2984, %v3005
  %v3008 = vlaneseq
  %v3009 = vshrl.u32 %v3008, 7
  %v3010 = vsub.s32 0, %v3009
  %v3011 = vrot.slane %v2849, %v3010
  %v3012 = vadd.f32 %v3006, %v3011
  %v3013 = vadd.f32 %v3007, %v3011
  %v3014 = vmul.f32 %v2702, %v3012
  %v3015 = vmul.f32 %v2703, %v3013
  %v3016 = vld [vmem:[%s4 + $0x200] sm:$0xff]
  %v3017 = vld [vmem:[%s4 + $0x208] sm:$0xff]
  %v3018 = vld [vmem:[%s4 + $0x210] sm:$0xff]
  %v3019 = vld [vmem:[%s4 + $0x218] sm:$0xff]
  %v3020 = vld [vmem:[%s4 + $0x220] sm:$0x1]
  %v3021 = vlaneseq
  %v3022 = vshrl.u32 %v3021, 7
  %v3023 = vsub.s32 0, %v3022
  %v3024 = vrot.slane %v3020, %v3023
  %v3026 = vsel %vm1034, %v3014, 0
  %v3029 = vsel %vm1034, %v3015, 0
  %3031 = vmatprep.subr.mxu0 0.0
  %3032 = vmatpush1.msra.mxu0 0.0
  %3033 = vmatprep.subr.mxu0 0.0
  %3034 = vmatpush1.msra.mxu0 0.0
  %3035 = vmatprep.subr.mxu0 0.0
  %3036 = vmatpush1.msra.mxu0 0.0
  %3037 = vmatprep.subr.mxu0 0.0
  %3038 = vmatpush1.msra.mxu0 0.0
  %3039 = vmatprep.subr.mxu0 0.0
  %3040 = vmatpush1.msra.mxu0 0.0
  %3041 = vmatprep.subr.mxu0 0.0
  %3042 = vmatpush1.msra.mxu0 0.0
  %3043 = vmatprep.subr.mxu0 0.0
  %3044 = vmatpush1.msra.mxu0 0.0
  %3045 = vmatprep.subr.mxu0 0.0
  %3046 = vmatpush1.msra.mxu0 0.0
  %3047 = vmatprep.subr.mxu0 0.0
  %3048 = vmatpush1.msra.mxu0 0.0
  %3049 = vmatprep.subr.mxu0 0.0
  %3050 = vmatpush1.msra.mxu0 0.0
  %3051 = vmatprep.subr.mxu0 0.0
  %3052 = vmatpush1.msra.mxu0 0.0
  %3053 = vmatprep.subr.mxu0 0.0
  %3054 = vmatpush1.msra.mxu0 0.0
  %3055 = vmatprep.subr.mxu0 0.0
  %3056 = vmatpush1.msra.mxu0 %v3019
  %3057 = vmatprep.subr.mxu0 0.0
  %3058 = vmatpush1.msra.mxu0 %v3018
  %3059 = vmatprep.subr.mxu0 0.0
  %3060 = vmatpush1.msra.mxu0 %v3017
  %3061 = vmatprep.subr.mxu0 0.0
  %3062 = vmatpush1.msra.mxu0 %v3016
  %3063 = vmatprep.subr.mxu0 0.0
  %3064 = vmatpush2.msra.mxu0 0.0
  %3065 = vmatprep.subr.mxu0 0.0
  %3066 = vmatpush2.msra.mxu0 0.0
  %3067 = vmatprep.subr.mxu0 0.0
  %3068 = vmatpush2.msra.mxu0 0.0
  %3069 = vmatprep.subr.mxu0 0.0
  %3070 = vmatpush2.msra.mxu0 0.0
  %3071 = vmatprep.subr.mxu0 0.0
  %3072 = vmatpush2.msra.mxu0 0.0
  %3073 = vmatprep.subr.mxu0 0.0
  %3074 = vmatpush2.msra.mxu0 0.0
  %3075 = vmatprep.subr.mxu0 0.0
  %3076 = vmatpush2.msra.mxu0 0.0
  %3077 = vmatprep.subr.mxu0 0.0
  %3078 = vmatpush2.msra.mxu0 0.0
  %3079 = vmatprep.subr.mxu0 0.0
  %3080 = vmatpush2.msra.mxu0 0.0
  %3081 = vmatprep.subr.mxu0 0.0
  %3082 = vmatpush2.msra.mxu0 0.0
  %3083 = vmatprep.subr.mxu0 0.0
  %3084 = vmatpush2.msra.mxu0 0.0
  %3085 = vmatprep.subr.mxu0 0.0
  %3086 = vmatpush2.msra.mxu0 0.0
  %3087 = vmatprep.subr.mxu0 0.0
  %3088 = vmatpush2.msra.mxu0 0.0
  %3089 = vmatprep.subr.mxu0 0.0
  %3090 = vmatpush2.msra.mxu0 0.0
  %3091 = vmatprep.subr.mxu0 0.0
  %3092 = vmatpush2.msra.mxu0 0.0
  %3093 = vmatprep.subr.mxu0 0.0
  %3094 = vmatpush2.msra.mxu0 0.0
  %3095 = vmatprep.mubr.f32.mxu0 0.0
  %3096 = vmatmul.mubr.f32.gmra.mxu0 %v3026
  %v3097 = vpop.f32.mrf.mxu0
  %v3098 = vadd.f32 %v3024, %v3097
  %v3099 = vpop.f32.mrf.mxu0
  %3100 = vmatprep.mubr.f32.mxu0 0.0
  %3101 = vmatmul.mubr.f32.gmra.mxu0 %v3029
  %v3102 = vpop.f32.mrf.mxu0
  %v3103 = vadd.f32 %v3024, %v3102
  %v3104 = vpop.f32.mrf.mxu0
  %3105 = vdwg.mxu0
  %v3106 = vld [vmem:[%s4 + $0x228] sm:$0x7]
  %v3107 = vld [vmem:[%s4 + $0x230] sm:$0x1]
  %v3108 = vrot.slane %v2574, 7
  %v3109 = vrot.slane %v2579, 7
  %v3110 = vsel %vm2900, %v3108, %v3109
  %v3111 = vsel %vm2900, %v3109, %v3108
  %v3112 = vlaneseq
  %v3113 = vshrl.u32 %v3112, 7
  %v3114 = vsub.s32 0, %v3113
  %v3115 = vrot.slane %v3106, %v3114
  %v3116 = vmul.f32 %v3115, %v3111
  %v3117 = vmul.f32 %v3115, %v3110
  %v3118 = vmul.f32 %v3116, %v2911
  %v3119 = vmul.f32 %v3117, %v2915
  %v3120 = vlaneseq
  %v3121 = vshrl.u32 %v3120, 7
  %v3122 = vsub.s32 1, %v3121
  %v3123 = vrot.slane %v3106, %v3122
  %v3124 = vmul.f32 %v3123, %v2574
  %v3125 = vmul.f32 %v3123, %v2579
  %v3126 = vmul.f32 %v3124, %v2929
  %v3127 = vmul.f32 %v3125, %v2933
  %v3128 = vadd.f32 %v3118, %v3126
  %v3129 = vadd.f32 %v3119, %v3127
  %v3130 = vrot.slane %v2574, 1
  %v3131 = vrot.slane %v2579, 1
  %v3132 = vsel %vm2941, %v3130, %v3131
  %v3133 = vsel %vm2941, %v3131, %v3130
  %v3134 = vlaneseq
  %v3135 = vshrl.u32 %v3134, 7
  %v3136 = vsub.s32 2, %v3135
  %v3137 = vrot.slane %v3106, %v3136
  %v3138 = vmul.f32 %v3137, %v3132
  %v3139 = vmul.f32 %v3137, %v3133
  %v3140 = vmul.f32 %v3138, %v2952
  %v3141 = vmul.f32 %v3139, %v2956
  %v3142 = vadd.f32 %v3128, %v3140
  %v3143 = vadd.f32 %v3129, %v3141
  %v3144 = vlaneseq
  %v3145 = vshrl.u32 %v3144, 7
  %v3146 = vsub.s32 0, %v3145
  %v3147 = vrot.slane %v3107, %v3146
  %v3148 = vadd.f32 %v3142, %v3147
  %v3149 = vadd.f32 %v3143, %v3147
  %v3150 = vld [vmem:[%s4 + $0x238] sm:$0x7]
  %v3151 = vld [vmem:[%s4 + $0x240] sm:$0x1]
  %v3152 = vrot.slane %v3098, 7
  %v3153 = vrot.slane %v3103, 7
  %v3154 = vsel %vm2900, %v3152, %v3153
  %v3155 = vsel %vm2900, %v3153, %v3152
  %v3156 = vlaneseq
  %v3157 = vshrl.u32 %v3156, 7
  %v3158 = vsub.s32 0, %v3157
  %v3159 = vrot.slane %v3150, %v3158
  %v3160 = vmul.f32 %v3159, %v3155
  %v3161 = vmul.f32 %v3159, %v3154
  %v3162 = vmul.f32 %v3160, %v2911
  %v3163 = vmul.f32 %v3161, %v2915
  %v3164 = vlaneseq
  %v3165 = vshrl.u32 %v3164, 7
  %v3166 = vsub.s32 1, %v3165
  %v3167 = vrot.slane %v3150, %v3166
  %v3168 = vmul.f32 %v3167, %v3098
  %v3169 = vmul.f32 %v3167, %v3103
  %v3170 = vmul.f32 %v3168, %v2929
  %v3171 = vmul.f32 %v3169, %v2933
  %v3172 = vadd.f32 %v3162, %v3170
  %v3173 = vadd.f32 %v3163, %v3171
  %v3174 = vrot.slane %v3098, 1
  %v3175 = vrot.slane %v3103, 1
  %v3176 = vsel %vm2941, %v3174, %v3175
  %v3177 = vsel %vm2941, %v3175, %v3174
  %v3178 = vlaneseq
  %v3179 = vshrl.u32 %v3178, 7
  %v3180 = vsub.s32 2, %v3179
  %v3181 = vrot.slane %v3150, %v3180
  %v3182 = vmul.f32 %v3181, %v3176
  %v3183 = vmul.f32 %v3181, %v3177
  %v3184 = vmul.f32 %v3182, %v2952
  %v3185 = vmul.f32 %v3183, %v2956
  %v3186 = vadd.f32 %v3172, %v3184
  %v3187 = vadd.f32 %v3173, %v3185
  %v3188 = vlaneseq
  %v3189 = vshrl.u32 %v3188, 7
  %v3190 = vsub.s32 0, %v3189
  %v3191 = vrot.slane %v3151, %v3190
  %v3192 = vadd.f32 %v3186, %v3191
  %v3193 = vadd.f32 %v3187, %v3191
  %v3194 = vadd.f32 %v2574, %v3148
  %v3195 = vadd.f32 %v2579, %v3149
  %v3196 = vld [vmem:[%s4 + $0x248] sm:$0xff]
  %v3197 = vld [vmem:[%s4 + $0x250] sm:$0xff]
  %v3198 = vld [vmem:[%s4 + $0x258] sm:$0xff]
  %v3199 = vld [vmem:[%s4 + $0x260] sm:$0xff]
  %v3200 = vadd.f32 %v3098, %v3192
  %v3201 = vadd.f32 %v3103, %v3193
  %v3202 = vld [vmem:[%s4 + $0x268] sm:$0xff]
  %v3203 = vld [vmem:[%s4 + $0x270] sm:$0xff]
  %v3204 = vld [vmem:[%s4 + $0x278] sm:$0xff]
  %v3205 = vld [vmem:[%s4 + $0x280] sm:$0xff]
  %v3207 = vsel %vm1034, %v3200, 0
  %v3210 = vsel %vm1034, %v3201, 0
  %3212 = vmatprep.subr.mxu0 0.0
  %3213 = vmatpush1.msra.mxu0 0.0
  %3214 = vmatprep.subr.mxu0 0.0
  %3215 = vmatpush1.msra.mxu0 0.0
  %3216 = vmatprep.subr.mxu0 0.0
  %3217 = vmatpush1.msra.mxu0 0.0
  %3218 = vmatprep.subr.mxu0 0.0
  %3219 = vmatpush1.msra.mxu0 0.0
  %3220 = vmatprep.subr.mxu0 0.0
  %3221 = vmatpush1.msra.mxu0 0.0
  %3222 = vmatprep.subr.mxu0 0.0
  %3223 = vmatpush1.msra.mxu0 0.0
  %3224 = vmatprep.subr.mxu0 0.0
  %3225 = vmatpush1.msra.mxu0 0.0
  %3226 = vmatprep.subr.mxu0 0.0
  %3227 = vmatpush1.msra.mxu0 0.0
  %3228 = vmatprep.subr.mxu0 0.0
  %3229 = vmatpush1.msra.mxu0 0.0
  %3230 = vmatprep.subr.mxu0 0.0
  %3231 = vmatpush1.msra.mxu0 0.0
  %3232 = vmatprep.subr.mxu0 0.0
  %3233 = vmatpush1.msra.mxu0 0.0
  %3234 = vmatprep.subr.mxu0 0.0
  %3235 = vmatpush1.msra.mxu0 0.0
  %3236 = vmatprep.subr.mxu0 0.0
  %3237 = vmatpush1.msra.mxu0 %v3205
  %3238 = vmatprep.subr.mxu0 0.0
  %3239 = vmatpush1.msra.mxu0 %v3204
  %3240 = vmatprep.subr.mxu0 0.0
  %3241 = vmatpush1.msra.mxu0 %v3203
  %3242 = vmatprep.subr.mxu0 0.0
  %3243 = vmatpush1.msra.mxu0 %v3202
  %3244 = vmatprep.subr.mxu0 0.0
  %3245 = vmatpush2.msra.mxu0 0.0
  %3246 = vmatprep.subr.mxu0 0.0
  %3247 = vmatpush2.msra.mxu0 0.0
  %3248 = vmatprep.subr.mxu0 0.0
  %3249 = vmatpush2.msra.mxu0 0.0
  %3250 = vmatprep.subr.mxu0 0.0
  %3251 = vmatpush2.msra.mxu0 0.0
  %3252 = vmatprep.subr.mxu0 0.0
  %3253 = vmatpush2.msra.mxu0 0.0
  %3254 = vmatprep.subr.mxu0 0.0
  %3255 = vmatpush2.msra.mxu0 0.0
  %3256 = vmatprep.subr.mxu0 0.0
  %3257 = vmatpush2.msra.mxu0 0.0
  %3258 = vmatprep.subr.mxu0 0.0
  %3259 = vmatpush2.msra.mxu0 0.0
  %3260 = vmatprep.subr.mxu0 0.0
  %3261 = vmatpush2.msra.mxu0 0.0
  %3262 = vmatprep.subr.mxu0 0.0
  %3263 = vmatpush2.msra.mxu0 0.0
  %3264 = vmatprep.subr.mxu0 0.0
  %3265 = vmatpush2.msra.mxu0 0.0
  %3266 = vmatprep.subr.mxu0 0.0
  %3267 = vmatpush2.msra.mxu0 0.0
  %3268 = vmatprep.subr.mxu0 0.0
  %3269 = vmatpush2.msra.mxu0 0.0
  %3270 = vmatprep.subr.mxu0 0.0
  %3271 = vmatpush2.msra.mxu0 0.0
  %3272 = vmatprep.subr.mxu0 0.0
  %3273 = vmatpush2.msra.mxu0 0.0
  %3274 = vmatprep.subr.mxu0 0.0
  %3275 = vmatpush2.msra.mxu0 0.0
  %3276 = vmatprep.mubr.f32.mxu0 0.0
  %3277 = vmatmul.mubr.f32.gmra.mxu0 %v3207
  %v3278 = vpop.f32.mrf.mxu0
  %v3279 = vadd.f32 0.0, %v3278
  %v3280 = vpop.f32.mrf.mxu0
  %3281 = vmatprep.mubr.f32.mxu0 0.0
  %3282 = vmatmul.mubr.f32.gmra.mxu0 %v3210
  %v3283 = vpop.f32.mrf.mxu0
  %v3284 = vadd.f32 0.0, %v3283
  %v3285 = vpop.f32.mrf.mxu0
  %3286 = vdwg.mxu0
  %v3288 = vsel %vm1034, %v3194, 0
  %v3291 = vsel %vm1034, %v3195, 0
  %3293 = vmatprep.subr.mxu0 0.0
  %3294 = vmatpush1.msra.mxu0 0.0
  %3295 = vmatprep.subr.mxu0 0.0
  %3296 = vmatpush1.msra.mxu0 0.0
  %3297 = vmatprep.subr.mxu0 0.0
  %3298 = vmatpush1.msra.mxu0 0.0
  %3299 = vmatprep.subr.mxu0 0.0
  %3300 = vmatpush1.msra.mxu0 0.0
  %3301 = vmatprep.subr.mxu0 0.0
  %3302 = vmatpush1.msra.mxu0 0.0
  %3303 = vmatprep.subr.mxu0 0.0
  %3304 = vmatpush1.msra.mxu0 0.0
  %3305 = vmatprep.subr.mxu0 0.0
  %3306 = vmatpush1.msra.mxu0 0.0
  %3307 = vmatprep.subr.mxu0 0.0
  %3308 = vmatpush1.msra.mxu0 0.0
  %3309 = vmatprep.subr.mxu0 0.0
  %3310 = vmatpush1.msra.mxu0 0.0
  %3311 = vmatprep.subr.mxu0 0.0
  %3312 = vmatpush1.msra.mxu0 0.0
  %3313 = vmatprep.subr.mxu0 0.0
  %3314 = vmatpush1.msra.mxu0 0.0
  %3315 = vmatprep.subr.mxu0 0.0
  %3316 = vmatpush1.msra.mxu0 0.0
  %3317 = vmatprep.subr.mxu0 0.0
  %3318 = vmatpush1.msra.mxu0 %v3199
  %3319 = vmatprep.subr.mxu0 0.0
  %3320 = vmatpush1.msra.mxu0 %v3198
  %3321 = vmatprep.subr.mxu0 0.0
  %3322 = vmatpush1.msra.mxu0 %v3197
  %3323 = vmatprep.subr.mxu0 0.0
  %3324 = vmatpush1.msra.mxu0 %v3196
  %3325 = vmatprep.subr.mxu0 0.0
  %3326 = vmatpush2.msra.mxu0 0.0
  %3327 = vmatprep.subr.mxu0 0.0
  %3328 = vmatpush2.msra.mxu0 0.0
  %3329 = vmatprep.subr.mxu0 0.0
  %3330 = vmatpush2.msra.mxu0 0.0
  %3331 = vmatprep.subr.mxu0 0.0
  %3332 = vmatpush2.msra.mxu0 0.0
  %3333 = vmatprep.subr.mxu0 0.0
  %3334 = vmatpush2.msra.mxu0 0.0
  %3335 = vmatprep.subr.mxu0 0.0
  %3336 = vmatpush2.msra.mxu0 0.0
  %3337 = vmatprep.subr.mxu0 0.0
  %3338 = vmatpush2.msra.mxu0 0.0
  %3339 = vmatprep.subr.mxu0 0.0
  %3340 = vmatpush2.msra.mxu0 0.0
  %3341 = vmatprep.subr.mxu0 0.0
  %3342 = vmatpush2.msra.mxu0 0.0
  %3343 = vmatprep.subr.mxu0 0.0
  %3344 = vmatpush2.msra.mxu0 0.0
  %3345 = vmatprep.subr.mxu0 0.0
  %3346 = vmatpush2.msra.mxu0 0.0
  %3347 = vmatprep.subr.mxu0 0.0
  %3348 = vmatpush2.msra.mxu0 0.0
  %3349 = vmatprep.subr.mxu0 0.0
  %3350 = vmatpush2.msra.mxu0 0.0
  %3351 = vmatprep.subr.mxu0 0.0
  %3352 = vmatpush2.msra.mxu0 0.0
  %3353 = vmatprep.subr.mxu0 0.0
  %3354 = vmatpush2.msra.mxu0 0.0
  %3355 = vmatprep.subr.mxu0 0.0
  %3356 = vmatpush2.msra.mxu0 0.0
  %3357 = vmatprep.mubr.f32.mxu0 0.0
  %3358 = vmatmul.mubr.f32.gmra.mxu0 %v3288
  %v3359 = vpop.f32.mrf.mxu0
  %v3360 = vadd.f32 %v3279, %v3359
  %v3361 = vpop.f32.mrf.mxu0
  %3362 = vmatprep.mubr.f32.mxu0 0.0
  %3363 = vmatmul.mubr.f32.gmra.mxu0 %v3291
  %v3364 = vpop.f32.mrf.mxu0
  %v3365 = vadd.f32 %v3284, %v3364
  %v3366 = vpop.f32.mrf.mxu0
  %3367 = vdwg.mxu0
  %v3368 = vld [vmem:[%s4 + $0x288] sm:$0x1]
  %v3369 = vlaneseq
  %v3370 = vshrl.u32 %v3369, 7
  %v3371 = vsub.s32 0, %v3370
  %v3372 = vrot.slane %v3368, %v3371
  %v3373 = vadd.f32 %v3360, %v3372
  %v3374 = vadd.f32 %v3365, %v3372
  %v3375 = vadd.f32 %v1275, %v3373
  %v3376 = vadd.f32 %v1276, %v3374
  %v3377 = vld [vmem:[%s4 + $0x30] sm:$0x1]
  %v3378 = vld [vmem:[%s4 + $0x38] sm:$0x1]
  %v3379 = vsel %vm1034, %v3375, 0.0
  %3380 = vadd.xlane.f32.xlu0 %v3379
  %v3381 = vpop.xlane.xlu0 %3380
  %v3382 = vsel %vm1034, %v3376, 0.0
  %3383 = vadd.xlane.f32.xlu0 %v3382
  %v3384 = vpop.xlane.xlu0 %3383
  %v3385 = vmul.f32 %v3381, %v1041
  %v3386 = vmul.f32 %v3384, %v1041
  %v3387 = vsub.f32 %v3375, %v3385
  %v3388 = vsub.f32 %v3376, %v3386
  %v3389 = vmul.f32 %v3387, %v3387
  %v3390 = vmul.f32 %v3388, %v3388
  %v3391 = vsel %vm1034, %v3389, 0.0
  %3392 = vadd.xlane.f32.xlu0 %v3391
  %v3393 = vpop.xlane.xlu0 %3392
  %v3394 = vsel %vm1034, %v3390, 0.0
  %3395 = vadd.xlane.f32.xlu0 %v3394
  %v3396 = vpop.xlane.xlu0 %3395
  %v3397 = vmul.f32 %v3393, %v1041
  %v3398 = vmul.f32 %v3396, %v1041
  %v3399 = vadd.f32 %v3397, 1e-05
  %v3400 = vadd.f32 %v3398, 1e-05
  %v3401 = vrsqrt.pop %v3399
  %v3402 = vrsqrt.pop %v3400
  %v3403 = vmul.f32 %v3387, %v3401
  %v3404 = vmul.f32 %v3388, %v3402
  %v3405 = vlaneseq
  %v3406 = vshrl.u32 %v3405, 7
  %v3407 = vsub.s32 0, %v3406
  %v3408 = vrot.slane %v3377, %v3407
  %v3409 = vmul.f32 %v3403, %v3408
  %v3410 = vmul.f32 %v3404, %v3408
  %v3411 = vlaneseq
  %v3412 = vshrl.u32 %v3411, 7
  %v3413 = vsub.s32 0, %v3412
  %v3414 = vrot.slane %v3378, %v3413
  %v3415 = vadd.f32 %v3409, %v3414
  %v3416 = vadd.f32 %v3410, %v3414
  %v3417 = vld [vmem:[%s4 + $0x290] sm:$0xff]
  %v3418 = vld [vmem:[%s4 + $0x298] sm:$0xff]
  %v3419 = vld [vmem:[%s4 + $0x2a0] sm:$0xff]
  %v3420 = vld [vmem:[%s4 + $0x2a8] sm:$0xff]
  %v3421 = vld [vmem:[%s4 + $0x2b0] sm:$0x1]
  %v3422 = vlaneseq
  %v3423 = vshrl.u32 %v3422, 7
  %v3424 = vsub.s32 0, %v3423
  %v3425 = vrot.slane %v3421, %v3424
  %v3427 = vsel %vm1034, %v3415, 0
  %v3430 = vsel %vm1034, %v3416, 0
  %3432 = vmatprep.subr.mxu0 0.0
  %3433 = vmatpush1.msra.mxu0 0.0
  %3434 = vmatprep.subr.mxu0 0.0
  %3435 = vmatpush1.msra.mxu0 0.0
  %3436 = vmatprep.subr.mxu0 0.0
  %3437 = vmatpush1.msra.mxu0 0.0
  %3438 = vmatprep.subr.mxu0 0.0
  %3439 = vmatpush1.msra.mxu0 0.0
  %3440 = vmatprep.subr.mxu0 0.0
  %3441 = vmatpush1.msra.mxu0 0.0
  %3442 = vmatprep.subr.mxu0 0.0
  %3443 = vmatpush1.msra.mxu0 0.0
  %3444 = vmatprep.subr.mxu0 0.0
  %3445 = vmatpush1.msra.mxu0 0.0
  %3446 = vmatprep.subr.mxu0 0.0
  %3447 = vmatpush1.msra.mxu0 0.0
  %3448 = vmatprep.subr.mxu0 0.0
  %3449 = vmatpush1.msra.mxu0 0.0
  %3450 = vmatprep.subr.mxu0 0.0
  %3451 = vmatpush1.msra.mxu0 0.0
  %3452 = vmatprep.subr.mxu0 0.0
  %3453 = vmatpush1.msra.mxu0 0.0
  %3454 = vmatprep.subr.mxu0 0.0
  %3455 = vmatpush1.msra.mxu0 0.0
  %3456 = vmatprep.subr.mxu0 0.0
  %3457 = vmatpush1.msra.mxu0 %v3420
  %3458 = vmatprep.subr.mxu0 0.0
  %3459 = vmatpush1.msra.mxu0 %v3419
  %3460 = vmatprep.subr.mxu0 0.0
  %3461 = vmatpush1.msra.mxu0 %v3418
  %3462 = vmatprep.subr.mxu0 0.0
  %3463 = vmatpush1.msra.mxu0 %v3417
  %3464 = vmatprep.subr.mxu0 0.0
  %3465 = vmatpush2.msra.mxu0 0.0
  %3466 = vmatprep.subr.mxu0 0.0
  %3467 = vmatpush2.msra.mxu0 0.0
  %3468 = vmatprep.subr.mxu0 0.0
  %3469 = vmatpush2.msra.mxu0 0.0
  %3470 = vmatprep.subr.mxu0 0.0
  %3471 = vmatpush2.msra.mxu0 0.0
  %3472 = vmatprep.subr.mxu0 0.0
  %3473 = vmatpush2.msra.mxu0 0.0
  %3474 = vmatprep.subr.mxu0 0.0
  %3475 = vmatpush2.msra.mxu0 0.0
  %3476 = vmatprep.subr.mxu0 0.0
  %3477 = vmatpush2.msra.mxu0 0.0
  %3478 = vmatprep.subr.mxu0 0.0
  %3479 = vmatpush2.msra.mxu0 0.0
  %3480 = vmatprep.subr.mxu0 0.0
  %3481 = vmatpush2.msra.mxu0 0.0
  %3482 = vmatprep.subr.mxu0 0.0
  %3483 = vmatpush2.msra.mxu0 0.0
  %3484 = vmatprep.subr.mxu0 0.0
  %3485 = vmatpush2.msra.mxu0 0.0
  %3486 = vmatprep.subr.mxu0 0.0
  %3487 = vmatpush2.msra.mxu0 0.0
  %3488 = vmatprep.subr.mxu0 0.0
  %3489 = vmatpush2.msra.mxu0 0.0
  %3490 = vmatprep.subr.mxu0 0.0
  %3491 = vmatpush2.msra.mxu0 0.0
  %3492 = vmatprep.subr.mxu0 0.0
  %3493 = vmatpush2.msra.mxu0 0.0
  %3494 = vmatprep.subr.mxu0 0.0
  %3495 = vmatpush2.msra.mxu0 0.0
  %3496 = vmatprep.mubr.f32.mxu0 0.0
  %3497 = vmatmul.mubr.f32.gmra.mxu0 %v3427
  %v3498 = vpop.f32.mrf.mxu0
  %v3499 = vadd.f32 %v3425, %v3498
  %v3500 = vpop.f32.mrf.mxu0
  %3501 = vmatprep.mubr.f32.mxu0 0.0
  %3502 = vmatmul.mubr.f32.gmra.mxu0 %v3430
  %v3503 = vpop.f32.mrf.mxu0
  %v3504 = vadd.f32 %v3425, %v3503
  %v3505 = vpop.f32.mrf.mxu0
  %3506 = vdwg.mxu0
  %v3507 = vxor.u32 %v3499, 2147483648
  %v3508 = vxor.u32 %v3504, 2147483648
  %v3509 = vmul.f32 %v3507, 1.442695
  %v3510 = vpow.pop %v3509
  %v3511 = vmul.f32 %v3508, 1.442695
  %v3512 = vpow.pop %v3511
  %v3513 = vadd.f32 %v3510, 1.0
  %v3514 = vadd.f32 %v3512, 1.0
  %v3515 = vrcp.pop %v3513
  %v3516 = vmul.f32 1.0, %v3515
  %v3517 = vrcp.pop %v3514
  %v3518 = vmul.f32 1.0, %v3517
  %v3519 = vmul.f32 %v3499, %v3516
  %v3520 = vmul.f32 %v3504, %v3518
  %v3521 = vld [vmem:[%s4 + $0x2b8] sm:$0xff]
  %v3522 = vld [vmem:[%s4 + $0x2c0] sm:$0xff]
  %v3523 = vld [vmem:[%s4 + $0x2c8] sm:$0xff]
  %v3524 = vld [vmem:[%s4 + $0x2d0] sm:$0xff]
  %v3525 = vld [vmem:[%s4 + $0x2d8] sm:$0xff]
  %v3526 = vld [vmem:[%s4 + $0x2e0] sm:$0xff]
  %v3527 = vld [vmem:[%s4 + $0x2e8] sm:$0xff]
  %v3528 = vld [vmem:[%s4 + $0x2f0] sm:$0xff]
  %v3529 = vld [vmem:[%s4 + $0x2f8] sm:$0x1]
  %v3530 = vlaneseq
  %v3531 = vshrl.u32 %v3530, 7
  %v3532 = vsub.s32 0, %v3531
  %v3533 = vrot.slane %v3529, %v3532
  %v3535 = vsel %vm1191, %v3519, 0
  %v3538 = vsel %vm1191, %v3520, 0
  %3540 = vmatprep.subr.mxu0 0.0
  %3541 = vmatpush1.msra.mxu0 0.0
  %3542 = vmatprep.subr.mxu0 0.0
  %3543 = vmatpush1.msra.mxu0 0.0
  %3544 = vmatprep.subr.mxu0 0.0
  %3545 = vmatpush1.msra.mxu0 0.0
  %3546 = vmatprep.subr.mxu0 0.0
  %3547 = vmatpush1.msra.mxu0 0.0
  %3548 = vmatprep.subr.mxu0 0.0
  %3549 = vmatpush1.msra.mxu0 0.0
  %3550 = vmatprep.subr.mxu0 0.0
  %3551 = vmatpush1.msra.mxu0 0.0
  %3552 = vmatprep.subr.mxu0 0.0
  %3553 = vmatpush1.msra.mxu0 0.0
  %3554 = vmatprep.subr.mxu0 0.0
  %3555 = vmatpush1.msra.mxu0 0.0
  %3556 = vmatprep.subr.mxu0 0.0
  %3557 = vmatpush1.msra.mxu0 %v3528
  %3558 = vmatprep.subr.mxu0 0.0
  %3559 = vmatpush1.msra.mxu0 %v3527
  %3560 = vmatprep.subr.mxu0 0.0
  %3561 = vmatpush1.msra.mxu0 %v3526
  %3562 = vmatprep.subr.mxu0 0.0
  %3563 = vmatpush1.msra.mxu0 %v3525
  %3564 = vmatprep.subr.mxu0 0.0
  %3565 = vmatpush1.msra.mxu0 %v3524
  %3566 = vmatprep.subr.mxu0 0.0
  %3567 = vmatpush1.msra.mxu0 %v3523
  %3568 = vmatprep.subr.mxu0 0.0
  %3569 = vmatpush1.msra.mxu0 %v3522
  %3570 = vmatprep.subr.mxu0 0.0
  %3571 = vmatpush1.msra.mxu0 %v3521
  %3572 = vmatprep.subr.mxu0 0.0
  %3573 = vmatpush2.msra.mxu0 0.0
  %3574 = vmatprep.subr.mxu0 0.0
  %3575 = vmatpush2.msra.mxu0 0.0
  %3576 = vmatprep.subr.mxu0 0.0
  %3577 = vmatpush2.msra.mxu0 0.0
  %3578 = vmatprep.subr.mxu0 0.0
  %3579 = vmatpush2.msra.mxu0 0.0
  %3580 = vmatprep.subr.mxu0 0.0
  %3581 = vmatpush2.msra.mxu0 0.0
  %3582 = vmatprep.subr.mxu0 0.0
  %3583 = vmatpush2.msra.mxu0 0.0
  %3584 = vmatprep.subr.mxu0 0.0
  %3585 = vmatpush2.msra.mxu0 0.0
  %3586 = vmatprep.subr.mxu0 0.0
  %3587 = vmatpush2.msra.mxu0 0.0
  %3588 = vmatprep.subr.mxu0 0.0
  %3589 = vmatpush2.msra.mxu0 0.0
  %3590 = vmatprep.subr.mxu0 0.0
  %3591 = vmatpush2.msra.mxu0 0.0
  %3592 = vmatprep.subr.mxu0 0.0
  %3593 = vmatpush2.msra.mxu0 0.0
  %3594 = vmatprep.subr.mxu0 0.0
  %3595 = vmatpush2.msra.mxu0 0.0
  %3596 = vmatprep.subr.mxu0 0.0
  %3597 = vmatpush2.msra.mxu0 0.0
  %3598 = vmatprep.subr.mxu0 0.0
  %3599 = vmatpush2.msra.mxu0 0.0
  %3600 = vmatprep.subr.mxu0 0.0
  %3601 = vmatpush2.msra.mxu0 0.0
  %3602 = vmatprep.subr.mxu0 0.0
  %3603 = vmatpush2.msra.mxu0 0.0
  %3604 = vmatprep.mubr.f32.mxu0 0.0
  %3605 = vmatmul.mubr.f32.gmra.mxu0 %v3535
  %v3606 = vpop.f32.mrf.mxu0
  %v3607 = vadd.f32 %v3533, %v3606
  %v3608 = vpop.f32.mrf.mxu0
  %3609 = vmatprep.mubr.f32.mxu0 0.0
  %3610 = vmatmul.mubr.f32.gmra.mxu0 %v3538
  %v3611 = vpop.f32.mrf.mxu0
  %v3612 = vadd.f32 %v3533, %v3611
  %v3613 = vpop.f32.mrf.mxu0
  %3614 = vdwg.mxu0
  %v3615 = vmul.f32 %v3607, 0.5
  %v3616 = vmul.f32 %v3612, 0.5
  %v3617 = vadd.f32 %v3375, %v3615
  %v3618 = vadd.f32 %v3376, %v3616
  %v3619 = vld [vmem:[%s4 + $0x40] sm:$0x1]
  %v3620 = vld [vmem:[%s4 + $0x48] sm:$0x1]
  %v3621 = vsel %vm1034, %v3617, 0.0
  %3622 = vadd.xlane.f32.xlu0 %v3621
  %v3623 = vpop.xlane.xlu0 %3622
  %v3624 = vsel %vm1034, %v3618, 0.0
  %3625 = vadd.xlane.f32.xlu0 %v3624
  %v3626 = vpop.xlane.xlu0 %3625
  %v3627 = vmul.f32 %v3623, %v1041
  %v3628 = vmul.f32 %v3626, %v1041
  %v3629 = vsub.f32 %v3617, %v3627
  %v3630 = vsub.f32 %v3618, %v3628
  %v3631 = vmul.f32 %v3629, %v3629
  %v3632 = vmul.f32 %v3630, %v3630
  %v3633 = vsel %vm1034, %v3631, 0.0
  %3634 = vadd.xlane.f32.xlu0 %v3633
  %v3635 = vpop.xlane.xlu0 %3634
  %v3636 = vsel %vm1034, %v3632, 0.0
  %3637 = vadd.xlane.f32.xlu0 %v3636
  %v3638 = vpop.xlane.xlu0 %3637
  %v3639 = vmul.f32 %v3635, %v1041
  %v3640 = vmul.f32 %v3638, %v1041
  %v3641 = vadd.f32 %v3639, 1e-05
  %v3642 = vadd.f32 %v3640, 1e-05
  %v3643 = vrsqrt.pop %v3641
  %v3644 = vrsqrt.pop %v3642
  %v3645 = vmul.f32 %v3629, %v3643
  %v3646 = vmul.f32 %v3630, %v3644
  %v3647 = vlaneseq
  %v3648 = vshrl.u32 %v3647, 7
  %v3649 = vsub.s32 0, %v3648
  %v3650 = vrot.slane %v3619, %v3649
  %v3651 = vmul.f32 %v3645, %v3650
  %v3652 = vmul.f32 %v3646, %v3650
  %v3653 = vlaneseq
  %v3654 = vshrl.u32 %v3653, 7
  %v3655 = vsub.s32 0, %v3654
  %v3656 = vrot.slane %v3620, %v3655
  %v3657 = vadd.f32 %v3651, %v3656
  %v3658 = vadd.f32 %v3652, %v3656
  %s3659 = scalar_lea.vmem %s4, 768
  %v3660 = vld [vmem:[%s3659] sm:$0x1]
  %v3661 = vld [vmem:[%s3659 + $0x8] sm:$0x1]
  %v3662 = vsel %vm1034, %v3657, 0.0
  %3663 = vadd.xlane.f32.xlu0 %v3662
  %v3664 = vpop.xlane.xlu0 %3663
  %v3665 = vsel %vm1034, %v3658, 0.0
  %3666 = vadd.xlane.f32.xlu0 %v3665
  %v3667 = vpop.xlane.xlu0 %3666
  %v3668 = vmul.f32 %v3664, %v1041
  %v3669 = vmul.f32 %v3667, %v1041
  %v3670 = vsub.f32 %v3657, %v3668
  %v3671 = vsub.f32 %v3658, %v3669
  %v3672 = vmul.f32 %v3670, %v3670
  %v3673 = vmul.f32 %v3671, %v3671
  %v3674 = vsel %vm1034, %v3672, 0.0
  %3675 = vadd.xlane.f32.xlu0 %v3674
  %v3676 = vpop.xlane.xlu0 %3675
  %v3677 = vsel %vm1034, %v3673, 0.0
  %3678 = vadd.xlane.f32.xlu0 %v3677
  %v3679 = vpop.xlane.xlu0 %3678
  %v3680 = vmul.f32 %v3676, %v1041
  %v3681 = vmul.f32 %v3679, %v1041
  %v3682 = vadd.f32 %v3680, 1e-05
  %v3683 = vadd.f32 %v3681, 1e-05
  %v3684 = vrsqrt.pop %v3682
  %v3685 = vrsqrt.pop %v3683
  %v3686 = vmul.f32 %v3670, %v3684
  %v3687 = vmul.f32 %v3671, %v3685
  %v3688 = vlaneseq
  %v3689 = vshrl.u32 %v3688, 7
  %v3690 = vsub.s32 0, %v3689
  %v3691 = vrot.slane %v3660, %v3690
  %v3692 = vmul.f32 %v3686, %v3691
  %v3693 = vmul.f32 %v3687, %v3691
  %v3694 = vlaneseq
  %v3695 = vshrl.u32 %v3694, 7
  %v3696 = vsub.s32 0, %v3695
  %v3697 = vrot.slane %v3661, %v3696
  %v3698 = vadd.f32 %v3692, %v3697
  %v3699 = vadd.f32 %v3693, %v3697
  %v3700 = vld [vmem:[%s3659 + $0x50] sm:$0xff]
  %v3701 = vld [vmem:[%s3659 + $0x58] sm:$0xff]
  %v3702 = vld [vmem:[%s3659 + $0x60] sm:$0xff]
  %v3703 = vld [vmem:[%s3659 + $0x68] sm:$0xff]
  %v3704 = vld [vmem:[%s3659 + $0x70] sm:$0x1]
  %v3705 = vlaneseq
  %v3706 = vshrl.u32 %v3705, 7
  %v3707 = vsub.s32 0, %v3706
  %v3708 = vrot.slane %v3704, %v3707
  %v3710 = vsel %vm1034, %v3698, 0
  %v3713 = vsel %vm1034, %v3699, 0
  %3715 = vmatprep.subr.mxu0 0.0
  %3716 = vmatpush1.msra.mxu0 0.0
  %3717 = vmatprep.subr.mxu0 0.0
  %3718 = vmatpush1.msra.mxu0 0.0
  %3719 = vmatprep.subr.mxu0 0.0
  %3720 = vmatpush1.msra.mxu0 0.0
  %3721 = vmatprep.subr.mxu0 0.0
  %3722 = vmatpush1.msra.mxu0 0.0
  %3723 = vmatprep.subr.mxu0 0.0
  %3724 = vmatpush1.msra.mxu0 0.0
  %3725 = vmatprep.subr.mxu0 0.0
  %3726 = vmatpush1.msra.mxu0 0.0
  %3727 = vmatprep.subr.mxu0 0.0
  %3728 = vmatpush1.msra.mxu0 0.0
  %3729 = vmatprep.subr.mxu0 0.0
  %3730 = vmatpush1.msra.mxu0 0.0
  %3731 = vmatprep.subr.mxu0 0.0
  %3732 = vmatpush1.msra.mxu0 0.0
  %3733 = vmatprep.subr.mxu0 0.0
  %3734 = vmatpush1.msra.mxu0 0.0
  %3735 = vmatprep.subr.mxu0 0.0
  %3736 = vmatpush1.msra.mxu0 0.0
  %3737 = vmatprep.subr.mxu0 0.0
  %3738 = vmatpush1.msra.mxu0 0.0
  %3739 = vmatprep.subr.mxu0 0.0
  %3740 = vmatpush1.msra.mxu0 %v3703
  %3741 = vmatprep.subr.mxu0 0.0
  %3742 = vmatpush1.msra.mxu0 %v3702
  %3743 = vmatprep.subr.mxu0 0.0
  %3744 = vmatpush1.msra.mxu0 %v3701
  %3745 = vmatprep.subr.mxu0 0.0
  %3746 = vmatpush1.msra.mxu0 %v3700
  %3747 = vmatprep.subr.mxu0 0.0
  %3748 = vmatpush2.msra.mxu0 0.0
  %3749 = vmatprep.subr.mxu0 0.0
  %3750 = vmatpush2.msra.mxu0 0.0
  %3751 = vmatprep.subr.mxu0 0.0
  %3752 = vmatpush2.msra.mxu0 0.0
  %3753 = vmatprep.subr.mxu0 0.0
  %3754 = vmatpush2.msra.mxu0 0.0
  %3755 = vmatprep.subr.mxu0 0.0
  %3756 = vmatpush2.msra.mxu0 0.0
  %3757 = vmatprep.subr.mxu0 0.0
  %3758 = vmatpush2.msra.mxu0 0.0
  %3759 = vmatprep.subr.mxu0 0.0
  %3760 = vmatpush2.msra.mxu0 0.0
  %3761 = vmatprep.subr.mxu0 0.0
  %3762 = vmatpush2.msra.mxu0 0.0
  %3763 = vmatprep.subr.mxu0 0.0
  %3764 = vmatpush2.msra.mxu0 0.0
  %3765 = vmatprep.subr.mxu0 0.0
  %3766 = vmatpush2.msra.mxu0 0.0
  %3767 = vmatprep.subr.mxu0 0.0
  %3768 = vmatpush2.msra.mxu0 0.0
  %3769 = vmatprep.subr.mxu0 0.0
  %3770 = vmatpush2.msra.mxu0 0.0
  %3771 = vmatprep.subr.mxu0 0.0
  %3772 = vmatpush2.msra.mxu0 0.0
  %3773 = vmatprep.subr.mxu0 0.0
  %3774 = vmatpush2.msra.mxu0 0.0
  %3775 = vmatprep.subr.mxu0 0.0
  %3776 = vmatpush2.msra.mxu0 0.0
  %3777 = vmatprep.subr.mxu0 0.0
  %3778 = vmatpush2.msra.mxu0 0.0
  %3779 = vmatprep.mubr.f32.mxu0 0.0
  %3780 = vmatmul.mubr.f32.gmra.mxu0 %v3710
  %v3781 = vpop.f32.mrf.mxu0
  %v3782 = vadd.f32 %v3708, %v3781
  %v3783 = vpop.f32.mrf.mxu0
  %3784 = vmatprep.mubr.f32.mxu0 0.0
  %3785 = vmatmul.mubr.f32.gmra.mxu0 %v3713
  %v3786 = vpop.f32.mrf.mxu0
  %v3787 = vadd.f32 %v3708, %v3786
  %v3788 = vpop.f32.mrf.mxu0
  %3789 = vdwg.mxu0
  %v3790 = vxor.u32 %v3782, 2147483648
  %v3791 = vxor.u32 %v3787, 2147483648
  %v3792 = vmul.f32 %v3790, 1.442695
  %v3793 = vpow.pop %v3792
  %v3794 = vmul.f32 %v3791, 1.442695
  %v3795 = vpow.pop %v3794
  %v3796 = vadd.f32 %v3793, 1.0
  %v3797 = vadd.f32 %v3795, 1.0
  %v3798 = vrcp.pop %v3796
  %v3799 = vmul.f32 1.0, %v3798
  %v3800 = vrcp.pop %v3797
  %v3801 = vmul.f32 1.0, %v3800
  %v3802 = vmul.f32 %v3782, %v3799
  %v3803 = vmul.f32 %v3787, %v3801
  %v3804 = vld [vmem:[%s3659 + $0x78] sm:$0xff]
  %v3805 = vld [vmem:[%s3659 + $0x80] sm:$0xff]
  %v3806 = vld [vmem:[%s3659 + $0x88] sm:$0xff]
  %v3807 = vld [vmem:[%s3659 + $0x90] sm:$0xff]
  %v3808 = vld [vmem:[%s3659 + $0x98] sm:$0xff]
  %v3809 = vld [vmem:[%s3659 + $0xa0] sm:$0xff]
  %v3810 = vld [vmem:[%s3659 + $0xa8] sm:$0xff]
  %v3811 = vld [vmem:[%s3659 + $0xb0] sm:$0xff]
  %v3812 = vld [vmem:[%s3659 + $0xb8] sm:$0x1]
  %v3813 = vlaneseq
  %v3814 = vshrl.u32 %v3813, 7
  %v3815 = vsub.s32 0, %v3814
  %v3816 = vrot.slane %v3812, %v3815
  %v3818 = vsel %vm1191, %v3802, 0
  %v3821 = vsel %vm1191, %v3803, 0
  %3823 = vmatprep.subr.mxu0 0.0
  %3824 = vmatpush1.msra.mxu0 0.0
  %3825 = vmatprep.subr.mxu0 0.0
  %3826 = vmatpush1.msra.mxu0 0.0
  %3827 = vmatprep.subr.mxu0 0.0
  %3828 = vmatpush1.msra.mxu0 0.0
  %3829 = vmatprep.subr.mxu0 0.0
  %3830 = vmatpush1.msra.mxu0 0.0
  %3831 = vmatprep.subr.mxu0 0.0
  %3832 = vmatpush1.msra.mxu0 0.0
  %3833 = vmatprep.subr.mxu0 0.0
  %3834 = vmatpush1.msra.mxu0 0.0
  %3835 = vmatprep.subr.mxu0 0.0
  %3836 = vmatpush1.msra.mxu0 0.0
  %3837 = vmatprep.subr.mxu0 0.0
  %3838 = vmatpush1.msra.mxu0 0.0
  %3839 = vmatprep.subr.mxu0 0.0
  %3840 = vmatpush1.msra.mxu0 %v3811
  %3841 = vmatprep.subr.mxu0 0.0
  %3842 = vmatpush1.msra.mxu0 %v3810
  %3843 = vmatprep.subr.mxu0 0.0
  %3844 = vmatpush1.msra.mxu0 %v3809
  %3845 = vmatprep.subr.mxu0 0.0
  %3846 = vmatpush1.msra.mxu0 %v3808
  %3847 = vmatprep.subr.mxu0 0.0
  %3848 = vmatpush1.msra.mxu0 %v3807
  %3849 = vmatprep.subr.mxu0 0.0
  %3850 = vmatpush1.msra.mxu0 %v3806
  %3851 = vmatprep.subr.mxu0 0.0
  %3852 = vmatpush1.msra.mxu0 %v3805
  %3853 = vmatprep.subr.mxu0 0.0
  %3854 = vmatpush1.msra.mxu0 %v3804
  %3855 = vmatprep.subr.mxu0 0.0
  %3856 = vmatpush2.msra.mxu0 0.0
  %3857 = vmatprep.subr.mxu0 0.0
  %3858 = vmatpush2.msra.mxu0 0.0
  %3859 = vmatprep.subr.mxu0 0.0
  %3860 = vmatpush2.msra.mxu0 0.0
  %3861 = vmatprep.subr.mxu0 0.0
  %3862 = vmatpush2.msra.mxu0 0.0
  %3863 = vmatprep.subr.mxu0 0.0
  %3864 = vmatpush2.msra.mxu0 0.0
  %3865 = vmatprep.subr.mxu0 0.0
  %3866 = vmatpush2.msra.mxu0 0.0
  %3867 = vmatprep.subr.mxu0 0.0
  %3868 = vmatpush2.msra.mxu0 0.0
  %3869 = vmatprep.subr.mxu0 0.0
  %3870 = vmatpush2.msra.mxu0 0.0
  %3871 = vmatprep.subr.mxu0 0.0
  %3872 = vmatpush2.msra.mxu0 0.0
  %3873 = vmatprep.subr.mxu0 0.0
  %3874 = vmatpush2.msra.mxu0 0.0
  %3875 = vmatprep.subr.mxu0 0.0
  %3876 = vmatpush2.msra.mxu0 0.0
  %3877 = vmatprep.subr.mxu0 0.0
  %3878 = vmatpush2.msra.mxu0 0.0
  %3879 = vmatprep.subr.mxu0 0.0
  %3880 = vmatpush2.msra.mxu0 0.0
  %3881 = vmatprep.subr.mxu0 0.0
  %3882 = vmatpush2.msra.mxu0 0.0
  %3883 = vmatprep.subr.mxu0 0.0
  %3884 = vmatpush2.msra.mxu0 0.0
  %3885 = vmatprep.subr.mxu0 0.0
  %3886 = vmatpush2.msra.mxu0 0.0
  %3887 = vmatprep.mubr.f32.mxu0 0.0
  %3888 = vmatmul.mubr.f32.gmra.mxu0 %v3818
  %v3889 = vpop.f32.mrf.mxu0
  %v3890 = vadd.f32 %v3816, %v3889
  %v3891 = vpop.f32.mrf.mxu0
  %3892 = vmatprep.mubr.f32.mxu0 0.0
  %3893 = vmatmul.mubr.f32.gmra.mxu0 %v3821
  %v3894 = vpop.f32.mrf.mxu0
  %v3895 = vadd.f32 %v3816, %v3894
  %v3896 = vpop.f32.mrf.mxu0
  %3897 = vdwg.mxu0
  %v3898 = vmul.f32 %v3890, 0.5
  %v3899 = vmul.f32 %v3895, 0.5
  %v3900 = vadd.f32 %v3657, %v3898
  %v3901 = vadd.f32 %v3658, %v3899
  %v3902 = vld [vmem:[%s3659 + $0x10] sm:$0x1]
  %v3903 = vld [vmem:[%s3659 + $0x18] sm:$0x1]
  %v3904 = vsel %vm1034, %v3900, 0.0
  %3905 = vadd.xlane.f32.xlu0 %v3904
  %v3906 = vpop.xlane.xlu0 %3905
  %v3907 = vsel %vm1034, %v3901, 0.0
  %3908 = vadd.xlane.f32.xlu0 %v3907
  %v3909 = vpop.xlane.xlu0 %3908
  %v3910 = vmul.f32 %v3906, %v1041
  %v3911 = vmul.f32 %v3909, %v1041
  %v3912 = vsub.f32 %v3900, %v3910
  %v3913 = vsub.f32 %v3901, %v3911
  %v3914 = vmul.f32 %v3912, %v3912
  %v3915 = vmul.f32 %v3913, %v3913
  %v3916 = vsel %vm1034, %v3914, 0.0
  %3917 = vadd.xlane.f32.xlu0 %v3916
  %v3918 = vpop.xlane.xlu0 %3917
  %v3919 = vsel %vm1034, %v3915, 0.0
  %3920 = vadd.xlane.f32.xlu0 %v3919
  %v3921 = vpop.xlane.xlu0 %3920
  %v3922 = vmul.f32 %v3918, %v1041
  %v3923 = vmul.f32 %v3921, %v1041
  %v3924 = vadd.f32 %v3922, 1e-05
  %v3925 = vadd.f32 %v3923, 1e-05
  %v3926 = vrsqrt.pop %v3924
  %v3927 = vrsqrt.pop %v3925
  %v3928 = vmul.f32 %v3912, %v3926
  %v3929 = vmul.f32 %v3913, %v3927
  %v3930 = vlaneseq
  %v3931 = vshrl.u32 %v3930, 7
  %v3932 = vsub.s32 0, %v3931
  %v3933 = vrot.slane %v3902, %v3932
  %v3934 = vmul.f32 %v3928, %v3933
  %v3935 = vmul.f32 %v3929, %v3933
  %v3936 = vlaneseq
  %v3937 = vshrl.u32 %v3936, 7
  %v3938 = vsub.s32 0, %v3937
  %v3939 = vrot.slane %v3903, %v3938
  %v3940 = vadd.f32 %v3934, %v3939
  %v3941 = vadd.f32 %v3935, %v3939
  %v3942 = vld [vmem:[%s3659 + $0xc0] sm:$0xff]
  %v3943 = vld [vmem:[%s3659 + $0xc8] sm:$0xff]
  %v3944 = vld [vmem:[%s3659 + $0xd0] sm:$0xff]
  %v3945 = vld [vmem:[%s3659 + $0xd8] sm:$0xff]
  %v3946 = vld [vmem:[%s3659 + $0xe0] sm:$0x1]
  %v3947 = vlaneseq
  %v3948 = vshrl.u32 %v3947, 7
  %v3949 = vsub.s32 0, %v3948
  %v3950 = vrot.slane %v3946, %v3949
  %v3952 = vsel %vm1034, %v3940, 0
  %v3955 = vsel %vm1034, %v3941, 0
  %3957 = vmatprep.subr.mxu0 0.0
  %3958 = vmatpush1.msra.mxu0 0.0
  %3959 = vmatprep.subr.mxu0 0.0
  %3960 = vmatpush1.msra.mxu0 0.0
  %3961 = vmatprep.subr.mxu0 0.0
  %3962 = vmatpush1.msra.mxu0 0.0
  %3963 = vmatprep.subr.mxu0 0.0
  %3964 = vmatpush1.msra.mxu0 0.0
  %3965 = vmatprep.subr.mxu0 0.0
  %3966 = vmatpush1.msra.mxu0 0.0
  %3967 = vmatprep.subr.mxu0 0.0
  %3968 = vmatpush1.msra.mxu0 0.0
  %3969 = vmatprep.subr.mxu0 0.0
  %3970 = vmatpush1.msra.mxu0 0.0
  %3971 = vmatprep.subr.mxu0 0.0
  %3972 = vmatpush1.msra.mxu0 0.0
  %3973 = vmatprep.subr.mxu0 0.0
  %3974 = vmatpush1.msra.mxu0 0.0
  %3975 = vmatprep.subr.mxu0 0.0
  %3976 = vmatpush1.msra.mxu0 0.0
  %3977 = vmatprep.subr.mxu0 0.0
  %3978 = vmatpush1.msra.mxu0 0.0
  %3979 = vmatprep.subr.mxu0 0.0
  %3980 = vmatpush1.msra.mxu0 0.0
  %3981 = vmatprep.subr.mxu0 0.0
  %3982 = vmatpush1.msra.mxu0 %v3945
  %3983 = vmatprep.subr.mxu0 0.0
  %3984 = vmatpush1.msra.mxu0 %v3944
  %3985 = vmatprep.subr.mxu0 0.0
  %3986 = vmatpush1.msra.mxu0 %v3943
  %3987 = vmatprep.subr.mxu0 0.0
  %3988 = vmatpush1.msra.mxu0 %v3942
  %3989 = vmatprep.subr.mxu0 0.0
  %3990 = vmatpush2.msra.mxu0 0.0
  %3991 = vmatprep.subr.mxu0 0.0
  %3992 = vmatpush2.msra.mxu0 0.0
  %3993 = vmatprep.subr.mxu0 0.0
  %3994 = vmatpush2.msra.mxu0 0.0
  %3995 = vmatprep.subr.mxu0 0.0
  %3996 = vmatpush2.msra.mxu0 0.0
  %3997 = vmatprep.subr.mxu0 0.0
  %3998 = vmatpush2.msra.mxu0 0.0
  %3999 = vmatprep.subr.mxu0 0.0
  %4000 = vmatpush2.msra.mxu0 0.0
  %4001 = vmatprep.subr.mxu0 0.0
  %4002 = vmatpush2.msra.mxu0 0.0
  %4003 = vmatprep.subr.mxu0 0.0
  %4004 = vmatpush2.msra.mxu0 0.0
  %4005 = vmatprep.subr.mxu0 0.0
  %4006 = vmatpush2.msra.mxu0 0.0
  %4007 = vmatprep.subr.mxu0 0.0
  %4008 = vmatpush2.msra.mxu0 0.0
  %4009 = vmatprep.subr.mxu0 0.0
  %4010 = vmatpush2.msra.mxu0 0.0
  %4011 = vmatprep.subr.mxu0 0.0
  %4012 = vmatpush2.msra.mxu0 0.0
  %4013 = vmatprep.subr.mxu0 0.0
  %4014 = vmatpush2.msra.mxu0 0.0
  %4015 = vmatprep.subr.mxu0 0.0
  %4016 = vmatpush2.msra.mxu0 0.0
  %4017 = vmatprep.subr.mxu0 0.0
  %4018 = vmatpush2.msra.mxu0 0.0
  %4019 = vmatprep.subr.mxu0 0.0
  %4020 = vmatpush2.msra.mxu0 0.0
  %4021 = vmatprep.mubr.f32.mxu0 0.0
  %4022 = vmatmul.mubr.f32.gmra.mxu0 %v3952
  %v4023 = vpop.f32.mrf.mxu0
  %v4024 = vadd.f32 %v3950, %v4023
  %v4025 = vpop.f32.mrf.mxu0
  %4026 = vmatprep.mubr.f32.mxu0 0.0
  %4027 = vmatmul.mubr.f32.gmra.mxu0 %v3955
  %v4028 = vpop.f32.mrf.mxu0
  %v4029 = vadd.f32 %v3950, %v4028
  %v4030 = vpop.f32.mrf.mxu0
  %4031 = vdwg.mxu0
  %v4032 = vld [vmem:[%s3659 + $0xe8] sm:$0xff]
  %v4033 = vld [vmem:[%s3659 + $0xf0] sm:$0xff]
  %v4034 = vld [vmem:[%s3659 + $0xf8] sm:$0xff]
  %v4035 = vld [vmem:[%s3659 + $0x100] sm:$0xff]
  %v4036 = vld [vmem:[%s3659 + $0x108] sm:$0x1]
  %v4037 = vlaneseq
  %v4038 = vshrl.u32 %v4037, 7
  %v4039 = vsub.s32 0, %v4038
  %v4040 = vrot.slane %v4036, %v4039
  %4041 = vmatprep.subr.mxu0 0.0
  %4042 = vmatpush1.msra.mxu0 0.0
  %4043 = vmatprep.subr.mxu0 0.0
  %4044 = vmatpush1.msra.mxu0 0.0
  %4045 = vmatprep.subr.mxu0 0.0
  %4046 = vmatpush1.msra.mxu0 0.0
  %4047 = vmatprep.subr.mxu0 0.0
  %4048 = vmatpush1.msra.mxu0 0.0
  %4049 = vmatprep.subr.mxu0 0.0
  %4050 = vmatpush1.msra.mxu0 0.0
  %4051 = vmatprep.subr.mxu0 0.0
  %4052 = vmatpush1.msra.mxu0 0.0
  %4053 = vmatprep.subr.mxu0 0.0
  %4054 = vmatpush1.msra.mxu0 0.0
  %4055 = vmatprep.subr.mxu0 0.0
  %4056 = vmatpush1.msra.mxu0 0.0
  %4057 = vmatprep.subr.mxu0 0.0
  %4058 = vmatpush1.msra.mxu0 0.0
  %4059 = vmatprep.subr.mxu0 0.0
  %4060 = vmatpush1.msra.mxu0 0.0
  %4061 = vmatprep.subr.mxu0 0.0
  %4062 = vmatpush1.msra.mxu0 0.0
  %4063 = vmatprep.subr.mxu0 0.0
  %4064 = vmatpush1.msra.mxu0 0.0
  %4065 = vmatprep.subr.mxu0 0.0
  %4066 = vmatpush1.msra.mxu0 %v4035
  %4067 = vmatprep.subr.mxu0 0.0
  %4068 = vmatpush1.msra.mxu0 %v4034
  %4069 = vmatprep.subr.mxu0 0.0
  %4070 = vmatpush1.msra.mxu0 %v4033
  %4071 = vmatprep.subr.mxu0 0.0
  %4072 = vmatpush1.msra.mxu0 %v4032
  %4073 = vmatprep.subr.mxu0 0.0
  %4074 = vmatpush2.msra.mxu0 0.0
  %4075 = vmatprep.subr.mxu0 0.0
  %4076 = vmatpush2.msra.mxu0 0.0
  %4077 = vmatprep.subr.mxu0 0.0
  %4078 = vmatpush2.msra.mxu0 0.0
  %4079 = vmatprep.subr.mxu0 0.0
  %4080 = vmatpush2.msra.mxu0 0.0
  %4081 = vmatprep.subr.mxu0 0.0
  %4082 = vmatpush2.msra.mxu0 0.0
  %4083 = vmatprep.subr.mxu0 0.0
  %4084 = vmatpush2.msra.mxu0 0.0
  %4085 = vmatprep.subr.mxu0 0.0
  %4086 = vmatpush2.msra.mxu0 0.0
  %4087 = vmatprep.subr.mxu0 0.0
  %4088 = vmatpush2.msra.mxu0 0.0
  %4089 = vmatprep.subr.mxu0 0.0
  %4090 = vmatpush2.msra.mxu0 0.0
  %4091 = vmatprep.subr.mxu0 0.0
  %4092 = vmatpush2.msra.mxu0 0.0
  %4093 = vmatprep.subr.mxu0 0.0
  %4094 = vmatpush2.msra.mxu0 0.0
  %4095 = vmatprep.subr.mxu0 0.0
  %4096 = vmatpush2.msra.mxu0 0.0
  %4097 = vmatprep.subr.mxu0 0.0
  %4098 = vmatpush2.msra.mxu0 0.0
  %4099 = vmatprep.subr.mxu0 0.0
  %4100 = vmatpush2.msra.mxu0 0.0
  %4101 = vmatprep.subr.mxu0 0.0
  %4102 = vmatpush2.msra.mxu0 0.0
  %4103 = vmatprep.subr.mxu0 0.0
  %4104 = vmatpush2.msra.mxu0 0.0
  %4105 = vmatprep.mubr.f32.mxu0 0.0
  %4106 = vmatmul.mubr.f32.gmra.mxu0 %v3952
  %v4107 = vpop.f32.mrf.mxu0
  %v4108 = vadd.f32 %v4040, %v4107
  %v4109 = vpop.f32.mrf.mxu0
  %4110 = vmatprep.mubr.f32.mxu0 0.0
  %4111 = vmatmul.mubr.f32.gmra.mxu0 %v3955
  %v4112 = vpop.f32.mrf.mxu0
  %v4113 = vadd.f32 %v4040, %v4112
  %v4114 = vpop.f32.mrf.mxu0
  %4115 = vdwg.mxu0
  %v4116 = vld [vmem:[%s3659 + $0x110] sm:$0xff]
  %v4117 = vld [vmem:[%s3659 + $0x118] sm:$0xff]
  %v4118 = vld [vmem:[%s3659 + $0x120] sm:$0xff]
  %v4119 = vld [vmem:[%s3659 + $0x128] sm:$0xff]
  %v4120 = vld [vmem:[%s3659 + $0x130] sm:$0x1]
  %v4121 = vlaneseq
  %v4122 = vshrl.u32 %v4121, 7
  %v4123 = vsub.s32 0, %v4122
  %v4124 = vrot.slane %v4120, %v4123
  %4125 = vmatprep.subr.mxu0 0.0
  %4126 = vmatpush1.msra.mxu0 0.0
  %4127 = vmatprep.subr.mxu0 0.0
  %4128 = vmatpush1.msra.mxu0 0.0
  %4129 = vmatprep.subr.mxu0 0.0
  %4130 = vmatpush1.msra.mxu0 0.0
  %4131 = vmatprep.subr.mxu0 0.0
  %4132 = vmatpush1.msra.mxu0 0.0
  %4133 = vmatprep.subr.mxu0 0.0
  %4134 = vmatpush1.msra.mxu0 0.0
  %4135 = vmatprep.subr.mxu0 0.0
  %4136 = vmatpush1.msra.mxu0 0.0
  %4137 = vmatprep.subr.mxu0 0.0
  %4138 = vmatpush1.msra.mxu0 0.0
  %4139 = vmatprep.subr.mxu0 0.0
  %4140 = vmatpush1.msra.mxu0 0.0
  %4141 = vmatprep.subr.mxu0 0.0
  %4142 = vmatpush1.msra.mxu0 0.0
  %4143 = vmatprep.subr.mxu0 0.0
  %4144 = vmatpush1.msra.mxu0 0.0
  %4145 = vmatprep.subr.mxu0 0.0
  %4146 = vmatpush1.msra.mxu0 0.0
  %4147 = vmatprep.subr.mxu0 0.0
  %4148 = vmatpush1.msra.mxu0 0.0
  %4149 = vmatprep.subr.mxu0 0.0
  %4150 = vmatpush1.msra.mxu0 %v4119
  %4151 = vmatprep.subr.mxu0 0.0
  %4152 = vmatpush1.msra.mxu0 %v4118
  %4153 = vmatprep.subr.mxu0 0.0
  %4154 = vmatpush1.msra.mxu0 %v4117
  %4155 = vmatprep.subr.mxu0 0.0
  %4156 = vmatpush1.msra.mxu0 %v4116
  %4157 = vmatprep.subr.mxu0 0.0
  %4158 = vmatpush2.msra.mxu0 0.0
  %4159 = vmatprep.subr.mxu0 0.0
  %4160 = vmatpush2.msra.mxu0 0.0
  %4161 = vmatprep.subr.mxu0 0.0
  %4162 = vmatpush2.msra.mxu0 0.0
  %4163 = vmatprep.subr.mxu0 0.0
  %4164 = vmatpush2.msra.mxu0 0.0
  %4165 = vmatprep.subr.mxu0 0.0
  %4166 = vmatpush2.msra.mxu0 0.0
  %4167 = vmatprep.subr.mxu0 0.0
  %4168 = vmatpush2.msra.mxu0 0.0
  %4169 = vmatprep.subr.mxu0 0.0
  %4170 = vmatpush2.msra.mxu0 0.0
  %4171 = vmatprep.subr.mxu0 0.0
  %4172 = vmatpush2.msra.mxu0 0.0
  %4173 = vmatprep.subr.mxu0 0.0
  %4174 = vmatpush2.msra.mxu0 0.0
  %4175 = vmatprep.subr.mxu0 0.0
  %4176 = vmatpush2.msra.mxu0 0.0
  %4177 = vmatprep.subr.mxu0 0.0
  %4178 = vmatpush2.msra.mxu0 0.0
  %4179 = vmatprep.subr.mxu0 0.0
  %4180 = vmatpush2.msra.mxu0 0.0
  %4181 = vmatprep.subr.mxu0 0.0
  %4182 = vmatpush2.msra.mxu0 0.0
  %4183 = vmatprep.subr.mxu0 0.0
  %4184 = vmatpush2.msra.mxu0 0.0
  %4185 = vmatprep.subr.mxu0 0.0
  %4186 = vmatpush2.msra.mxu0 0.0
  %4187 = vmatprep.subr.mxu0 0.0
  %4188 = vmatpush2.msra.mxu0 0.0
  %4189 = vmatprep.mubr.f32.mxu0 0.0
  %4190 = vmatmul.mubr.f32.gmra.mxu0 %v3952
  %v4191 = vpop.f32.mrf.mxu0
  %v4192 = vadd.f32 %v4124, %v4191
  %v4193 = vpop.f32.mrf.mxu0
  %4194 = vmatprep.mubr.f32.mxu0 0.0
  %4195 = vmatmul.mubr.f32.gmra.mxu0 %v3955
  %v4196 = vpop.f32.mrf.mxu0
  %v4197 = vadd.f32 %v4124, %v4196
  %v4198 = vpop.f32.mrf.mxu0
  %4199 = vdwg.mxu0
  %v4200 = vld [vmem:[%s3659 + $0x138] sm:$0xff]
  %v4201 = vld [vmem:[%s3659 + $0x140] sm:$0xff]
  %v4202 = vld [vmem:[%s3659 + $0x148] sm:$0xff]
  %v4203 = vld [vmem:[%s3659 + $0x150] sm:$0xff]
  %4204 = vmatprep.subr.mxu0 0.0
  %4205 = vmatpush1.msra.mxu0 0.0
  %4206 = vmatprep.subr.mxu0 0.0
  %4207 = vmatpush1.msra.mxu0 0.0
  %4208 = vmatprep.subr.mxu0 0.0
  %4209 = vmatpush1.msra.mxu0 0.0
  %4210 = vmatprep.subr.mxu0 0.0
  %4211 = vmatpush1.msra.mxu0 0.0
  %4212 = vmatprep.subr.mxu0 0.0
  %4213 = vmatpush1.msra.mxu0 0.0
  %4214 = vmatprep.subr.mxu0 0.0
  %4215 = vmatpush1.msra.mxu0 0.0
  %4216 = vmatprep.subr.mxu0 0.0
  %4217 = vmatpush1.msra.mxu0 0.0
  %4218 = vmatprep.subr.mxu0 0.0
  %4219 = vmatpush1.msra.mxu0 0.0
  %4220 = vmatprep.subr.mxu0 0.0
  %4221 = vmatpush1.msra.mxu0 0.0
  %4222 = vmatprep.subr.mxu0 0.0
  %4223 = vmatpush1.msra.mxu0 0.0
  %4224 = vmatprep.subr.mxu0 0.0
  %4225 = vmatpush1.msra.mxu0 0.0
  %4226 = vmatprep.subr.mxu0 0.0
  %4227 = vmatpush1.msra.mxu0 0.0
  %4228 = vmatprep.subr.mxu0 0.0
  %4229 = vmatpush1.msra.mxu0 %v4203
  %4230 = vmatprep.subr.mxu0 0.0
  %4231 = vmatpush1.msra.mxu0 %v4202
  %4232 = vmatprep.subr.mxu0 0.0
  %4233 = vmatpush1.msra.mxu0 %v4201
  %4234 = vmatprep.subr.mxu0 0.0
  %4235 = vmatpush1.msra.mxu0 %v4200
  %4236 = vmatprep.subr.mxu0 0.0
  %4237 = vmatpush2.msra.mxu0 0.0
  %4238 = vmatprep.subr.mxu0 0.0
  %4239 = vmatpush2.msra.mxu0 0.0
  %4240 = vmatprep.subr.mxu0 0.0
  %4241 = vmatpush2.msra.mxu0 0.0
  %4242 = vmatprep.subr.mxu0 0.0
  %4243 = vmatpush2.msra.mxu0 0.0
  %4244 = vmatprep.subr.mxu0 0.0
  %4245 = vmatpush2.msra.mxu0 0.0
  %4246 = vmatprep.subr.mxu0 0.0
  %4247 = vmatpush2.msra.mxu0 0.0
  %4248 = vmatprep.subr.mxu0 0.0
  %4249 = vmatpush2.msra.mxu0 0.0
  %4250 = vmatprep.subr.mxu0 0.0
  %4251 = vmatpush2.msra.mxu0 0.0
  %4252 = vmatprep.subr.mxu0 0.0
  %4253 = vmatpush2.msra.mxu0 0.0
  %4254 = vmatprep.subr.mxu0 0.0
  %4255 = vmatpush2.msra.mxu0 0.0
  %4256 = vmatprep.subr.mxu0 0.0
  %4257 = vmatpush2.msra.mxu0 0.0
  %4258 = vmatprep.subr.mxu0 0.0
  %4259 = vmatpush2.msra.mxu0 0.0
  %4260 = vmatprep.subr.mxu0 0.0
  %4261 = vmatpush2.msra.mxu0 0.0
  %4262 = vmatprep.subr.mxu0 0.0
  %4263 = vmatpush2.msra.mxu0 0.0
  %4264 = vmatprep.subr.mxu0 0.0
  %4265 = vmatpush2.msra.mxu0 0.0
  %4266 = vmatprep.subr.mxu0 0.0
  %4267 = vmatpush2.msra.mxu0 0.0
  %4268 = vmatprep.mubr.f32.mxu0 0.0
  %4269 = vmatmul.mubr.f32.gmra.mxu0 %v1580
  %v4270 = vpop.f32.mrf.mxu0
  %v4271 = vadd.f32 0.0, %v4270
  %v4272 = vpop.f32.mrf.mxu0
  %4273 = vmatprep.mubr.f32.mxu0 0.0
  %4274 = vmatmul.mubr.f32.gmra.mxu0 %v1583
  %v4275 = vpop.f32.mrf.mxu0
  %v4276 = vadd.f32 0.0, %v4275
  %v4277 = vpop.f32.mrf.mxu0
  %4278 = vdwg.mxu0
  %v4279 = vld [vmem:[%s3659 + $0x158] sm:$0x1]
  %v4280 = vlaneseq
  %v4281 = vshrl.u32 %v4280, 7
  %v4282 = vsub.s32 0, %v4281
  %v4283 = vrot.slane %v4279, %v4282
  %v4284 = vadd.f32 %v4024, %v4283
  %v4285 = vadd.f32 %v4029, %v4283
  %4286 = vmatprep.subr.mxu0 0.0
  %4287 = vmatpush1.msra.mxu0 0.0
  %4288 = vmatprep.subr.mxu0 0.0
  %4289 = vmatpush1.msra.mxu0 0.0
  %4290 = vmatprep.subr.mxu0 0.0
  %4291 = vmatpush1.msra.mxu0 0.0
  %4292 = vmatprep.subr.mxu0 0.0
  %4293 = vmatpush1.msra.mxu0 0.0
  %4294 = vmatprep.subr.mxu0 0.0
  %4295 = vmatpush1.msra.mxu0 0.0
  %4296 = vmatprep.subr.mxu0 0.0
  %4297 = vmatpush1.msra.mxu0 0.0
  %4298 = vmatprep.subr.mxu0 0.0
  %4299 = vmatpush1.msra.mxu0 0.0
  %4300 = vmatprep.subr.mxu0 0.0
  %4301 = vmatpush1.msra.mxu0 0.0
  %4302 = vmatprep.subr.mxu0 0.0
  %4303 = vmatpush1.msra.mxu0 0.0
  %4304 = vmatprep.subr.mxu0 0.0
  %4305 = vmatpush1.msra.mxu0 0.0
  %4306 = vmatprep.subr.mxu0 0.0
  %4307 = vmatpush1.msra.mxu0 0.0
  %4308 = vmatprep.subr.mxu0 0.0
  %4309 = vmatpush1.msra.mxu0 0.0
  %4310 = vmatprep.subr.mxu0 0.0
  %4311 = vmatpush1.msra.mxu0 0.0
  %4312 = vmatprep.subr.mxu0 0.0
  %4313 = vmatpush1.msra.mxu0 0.0
  %4314 = vmatprep.subr.mxu0 0.0
  %4315 = vmatpush1.msra.mxu0 %v4285
  %4316 = vmatprep.subr.mxu0 0.0
  %4317 = vmatpush1.msra.mxu0 %v4284
  %4318 = vmatprep.subr.mxu0 0.0
  %4319 = vmatpush2.msra.mxu0 0.0
  %4320 = vmatprep.subr.mxu0 0.0
  %4321 = vmatpush2.msra.mxu0 0.0
  %4322 = vmatprep.subr.mxu0 0.0
  %4323 = vmatpush2.msra.mxu0 0.0
  %4324 = vmatprep.subr.mxu0 0.0
  %4325 = vmatpush2.msra.mxu0 0.0
  %4326 = vmatprep.subr.mxu0 0.0
  %4327 = vmatpush2.msra.mxu0 0.0
  %4328 = vmatprep.subr.mxu0 0.0
  %4329 = vmatpush2.msra.mxu0 0.0
  %4330 = vmatprep.subr.mxu0 0.0
  %4331 = vmatpush2.msra.mxu0 0.0
  %4332 = vmatprep.subr.mxu0 0.0
  %4333 = vmatpush2.msra.mxu0 0.0
  %4334 = vmatprep.subr.mxu0 0.0
  %4335 = vmatpush2.msra.mxu0 0.0
  %4336 = vmatprep.subr.mxu0 0.0
  %4337 = vmatpush2.msra.mxu0 0.0
  %4338 = vmatprep.subr.mxu0 0.0
  %4339 = vmatpush2.msra.mxu0 0.0
  %4340 = vmatprep.subr.mxu0 0.0
  %4341 = vmatpush2.msra.mxu0 0.0
  %4342 = vmatprep.subr.mxu0 0.0
  %4343 = vmatpush2.msra.mxu0 0.0
  %4344 = vmatprep.subr.mxu0 0.0
  %4345 = vmatpush2.msra.mxu0 0.0
  %4346 = vmatprep.subr.mxu0 0.0
  %4347 = vmatpush2.msra.mxu0 0.0
  %4348 = vmatprep.subr.mxu0 0.0
  %4349 = vmatpush2.msra.mxu0 0.0
  %4350 = vmatprep.mubr.f32.mxu0 0.0
  %4351 = vmatmul.mubr.f32.gmra.mxu0 %v892
  %v4352 = vpop.f32.mrf.mxu0
  %v4353 = vadd.f32 0.0, %v4352
  %v4354 = vpop.f32.mrf.mxu0
  %4355 = vmatprep.mubr.f32.mxu0 0.0
  %4356 = vmatmul.mubr.f32.gmra.mxu0 %v895
  %v4357 = vpop.f32.mrf.mxu0
  %v4358 = vadd.f32 0.0, %v4357
  %v4359 = vpop.f32.mrf.mxu0
  %4360 = vmatprep.mubr.f32.mxu0 0.0
  %4361 = vmatmul.mubr.f32.gmra.mxu0 %v898
  %v4362 = vpop.f32.mrf.mxu0
  %v4363 = vadd.f32 0.0, %v4362
  %v4364 = vpop.f32.mrf.mxu0
  %4365 = vmatprep.mubr.f32.mxu0 0.0
  %4366 = vmatmul.mubr.f32.gmra.mxu0 %v901
  %v4367 = vpop.f32.mrf.mxu0
  %v4368 = vadd.f32 0.0, %v4367
  %v4369 = vpop.f32.mrf.mxu0
  %4370 = vmatprep.mubr.f32.mxu0 0.0
  %4371 = vmatmul.mubr.f32.gmra.mxu0 %v904
  %v4372 = vpop.f32.mrf.mxu0
  %v4373 = vadd.f32 0.0, %v4372
  %v4374 = vpop.f32.mrf.mxu0
  %4375 = vmatprep.mubr.f32.mxu0 0.0
  %4376 = vmatmul.mubr.f32.gmra.mxu0 %v907
  %v4377 = vpop.f32.mrf.mxu0
  %v4378 = vadd.f32 0.0, %v4377
  %v4379 = vpop.f32.mrf.mxu0
  %4380 = vmatprep.mubr.f32.mxu0 0.0
  %4381 = vmatmul.mubr.f32.gmra.mxu0 %v910
  %v4382 = vpop.f32.mrf.mxu0
  %v4383 = vadd.f32 0.0, %v4382
  %v4384 = vpop.f32.mrf.mxu0
  %4385 = vmatprep.mubr.f32.mxu0 0.0
  %4386 = vmatmul.mubr.f32.gmra.mxu0 %v913
  %v4387 = vpop.f32.mrf.mxu0
  %v4388 = vadd.f32 0.0, %v4387
  %v4389 = vpop.f32.mrf.mxu0
  %4390 = vdwg.mxu0
  %v4391 = vmul.f32 %v4353, %v874
  %v4392 = vmul.f32 %v4358, %v875
  %v4393 = vmul.f32 %v4363, %v876
  %v4394 = vmul.f32 %v4368, %v877
  %v4395 = vmul.f32 %v4373, %v878
  %v4396 = vmul.f32 %v4378, %v879
  %v4397 = vmul.f32 %v4383, %v880
  %v4398 = vmul.f32 %v4388, %v881
  %v4399 = vld [vmem:[%s3659 + $0x160] sm:$0x1]
  %v4400 = vlaneseq
  %v4401 = vshrl.u32 %v4400, 7
  %v4402 = vsub.s32 0, %v4401
  %v4403 = vrot.slane %v4399, %v4402
  %v4404 = vadd.f32 %v4024, %v4403
  %v4405 = vadd.f32 %v4029, %v4403
  %4406 = vmatprep.subr.mxu0 0.0
  %4407 = vmatpush1.msra.mxu0 0.0
  %4408 = vmatprep.subr.mxu0 0.0
  %4409 = vmatpush1.msra.mxu0 0.0
  %4410 = vmatprep.subr.mxu0 0.0
  %4411 = vmatpush1.msra.mxu0 0.0
  %4412 = vmatprep.subr.mxu0 0.0
  %4413 = vmatpush1.msra.mxu0 0.0
  %4414 = vmatprep.subr.mxu0 0.0
  %4415 = vmatpush1.msra.mxu0 0.0
  %4416 = vmatprep.subr.mxu0 0.0
  %4417 = vmatpush1.msra.mxu0 0.0
  %4418 = vmatprep.subr.mxu0 0.0
  %4419 = vmatpush1.msra.mxu0 0.0
  %4420 = vmatprep.subr.mxu0 0.0
  %4421 = vmatpush1.msra.mxu0 0.0
  %4422 = vmatprep.subr.mxu0 0.0
  %4423 = vmatpush1.msra.mxu0 0.0
  %4424 = vmatprep.subr.mxu0 0.0
  %4425 = vmatpush1.msra.mxu0 0.0
  %4426 = vmatprep.subr.mxu0 0.0
  %4427 = vmatpush1.msra.mxu0 0.0
  %4428 = vmatprep.subr.mxu0 0.0
  %4429 = vmatpush1.msra.mxu0 0.0
  %4430 = vmatprep.subr.mxu0 0.0
  %4431 = vmatpush1.msra.mxu0 0.0
  %4432 = vmatprep.subr.mxu0 0.0
  %4433 = vmatpush1.msra.mxu0 0.0
  %4434 = vmatprep.subr.mxu0 0.0
  %4435 = vmatpush1.msra.mxu0 %v4405
  %4436 = vmatprep.subr.mxu0 0.0
  %4437 = vmatpush1.msra.mxu0 %v4404
  %4438 = vmatprep.subr.mxu0 0.0
  %4439 = vmatpush2.msra.mxu0 0.0
  %4440 = vmatprep.subr.mxu0 0.0
  %4441 = vmatpush2.msra.mxu0 0.0
  %4442 = vmatprep.subr.mxu0 0.0
  %4443 = vmatpush2.msra.mxu0 0.0
  %4444 = vmatprep.subr.mxu0 0.0
  %4445 = vmatpush2.msra.mxu0 0.0
  %4446 = vmatprep.subr.mxu0 0.0
  %4447 = vmatpush2.msra.mxu0 0.0
  %4448 = vmatprep.subr.mxu0 0.0
  %4449 = vmatpush2.msra.mxu0 0.0
  %4450 = vmatprep.subr.mxu0 0.0
  %4451 = vmatpush2.msra.mxu0 0.0
  %4452 = vmatprep.subr.mxu0 0.0
  %4453 = vmatpush2.msra.mxu0 0.0
  %4454 = vmatprep.subr.mxu0 0.0
  %4455 = vmatpush2.msra.mxu0 0.0
  %4456 = vmatprep.subr.mxu0 0.0
  %4457 = vmatpush2.msra.mxu0 0.0
  %4458 = vmatprep.subr.mxu0 0.0
  %4459 = vmatpush2.msra.mxu0 0.0
  %4460 = vmatprep.subr.mxu0 0.0
  %4461 = vmatpush2.msra.mxu0 0.0
  %4462 = vmatprep.subr.mxu0 0.0
  %4463 = vmatpush2.msra.mxu0 0.0
  %4464 = vmatprep.subr.mxu0 0.0
  %4465 = vmatpush2.msra.mxu0 0.0
  %4466 = vmatprep.subr.mxu0 0.0
  %4467 = vmatpush2.msra.mxu0 0.0
  %4468 = vmatprep.subr.mxu0 0.0
  %4469 = vmatpush2.msra.mxu0 0.0
  %4470 = vmatprep.mubr.f32.mxu0 0.0
  %4471 = vmatmul.mubr.f32.gmra.mxu0 %v892
  %v4472 = vpop.f32.mrf.mxu0
  %v4473 = vadd.f32 0.0, %v4472
  %v4474 = vpop.f32.mrf.mxu0
  %4475 = vmatprep.mubr.f32.mxu0 0.0
  %4476 = vmatmul.mubr.f32.gmra.mxu0 %v895
  %v4477 = vpop.f32.mrf.mxu0
  %v4478 = vadd.f32 0.0, %v4477
  %v4479 = vpop.f32.mrf.mxu0
  %4480 = vmatprep.mubr.f32.mxu0 0.0
  %4481 = vmatmul.mubr.f32.gmra.mxu0 %v898
  %v4482 = vpop.f32.mrf.mxu0
  %v4483 = vadd.f32 0.0, %v4482
  %v4484 = vpop.f32.mrf.mxu0
  %4485 = vmatprep.mubr.f32.mxu0 0.0
  %4486 = vmatmul.mubr.f32.gmra.mxu0 %v901
  %v4487 = vpop.f32.mrf.mxu0
  %v4488 = vadd.f32 0.0, %v4487
  %v4489 = vpop.f32.mrf.mxu0
  %4490 = vmatprep.mubr.f32.mxu0 0.0
  %4491 = vmatmul.mubr.f32.gmra.mxu0 %v904
  %v4492 = vpop.f32.mrf.mxu0
  %v4493 = vadd.f32 0.0, %v4492
  %v4494 = vpop.f32.mrf.mxu0
  %4495 = vmatprep.mubr.f32.mxu0 0.0
  %4496 = vmatmul.mubr.f32.gmra.mxu0 %v907
  %v4497 = vpop.f32.mrf.mxu0
  %v4498 = vadd.f32 0.0, %v4497
  %v4499 = vpop.f32.mrf.mxu0
  %4500 = vmatprep.mubr.f32.mxu0 0.0
  %4501 = vmatmul.mubr.f32.gmra.mxu0 %v910
  %v4502 = vpop.f32.mrf.mxu0
  %v4503 = vadd.f32 0.0, %v4502
  %v4504 = vpop.f32.mrf.mxu0
  %4505 = vmatprep.mubr.f32.mxu0 0.0
  %4506 = vmatmul.mubr.f32.gmra.mxu0 %v913
  %v4507 = vpop.f32.mrf.mxu0
  %v4508 = vadd.f32 0.0, %v4507
  %v4509 = vpop.f32.mrf.mxu0
  %4510 = vdwg.mxu0
  %v4511 = vmul.f32 %v4473, %v874
  %v4512 = vmul.f32 %v4478, %v875
  %v4513 = vmul.f32 %v4483, %v876
  %v4514 = vmul.f32 %v4488, %v877
  %v4515 = vmul.f32 %v4493, %v878
  %v4516 = vmul.f32 %v4498, %v879
  %v4517 = vmul.f32 %v4503, %v880
  %v4518 = vmul.f32 %v4508, %v881
  %v4520 = vsel %vm1034, %v4511, 0
  %v4523 = vsel %vm1034, %v4512, 0
  %v4526 = vsel %vm1034, %v4513, 0
  %v4529 = vsel %vm1034, %v4514, 0
  %v4532 = vsel %vm1034, %v4515, 0
  %v4535 = vsel %vm1034, %v4516, 0
  %v4538 = vsel %vm1034, %v4517, 0
  %v4541 = vsel %vm1034, %v4518, 0
  %v4544 = vsel %vm1034, %v4271, 0
  %v4547 = vsel %vm1034, %v4276, 0
  %4549 = vmatprep.subr.mxu0 0.0
  %4550 = vmatpush1.xpose.msra.mxu0 0.0
  %4551 = vmatprep.subr.mxu0 0.0
  %4552 = vmatpush1.xpose.msra.mxu0 0.0
  %4553 = vmatprep.subr.mxu0 0.0
  %4554 = vmatpush1.xpose.msra.mxu0 0.0
  %4555 = vmatprep.subr.mxu0 0.0
  %4556 = vmatpush1.xpose.msra.mxu0 0.0
  %4557 = vmatprep.subr.mxu0 0.0
  %4558 = vmatpush1.xpose.msra.mxu0 0.0
  %4559 = vmatprep.subr.mxu0 0.0
  %4560 = vmatpush1.xpose.msra.mxu0 0.0
  %4561 = vmatprep.subr.mxu0 0.0
  %4562 = vmatpush1.xpose.msra.mxu0 0.0
  %4563 = vmatprep.subr.mxu0 0.0
  %4564 = vmatpush1.xpose.msra.mxu0 0.0
  %4565 = vmatprep.subr.mxu0 0.0
  %4566 = vmatpush1.xpose.msra.mxu0 0.0
  %4567 = vmatprep.subr.mxu0 0.0
  %4568 = vmatpush1.xpose.msra.mxu0 0.0
  %4569 = vmatprep.subr.mxu0 0.0
  %4570 = vmatpush1.xpose.msra.mxu0 0.0
  %4571 = vmatprep.subr.mxu0 0.0
  %4572 = vmatpush1.xpose.msra.mxu0 0.0
  %4573 = vmatprep.subr.mxu0 0.0
  %4574 = vmatpush1.xpose.msra.mxu0 0.0
  %4575 = vmatprep.subr.mxu0 0.0
  %4576 = vmatpush1.xpose.msra.mxu0 0.0
  %4577 = vmatprep.subr.mxu0 0.0
  %4578 = vmatpush1.xpose.msra.mxu0 %v4547
  %4579 = vmatprep.subr.mxu0 0.0
  %4580 = vmatpush1.xpose.msra.mxu0 %v4544
  %4581 = vmatprep.subr.mxu0 0.0
  %4582 = vmatpush2.xpose.msra.mxu0 0.0
  %4583 = vmatprep.subr.mxu0 0.0
  %4584 = vmatpush2.xpose.msra.mxu0 0.0
  %4585 = vmatprep.subr.mxu0 0.0
  %4586 = vmatpush2.xpose.msra.mxu0 0.0
  %4587 = vmatprep.subr.mxu0 0.0
  %4588 = vmatpush2.xpose.msra.mxu0 0.0
  %4589 = vmatprep.subr.mxu0 0.0
  %4590 = vmatpush2.xpose.msra.mxu0 0.0
  %4591 = vmatprep.subr.mxu0 0.0
  %4592 = vmatpush2.xpose.msra.mxu0 0.0
  %4593 = vmatprep.subr.mxu0 0.0
  %4594 = vmatpush2.xpose.msra.mxu0 0.0
  %4595 = vmatprep.subr.mxu0 0.0
  %4596 = vmatpush2.xpose.msra.mxu0 0.0
  %4597 = vmatprep.subr.mxu0 0.0
  %4598 = vmatpush2.xpose.msra.mxu0 0.0
  %4599 = vmatprep.subr.mxu0 0.0
  %4600 = vmatpush2.xpose.msra.mxu0 0.0
  %4601 = vmatprep.subr.mxu0 0.0
  %4602 = vmatpush2.xpose.msra.mxu0 0.0
  %4603 = vmatprep.subr.mxu0 0.0
  %4604 = vmatpush2.xpose.msra.mxu0 0.0
  %4605 = vmatprep.subr.mxu0 0.0
  %4606 = vmatpush2.xpose.msra.mxu0 0.0
  %4607 = vmatprep.subr.mxu0 0.0
  %4608 = vmatpush2.xpose.msra.mxu0 0.0
  %4609 = vmatprep.subr.mxu0 0.0
  %4610 = vmatpush2.xpose.msra.mxu0 0.0
  %4611 = vmatprep.subr.mxu0 0.0
  %4612 = vmatpush2.xpose.msra.mxu0 0.0
  %4613 = vmatprep.mubr.f32.mxu0 0.0
  %4614 = vmatmul.mubr.f32.gmra.mxu0 %v4520
  %v4615 = vpop.f32.mrf.mxu0
  %v4616 = vadd.f32 0.0, %v4615
  %v4617 = vpop.f32.mrf.mxu0
  %4618 = vmatprep.mubr.f32.mxu0 0.0
  %4619 = vmatmul.mubr.f32.gmra.mxu0 %v4523
  %v4620 = vpop.f32.mrf.mxu0
  %v4621 = vadd.f32 0.0, %v4620
  %v4622 = vpop.f32.mrf.mxu0
  %4623 = vmatprep.mubr.f32.mxu0 0.0
  %4624 = vmatmul.mubr.f32.gmra.mxu0 %v4526
  %v4625 = vpop.f32.mrf.mxu0
  %v4626 = vadd.f32 0.0, %v4625
  %v4627 = vpop.f32.mrf.mxu0
  %4628 = vmatprep.mubr.f32.mxu0 0.0
  %4629 = vmatmul.mubr.f32.gmra.mxu0 %v4529
  %v4630 = vpop.f32.mrf.mxu0
  %v4631 = vadd.f32 0.0, %v4630
  %v4632 = vpop.f32.mrf.mxu0
  %4633 = vmatprep.mubr.f32.mxu0 0.0
  %4634 = vmatmul.mubr.f32.gmra.mxu0 %v4532
  %v4635 = vpop.f32.mrf.mxu0
  %v4636 = vadd.f32 0.0, %v4635
  %v4637 = vpop.f32.mrf.mxu0
  %4638 = vmatprep.mubr.f32.mxu0 0.0
  %4639 = vmatmul.mubr.f32.gmra.mxu0 %v4535
  %v4640 = vpop.f32.mrf.mxu0
  %v4641 = vadd.f32 0.0, %v4640
  %v4642 = vpop.f32.mrf.mxu0
  %4643 = vmatprep.mubr.f32.mxu0 0.0
  %4644 = vmatmul.mubr.f32.gmra.mxu0 %v4538
  %v4645 = vpop.f32.mrf.mxu0
  %v4646 = vadd.f32 0.0, %v4645
  %v4647 = vpop.f32.mrf.mxu0
  %4648 = vmatprep.mubr.f32.mxu0 0.0
  %4649 = vmatmul.mubr.f32.gmra.mxu0 %v4541
  %v4650 = vpop.f32.mrf.mxu0
  %v4651 = vadd.f32 0.0, %v4650
  %v4652 = vpop.f32.mrf.mxu0
  %4653 = vdwg.mxu0
  %v4655 = vsel %vm1034, %v4391, 0
  %v4658 = vsel %vm1034, %v4392, 0
  %v4661 = vsel %vm1034, %v4393, 0
  %v4664 = vsel %vm1034, %v4394, 0
  %v4667 = vsel %vm1034, %v4395, 0
  %v4670 = vsel %vm1034, %v4396, 0
  %v4673 = vsel %vm1034, %v4397, 0
  %v4676 = vsel %vm1034, %v4398, 0
  %v4679 = vsel %vm1034, %v4108, 0
  %v4682 = vsel %vm1034, %v4113, 0
  %4684 = vmatprep.subr.mxu0 0.0
  %4685 = vmatpush1.xpose.msra.mxu0 0.0
  %4686 = vmatprep.subr.mxu0 0.0
  %4687 = vmatpush1.xpose.msra.mxu0 0.0
  %4688 = vmatprep.subr.mxu0 0.0
  %4689 = vmatpush1.xpose.msra.mxu0 0.0
  %4690 = vmatprep.subr.mxu0 0.0
  %4691 = vmatpush1.xpose.msra.mxu0 0.0
  %4692 = vmatprep.subr.mxu0 0.0
  %4693 = vmatpush1.xpose.msra.mxu0 0.0
  %4694 = vmatprep.subr.mxu0 0.0
  %4695 = vmatpush1.xpose.msra.mxu0 0.0
  %4696 = vmatprep.subr.mxu0 0.0
  %4697 = vmatpush1.xpose.msra.mxu0 0.0
  %4698 = vmatprep.subr.mxu0 0.0
  %4699 = vmatpush1.xpose.msra.mxu0 0.0
  %4700 = vmatprep.subr.mxu0 0.0
  %4701 = vmatpush1.xpose.msra.mxu0 0.0
  %4702 = vmatprep.subr.mxu0 0.0
  %4703 = vmatpush1.xpose.msra.mxu0 0.0
  %4704 = vmatprep.subr.mxu0 0.0
  %4705 = vmatpush1.xpose.msra.mxu0 0.0
  %4706 = vmatprep.subr.mxu0 0.0
  %4707 = vmatpush1.xpose.msra.mxu0 0.0
  %4708 = vmatprep.subr.mxu0 0.0
  %4709 = vmatpush1.xpose.msra.mxu0 0.0
  %4710 = vmatprep.subr.mxu0 0.0
  %4711 = vmatpush1.xpose.msra.mxu0 0.0
  %4712 = vmatprep.subr.mxu0 0.0
  %4713 = vmatpush1.xpose.msra.mxu0 %v4682
  %4714 = vmatprep.subr.mxu0 0.0
  %4715 = vmatpush1.xpose.msra.mxu0 %v4679
  %4716 = vmatprep.subr.mxu0 0.0
  %4717 = vmatpush2.xpose.msra.mxu0 0.0
  %4718 = vmatprep.subr.mxu0 0.0
  %4719 = vmatpush2.xpose.msra.mxu0 0.0
  %4720 = vmatprep.subr.mxu0 0.0
  %4721 = vmatpush2.xpose.msra.mxu0 0.0
  %4722 = vmatprep.subr.mxu0 0.0
  %4723 = vmatpush2.xpose.msra.mxu0 0.0
  %4724 = vmatprep.subr.mxu0 0.0
  %4725 = vmatpush2.xpose.msra.mxu0 0.0
  %4726 = vmatprep.subr.mxu0 0.0
  %4727 = vmatpush2.xpose.msra.mxu0 0.0
  %4728 = vmatprep.subr.mxu0 0.0
  %4729 = vmatpush2.xpose.msra.mxu0 0.0
  %4730 = vmatprep.subr.mxu0 0.0
  %4731 = vmatpush2.xpose.msra.mxu0 0.0
  %4732 = vmatprep.subr.mxu0 0.0
  %4733 = vmatpush2.xpose.msra.mxu0 0.0
  %4734 = vmatprep.subr.mxu0 0.0
  %4735 = vmatpush2.xpose.msra.mxu0 0.0
  %4736 = vmatprep.subr.mxu0 0.0
  %4737 = vmatpush2.xpose.msra.mxu0 0.0
  %4738 = vmatprep.subr.mxu0 0.0
  %4739 = vmatpush2.xpose.msra.mxu0 0.0
  %4740 = vmatprep.subr.mxu0 0.0
  %4741 = vmatpush2.xpose.msra.mxu0 0.0
  %4742 = vmatprep.subr.mxu0 0.0
  %4743 = vmatpush2.xpose.msra.mxu0 0.0
  %4744 = vmatprep.subr.mxu0 0.0
  %4745 = vmatpush2.xpose.msra.mxu0 0.0
  %4746 = vmatprep.subr.mxu0 0.0
  %4747 = vmatpush2.xpose.msra.mxu0 0.0
  %4748 = vmatprep.mubr.f32.mxu0 0.0
  %4749 = vmatmul.mubr.f32.gmra.mxu0 %v4655
  %v4750 = vpop.f32.mrf.mxu0
  %v4751 = vadd.f32 %v4616, %v4750
  %v4752 = vpop.f32.mrf.mxu0
  %4753 = vmatprep.mubr.f32.mxu0 0.0
  %4754 = vmatmul.mubr.f32.gmra.mxu0 %v4658
  %v4755 = vpop.f32.mrf.mxu0
  %v4756 = vadd.f32 %v4621, %v4755
  %v4757 = vpop.f32.mrf.mxu0
  %4758 = vmatprep.mubr.f32.mxu0 0.0
  %4759 = vmatmul.mubr.f32.gmra.mxu0 %v4661
  %v4760 = vpop.f32.mrf.mxu0
  %v4761 = vadd.f32 %v4626, %v4760
  %v4762 = vpop.f32.mrf.mxu0
  %4763 = vmatprep.mubr.f32.mxu0 0.0
  %4764 = vmatmul.mubr.f32.gmra.mxu0 %v4664
  %v4765 = vpop.f32.mrf.mxu0
  %v4766 = vadd.f32 %v4631, %v4765
  %v4767 = vpop.f32.mrf.mxu0
  %4768 = vmatprep.mubr.f32.mxu0 0.0
  %4769 = vmatmul.mubr.f32.gmra.mxu0 %v4667
  %v4770 = vpop.f32.mrf.mxu0
  %v4771 = vadd.f32 %v4636, %v4770
  %v4772 = vpop.f32.mrf.mxu0
  %4773 = vmatprep.mubr.f32.mxu0 0.0
  %4774 = vmatmul.mubr.f32.gmra.mxu0 %v4670
  %v4775 = vpop.f32.mrf.mxu0
  %v4776 = vadd.f32 %v4641, %v4775
  %v4777 = vpop.f32.mrf.mxu0
  %4778 = vmatprep.mubr.f32.mxu0 0.0
  %4779 = vmatmul.mubr.f32.gmra.mxu0 %v4673
  %v4780 = vpop.f32.mrf.mxu0
  %v4781 = vadd.f32 %v4646, %v4780
  %v4782 = vpop.f32.mrf.mxu0
  %4783 = vmatprep.mubr.f32.mxu0 0.0
  %4784 = vmatmul.mubr.f32.gmra.mxu0 %v4676
  %v4785 = vpop.f32.mrf.mxu0
  %v4786 = vadd.f32 %v4651, %v4785
  %v4787 = vpop.f32.mrf.mxu0
  %4788 = vdwg.mxu0
  %v4789 = vmul.f32 %v4751, 0.35355338
  %v4790 = vmul.f32 %v4756, 0.35355338
  %v4791 = vmul.f32 %v4761, 0.35355338
  %v4792 = vmul.f32 %v4766, 0.35355338
  %v4793 = vmul.f32 %v4771, 0.35355338
  %v4794 = vmul.f32 %v4776, 0.35355338
  %v4795 = vmul.f32 %v4781, 0.35355338
  %v4796 = vmul.f32 %v4786, 0.35355338
  %v4797 = vadd.f32 %v4789, %v982
  %v4798 = vadd.f32 %v4790, %v987
  %v4799 = vadd.f32 %v4791, %v992
  %v4800 = vadd.f32 %v4792, %v997
  %v4801 = vadd.f32 %v4793, %v1002
  %v4802 = vadd.f32 %v4794, %v1007
  %v4803 = vadd.f32 %v4795, %v1012
  %v4804 = vadd.f32 %v4796, %v1017
  %v4805 = vsel %vm890, %v4797, -inf
  %4806 = vmax.xlane.f32.xlu0 %v4805
  %v4807 = vpop.xlane.xlu0 %4806
  %v4808 = vsel %vm890, %v4798, -inf
  %4809 = vmax.xlane.f32.xlu0 %v4808
  %v4810 = vpop.xlane.xlu0 %4809
  %v4811 = vsel %vm890, %v4799, -inf
  %4812 = vmax.xlane.f32.xlu0 %v4811
  %v4813 = vpop.xlane.xlu0 %4812
  %v4814 = vsel %vm890, %v4800, -inf
  %4815 = vmax.xlane.f32.xlu0 %v4814
  %v4816 = vpop.xlane.xlu0 %4815
  %v4817 = vsel %vm890, %v4801, -inf
  %4818 = vmax.xlane.f32.xlu0 %v4817
  %v4819 = vpop.xlane.xlu0 %4818
  %v4820 = vsel %vm890, %v4802, -inf
  %4821 = vmax.xlane.f32.xlu0 %v4820
  %v4822 = vpop.xlane.xlu0 %4821
  %v4823 = vsel %vm890, %v4803, -inf
  %4824 = vmax.xlane.f32.xlu0 %v4823
  %v4825 = vpop.xlane.xlu0 %4824
  %v4826 = vsel %vm890, %v4804, -inf
  %4827 = vmax.xlane.f32.xlu0 %v4826
  %v4828 = vpop.xlane.xlu0 %4827
  %v4829 = vsub.f32 %v4797, %v4807
  %v4830 = vsub.f32 %v4798, %v4810
  %v4831 = vsub.f32 %v4799, %v4813
  %v4832 = vsub.f32 %v4800, %v4816
  %v4833 = vsub.f32 %v4801, %v4819
  %v4834 = vsub.f32 %v4802, %v4822
  %v4835 = vsub.f32 %v4803, %v4825
  %v4836 = vsub.f32 %v4804, %v4828
  %v4837 = vmul.f32 %v4829, 1.442695
  %v4838 = vpow.pop %v4837
  %v4839 = vmul.f32 %v4830, 1.442695
  %v4840 = vpow.pop %v4839
  %v4841 = vmul.f32 %v4831, 1.442695
  %v4842 = vpow.pop %v4841
  %v4843 = vmul.f32 %v4832, 1.442695
  %v4844 = vpow.pop %v4843
  %v4845 = vmul.f32 %v4833, 1.442695
  %v4846 = vpow.pop %v4845
  %v4847 = vmul.f32 %v4834, 1.442695
  %v4848 = vpow.pop %v4847
  %v4849 = vmul.f32 %v4835, 1.442695
  %v4850 = vpow.pop %v4849
  %v4851 = vmul.f32 %v4836, 1.442695
  %v4852 = vpow.pop %v4851
  %v4853 = vsel %vm890, %v4838, 0.0
  %4854 = vadd.xlane.f32.xlu0 %v4853
  %v4855 = vpop.xlane.xlu0 %4854
  %v4856 = vsel %vm890, %v4840, 0.0
  %4857 = vadd.xlane.f32.xlu0 %v4856
  %v4858 = vpop.xlane.xlu0 %4857
  %v4859 = vsel %vm890, %v4842, 0.0
  %4860 = vadd.xlane.f32.xlu0 %v4859
  %v4861 = vpop.xlane.xlu0 %4860
  %v4862 = vsel %vm890, %v4844, 0.0
  %4863 = vadd.xlane.f32.xlu0 %v4862
  %v4864 = vpop.xlane.xlu0 %4863
  %v4865 = vsel %vm890, %v4846, 0.0
  %4866 = vadd.xlane.f32.xlu0 %v4865
  %v4867 = vpop.xlane.xlu0 %4866
  %v4868 = vsel %vm890, %v4848, 0.0
  %4869 = vadd.xlane.f32.xlu0 %v4868
  %v4870 = vpop.xlane.xlu0 %4869
  %v4871 = vsel %vm890, %v4850, 0.0
  %4872 = vadd.xlane.f32.xlu0 %v4871
  %v4873 = vpop.xlane.xlu0 %4872
  %v4874 = vsel %vm890, %v4852, 0.0
  %4875 = vadd.xlane.f32.xlu0 %v4874
  %v4876 = vpop.xlane.xlu0 %4875
  %v4877 = vrcp.pop %v4855
  %v4878 = vrcp.pop %v4858
  %v4879 = vrcp.pop %v4861
  %v4880 = vrcp.pop %v4864
  %v4881 = vrcp.pop %v4867
  %v4882 = vrcp.pop %v4870
  %v4883 = vrcp.pop %v4873
  %v4884 = vrcp.pop %v4876
  %v4885 = vmul.f32 %v4838, %v4877
  %v4886 = vmul.f32 %v4840, %v4878
  %v4887 = vmul.f32 %v4842, %v4879
  %v4888 = vmul.f32 %v4844, %v4880
  %v4889 = vmul.f32 %v4846, %v4881
  %v4890 = vmul.f32 %v4848, %v4882
  %v4891 = vmul.f32 %v4850, %v4883
  %v4892 = vmul.f32 %v4852, %v4884
  %v4894 = vsel %vm890, %v4885, 0
  %v4897 = vsel %vm890, %v4886, 0
  %v4900 = vsel %vm890, %v4887, 0
  %v4903 = vsel %vm890, %v4888, 0
  %v4906 = vsel %vm890, %v4889, 0
  %v4909 = vsel %vm890, %v4890, 0
  %v4912 = vsel %vm890, %v4891, 0
  %v4915 = vsel %vm890, %v4892, 0
  %4917 = vmatprep.subr.mxu0 0.0
  %4918 = vmatpush1.msra.mxu0 0.0
  %4919 = vmatprep.subr.mxu0 0.0
  %4920 = vmatpush1.msra.mxu0 0.0
  %4921 = vmatprep.subr.mxu0 0.0
  %4922 = vmatpush1.msra.mxu0 0.0
  %4923 = vmatprep.subr.mxu0 0.0
  %4924 = vmatpush1.msra.mxu0 0.0
  %4925 = vmatprep.subr.mxu0 0.0
  %4926 = vmatpush1.msra.mxu0 0.0
  %4927 = vmatprep.subr.mxu0 0.0
  %4928 = vmatpush1.msra.mxu0 0.0
  %4929 = vmatprep.subr.mxu0 0.0
  %4930 = vmatpush1.msra.mxu0 0.0
  %4931 = vmatprep.subr.mxu0 0.0
  %4932 = vmatpush1.msra.mxu0 0.0
  %4933 = vmatprep.subr.mxu0 0.0
  %4934 = vmatpush1.msra.mxu0 0.0
  %4935 = vmatprep.subr.mxu0 0.0
  %4936 = vmatpush1.msra.mxu0 0.0
  %4937 = vmatprep.subr.mxu0 0.0
  %4938 = vmatpush1.msra.mxu0 0.0
  %4939 = vmatprep.subr.mxu0 0.0
  %4940 = vmatpush1.msra.mxu0 0.0
  %4941 = vmatprep.subr.mxu0 0.0
  %4942 = vmatpush1.msra.mxu0 0.0
  %4943 = vmatprep.subr.mxu0 0.0
  %4944 = vmatpush1.msra.mxu0 0.0
  %4945 = vmatprep.subr.mxu0 0.0
  %4946 = vmatpush1.msra.mxu0 %v4197
  %4947 = vmatprep.subr.mxu0 0.0
  %4948 = vmatpush1.msra.mxu0 %v4192
  %4949 = vmatprep.subr.mxu0 0.0
  %4950 = vmatpush2.msra.mxu0 0.0
  %4951 = vmatprep.subr.mxu0 0.0
  %4952 = vmatpush2.msra.mxu0 0.0
  %4953 = vmatprep.subr.mxu0 0.0
  %4954 = vmatpush2.msra.mxu0 0.0
  %4955 = vmatprep.subr.mxu0 0.0
  %4956 = vmatpush2.msra.mxu0 0.0
  %4957 = vmatprep.subr.mxu0 0.0
  %4958 = vmatpush2.msra.mxu0 0.0
  %4959 = vmatprep.subr.mxu0 0.0
  %4960 = vmatpush2.msra.mxu0 0.0
  %4961 = vmatprep.subr.mxu0 0.0
  %4962 = vmatpush2.msra.mxu0 0.0
  %4963 = vmatprep.subr.mxu0 0.0
  %4964 = vmatpush2.msra.mxu0 0.0
  %4965 = vmatprep.subr.mxu0 0.0
  %4966 = vmatpush2.msra.mxu0 0.0
  %4967 = vmatprep.subr.mxu0 0.0
  %4968 = vmatpush2.msra.mxu0 0.0
  %4969 = vmatprep.subr.mxu0 0.0
  %4970 = vmatpush2.msra.mxu0 0.0
  %4971 = vmatprep.subr.mxu0 0.0
  %4972 = vmatpush2.msra.mxu0 0.0
  %4973 = vmatprep.subr.mxu0 0.0
  %4974 = vmatpush2.msra.mxu0 0.0
  %4975 = vmatprep.subr.mxu0 0.0
  %4976 = vmatpush2.msra.mxu0 0.0
  %4977 = vmatprep.subr.mxu0 0.0
  %4978 = vmatpush2.msra.mxu0 0.0
  %4979 = vmatprep.subr.mxu0 0.0
  %4980 = vmatpush2.msra.mxu0 0.0
  %4981 = vmatprep.mubr.f32.mxu0 0.0
  %4982 = vmatmul.mubr.f32.gmra.mxu0 %v4894
  %v4983 = vpop.f32.mrf.mxu0
  %v4984 = vadd.f32 0.0, %v4983
  %v4985 = vpop.f32.mrf.mxu0
  %4986 = vmatprep.mubr.f32.mxu0 0.0
  %4987 = vmatmul.mubr.f32.gmra.mxu0 %v4897
  %v4988 = vpop.f32.mrf.mxu0
  %v4989 = vadd.f32 0.0, %v4988
  %v4990 = vpop.f32.mrf.mxu0
  %4991 = vmatprep.mubr.f32.mxu0 0.0
  %4992 = vmatmul.mubr.f32.gmra.mxu0 %v4900
  %v4993 = vpop.f32.mrf.mxu0
  %v4994 = vadd.f32 0.0, %v4993
  %v4995 = vpop.f32.mrf.mxu0
  %4996 = vmatprep.mubr.f32.mxu0 0.0
  %4997 = vmatmul.mubr.f32.gmra.mxu0 %v4903
  %v4998 = vpop.f32.mrf.mxu0
  %v4999 = vadd.f32 0.0, %v4998
  %v5000 = vpop.f32.mrf.mxu0
  %5001 = vmatprep.mubr.f32.mxu0 0.0
  %5002 = vmatmul.mubr.f32.gmra.mxu0 %v4906
  %v5003 = vpop.f32.mrf.mxu0
  %v5004 = vadd.f32 0.0, %v5003
  %v5005 = vpop.f32.mrf.mxu0
  %5006 = vmatprep.mubr.f32.mxu0 0.0
  %5007 = vmatmul.mubr.f32.gmra.mxu0 %v4909
  %v5008 = vpop.f32.mrf.mxu0
  %v5009 = vadd.f32 0.0, %v5008
  %v5010 = vpop.f32.mrf.mxu0
  %5011 = vmatprep.mubr.f32.mxu0 0.0
  %5012 = vmatmul.mubr.f32.gmra.mxu0 %v4912
  %v5013 = vpop.f32.mrf.mxu0
  %v5014 = vadd.f32 0.0, %v5013
  %v5015 = vpop.f32.mrf.mxu0
  %5016 = vmatprep.mubr.f32.mxu0 0.0
  %5017 = vmatmul.mubr.f32.gmra.mxu0 %v4915
  %v5018 = vpop.f32.mrf.mxu0
  %v5019 = vadd.f32 0.0, %v5018
  %v5020 = vpop.f32.mrf.mxu0
  %5021 = vdwg.mxu0
  %v5022 = vmul.f32 %v4984, %v874
  %v5023 = vmul.f32 %v4989, %v875
  %v5024 = vmul.f32 %v4994, %v876
  %v5025 = vmul.f32 %v4999, %v877
  %v5026 = vmul.f32 %v5004, %v878
  %v5027 = vmul.f32 %v5009, %v879
  %v5028 = vmul.f32 %v5014, %v880
  %v5029 = vmul.f32 %v5019, %v881
  %5030 = vmatprep.subr.mxu0 0.0
  %5031 = vmatpush1.msra.mxu0 0.0
  %5032 = vmatprep.subr.mxu0 0.0
  %5033 = vmatpush1.msra.mxu0 0.0
  %5034 = vmatprep.subr.mxu0 0.0
  %5035 = vmatpush1.msra.mxu0 0.0
  %5036 = vmatprep.subr.mxu0 0.0
  %5037 = vmatpush1.msra.mxu0 0.0
  %5038 = vmatprep.subr.mxu0 0.0
  %5039 = vmatpush1.msra.mxu0 0.0
  %5040 = vmatprep.subr.mxu0 0.0
  %5041 = vmatpush1.msra.mxu0 0.0
  %5042 = vmatprep.subr.mxu0 0.0
  %5043 = vmatpush1.msra.mxu0 0.0
  %5044 = vmatprep.subr.mxu0 0.0
  %5045 = vmatpush1.msra.mxu0 0.0
  %5046 = vmatprep.subr.mxu0 0.0
  %5047 = vmatpush1.msra.mxu0 %v5029
  %5048 = vmatprep.subr.mxu0 0.0
  %5049 = vmatpush1.msra.mxu0 %v5028
  %5050 = vmatprep.subr.mxu0 0.0
  %5051 = vmatpush1.msra.mxu0 %v5027
  %5052 = vmatprep.subr.mxu0 0.0
  %5053 = vmatpush1.msra.mxu0 %v5026
  %5054 = vmatprep.subr.mxu0 0.0
  %5055 = vmatpush1.msra.mxu0 %v5025
  %5056 = vmatprep.subr.mxu0 0.0
  %5057 = vmatpush1.msra.mxu0 %v5024
  %5058 = vmatprep.subr.mxu0 0.0
  %5059 = vmatpush1.msra.mxu0 %v5023
  %5060 = vmatprep.subr.mxu0 0.0
  %5061 = vmatpush1.msra.mxu0 %v5022
  %5062 = vmatprep.subr.mxu0 0.0
  %5063 = vmatpush2.msra.mxu0 0.0
  %5064 = vmatprep.subr.mxu0 0.0
  %5065 = vmatpush2.msra.mxu0 0.0
  %5066 = vmatprep.subr.mxu0 0.0
  %5067 = vmatpush2.msra.mxu0 0.0
  %5068 = vmatprep.subr.mxu0 0.0
  %5069 = vmatpush2.msra.mxu0 0.0
  %5070 = vmatprep.subr.mxu0 0.0
  %5071 = vmatpush2.msra.mxu0 0.0
  %5072 = vmatprep.subr.mxu0 0.0
  %5073 = vmatpush2.msra.mxu0 0.0
  %5074 = vmatprep.subr.mxu0 0.0
  %5075 = vmatpush2.msra.mxu0 0.0
  %5076 = vmatprep.subr.mxu0 0.0
  %5077 = vmatpush2.msra.mxu0 0.0
  %5078 = vmatprep.subr.mxu0 0.0
  %5079 = vmatpush2.msra.mxu0 0.0
  %5080 = vmatprep.subr.mxu0 0.0
  %5081 = vmatpush2.msra.mxu0 0.0
  %5082 = vmatprep.subr.mxu0 0.0
  %5083 = vmatpush2.msra.mxu0 0.0
  %5084 = vmatprep.subr.mxu0 0.0
  %5085 = vmatpush2.msra.mxu0 0.0
  %5086 = vmatprep.subr.mxu0 0.0
  %5087 = vmatpush2.msra.mxu0 0.0
  %5088 = vmatprep.subr.mxu0 0.0
  %5089 = vmatpush2.msra.mxu0 0.0
  %5090 = vmatprep.subr.mxu0 0.0
  %5091 = vmatpush2.msra.mxu0 0.0
  %5092 = vmatprep.subr.mxu0 0.0
  %5093 = vmatpush2.msra.mxu0 0.0
  %5094 = vmatprep.mubr.f32.mxu0 0.0
  %5095 = vmatmul.mubr.f32.gmra.mxu0 %v2412
  %v5096 = vpop.f32.mrf.mxu0
  %v5097 = vadd.f32 0.0, %v5096
  %v5098 = vpop.f32.mrf.mxu0
  %5099 = vmatprep.mubr.f32.mxu0 0.0
  %5100 = vmatmul.mubr.f32.gmra.mxu0 %v2415
  %v5101 = vpop.f32.mrf.mxu0
  %v5102 = vadd.f32 0.0, %v5101
  %v5103 = vpop.f32.mrf.mxu0
  %5104 = vdwg.mxu0
  %v5105 = vld [vmem:[%s3659 + $0x168] sm:$0xff]
  %v5106 = vld [vmem:[%s3659 + $0x170] sm:$0xff]
  %v5107 = vld [vmem:[%s3659 + $0x178] sm:$0xff]
  %v5108 = vld [vmem:[%s3659 + $0x180] sm:$0xff]
  %v5109 = vld [vmem:[%s3659 + $0x188] sm:$0x1]
  %v5110 = vlaneseq
  %v5111 = vshrl.u32 %v5110, 7
  %v5112 = vsub.s32 0, %v5111
  %v5113 = vrot.slane %v5109, %v5112
  %v5115 = vsel %vm1034, %v5097, 0
  %v5118 = vsel %vm1034, %v5102, 0
  %5120 = vmatprep.subr.mxu0 0.0
  %5121 = vmatpush1.msra.mxu0 0.0
  %5122 = vmatprep.subr.mxu0 0.0
  %5123 = vmatpush1.msra.mxu0 0.0
  %5124 = vmatprep.subr.mxu0 0.0
  %5125 = vmatpush1.msra.mxu0 0.0
  %5126 = vmatprep.subr.mxu0 0.0
  %5127 = vmatpush1.msra.mxu0 0.0
  %5128 = vmatprep.subr.mxu0 0.0
  %5129 = vmatpush1.msra.mxu0 0.0
  %5130 = vmatprep.subr.mxu0 0.0
  %5131 = vmatpush1.msra.mxu0 0.0
  %5132 = vmatprep.subr.mxu0 0.0
  %5133 = vmatpush1.msra.mxu0 0.0
  %5134 = vmatprep.subr.mxu0 0.0
  %5135 = vmatpush1.msra.mxu0 0.0
  %5136 = vmatprep.subr.mxu0 0.0
  %5137 = vmatpush1.msra.mxu0 0.0
  %5138 = vmatprep.subr.mxu0 0.0
  %5139 = vmatpush1.msra.mxu0 0.0
  %5140 = vmatprep.subr.mxu0 0.0
  %5141 = vmatpush1.msra.mxu0 0.0
  %5142 = vmatprep.subr.mxu0 0.0
  %5143 = vmatpush1.msra.mxu0 0.0
  %5144 = vmatprep.subr.mxu0 0.0
  %5145 = vmatpush1.msra.mxu0 %v5108
  %5146 = vmatprep.subr.mxu0 0.0
  %5147 = vmatpush1.msra.mxu0 %v5107
  %5148 = vmatprep.subr.mxu0 0.0
  %5149 = vmatpush1.msra.mxu0 %v5106
  %5150 = vmatprep.subr.mxu0 0.0
  %5151 = vmatpush1.msra.mxu0 %v5105
  %5152 = vmatprep.subr.mxu0 0.0
  %5153 = vmatpush2.msra.mxu0 0.0
  %5154 = vmatprep.subr.mxu0 0.0
  %5155 = vmatpush2.msra.mxu0 0.0
  %5156 = vmatprep.subr.mxu0 0.0
  %5157 = vmatpush2.msra.mxu0 0.0
  %5158 = vmatprep.subr.mxu0 0.0
  %5159 = vmatpush2.msra.mxu0 0.0
  %5160 = vmatprep.subr.mxu0 0.0
  %5161 = vmatpush2.msra.mxu0 0.0
  %5162 = vmatprep.subr.mxu0 0.0
  %5163 = vmatpush2.msra.mxu0 0.0
  %5164 = vmatprep.subr.mxu0 0.0
  %5165 = vmatpush2.msra.mxu0 0.0
  %5166 = vmatprep.subr.mxu0 0.0
  %5167 = vmatpush2.msra.mxu0 0.0
  %5168 = vmatprep.subr.mxu0 0.0
  %5169 = vmatpush2.msra.mxu0 0.0
  %5170 = vmatprep.subr.mxu0 0.0
  %5171 = vmatpush2.msra.mxu0 0.0
  %5172 = vmatprep.subr.mxu0 0.0
  %5173 = vmatpush2.msra.mxu0 0.0
  %5174 = vmatprep.subr.mxu0 0.0
  %5175 = vmatpush2.msra.mxu0 0.0
  %5176 = vmatprep.subr.mxu0 0.0
  %5177 = vmatpush2.msra.mxu0 0.0
  %5178 = vmatprep.subr.mxu0 0.0
  %5179 = vmatpush2.msra.mxu0 0.0
  %5180 = vmatprep.subr.mxu0 0.0
  %5181 = vmatpush2.msra.mxu0 0.0
  %5182 = vmatprep.subr.mxu0 0.0
  %5183 = vmatpush2.msra.mxu0 0.0
  %5184 = vmatprep.mubr.f32.mxu0 0.0
  %5185 = vmatmul.mubr.f32.gmra.mxu0 %v5115
  %v5186 = vpop.f32.mrf.mxu0
  %v5187 = vadd.f32 %v5113, %v5186
  %v5188 = vpop.f32.mrf.mxu0
  %5189 = vmatprep.mubr.f32.mxu0 0.0
  %5190 = vmatmul.mubr.f32.gmra.mxu0 %v5118
  %v5191 = vpop.f32.mrf.mxu0
  %v5192 = vadd.f32 %v5113, %v5191
  %v5193 = vpop.f32.mrf.mxu0
  %5194 = vdwg.mxu0
  %v5195 = vld [vmem:[%s3659 + $0x20] sm:$0x1]
  %v5196 = vld [vmem:[%s3659 + $0x28] sm:$0x1]
  %v5197 = vlaneseq
  %v5198 = vshrl.u32 %v5197, 7
  %v5199 = vsub.s32 0, %v5198
  %v5200 = vrot.slane %v5195, %v5199
  %v5201 = vmul.f32 %v3928, %v5200
  %v5202 = vmul.f32 %v3929, %v5200
  %v5203 = vlaneseq
  %v5204 = vshrl.u32 %v5203, 7
  %v5205 = vsub.s32 0, %v5204
  %v5206 = vrot.slane %v5196, %v5205
  %v5207 = vadd.f32 %v5201, %v5206
  %v5208 = vadd.f32 %v5202, %v5206
  %v5209 = vld [vmem:[%s3659 + $0x190] sm:$0xff]
  %v5210 = vld [vmem:[%s3659 + $0x198] sm:$0xff]
  %v5211 = vld [vmem:[%s3659 + $0x1a0] sm:$0xff]
  %v5212 = vld [vmem:[%s3659 + $0x1a8] sm:$0xff]
  %v5213 = vld [vmem:[%s3659 + $0x1b0] sm:$0x1]
  %v5214 = vlaneseq
  %v5215 = vshrl.u32 %v5214, 7
  %v5216 = vsub.s32 0, %v5215
  %v5217 = vrot.slane %v5213, %v5216
  %v5219 = vsel %vm1034, %v5207, 0
  %v5222 = vsel %vm1034, %v5208, 0
  %5224 = vmatprep.subr.mxu0 0.0
  %5225 = vmatpush1.msra.mxu0 0.0
  %5226 = vmatprep.subr.mxu0 0.0
  %5227 = vmatpush1.msra.mxu0 0.0
  %5228 = vmatprep.subr.mxu0 0.0
  %5229 = vmatpush1.msra.mxu0 0.0
  %5230 = vmatprep.subr.mxu0 0.0
  %5231 = vmatpush1.msra.mxu0 0.0
  %5232 = vmatprep.subr.mxu0 0.0
  %5233 = vmatpush1.msra.mxu0 0.0
  %5234 = vmatprep.subr.mxu0 0.0
  %5235 = vmatpush1.msra.mxu0 0.0
  %5236 = vmatprep.subr.mxu0 0.0
  %5237 = vmatpush1.msra.mxu0 0.0
  %5238 = vmatprep.subr.mxu0 0.0
  %5239 = vmatpush1.msra.mxu0 0.0
  %5240 = vmatprep.subr.mxu0 0.0
  %5241 = vmatpush1.msra.mxu0 0.0
  %5242 = vmatprep.subr.mxu0 0.0
  %5243 = vmatpush1.msra.mxu0 0.0
  %5244 = vmatprep.subr.mxu0 0.0
  %5245 = vmatpush1.msra.mxu0 0.0
  %5246 = vmatprep.subr.mxu0 0.0
  %5247 = vmatpush1.msra.mxu0 0.0
  %5248 = vmatprep.subr.mxu0 0.0
  %5249 = vmatpush1.msra.mxu0 %v5212
  %5250 = vmatprep.subr.mxu0 0.0
  %5251 = vmatpush1.msra.mxu0 %v5211
  %5252 = vmatprep.subr.mxu0 0.0
  %5253 = vmatpush1.msra.mxu0 %v5210
  %5254 = vmatprep.subr.mxu0 0.0
  %5255 = vmatpush1.msra.mxu0 %v5209
  %5256 = vmatprep.subr.mxu0 0.0
  %5257 = vmatpush2.msra.mxu0 0.0
  %5258 = vmatprep.subr.mxu0 0.0
  %5259 = vmatpush2.msra.mxu0 0.0
  %5260 = vmatprep.subr.mxu0 0.0
  %5261 = vmatpush2.msra.mxu0 0.0
  %5262 = vmatprep.subr.mxu0 0.0
  %5263 = vmatpush2.msra.mxu0 0.0
  %5264 = vmatprep.subr.mxu0 0.0
  %5265 = vmatpush2.msra.mxu0 0.0
  %5266 = vmatprep.subr.mxu0 0.0
  %5267 = vmatpush2.msra.mxu0 0.0
  %5268 = vmatprep.subr.mxu0 0.0
  %5269 = vmatpush2.msra.mxu0 0.0
  %5270 = vmatprep.subr.mxu0 0.0
  %5271 = vmatpush2.msra.mxu0 0.0
  %5272 = vmatprep.subr.mxu0 0.0
  %5273 = vmatpush2.msra.mxu0 0.0
  %5274 = vmatprep.subr.mxu0 0.0
  %5275 = vmatpush2.msra.mxu0 0.0
  %5276 = vmatprep.subr.mxu0 0.0
  %5277 = vmatpush2.msra.mxu0 0.0
  %5278 = vmatprep.subr.mxu0 0.0
  %5279 = vmatpush2.msra.mxu0 0.0
  %5280 = vmatprep.subr.mxu0 0.0
  %5281 = vmatpush2.msra.mxu0 0.0
  %5282 = vmatprep.subr.mxu0 0.0
  %5283 = vmatpush2.msra.mxu0 0.0
  %5284 = vmatprep.subr.mxu0 0.0
  %5285 = vmatpush2.msra.mxu0 0.0
  %5286 = vmatprep.subr.mxu0 0.0
  %5287 = vmatpush2.msra.mxu0 0.0
  %5288 = vmatprep.mubr.f32.mxu0 0.0
  %5289 = vmatmul.mubr.f32.gmra.mxu0 %v5219
  %v5290 = vpop.f32.mrf.mxu0
  %v5291 = vadd.f32 %v5217, %v5290
  %v5292 = vpop.f32.mrf.mxu0
  %5293 = vmatprep.mubr.f32.mxu0 0.0
  %5294 = vmatmul.mubr.f32.gmra.mxu0 %v5222
  %v5295 = vpop.f32.mrf.mxu0
  %v5296 = vadd.f32 %v5217, %v5295
  %v5297 = vpop.f32.mrf.mxu0
  %5298 = vdwg.mxu0
  %v5299 = vmul.f32 %v5291, 0.5
  %v5300 = vmul.f32 %v5296, 0.5
  %v5301 = vmul.f32 %v5291, 0.044715
  %v5302 = vmul.f32 %v5296, 0.044715
  %v5303 = vmul.f32 %v5301, %v5291
  %v5304 = vmul.f32 %v5302, %v5296
  %v5305 = vmul.f32 %v5303, %v5291
  %v5306 = vmul.f32 %v5304, %v5296
  %v5307 = vadd.f32 %v5291, %v5305
  %v5308 = vadd.f32 %v5296, %v5306
  %v5309 = vmul.f32 %v5307, 0.7978846
  %v5310 = vmul.f32 %v5308, 0.7978846
  %v5311 = vtanh.pop %v5309
  %v5312 = vtanh.pop %v5310
  %v5313 = vadd.f32 %v5311, 1.0
  %v5314 = vadd.f32 %v5312, 1.0
  %v5315 = vmul.f32 %v5299, %v5313
  %v5316 = vmul.f32 %v5300, %v5314
  %v5317 = vld [vmem:[%s3659 + $0x1b8] sm:$0xff]
  %v5318 = vld [vmem:[%s3659 + $0x1c0] sm:$0xff]
  %v5319 = vld [vmem:[%s3659 + $0x1c8] sm:$0xff]
  %v5320 = vld [vmem:[%s3659 + $0x1d0] sm:$0xff]
  %v5321 = vld [vmem:[%s3659 + $0x1d8] sm:$0x1]
  %v5322 = vlaneseq
  %v5323 = vshrl.u32 %v5322, 7
  %v5324 = vsub.s32 0, %v5323
  %v5325 = vrot.slane %v5321, %v5324
  %5326 = vmatprep.subr.mxu0 0.0
  %5327 = vmatpush1.msra.mxu0 0.0
  %5328 = vmatprep.subr.mxu0 0.0
  %5329 = vmatpush1.msra.mxu0 0.0
  %5330 = vmatprep.subr.mxu0 0.0
  %5331 = vmatpush1.msra.mxu0 0.0
  %5332 = vmatprep.subr.mxu0 0.0
  %5333 = vmatpush1.msra.mxu0 0.0
  %5334 = vmatprep.subr.mxu0 0.0
  %5335 = vmatpush1.msra.mxu0 0.0
  %5336 = vmatprep.subr.mxu0 0.0
  %5337 = vmatpush1.msra.mxu0 0.0
  %5338 = vmatprep.subr.mxu0 0.0
  %5339 = vmatpush1.msra.mxu0 0.0
  %5340 = vmatprep.subr.mxu0 0.0
  %5341 = vmatpush1.msra.mxu0 0.0
  %5342 = vmatprep.subr.mxu0 0.0
  %5343 = vmatpush1.msra.mxu0 0.0
  %5344 = vmatprep.subr.mxu0 0.0
  %5345 = vmatpush1.msra.mxu0 0.0
  %5346 = vmatprep.subr.mxu0 0.0
  %5347 = vmatpush1.msra.mxu0 0.0
  %5348 = vmatprep.subr.mxu0 0.0
  %5349 = vmatpush1.msra.mxu0 0.0
  %5350 = vmatprep.subr.mxu0 0.0
  %5351 = vmatpush1.msra.mxu0 %v5320
  %5352 = vmatprep.subr.mxu0 0.0
  %5353 = vmatpush1.msra.mxu0 %v5319
  %5354 = vmatprep.subr.mxu0 0.0
  %5355 = vmatpush1.msra.mxu0 %v5318
  %5356 = vmatprep.subr.mxu0 0.0
  %5357 = vmatpush1.msra.mxu0 %v5317
  %5358 = vmatprep.subr.mxu0 0.0
  %5359 = vmatpush2.msra.mxu0 0.0
  %5360 = vmatprep.subr.mxu0 0.0
  %5361 = vmatpush2.msra.mxu0 0.0
  %5362 = vmatprep.subr.mxu0 0.0
  %5363 = vmatpush2.msra.mxu0 0.0
  %5364 = vmatprep.subr.mxu0 0.0
  %5365 = vmatpush2.msra.mxu0 0.0
  %5366 = vmatprep.subr.mxu0 0.0
  %5367 = vmatpush2.msra.mxu0 0.0
  %5368 = vmatprep.subr.mxu0 0.0
  %5369 = vmatpush2.msra.mxu0 0.0
  %5370 = vmatprep.subr.mxu0 0.0
  %5371 = vmatpush2.msra.mxu0 0.0
  %5372 = vmatprep.subr.mxu0 0.0
  %5373 = vmatpush2.msra.mxu0 0.0
  %5374 = vmatprep.subr.mxu0 0.0
  %5375 = vmatpush2.msra.mxu0 0.0
  %5376 = vmatprep.subr.mxu0 0.0
  %5377 = vmatpush2.msra.mxu0 0.0
  %5378 = vmatprep.subr.mxu0 0.0
  %5379 = vmatpush2.msra.mxu0 0.0
  %5380 = vmatprep.subr.mxu0 0.0
  %5381 = vmatpush2.msra.mxu0 0.0
  %5382 = vmatprep.subr.mxu0 0.0
  %5383 = vmatpush2.msra.mxu0 0.0
  %5384 = vmatprep.subr.mxu0 0.0
  %5385 = vmatpush2.msra.mxu0 0.0
  %5386 = vmatprep.subr.mxu0 0.0
  %5387 = vmatpush2.msra.mxu0 0.0
  %5388 = vmatprep.subr.mxu0 0.0
  %5389 = vmatpush2.msra.mxu0 0.0
  %5390 = vmatprep.mubr.f32.mxu0 0.0
  %5391 = vmatmul.mubr.f32.gmra.mxu0 %v5219
  %v5392 = vpop.f32.mrf.mxu0
  %v5393 = vadd.f32 %v5325, %v5392
  %v5394 = vpop.f32.mrf.mxu0
  %5395 = vmatprep.mubr.f32.mxu0 0.0
  %5396 = vmatmul.mubr.f32.gmra.mxu0 %v5222
  %v5397 = vpop.f32.mrf.mxu0
  %v5398 = vadd.f32 %v5325, %v5397
  %v5399 = vpop.f32.mrf.mxu0
  %5400 = vdwg.mxu0
  %v5401 = vmul.f32 %v5393, 0.5
  %v5402 = vmul.f32 %v5398, 0.5
  %v5403 = vmul.f32 %v5393, 0.044715
  %v5404 = vmul.f32 %v5398, 0.044715
  %v5405 = vmul.f32 %v5403, %v5393
  %v5406 = vmul.f32 %v5404, %v5398
  %v5407 = vmul.f32 %v5405, %v5393
  %v5408 = vmul.f32 %v5406, %v5398
  %v5409 = vadd.f32 %v5393, %v5407
  %v5410 = vadd.f32 %v5398, %v5408
  %v5411 = vmul.f32 %v5409, 0.7978846
  %v5412 = vmul.f32 %v5410, 0.7978846
  %v5413 = vtanh.pop %v5411
  %v5414 = vtanh.pop %v5412
  %v5415 = vadd.f32 %v5413, 1.0
  %v5416 = vadd.f32 %v5414, 1.0
  %v5417 = vmul.f32 %v5401, %v5415
  %v5418 = vmul.f32 %v5402, %v5416
  %v5419 = vmul.f32 %v5417, %v1030
  %v5420 = vmul.f32 %v5418, %v1031
  %v5421 = vld [vmem:[%s3659 + $0x1e0] sm:$0x1]
  %v5422 = vld [vmem:[%s3659 + $0x1e8] sm:$0x1]
  %v5423 = vsel %vm1034, %v5419, 0.0
  %5424 = vadd.xlane.f32.xlu0 %v5423
  %v5425 = vpop.xlane.xlu0 %5424
  %v5426 = vsel %vm1034, %v5420, 0.0
  %5427 = vadd.xlane.f32.xlu0 %v5426
  %v5428 = vpop.xlane.xlu0 %5427
  %v5429 = vmul.f32 %v5425, %v1041
  %v5430 = vmul.f32 %v5428, %v1041
  %v5431 = vsub.f32 %v5419, %v5429
  %v5432 = vsub.f32 %v5420, %v5430
  %v5433 = vmul.f32 %v5431, %v5431
  %v5434 = vmul.f32 %v5432, %v5432
  %v5435 = vsel %vm1034, %v5433, 0.0
  %5436 = vadd.xlane.f32.xlu0 %v5435
  %v5437 = vpop.xlane.xlu0 %5436
  %v5438 = vsel %vm1034, %v5434, 0.0
  %5439 = vadd.xlane.f32.xlu0 %v5438
  %v5440 = vpop.xlane.xlu0 %5439
  %v5441 = vmul.f32 %v5437, %v1041
  %v5442 = vmul.f32 %v5440, %v1041
  %v5443 = vadd.f32 %v5441, 1e-05
  %v5444 = vadd.f32 %v5442, 1e-05
  %v5445 = vrsqrt.pop %v5443
  %v5446 = vrsqrt.pop %v5444
  %v5447 = vmul.f32 %v5431, %v5445
  %v5448 = vmul.f32 %v5432, %v5446
  %v5449 = vlaneseq
  %v5450 = vshrl.u32 %v5449, 7
  %v5451 = vsub.s32 0, %v5450
  %v5452 = vrot.slane %v5421, %v5451
  %v5453 = vmul.f32 %v5447, %v5452
  %v5454 = vmul.f32 %v5448, %v5452
  %v5455 = vlaneseq
  %v5456 = vshrl.u32 %v5455, 7
  %v5457 = vsub.s32 0, %v5456
  %v5458 = vrot.slane %v5422, %v5457
  %v5459 = vadd.f32 %v5453, %v5458
  %v5460 = vadd.f32 %v5454, %v5458
  %v5461 = vld [vmem:[%s3659 + $0x1f0] sm:$0x7f]
  %v5462 = vld [vmem:[%s3659 + $0x1f8] sm:$0x1]
  %v5463 = vrot.slane %v5459, 5
  %v5464 = vrot.slane %v5460, 5
  %v5465 = vsel %vm2854, %v5463, %v5464
  %v5466 = vsel %vm2854, %v5464, %v5463
  %v5467 = vlaneseq
  %v5468 = vshrl.u32 %v5467, 7
  %v5469 = vsub.s32 0, %v5468
  %v5470 = vrot.slane %v5461, %v5469
  %v5471 = vmul.f32 %v5470, %v5466
  %v5472 = vmul.f32 %v5470, %v5465
  %v5473 = vmul.f32 %v5471, %v2866
  %v5474 = vmul.f32 %v5472, %v2871
  %v5475 = vrot.slane %v5459, 6
  %v5476 = vrot.slane %v5460, 6
  %v5477 = vsel %vm2877, %v5475, %v5476
  %v5478 = vsel %vm2877, %v5476, %v5475
  %v5479 = vlaneseq
  %v5480 = vshrl.u32 %v5479, 7
  %v5481 = vsub.s32 1, %v5480
  %v5482 = vrot.slane %v5461, %v5481
  %v5483 = vmul.f32 %v5482, %v5478
  %v5484 = vmul.f32 %v5482, %v5477
  %v5485 = vmul.f32 %v5483, %v2888
  %v5486 = vmul.f32 %v5484, %v2892
  %v5487 = vadd.f32 %v5473, %v5485
  %v5488 = vadd.f32 %v5474, %v5486
  %v5489 = vrot.slane %v5459, 7
  %v5490 = vrot.slane %v5460, 7
  %v5491 = vsel %vm2900, %v5489, %v5490
  %v5492 = vsel %vm2900, %v5490, %v5489
  %v5493 = vlaneseq
  %v5494 = vshrl.u32 %v5493, 7
  %v5495 = vsub.s32 2, %v5494
  %v5496 = vrot.slane %v5461, %v5495
  %v5497 = vmul.f32 %v5496, %v5492
  %v5498 = vmul.f32 %v5496, %v5491
  %v5499 = vmul.f32 %v5497, %v2911
  %v5500 = vmul.f32 %v5498, %v2915
  %v5501 = vadd.f32 %v5487, %v5499
  %v5502 = vadd.f32 %v5488, %v5500
  %v5503 = vlaneseq
  %v5504 = vshrl.u32 %v5503, 7
  %v5505 = vsub.s32 3, %v5504
  %v5506 = vrot.slane %v5461, %v5505
  %v5507 = vmul.f32 %v5506, %v5459
  %v5508 = vmul.f32 %v5506, %v5460
  %v5509 = vmul.f32 %v5507, %v2929
  %v5510 = vmul.f32 %v5508, %v2933
  %v5511 = vadd.f32 %v5501, %v5509
  %v5512 = vadd.f32 %v5502, %v5510
  %v5513 = vrot.slane %v5459, 1
  %v5514 = vrot.slane %v5460, 1
  %v5515 = vsel %vm2941, %v5513, %v5514
  %v5516 = vsel %vm2941, %v5514, %v5513
  %v5517 = vlaneseq
  %v5518 = vshrl.u32 %v5517, 7
  %v5519 = vsub.s32 4, %v5518
  %v5520 = vrot.slane %v5461, %v5519
  %v5521 = vmul.f32 %v5520, %v5515
  %v5522 = vmul.f32 %v5520, %v5516
  %v5523 = vmul.f32 %v5521, %v2952
  %v5524 = vmul.f32 %v5522, %v2956
  %v5525 = vadd.f32 %v5511, %v5523
  %v5526 = vadd.f32 %v5512, %v5524
  %v5527 = vrot.slane %v5459, 2
  %v5528 = vrot.slane %v5460, 2
  %v5529 = vsel %vm2964, %v5527, %v5528
  %v5530 = vsel %vm2964, %v5528, %v5527
  %v5531 = vlaneseq
  %v5532 = vshrl.u32 %v5531, 7
  %v5533 = vsub.s32 5, %v5532
  %v5534 = vrot.slane %v5461, %v5533
  %v5535 = vmul.f32 %v5534, %v5529
  %v5536 = vmul.f32 %v5534, %v5530
  %v5537 = vmul.f32 %v5535, %v2975
  %v5538 = vmul.f32 %v5536, %v2979
  %v5539 = vadd.f32 %v5525, %v5537
  %v5540 = vadd.f32 %v5526, %v5538
  %v5541 = vrot.slane %v5459, 3
  %v5542 = vrot.slane %v5460, 3
  %v5543 = vsel %vm2987, %v5541, %v5542
  %v5544 = vsel %vm2987, %v5542, %v5541
  %v5545 = vlaneseq
  %v5546 = vshrl.u32 %v5545, 7
  %v5547 = vsub.s32 6, %v5546
  %v5548 = vrot.slane %v5461, %v5547
  %v5549 = vmul.f32 %v5548, %v5543
  %v5550 = vmul.f32 %v5548, %v5544
  %v5551 = vmul.f32 %v5549, %v2998
  %v5552 = vmul.f32 %v5550, %v3002
  %v5553 = vadd.f32 %v5539, %v5551
  %v5554 = vadd.f32 %v5540, %v5552
  %v5555 = vlaneseq
  %v5556 = vshrl.u32 %v5555, 7
  %v5557 = vsub.s32 0, %v5556
  %v5558 = vrot.slane %v5462, %v5557
  %v5559 = vadd.f32 %v5553, %v5558
  %v5560 = vadd.f32 %v5554, %v5558
  %v5561 = vmul.f32 %v5315, %v5559
  %v5562 = vmul.f32 %v5316, %v5560
  %v5563 = vld [vmem:[%s3659 + $0x200] sm:$0xff]
  %v5564 = vld [vmem:[%s3659 + $0x208] sm:$0xff]
  %v5565 = vld [vmem:[%s3659 + $0x210] sm:$0xff]
  %v5566 = vld [vmem:[%s3659 + $0x218] sm:$0xff]
  %v5567 = vld [vmem:[%s3659 + $0x220] sm:$0x1]
  %v5568 = vlaneseq
  %v5569 = vshrl.u32 %v5568, 7
  %v5570 = vsub.s32 0, %v5569
  %v5571 = vrot.slane %v5567, %v5570
  %v5573 = vsel %vm1034, %v5561, 0
  %v5576 = vsel %vm1034, %v5562, 0
  %5578 = vmatprep.subr.mxu0 0.0
  %5579 = vmatpush1.msra.mxu0 0.0
  %5580 = vmatprep.subr.mxu0 0.0
  %5581 = vmatpush1.msra.mxu0 0.0
  %5582 = vmatprep.subr.mxu0 0.0
  %5583 = vmatpush1.msra.mxu0 0.0
  %5584 = vmatprep.subr.mxu0 0.0
  %5585 = vmatpush1.msra.mxu0 0.0
  %5586 = vmatprep.subr.mxu0 0.0
  %5587 = vmatpush1.msra.mxu0 0.0
  %5588 = vmatprep.subr.mxu0 0.0
  %5589 = vmatpush1.msra.mxu0 0.0
  %5590 = vmatprep.subr.mxu0 0.0
  %5591 = vmatpush1.msra.mxu0 0.0
  %5592 = vmatprep.subr.mxu0 0.0
  %5593 = vmatpush1.msra.mxu0 0.0
  %5594 = vmatprep.subr.mxu0 0.0
  %5595 = vmatpush1.msra.mxu0 0.0
  %5596 = vmatprep.subr.mxu0 0.0
  %5597 = vmatpush1.msra.mxu0 0.0
  %5598 = vmatprep.subr.mxu0 0.0
  %5599 = vmatpush1.msra.mxu0 0.0
  %5600 = vmatprep.subr.mxu0 0.0
  %5601 = vmatpush1.msra.mxu0 0.0
  %5602 = vmatprep.subr.mxu0 0.0
  %5603 = vmatpush1.msra.mxu0 %v5566
  %5604 = vmatprep.subr.mxu0 0.0
  %5605 = vmatpush1.msra.mxu0 %v5565
  %5606 = vmatprep.subr.mxu0 0.0
  %5607 = vmatpush1.msra.mxu0 %v5564
  %5608 = vmatprep.subr.mxu0 0.0
  %5609 = vmatpush1.msra.mxu0 %v5563
  %5610 = vmatprep.subr.mxu0 0.0
  %5611 = vmatpush2.msra.mxu0 0.0
  %5612 = vmatprep.subr.mxu0 0.0
  %5613 = vmatpush2.msra.mxu0 0.0
  %5614 = vmatprep.subr.mxu0 0.0
  %5615 = vmatpush2.msra.mxu0 0.0
  %5616 = vmatprep.subr.mxu0 0.0
  %5617 = vmatpush2.msra.mxu0 0.0
  %5618 = vmatprep.subr.mxu0 0.0
  %5619 = vmatpush2.msra.mxu0 0.0
  %5620 = vmatprep.subr.mxu0 0.0
  %5621 = vmatpush2.msra.mxu0 0.0
  %5622 = vmatprep.subr.mxu0 0.0
  %5623 = vmatpush2.msra.mxu0 0.0
  %5624 = vmatprep.subr.mxu0 0.0
  %5625 = vmatpush2.msra.mxu0 0.0
  %5626 = vmatprep.subr.mxu0 0.0
  %5627 = vmatpush2.msra.mxu0 0.0
  %5628 = vmatprep.subr.mxu0 0.0
  %5629 = vmatpush2.msra.mxu0 0.0
  %5630 = vmatprep.subr.mxu0 0.0
  %5631 = vmatpush2.msra.mxu0 0.0
  %5632 = vmatprep.subr.mxu0 0.0
  %5633 = vmatpush2.msra.mxu0 0.0
  %5634 = vmatprep.subr.mxu0 0.0
  %5635 = vmatpush2.msra.mxu0 0.0
  %5636 = vmatprep.subr.mxu0 0.0
  %5637 = vmatpush2.msra.mxu0 0.0
  %5638 = vmatprep.subr.mxu0 0.0
  %5639 = vmatpush2.msra.mxu0 0.0
  %5640 = vmatprep.subr.mxu0 0.0
  %5641 = vmatpush2.msra.mxu0 0.0
  %5642 = vmatprep.mubr.f32.mxu0 0.0
  %5643 = vmatmul.mubr.f32.gmra.mxu0 %v5573
  %v5644 = vpop.f32.mrf.mxu0
  %v5645 = vadd.f32 %v5571, %v5644
  %v5646 = vpop.f32.mrf.mxu0
  %5647 = vmatprep.mubr.f32.mxu0 0.0
  %5648 = vmatmul.mubr.f32.gmra.mxu0 %v5576
  %v5649 = vpop.f32.mrf.mxu0
  %v5650 = vadd.f32 %v5571, %v5649
  %v5651 = vpop.f32.mrf.mxu0
  %5652 = vdwg.mxu0
  %v5653 = vld [vmem:[%s3659 + $0x228] sm:$0x7]
  %v5654 = vld [vmem:[%s3659 + $0x230] sm:$0x1]
  %v5655 = vrot.slane %v5187, 7
  %v5656 = vrot.slane %v5192, 7
  %v5657 = vsel %vm2900, %v5655, %v5656
  %v5658 = vsel %vm2900, %v5656, %v5655
  %v5659 = vlaneseq
  %v5660 = vshrl.u32 %v5659, 7
  %v5661 = vsub.s32 0, %v5660
  %v5662 = vrot.slane %v5653, %v5661
  %v5663 = vmul.f32 %v5662, %v5658
  %v5664 = vmul.f32 %v5662, %v5657
  %v5665 = vmul.f32 %v5663, %v2911
  %v5666 = vmul.f32 %v5664, %v2915
  %v5667 = vlaneseq
  %v5668 = vshrl.u32 %v5667, 7
  %v5669 = vsub.s32 1, %v5668
  %v5670 = vrot.slane %v5653, %v5669
  %v5671 = vmul.f32 %v5670, %v5187
  %v5672 = vmul.f32 %v5670, %v5192
  %v5673 = vmul.f32 %v5671, %v2929
  %v5674 = vmul.f32 %v5672, %v2933
  %v5675 = vadd.f32 %v5665, %v5673
  %v5676 = vadd.f32 %v5666, %v5674
  %v5677 = vrot.slane %v5187, 1
  %v5678 = vrot.slane %v5192, 1
  %v5679 = vsel %vm2941, %v5677, %v5678
  %v5680 = vsel %vm2941, %v5678, %v5677
  %v5681 = vlaneseq
  %v5682 = vshrl.u32 %v5681, 7
  %v5683 = vsub.s32 2, %v5682
  %v5684 = vrot.slane %v5653, %v5683
  %v5685 = vmul.f32 %v5684, %v5679
  %v5686 = vmul.f32 %v5684, %v5680
  %v5687 = vmul.f32 %v5685, %v2952
  %v5688 = vmul.f32 %v5686, %v2956
  %v5689 = vadd.f32 %v5675, %v5687
  %v5690 = vadd.f32 %v5676, %v5688
  %v5691 = vlaneseq
  %v5692 = vshrl.u32 %v5691, 7
  %v5693 = vsub.s32 0, %v5692
  %v5694 = vrot.slane %v5654, %v5693
  %v5695 = vadd.f32 %v5689, %v5694
  %v5696 = vadd.f32 %v5690, %v5694
  %v5697 = vld [vmem:[%s3659 + $0x238] sm:$0x7]
  %v5698 = vld [vmem:[%s3659 + $0x240] sm:$0x1]
  %v5699 = vrot.slane %v5645, 7
  %v5700 = vrot.slane %v5650, 7
  %v5701 = vsel %vm2900, %v5699, %v5700
  %v5702 = vsel %vm2900, %v5700, %v5699
  %v5703 = vlaneseq
  %v5704 = vshrl.u32 %v5703, 7
  %v5705 = vsub.s32 0, %v5704
  %v5706 = vrot.slane %v5697, %v5705
  %v5707 = vmul.f32 %v5706, %v5702
  %v5708 = vmul.f32 %v5706, %v5701
  %v5709 = vmul.f32 %v5707, %v2911
  %v5710 = vmul.f32 %v5708, %v2915
  %v5711 = vlaneseq
  %v5712 = vshrl.u32 %v5711, 7
  %v5713 = vsub.s32 1, %v5712
  %v5714 = vrot.slane %v5697, %v5713
  %v5715 = vmul.f32 %v5714, %v5645
  %v5716 = vmul.f32 %v5714, %v5650
  %v5717 = vmul.f32 %v5715, %v2929
  %v5718 = vmul.f32 %v5716, %v2933
  %v5719 = vadd.f32 %v5709, %v5717
  %v5720 = vadd.f32 %v5710, %v5718
  %v5721 = vrot.slane %v5645, 1
  %v5722 = vrot.slane %v5650, 1
  %v5723 = vsel %vm2941, %v5721, %v5722
  %v5724 = vsel %vm2941, %v5722, %v5721
  %v5725 = vlaneseq
  %v5726 = vshrl.u32 %v5725, 7
  %v5727 = vsub.s32 2, %v5726
  %v5728 = vrot.slane %v5697, %v5727
  %v5729 = vmul.f32 %v5728, %v5723
  %v5730 = vmul.f32 %v5728, %v5724
  %v5731 = vmul.f32 %v5729, %v2952
  %v5732 = vmul.f32 %v5730, %v2956
  %v5733 = vadd.f32 %v5719, %v5731
  %v5734 = vadd.f32 %v5720, %v5732
  %v5735 = vlaneseq
  %v5736 = vshrl.u32 %v5735, 7
  %v5737 = vsub.s32 0, %v5736
  %v5738 = vrot.slane %v5698, %v5737
  %v5739 = vadd.f32 %v5733, %v5738
  %v5740 = vadd.f32 %v5734, %v5738
  %v5741 = vadd.f32 %v5187, %v5695
  %v5742 = vadd.f32 %v5192, %v5696
  %v5743 = vld [vmem:[%s3659 + $0x248] sm:$0xff]
  %v5744 = vld [vmem:[%s3659 + $0x250] sm:$0xff]
  %v5745 = vld [vmem:[%s3659 + $0x258] sm:$0xff]
  %v5746 = vld [vmem:[%s3659 + $0x260] sm:$0xff]
  %v5747 = vadd.f32 %v5645, %v5739
  %v5748 = vadd.f32 %v5650, %v5740
  %v5749 = vld [vmem:[%s3659 + $0x268] sm:$0xff]
  %v5750 = vld [vmem:[%s3659 + $0x270] sm:$0xff]
  %v5751 = vld [vmem:[%s3659 + $0x278] sm:$0xff]
  %v5752 = vld [vmem:[%s3659 + $0x280] sm:$0xff]
  %v5754 = vsel %vm1034, %v5747, 0
  %v5757 = vsel %vm1034, %v5748, 0
  %5759 = vmatprep.subr.mxu0 0.0
  %5760 = vmatpush1.msra.mxu0 0.0
  %5761 = vmatprep.subr.mxu0 0.0
  %5762 = vmatpush1.msra.mxu0 0.0
  %5763 = vmatprep.subr.mxu0 0.0
  %5764 = vmatpush1.msra.mxu0 0.0
  %5765 = vmatprep.subr.mxu0 0.0
  %5766 = vmatpush1.msra.mxu0 0.0
  %5767 = vmatprep.subr.mxu0 0.0
  %5768 = vmatpush1.msra.mxu0 0.0
  %5769 = vmatprep.subr.mxu0 0.0
  %5770 = vmatpush1.msra.mxu0 0.0
  %5771 = vmatprep.subr.mxu0 0.0
  %5772 = vmatpush1.msra.mxu0 0.0
  %5773 = vmatprep.subr.mxu0 0.0
  %5774 = vmatpush1.msra.mxu0 0.0
  %5775 = vmatprep.subr.mxu0 0.0
  %5776 = vmatpush1.msra.mxu0 0.0
  %5777 = vmatprep.subr.mxu0 0.0
  %5778 = vmatpush1.msra.mxu0 0.0
  %5779 = vmatprep.subr.mxu0 0.0
  %5780 = vmatpush1.msra.mxu0 0.0
  %5781 = vmatprep.subr.mxu0 0.0
  %5782 = vmatpush1.msra.mxu0 0.0
  %5783 = vmatprep.subr.mxu0 0.0
  %5784 = vmatpush1.msra.mxu0 %v5752
  %5785 = vmatprep.subr.mxu0 0.0
  %5786 = vmatpush1.msra.mxu0 %v5751
  %5787 = vmatprep.subr.mxu0 0.0
  %5788 = vmatpush1.msra.mxu0 %v5750
  %5789 = vmatprep.subr.mxu0 0.0
  %5790 = vmatpush1.msra.mxu0 %v5749
  %5791 = vmatprep.subr.mxu0 0.0
  %5792 = vmatpush2.msra.mxu0 0.0
  %5793 = vmatprep.subr.mxu0 0.0
  %5794 = vmatpush2.msra.mxu0 0.0
  %5795 = vmatprep.subr.mxu0 0.0
  %5796 = vmatpush2.msra.mxu0 0.0
  %5797 = vmatprep.subr.mxu0 0.0
  %5798 = vmatpush2.msra.mxu0 0.0
  %5799 = vmatprep.subr.mxu0 0.0
  %5800 = vmatpush2.msra.mxu0 0.0
  %5801 = vmatprep.subr.mxu0 0.0
  %5802 = vmatpush2.msra.mxu0 0.0
  %5803 = vmatprep.subr.mxu0 0.0
  %5804 = vmatpush2.msra.mxu0 0.0
  %5805 = vmatprep.subr.mxu0 0.0
  %5806 = vmatpush2.msra.mxu0 0.0
  %5807 = vmatprep.subr.mxu0 0.0
  %5808 = vmatpush2.msra.mxu0 0.0
  %5809 = vmatprep.subr.mxu0 0.0
  %5810 = vmatpush2.msra.mxu0 0.0
  %5811 = vmatprep.subr.mxu0 0.0
  %5812 = vmatpush2.msra.mxu0 0.0
  %5813 = vmatprep.subr.mxu0 0.0
  %5814 = vmatpush2.msra.mxu0 0.0
  %5815 = vmatprep.subr.mxu0 0.0
  %5816 = vmatpush2.msra.mxu0 0.0
  %5817 = vmatprep.subr.mxu0 0.0
  %5818 = vmatpush2.msra.mxu0 0.0
  %5819 = vmatprep.subr.mxu0 0.0
  %5820 = vmatpush2.msra.mxu0 0.0
  %5821 = vmatprep.subr.mxu0 0.0
  %5822 = vmatpush2.msra.mxu0 0.0
  %5823 = vmatprep.mubr.f32.mxu0 0.0
  %5824 = vmatmul.mubr.f32.gmra.mxu0 %v5754
  %v5825 = vpop.f32.mrf.mxu0
  %v5826 = vadd.f32 0.0, %v5825
  %v5827 = vpop.f32.mrf.mxu0
  %5828 = vmatprep.mubr.f32.mxu0 0.0
  %5829 = vmatmul.mubr.f32.gmra.mxu0 %v5757
  %v5830 = vpop.f32.mrf.mxu0
  %v5831 = vadd.f32 0.0, %v5830
  %v5832 = vpop.f32.mrf.mxu0
  %5833 = vdwg.mxu0
  %v5835 = vsel %vm1034, %v5741, 0
  %v5838 = vsel %vm1034, %v5742, 0
  %5840 = vmatprep.subr.mxu0 0.0
  %5841 = vmatpush1.msra.mxu0 0.0
  %5842 = vmatprep.subr.mxu0 0.0
  %5843 = vmatpush1.msra.mxu0 0.0
  %5844 = vmatprep.subr.mxu0 0.0
  %5845 = vmatpush1.msra.mxu0 0.0
  %5846 = vmatprep.subr.mxu0 0.0
  %5847 = vmatpush1.msra.mxu0 0.0
  %5848 = vmatprep.subr.mxu0 0.0
  %5849 = vmatpush1.msra.mxu0 0.0
  %5850 = vmatprep.subr.mxu0 0.0
  %5851 = vmatpush1.msra.mxu0 0.0
  %5852 = vmatprep.subr.mxu0 0.0
  %5853 = vmatpush1.msra.mxu0 0.0
  %5854 = vmatprep.subr.mxu0 0.0
  %5855 = vmatpush1.msra.mxu0 0.0
  %5856 = vmatprep.subr.mxu0 0.0
  %5857 = vmatpush1.msra.mxu0 0.0
  %5858 = vmatprep.subr.mxu0 0.0
  %5859 = vmatpush1.msra.mxu0 0.0
  %5860 = vmatprep.subr.mxu0 0.0
  %5861 = vmatpush1.msra.mxu0 0.0
  %5862 = vmatprep.subr.mxu0 0.0
  %5863 = vmatpush1.msra.mxu0 0.0
  %5864 = vmatprep.subr.mxu0 0.0
  %5865 = vmatpush1.msra.mxu0 %v5746
  %5866 = vmatprep.subr.mxu0 0.0
  %5867 = vmatpush1.msra.mxu0 %v5745
  %5868 = vmatprep.subr.mxu0 0.0
  %5869 = vmatpush1.msra.mxu0 %v5744
  %5870 = vmatprep.subr.mxu0 0.0
  %5871 = vmatpush1.msra.mxu0 %v5743
  %5872 = vmatprep.subr.mxu0 0.0
  %5873 = vmatpush2.msra.mxu0 0.0
  %5874 = vmatprep.subr.mxu0 0.0
  %5875 = vmatpush2.msra.mxu0 0.0
  %5876 = vmatprep.subr.mxu0 0.0
  %5877 = vmatpush2.msra.mxu0 0.0
  %5878 = vmatprep.subr.mxu0 0.0
  %5879 = vmatpush2.msra.mxu0 0.0
  %5880 = vmatprep.subr.mxu0 0.0
  %5881 = vmatpush2.msra.mxu0 0.0
  %5882 = vmatprep.subr.mxu0 0.0
  %5883 = vmatpush2.msra.mxu0 0.0
  %5884 = vmatprep.subr.mxu0 0.0
  %5885 = vmatpush2.msra.mxu0 0.0
  %5886 = vmatprep.subr.mxu0 0.0
  %5887 = vmatpush2.msra.mxu0 0.0
  %5888 = vmatprep.subr.mxu0 0.0
  %5889 = vmatpush2.msra.mxu0 0.0
  %5890 = vmatprep.subr.mxu0 0.0
  %5891 = vmatpush2.msra.mxu0 0.0
  %5892 = vmatprep.subr.mxu0 0.0
  %5893 = vmatpush2.msra.mxu0 0.0
  %5894 = vmatprep.subr.mxu0 0.0
  %5895 = vmatpush2.msra.mxu0 0.0
  %5896 = vmatprep.subr.mxu0 0.0
  %5897 = vmatpush2.msra.mxu0 0.0
  %5898 = vmatprep.subr.mxu0 0.0
  %5899 = vmatpush2.msra.mxu0 0.0
  %5900 = vmatprep.subr.mxu0 0.0
  %5901 = vmatpush2.msra.mxu0 0.0
  %5902 = vmatprep.subr.mxu0 0.0
  %5903 = vmatpush2.msra.mxu0 0.0
  %5904 = vmatprep.mubr.f32.mxu0 0.0
  %5905 = vmatmul.mubr.f32.gmra.mxu0 %v5835
  %v5906 = vpop.f32.mrf.mxu0
  %v5907 = vadd.f32 %v5826, %v5906
  %v5908 = vpop.f32.mrf.mxu0
  %5909 = vmatprep.mubr.f32.mxu0 0.0
  %5910 = vmatmul.mubr.f32.gmra.mxu0 %v5838
  %v5911 = vpop.f32.mrf.mxu0
  %v5912 = vadd.f32 %v5831, %v5911
  %v5913 = vpop.f32.mrf.mxu0
  %5914 = vdwg.mxu0
  %v5915 = vld [vmem:[%s3659 + $0x288] sm:$0x1]
  %v5916 = vlaneseq
  %v5917 = vshrl.u32 %v5916, 7
  %v5918 = vsub.s32 0, %v5917
  %v5919 = vrot.slane %v5915, %v5918
  %v5920 = vadd.f32 %v5907, %v5919
  %v5921 = vadd.f32 %v5912, %v5919
  %v5922 = vadd.f32 %v3900, %v5920
  %v5923 = vadd.f32 %v3901, %v5921
  %v5924 = vld [vmem:[%s3659 + $0x30] sm:$0x1]
  %v5925 = vld [vmem:[%s3659 + $0x38] sm:$0x1]
  %v5926 = vsel %vm1034, %v5922, 0.0
  %5927 = vadd.xlane.f32.xlu0 %v5926
  %v5928 = vpop.xlane.xlu0 %5927
  %v5929 = vsel %vm1034, %v5923, 0.0
  %5930 = vadd.xlane.f32.xlu0 %v5929
  %v5931 = vpop.xlane.xlu0 %5930
  %v5932 = vmul.f32 %v5928, %v1041
  %v5933 = vmul.f32 %v5931, %v1041
  %v5934 = vsub.f32 %v5922, %v5932
  %v5935 = vsub.f32 %v5923, %v5933
  %v5936 = vmul.f32 %v5934, %v5934
  %v5937 = vmul.f32 %v5935, %v5935
  %v5938 = vsel %vm1034, %v5936, 0.0
  %5939 = vadd.xlane.f32.xlu0 %v5938
  %v5940 = vpop.xlane.xlu0 %5939
  %v5941 = vsel %vm1034, %v5937, 0.0
  %5942 = vadd.xlane.f32.xlu0 %v5941
  %v5943 = vpop.xlane.xlu0 %5942
  %v5944 = vmul.f32 %v5940, %v1041
  %v5945 = vmul.f32 %v5943, %v1041
  %v5946 = vadd.f32 %v5944, 1e-05
  %v5947 = vadd.f32 %v5945, 1e-05
  %v5948 = vrsqrt.pop %v5946
  %v5949 = vrsqrt.pop %v5947
  %v5950 = vmul.f32 %v5934, %v5948
  %v5951 = vmul.f32 %v5935, %v5949
  %v5952 = vlaneseq
  %v5953 = vshrl.u32 %v5952, 7
  %v5954 = vsub.s32 0, %v5953
  %v5955 = vrot.slane %v5924, %v5954
  %v5956 = vmul.f32 %v5950, %v5955
  %v5957 = vmul.f32 %v5951, %v5955
  %v5958 = vlaneseq
  %v5959 = vshrl.u32 %v5958, 7
  %v5960 = vsub.s32 0, %v5959
  %v5961 = vrot.slane %v5925, %v5960
  %v5962 = vadd.f32 %v5956, %v5961
  %v5963 = vadd.f32 %v5957, %v5961
  %v5964 = vld [vmem:[%s3659 + $0x290] sm:$0xff]
  %v5965 = vld [vmem:[%s3659 + $0x298] sm:$0xff]
  %v5966 = vld [vmem:[%s3659 + $0x2a0] sm:$0xff]
  %v5967 = vld [vmem:[%s3659 + $0x2a8] sm:$0xff]
  %v5968 = vld [vmem:[%s3659 + $0x2b0] sm:$0x1]
  %v5969 = vlaneseq
  %v5970 = vshrl.u32 %v5969, 7
  %v5971 = vsub.s32 0, %v5970
  %v5972 = vrot.slane %v5968, %v5971
  %v5974 = vsel %vm1034, %v5962, 0
  %v5977 = vsel %vm1034, %v5963, 0
  %5979 = vmatprep.subr.mxu0 0.0
  %5980 = vmatpush1.msra.mxu0 0.0
  %5981 = vmatprep.subr.mxu0 0.0
  %5982 = vmatpush1.msra.mxu0 0.0
  %5983 = vmatprep.subr.mxu0 0.0
  %5984 = vmatpush1.msra.mxu0 0.0
  %5985 = vmatprep.subr.mxu0 0.0
  %5986 = vmatpush1.msra.mxu0 0.0
  %5987 = vmatprep.subr.mxu0 0.0
  %5988 = vmatpush1.msra.mxu0 0.0
  %5989 = vmatprep.subr.mxu0 0.0
  %5990 = vmatpush1.msra.mxu0 0.0
  %5991 = vmatprep.subr.mxu0 0.0
  %5992 = vmatpush1.msra.mxu0 0.0
  %5993 = vmatprep.subr.mxu0 0.0
  %5994 = vmatpush1.msra.mxu0 0.0
  %5995 = vmatprep.subr.mxu0 0.0
  %5996 = vmatpush1.msra.mxu0 0.0
  %5997 = vmatprep.subr.mxu0 0.0
  %5998 = vmatpush1.msra.mxu0 0.0
  %5999 = vmatprep.subr.mxu0 0.0
  %6000 = vmatpush1.msra.mxu0 0.0
  %6001 = vmatprep.subr.mxu0 0.0
  %6002 = vmatpush1.msra.mxu0 0.0
  %6003 = vmatprep.subr.mxu0 0.0
  %6004 = vmatpush1.msra.mxu0 %v5967
  %6005 = vmatprep.subr.mxu0 0.0
  %6006 = vmatpush1.msra.mxu0 %v5966
  %6007 = vmatprep.subr.mxu0 0.0
  %6008 = vmatpush1.msra.mxu0 %v5965
  %6009 = vmatprep.subr.mxu0 0.0
  %6010 = vmatpush1.msra.mxu0 %v5964
  %6011 = vmatprep.subr.mxu0 0.0
  %6012 = vmatpush2.msra.mxu0 0.0
  %6013 = vmatprep.subr.mxu0 0.0
  %6014 = vmatpush2.msra.mxu0 0.0
  %6015 = vmatprep.subr.mxu0 0.0
  %6016 = vmatpush2.msra.mxu0 0.0
  %6017 = vmatprep.subr.mxu0 0.0
  %6018 = vmatpush2.msra.mxu0 0.0
  %6019 = vmatprep.subr.mxu0 0.0
  %6020 = vmatpush2.msra.mxu0 0.0
  %6021 = vmatprep.subr.mxu0 0.0
  %6022 = vmatpush2.msra.mxu0 0.0
  %6023 = vmatprep.subr.mxu0 0.0
  %6024 = vmatpush2.msra.mxu0 0.0
  %6025 = vmatprep.subr.mxu0 0.0
  %6026 = vmatpush2.msra.mxu0 0.0
  %6027 = vmatprep.subr.mxu0 0.0
  %6028 = vmatpush2.msra.mxu0 0.0
  %6029 = vmatprep.subr.mxu0 0.0
  %6030 = vmatpush2.msra.mxu0 0.0
  %6031 = vmatprep.subr.mxu0 0.0
  %6032 = vmatpush2.msra.mxu0 0.0
  %6033 = vmatprep.subr.mxu0 0.0
  %6034 = vmatpush2.msra.mxu0 0.0
  %6035 = vmatprep.subr.mxu0 0.0
  %6036 = vmatpush2.msra.mxu0 0.0
  %6037 = vmatprep.subr.mxu0 0.0
  %6038 = vmatpush2.msra.mxu0 0.0
  %6039 = vmatprep.subr.mxu0 0.0
  %6040 = vmatpush2.msra.mxu0 0.0
  %6041 = vmatprep.subr.mxu0 0.0
  %6042 = vmatpush2.msra.mxu0 0.0
  %6043 = vmatprep.mubr.f32.mxu0 0.0
  %6044 = vmatmul.mubr.f32.gmra.mxu0 %v5974
  %v6045 = vpop.f32.mrf.mxu0
  %v6046 = vadd.f32 %v5972, %v6045
  %v6047 = vpop.f32.mrf.mxu0
  %6048 = vmatprep.mubr.f32.mxu0 0.0
  %6049 = vmatmul.mubr.f32.gmra.mxu0 %v5977
  %v6050 = vpop.f32.mrf.mxu0
  %v6051 = vadd.f32 %v5972, %v6050
  %v6052 = vpop.f32.mrf.mxu0
  %6053 = vdwg.mxu0
  %v6054 = vxor.u32 %v6046, 2147483648
  %v6055 = vxor.u32 %v6051, 2147483648
  %v6056 = vmul.f32 %v6054, 1.442695
  %v6057 = vpow.pop %v6056
  %v6058 = vmul.f32 %v6055, 1.442695
  %v6059 = vpow.pop %v6058
  %v6060 = vadd.f32 %v6057, 1.0
  %v6061 = vadd.f32 %v6059, 1.0
  %v6062 = vrcp.pop %v6060
  %v6063 = vmul.f32 1.0, %v6062
  %v6064 = vrcp.pop %v6061
  %v6065 = vmul.f32 1.0, %v6064
  %v6066 = vmul.f32 %v6046, %v6063
  %v6067 = vmul.f32 %v6051, %v6065
  %v6068 = vld [vmem:[%s3659 + $0x2b8] sm:$0xff]
  %v6069 = vld [vmem:[%s3659 + $0x2c0] sm:$0xff]
  %v6070 = vld [vmem:[%s3659 + $0x2c8] sm:$0xff]
  %v6071 = vld [vmem:[%s3659 + $0x2d0] sm:$0xff]
  %v6072 = vld [vmem:[%s3659 + $0x2d8] sm:$0xff]
  %v6073 = vld [vmem:[%s3659 + $0x2e0] sm:$0xff]
  %v6074 = vld [vmem:[%s3659 + $0x2e8] sm:$0xff]
  %v6075 = vld [vmem:[%s3659 + $0x2f0] sm:$0xff]
  %v6076 = vld [vmem:[%s3659 + $0x2f8] sm:$0x1]
  %v6077 = vlaneseq
  %v6078 = vshrl.u32 %v6077, 7
  %v6079 = vsub.s32 0, %v6078
  %v6080 = vrot.slane %v6076, %v6079
  %v6082 = vsel %vm1191, %v6066, 0
  %v6085 = vsel %vm1191, %v6067, 0
  %6087 = vmatprep.subr.mxu0 0.0
  %6088 = vmatpush1.msra.mxu0 0.0
  %6089 = vmatprep.subr.mxu0 0.0
  %6090 = vmatpush1.msra.mxu0 0.0
  %6091 = vmatprep.subr.mxu0 0.0
  %6092 = vmatpush1.msra.mxu0 0.0
  %6093 = vmatprep.subr.mxu0 0.0
  %6094 = vmatpush1.msra.mxu0 0.0
  %6095 = vmatprep.subr.mxu0 0.0
  %6096 = vmatpush1.msra.mxu0 0.0
  %6097 = vmatprep.subr.mxu0 0.0
  %6098 = vmatpush1.msra.mxu0 0.0
  %6099 = vmatprep.subr.mxu0 0.0
  %6100 = vmatpush1.msra.mxu0 0.0
  %6101 = vmatprep.subr.mxu0 0.0
  %6102 = vmatpush1.msra.mxu0 0.0
  %6103 = vmatprep.subr.mxu0 0.0
  %6104 = vmatpush1.msra.mxu0 %v6075
  %6105 = vmatprep.subr.mxu0 0.0
  %6106 = vmatpush1.msra.mxu0 %v6074
  %6107 = vmatprep.subr.mxu0 0.0
  %6108 = vmatpush1.msra.mxu0 %v6073
  %6109 = vmatprep.subr.mxu0 0.0
  %6110 = vmatpush1.msra.mxu0 %v6072
  %6111 = vmatprep.subr.mxu0 0.0
  %6112 = vmatpush1.msra.mxu0 %v6071
  %6113 = vmatprep.subr.mxu0 0.0
  %6114 = vmatpush1.msra.mxu0 %v6070
  %6115 = vmatprep.subr.mxu0 0.0
  %6116 = vmatpush1.msra.mxu0 %v6069
  %6117 = vmatprep.subr.mxu0 0.0
  %6118 = vmatpush1.msra.mxu0 %v6068
  %6119 = vmatprep.subr.mxu0 0.0
  %6120 = vmatpush2.msra.mxu0 0.0
  %6121 = vmatprep.subr.mxu0 0.0
  %6122 = vmatpush2.msra.mxu0 0.0
  %6123 = vmatprep.subr.mxu0 0.0
  %6124 = vmatpush2.msra.mxu0 0.0
  %6125 = vmatprep.subr.mxu0 0.0
  %6126 = vmatpush2.msra.mxu0 0.0
  %6127 = vmatprep.subr.mxu0 0.0
  %6128 = vmatpush2.msra.mxu0 0.0
  %6129 = vmatprep.subr.mxu0 0.0
  %6130 = vmatpush2.msra.mxu0 0.0
  %6131 = vmatprep.subr.mxu0 0.0
  %6132 = vmatpush2.msra.mxu0 0.0
  %6133 = vmatprep.subr.mxu0 0.0
  %6134 = vmatpush2.msra.mxu0 0.0
  %6135 = vmatprep.subr.mxu0 0.0
  %6136 = vmatpush2.msra.mxu0 0.0
  %6137 = vmatprep.subr.mxu0 0.0
  %6138 = vmatpush2.msra.mxu0 0.0
  %6139 = vmatprep.subr.mxu0 0.0
  %6140 = vmatpush2.msra.mxu0 0.0
  %6141 = vmatprep.subr.mxu0 0.0
  %6142 = vmatpush2.msra.mxu0 0.0
  %6143 = vmatprep.subr.mxu0 0.0
  %6144 = vmatpush2.msra.mxu0 0.0
  %6145 = vmatprep.subr.mxu0 0.0
  %6146 = vmatpush2.msra.mxu0 0.0
  %6147 = vmatprep.subr.mxu0 0.0
  %6148 = vmatpush2.msra.mxu0 0.0
  %6149 = vmatprep.subr.mxu0 0.0
  %6150 = vmatpush2.msra.mxu0 0.0
  %6151 = vmatprep.mubr.f32.mxu0 0.0
  %6152 = vmatmul.mubr.f32.gmra.mxu0 %v6082
  %v6153 = vpop.f32.mrf.mxu0
  %v6154 = vadd.f32 %v6080, %v6153
  %v6155 = vpop.f32.mrf.mxu0
  %6156 = vmatprep.mubr.f32.mxu0 0.0
  %6157 = vmatmul.mubr.f32.gmra.mxu0 %v6085
  %v6158 = vpop.f32.mrf.mxu0
  %v6159 = vadd.f32 %v6080, %v6158
  %v6160 = vpop.f32.mrf.mxu0
  %6161 = vdwg.mxu0
  %v6162 = vmul.f32 %v6154, 0.5
  %v6163 = vmul.f32 %v6159, 0.5
  %v6164 = vadd.f32 %v5922, %v6162
  %v6165 = vadd.f32 %v5923, %v6163
  %v6166 = vld [vmem:[%s3659 + $0x40] sm:$0x1]
  %v6167 = vld [vmem:[%s3659 + $0x48] sm:$0x1]
  %v6168 = vsel %vm1034, %v6164, 0.0
  %6169 = vadd.xlane.f32.xlu0 %v6168
  %v6170 = vpop.xlane.xlu0 %6169
  %v6171 = vsel %vm1034, %v6165, 0.0
  %6172 = vadd.xlane.f32.xlu0 %v6171
  %v6173 = vpop.xlane.xlu0 %6172
  %v6174 = vmul.f32 %v6170, %v1041
  %v6175 = vmul.f32 %v6173, %v1041
  %v6176 = vsub.f32 %v6164, %v6174
  %v6177 = vsub.f32 %v6165, %v6175
  %v6178 = vmul.f32 %v6176, %v6176
  %v6179 = vmul.f32 %v6177, %v6177
  %v6180 = vsel %vm1034, %v6178, 0.0
  %6181 = vadd.xlane.f32.xlu0 %v6180
  %v6182 = vpop.xlane.xlu0 %6181
  %v6183 = vsel %vm1034, %v6179, 0.0
  %6184 = vadd.xlane.f32.xlu0 %v6183
  %v6185 = vpop.xlane.xlu0 %6184
  %v6186 = vmul.f32 %v6182, %v1041
  %v6187 = vmul.f32 %v6185, %v1041
  %v6188 = vadd.f32 %v6186, 1e-05
  %v6189 = vadd.f32 %v6187, 1e-05
  %v6190 = vrsqrt.pop %v6188
  %v6191 = vrsqrt.pop %v6189
  %v6192 = vmul.f32 %v6176, %v6190
  %v6193 = vmul.f32 %v6177, %v6191
  %v6194 = vlaneseq
  %v6195 = vshrl.u32 %v6194, 7
  %v6196 = vsub.s32 0, %v6195
  %v6197 = vrot.slane %v6166, %v6196
  %v6198 = vmul.f32 %v6192, %v6197
  %v6199 = vmul.f32 %v6193, %v6197
  %v6200 = vlaneseq
  %v6201 = vshrl.u32 %v6200, 7
  %v6202 = vsub.s32 0, %v6201
  %v6203 = vrot.slane %v6167, %v6202
  %v6204 = vadd.f32 %v6198, %v6203
  %v6205 = vadd.f32 %v6199, %v6203
  %v6206 = vsel %vm1034, %v6204, 0.0
  %6207 = vadd.xlane.f32.xlu0 %v6206
  %v6208 = vpop.xlane.xlu0 %6207
  %v6209 = vsel %vm1034, %v6205, 0.0
  %6210 = vadd.xlane.f32.xlu0 %v6209
  %v6211 = vpop.xlane.xlu0 %6210
  %v6212 = vmul.f32 %v6208, %v1041
  %v6213 = vmul.f32 %v6211, %v1041
  %v6214 = vsub.f32 %v6204, %v6212
  %v6215 = vsub.f32 %v6205, %v6213
  %v6216 = vmul.f32 %v6214, %v6214
  %v6217 = vmul.f32 %v6215, %v6215
  %v6218 = vsel %vm1034, %v6216, 0.0
  %6219 = vadd.xlane.f32.xlu0 %v6218
  %v6220 = vpop.xlane.xlu0 %6219
  %v6221 = vsel %vm1034, %v6217, 0.0
  %6222 = vadd.xlane.f32.xlu0 %v6221
  %v6223 = vpop.xlane.xlu0 %6222
  %v6224 = vmul.f32 %v6220, %v1041
  %v6225 = vmul.f32 %v6223, %v1041
  %v6226 = vadd.f32 %v6224, 1e-05
  %v6227 = vadd.f32 %v6225, 1e-05
  %v6228 = vrsqrt.pop %v6226
  %v6229 = vrsqrt.pop %v6227
  %v6230 = vmul.f32 %v6214, %v6228
  %v6231 = vmul.f32 %v6215, %v6229
  %v6232 = vlaneseq
  %v6233 = vshrl.u32 %v6232, 7
  %v6234 = vsub.s32 0, %v6233
  %v6235 = vrot.slane %v886, %v6234
  %v6236 = vmul.f32 %v6230, %v6235
  %v6237 = vmul.f32 %v6231, %v6235
  %v6238 = vlaneseq
  %v6239 = vshrl.u32 %v6238, 7
  %v6240 = vsub.s32 0, %v6239
  %v6241 = vrot.slane %v887, %v6240
  %v6242 = vadd.f32 %v6236, %v6241
  %v6243 = vadd.f32 %v6237, %v6241
  %6244 = vst.msk [vmem:[%s5] sm:$0xff] %vm1034, %v6242
  %6245 = vst.msk [vmem:[%s5 + $0x8] sm:$0xff] %vm1034, %v6243
  // Predicated region
  $region22: #{ebranchformer_encoder.1} parent=0 // pred_check
    _
  $region23: #{ebranchformer_encoder.1} parent=0 // pred_check_branch
    %6247 = sbr.rel (0) target = $region25
  $region24: #{ebranchformer_encoder.1} parent=0 // pred_region
    _
  $region25: #{ebranchformer_encoder.1} parent=0 // pred_fallthru
    _
  // Predicated region
  $region26: #{ebranchformer_encoder.1} parent=0 // pred_check
    _
  $region27: #{ebranchformer_encoder.1} parent=0 // pred_check_branch
    %6249 = sbr.rel (0) target = $region29
  $region28: #{ebranchformer_encoder.1} parent=0 // pred_region
    _
  $region29: #{ebranchformer_encoder.1} parent=0 // pred_fallthru
    _

</llo_original>
